<compile_context>
chip_gen: v6e
topology: v6e:2x2x1
jax: 0.10.0
libtpu: 0.0.40
codegen_flags: <defaults>
</compile_context>

<pallas_src>
import functools

import jax
import jax.numpy as jnp
from jax import lax
from jax.experimental import pallas as pl
from jax.experimental.pallas import tpu as pltpu

COEFF_NC = 70      # nn.Conv1d in_channels of `first`
CIN_PAD = 128      # COEFF_NC zero-padded to a full lane tile
DESC_NC = 256      # descriptor_nc
LAYERS = 3         # number of encoder blocks
K_FIRST = 7        # first conv kernel size
K_ENC = 3          # encoder conv kernel size
DIL_ENC = 3        # encoder conv dilation
MAX_BB = 32        # batch elements per grid step (multiple of 8)


def conv3dmm_kernel(x_ref, wf_ref, bf_ref, we_ref, be_ref, o_ref, *,
                    block_b, t_pad, t_valid):
    """One batch block per grid step; all activations stay full (padded) length.

    x_ref  : (bb*t_pad, CIN_PAD)              bf16 flattened channels-last input (batch-major rows)
    wf_ref : (K_FIRST, CIN_PAD, DESC_NC)      bf16 first-conv weight, tap-major
    bf_ref : (1, DESC_NC)                     f32 first-conv bias
    we_ref : (LAYERS, K_ENC, DESC_NC, DESC_NC) bf16 encoder conv weights, tap-major
    be_ref : (LAYERS, 1, DESC_NC)             f32 encoder conv biases
    o_ref  : (bb, DESC_NC)                    pooled descriptors for this batch block
    """
    bb = block_b
    n = bb * t_pad

    x = x_ref[...]                                            # (n, 128) bf16

    # ---- first conv: per-tap matmul, shift each tap's f32 result with an XLU roll ----
    # conv[t] = sum_k x[t + k] @ Wf_k ; roll(y, n - k)[t] == y[t + k].
    h = jnp.dot(x, wf_ref[0], preferred_element_type=jnp.float32)
    for k in range(1, K_FIRST):
        y = jnp.dot(x, wf_ref[k], preferred_element_type=jnp.float32)
        h = h + pltpu.roll(y, n - k, axis=0)
    h = h + bf_ref[...]                                       # (n, 256) f32

    # ---- encoder blocks: LeakyReLU(0.1) -> dilated conv (per-tap) -> residual[3:-3] ----
    for i in range(LAYERS):
        a = jnp.maximum(h, 0.1 * h).astype(jnp.bfloat16)      # LeakyReLU(0.1), bf16 MXU input
        conv = jnp.dot(a, we_ref[i, 0], preferred_element_type=jnp.float32)
        for k in range(1, K_ENC):
            y = jnp.dot(a, we_ref[i, k], preferred_element_type=jnp.float32)
            conv = conv + pltpu.roll(y, n - k * DIL_ENC, axis=0)
        # residual out[:, :, 3:-3] in full-length rows == h shifted forward by 3
        h = conv + be_ref[i] + pltpu.roll(h, n - DIL_ENC, axis=0)

    # ---- AdaptiveAvgPool1d(1): single masked mean over the valid time rows ----
    h3 = h.reshape(bb, t_pad, DESC_NC)
    row = lax.broadcasted_iota(jnp.int32, (t_pad, DESC_NC), 0)
    mask = (row < t_valid).astype(jnp.float32)                # (t_pad, 256)
    pooled = jnp.sum(h3 * mask, axis=1) * (1.0 / t_valid)     # (bb, 256)
    o_ref[...] = pooled.astype(o_ref.dtype)


@jax.jit
def conv3dmm_forward(x_nct, wf_packed, bf, we_packed, be):
    """x_nct: (B, COEFF_NC, T) float32 — same layout as the PyTorch module input."""
    B, C, T = x_nct.shape
    assert C == COEFF_NC
    t_valid = T - (K_FIRST - 1) - LAYERS * (K_ENC - 1) * DIL_ENC
    assert t_valid >= 1, "sequence too short"

    # Pad time to a sublane multiple and batch to a multiple of 8, then pick one big
    # batch block (grid=1 for small B; for large B the grid stays 'parallel' so v7x's
    # two TensorCores shard blocks).  M = bb * t_pad >= 256 fills the MXU.
    t_pad = -(-T // 8) * 8
    b8 = -(-B // 8) * 8
    bb = min(MAX_BB, b8)
    n_blocks = -(-b8 // bb)
    b_pad = n_blocks * bb

    # channels-last, bf16 (halves DMA; accumulation stays f32 in-kernel), pad, flatten.
    x = jnp.transpose(x_nct.astype(jnp.bfloat16), (0, 2, 1))          # (B, T, C)
    x = jnp.pad(x, ((0, b_pad - B), (0, t_pad - T), (0, CIN_PAD - C)))
    x = x.reshape(b_pad * t_pad, CIN_PAD)

    kernel = functools.partial(conv3dmm_kernel, block_b=bb, t_pad=t_pad, t_valid=t_valid)

    out = pl.pallas_call(
        kernel,
        out_shape=jax.ShapeDtypeStruct((b_pad, DESC_NC), jnp.float32),
        grid_spec=pltpu.PrefetchScalarGridSpec(
            num_scalar_prefetch=0,
            grid=(n_blocks,),
            in_specs=[
                pl.BlockSpec((bb * t_pad, CIN_PAD), lambda b: (b, 0)),
                pl.BlockSpec((K_FIRST, CIN_PAD, DESC_NC), lambda b: (0, 0, 0)),
                pl.BlockSpec((1, DESC_NC), lambda b: (0, 0)),
                pl.BlockSpec((LAYERS, K_ENC, DESC_NC, DESC_NC), lambda b: (0, 0, 0, 0)),
                pl.BlockSpec((LAYERS, 1, DESC_NC), lambda b: (0, 0, 0)),
            ],
            out_specs=pl.BlockSpec((bb, DESC_NC), lambda b: (b, 0)),
        ),
        compiler_params=pltpu.CompilerParams(
            dimension_semantics=("parallel",),
            vmem_limit_bytes=48 * 1024 * 1024,   # << 64 MiB physical on v7x
        ),
    )(x, wf_packed, bf, we_packed, be)
    return out[:B]


def pack_params(wf_torch, bf_torch, we_torch, be_torch):
    """Pack torch-layout weights into the tap-major layouts used by the kernel.

    wf_torch: (DESC_NC, COEFF_NC, K_FIRST)   torch Conv1d weight (Cout, Cin, K)
    bf_torch: (DESC_NC,)
    we_torch: (LAYERS, DESC_NC, DESC_NC, K_ENC)
    be_torch: (LAYERS, DESC_NC)
    """
    wf = jnp.transpose(wf_torch, (2, 1, 0))                           # (K, Cin, Cout)
    wf = jnp.pad(wf, ((0, 0), (0, CIN_PAD - COEFF_NC), (0, 0)))
    wf_packed = wf.astype(jnp.bfloat16)                               # (7, 128, 256)

    we_packed = jnp.transpose(we_torch, (0, 3, 2, 1)).astype(jnp.bfloat16)  # (L, K, Cin, Cout)

    bf = bf_torch.reshape(1, DESC_NC).astype(jnp.float32)
    be = be_torch.reshape(LAYERS, 1, DESC_NC).astype(jnp.float32)
    return wf_packed, bf, we_packed, be


def ref_forward(x_nct, wf_torch, bf_torch, we_torch, be_torch):
    """Pure-JAX reference with matching bf16-input / f32-accumulation numerics."""
    x = jnp.transpose(x_nct, (0, 2, 1)).astype(jnp.bfloat16)          # (B, T, Cin)

    def conv1d(a_bf16, w_kio, bias, dil):
        K = w_kio.shape[0]
        t_new = a_bf16.shape[1] - (K - 1) * dil
        out = jnp.zeros((a_bf16.shape[0], t_new, w_kio.shape[2]), jnp.float32)
        for k in range(K):
            s = k * dil
            out = out + jnp.einsum("btc,cd->btd",
                                   a_bf16[:, s:s + t_new, :],
                                   w_kio[k].astype(jnp.bfloat16),
                                   preferred_element_type=jnp.float32)
        return out + bias.reshape(1, 1, -1).astype(jnp.float32)

    h = conv1d(x, jnp.transpose(wf_torch, (2, 1, 0)), bf_torch, 1)
    for i in range(LAYERS):
        a = jnp.maximum(h, 0.1 * h).astype(jnp.bfloat16)
        c = conv1d(a, jnp.transpose(we_torch[i], (2, 1, 0)), be_torch[i], DIL_ENC)
        h = c + h[:, DIL_ENC:DIL_ENC + c.shape[1], :]
    return jnp.mean(h, axis=1)


def init_params(key):
    """Deterministic synthetic parameters in torch Conv1d layouts."""
    k1, k2, k3, k4 = jax.random.split(key, 4)
    wf_torch = jax.random.normal(k1, (DESC_NC, COEFF_NC, K_FIRST), jnp.float32)
    wf_torch = wf_torch * (1.0 / jnp.sqrt(float(COEFF_NC * K_FIRST)))
    bf_torch = jax.random.normal(k2, (DESC_NC,), jnp.float32) * 0.01
    we_torch = jax.random.normal(k3, (LAYERS, DESC_NC, DESC_NC, K_ENC), jnp.float32)
    we_torch = we_torch * (1.0 / jnp.sqrt(float(DESC_NC * K_ENC)))
    be_torch = jax.random.normal(k4, (LAYERS, DESC_NC), jnp.float32) * 0.01
    return wf_torch, bf_torch, we_torch, be_torch


if __name__ == "__main__":
    key = jax.random.PRNGKey(0)
    kx, kp = jax.random.split(key)

    B, T = 2, 32  # T=32 -> valid length 26 after first conv -> 20 -> 14 -> 8 after encoders
    x = jax.random.normal(kx, (B, COEFF_NC, T), jnp.float32)  # NCT, same as PyTorch

    wf_t, bf_t, we_t, be_t = init_params(kp)
    wf_packed, bf, we_packed, be = pack_params(wf_t, bf_t, we_t, be_t)

    out = jax.block_until_ready(conv3dmm_forward(x, wf_packed, bf, we_packed, be))
    assert out.shape == (B, DESC_NC), out.shape
    assert bool(jnp.all(jnp.isfinite(out)))

    ref = jax.block_until_ready(ref_forward(x, wf_t, bf_t, we_t, be_t))
    max_err = float(jnp.max(jnp.abs(out - ref)))
    assert jnp.allclose(out, ref, rtol=1e-2, atol=1e-2), max_err

    print("KERNEL_OK")
</pallas_src>

<mosaic_0001>
module attributes {stable_mosaic.version = 11 : i64} {
  func.func @conv3dmm_kernel(%arg0: i32, %arg1: memref<256x128xbf16, #tpu.memory_space<vmem>>, %arg2: memref<7x128x256xbf16, #tpu.memory_space<vmem>>, %arg3: memref<1x256xf32, #tpu.memory_space<vmem>>, %arg4: memref<3x3x256x256xbf16, #tpu.memory_space<vmem>>, %arg5: memref<3x1x256xf32, #tpu.memory_space<vmem>>, %arg6: memref<8x256xf32, #tpu.memory_space<vmem>>) attributes {dimension_semantics = [#tpu.dimension_semantics<parallel>], iteration_bounds = array<i64: 1>, scalar_prefetch = 0 : i64, scratch_operands = 0 : i64, tpu.core_type = #tpu.core_type<tc>, window_params = [{transform_indices = @transform_0, window_bounds = array<i64: 256, 128>}, {pipeline_mode = #tpu.pipeline_mode<synchronous>, transform_indices = @transform_1, window_bounds = array<i64: 7, 128, 256>}, {pipeline_mode = #tpu.pipeline_mode<synchronous>, transform_indices = @transform_2, window_bounds = array<i64: 1, 256>}, {pipeline_mode = #tpu.pipeline_mode<synchronous>, transform_indices = @transform_3, window_bounds = array<i64: 3, 3, 256, 256>}, {pipeline_mode = #tpu.pipeline_mode<synchronous>, transform_indices = @transform_4, window_bounds = array<i64: 3, 1, 256>}, {transform_indices = @transform_5, window_bounds = array<i64: 8, 256>}]} {
    %c0 = arith.constant 0 : index
    %c0_0 = arith.constant 0 : index
    %0 = vector.load %arg1[%c0, %c0_0] : memref<256x128xbf16, #tpu.memory_space<vmem>>, vector<256x128xbf16>
    %c0_1 = arith.constant 0 : index
    %c0_2 = arith.constant 0 : index
    %c0_3 = arith.constant 0 : index
    %1 = vector.load %arg2[%c0_1, %c0_2, %c0_3] : memref<7x128x256xbf16, #tpu.memory_space<vmem>>, vector<1x128x256xbf16>
    %2 = vector.shape_cast %1 : vector<1x128x256xbf16> to vector<128x256xbf16>
    %cst = arith.constant dense<0.000000e+00> : vector<256x256xf32>
    %3 = tpu.matmul %0, %2, %cst {dimension_numbers = #tpu.dot_dimension_numbers<[1], [0], [0], [1], [0, 0, 1, 1], [], []>} : vector<256x128xbf16>, vector<128x256xbf16>, vector<256x256xf32> -> vector<256x256xf32>
    %c1 = arith.constant 1 : index
    %c0_4 = arith.constant 0 : index
    %c0_5 = arith.constant 0 : index
    %4 = vector.load %arg2[%c1, %c0_4, %c0_5] : memref<7x128x256xbf16, #tpu.memory_space<vmem>>, vector<1x128x256xbf16>
    %5 = vector.shape_cast %4 : vector<1x128x256xbf16> to vector<128x256xbf16>
    %cst_6 = arith.constant dense<0.000000e+00> : vector<256x256xf32>
    %6 = tpu.matmul %0, %5, %cst_6 {dimension_numbers = #tpu.dot_dimension_numbers<[1], [0], [0], [1], [0, 0, 1, 1], [], []>} : vector<256x128xbf16>, vector<128x256xbf16>, vector<256x256xf32> -> vector<256x256xf32>
    %c255_i32 = arith.constant 255 : i32
    %7 = tpu.dynamic_rotate %6 by %c255_i32 dim 0 : vector<256x256xf32>, i32 -> vector<256x256xf32>
    %8 = arith.addf %3, %7 : vector<256x256xf32>
    %c2 = arith.constant 2 : index
    %c0_7 = arith.constant 0 : index
    %c0_8 = arith.constant 0 : index
    %9 = vector.load %arg2[%c2, %c0_7, %c0_8] : memref<7x128x256xbf16, #tpu.memory_space<vmem>>, vector<1x128x256xbf16>
    %10 = vector.shape_cast %9 : vector<1x128x256xbf16> to vector<128x256xbf16>
    %cst_9 = arith.constant dense<0.000000e+00> : vector<256x256xf32>
    %11 = tpu.matmul %0, %10, %cst_9 {dimension_numbers = #tpu.dot_dimension_numbers<[1], [0], [0], [1], [0, 0, 1, 1], [], []>} : vector<256x128xbf16>, vector<128x256xbf16>, vector<256x256xf32> -> vector<256x256xf32>
    %c254_i32 = arith.constant 254 : i32
    %12 = tpu.dynamic_rotate %11 by %c254_i32 dim 0 : vector<256x256xf32>, i32 -> vector<256x256xf32>
    %13 = arith.addf %8, %12 : vector<256x256xf32>
    %c3 = arith.constant 3 : index
    %c0_10 = arith.constant 0 : index
    %c0_11 = arith.constant 0 : index
    %14 = vector.load %arg2[%c3, %c0_10, %c0_11] : memref<7x128x256xbf16, #tpu.memory_space<vmem>>, vector<1x128x256xbf16>
    %15 = vector.shape_cast %14 : vector<1x128x256xbf16> to vector<128x256xbf16>
    %cst_12 = arith.constant dense<0.000000e+00> : vector<256x256xf32>
    %16 = tpu.matmul %0, %15, %cst_12 {dimension_numbers = #tpu.dot_dimension_numbers<[1], [0], [0], [1], [0, 0, 1, 1], [], []>} : vector<256x128xbf16>, vector<128x256xbf16>, vector<256x256xf32> -> vector<256x256xf32>
    %c253_i32 = arith.constant 253 : i32
    %17 = tpu.dynamic_rotate %16 by %c253_i32 dim 0 : vector<256x256xf32>, i32 -> vector<256x256xf32>
    %18 = arith.addf %13, %17 : vector<256x256xf32>
    %c4 = arith.constant 4 : index
    %c0_13 = arith.constant 0 : index
    %c0_14 = arith.constant 0 : index
    %19 = vector.load %arg2[%c4, %c0_13, %c0_14] : memref<7x128x256xbf16, #tpu.memory_space<vmem>>, vector<1x128x256xbf16>
    %20 = vector.shape_cast %19 : vector<1x128x256xbf16> to vector<128x256xbf16>
    %cst_15 = arith.constant dense<0.000000e+00> : vector<256x256xf32>
    %21 = tpu.matmul %0, %20, %cst_15 {dimension_numbers = #tpu.dot_dimension_numbers<[1], [0], [0], [1], [0, 0, 1, 1], [], []>} : vector<256x128xbf16>, vector<128x256xbf16>, vector<256x256xf32> -> vector<256x256xf32>
    %c252_i32 = arith.constant 252 : i32
    %22 = tpu.dynamic_rotate %21 by %c252_i32 dim 0 : vector<256x256xf32>, i32 -> vector<256x256xf32>
    %23 = arith.addf %18, %22 : vector<256x256xf32>
    %c5 = arith.constant 5 : index
    %c0_16 = arith.constant 0 : index
    %c0_17 = arith.constant 0 : index
    %24 = vector.load %arg2[%c5, %c0_16, %c0_17] : memref<7x128x256xbf16, #tpu.memory_space<vmem>>, vector<1x128x256xbf16>
    %25 = vector.shape_cast %24 : vector<1x128x256xbf16> to vector<128x256xbf16>
    %cst_18 = arith.constant dense<0.000000e+00> : vector<256x256xf32>
    %26 = tpu.matmul %0, %25, %cst_18 {dimension_numbers = #tpu.dot_dimension_numbers<[1], [0], [0], [1], [0, 0, 1, 1], [], []>} : vector<256x128xbf16>, vector<128x256xbf16>, vector<256x256xf32> -> vector<256x256xf32>
    %c251_i32 = arith.constant 251 : i32
    %27 = tpu.dynamic_rotate %26 by %c251_i32 dim 0 : vector<256x256xf32>, i32 -> vector<256x256xf32>
    %28 = arith.addf %23, %27 : vector<256x256xf32>
    %c6 = arith.constant 6 : index
    %c0_19 = arith.constant 0 : index
    %c0_20 = arith.constant 0 : index
    %29 = vector.load %arg2[%c6, %c0_19, %c0_20] : memref<7x128x256xbf16, #tpu.memory_space<vmem>>, vector<1x128x256xbf16>
    %30 = vector.shape_cast %29 : vector<1x128x256xbf16> to vector<128x256xbf16>
    %cst_21 = arith.constant dense<0.000000e+00> : vector<256x256xf32>
    %31 = tpu.matmul %0, %30, %cst_21 {dimension_numbers = #tpu.dot_dimension_numbers<[1], [0], [0], [1], [0, 0, 1, 1], [], []>} : vector<256x128xbf16>, vector<128x256xbf16>, vector<256x256xf32> -> vector<256x256xf32>
    %c250_i32 = arith.constant 250 : i32
    %32 = tpu.dynamic_rotate %31 by %c250_i32 dim 0 : vector<256x256xf32>, i32 -> vector<256x256xf32>
    %33 = arith.addf %28, %32 : vector<256x256xf32>
    %c0_22 = arith.constant 0 : index
    %c0_23 = arith.constant 0 : index
    %34 = vector.load %arg3[%c0_22, %c0_23] : memref<1x256xf32, #tpu.memory_space<vmem>>, vector<1x256xf32>
    %35 = vector.broadcast %34 : vector<1x256xf32> to vector<256x256xf32>
    %36 = arith.addf %33, %35 : vector<256x256xf32>
    %cst_24 = arith.constant 1.000000e-01 : f32
    %37 = vector.broadcast %cst_24 : f32 to vector<256x256xf32>
    %38 = arith.mulf %37, %36 : vector<256x256xf32>
    %39 = arith.maximumf %36, %38 : vector<256x256xf32>
    %40 = arith.truncf %39 : vector<256x256xf32> to vector<256x256xbf16>
    %c0_25 = arith.constant 0 : index
    %c0_26 = arith.constant 0 : index
    %c0_27 = arith.constant 0 : index
    %c0_28 = arith.constant 0 : index
    %41 = vector.load %arg4[%c0_25, %c0_26, %c0_27, %c0_28] : memref<3x3x256x256xbf16, #tpu.memory_space<vmem>>, vector<1x1x256x256xbf16>
    %42 = vector.shape_cast %41 : vector<1x1x256x256xbf16> to vector<256x256xbf16>
    %cst_29 = arith.constant dense<0.000000e+00> : vector<256x256xf32>
    %43 = tpu.matmul %40, %42, %cst_29 {dimension_numbers = #tpu.dot_dimension_numbers<[1], [0], [0], [1], [0, 0, 1, 1], [], []>} : vector<256x256xbf16>, vector<256x256xbf16>, vector<256x256xf32> -> vector<256x256xf32>
    %c0_30 = arith.constant 0 : index
    %c1_31 = arith.constant 1 : index
    %c0_32 = arith.constant 0 : index
    %c0_33 = arith.constant 0 : index
    %44 = vector.load %arg4[%c0_30, %c1_31, %c0_32, %c0_33] : memref<3x3x256x256xbf16, #tpu.memory_space<vmem>>, vector<1x1x256x256xbf16>
    %45 = vector.shape_cast %44 : vector<1x1x256x256xbf16> to vector<256x256xbf16>
    %cst_34 = arith.constant dense<0.000000e+00> : vector<256x256xf32>
    %46 = tpu.matmul %40, %45, %cst_34 {dimension_numbers = #tpu.dot_dimension_numbers<[1], [0], [0], [1], [0, 0, 1, 1], [], []>} : vector<256x256xbf16>, vector<256x256xbf16>, vector<256x256xf32> -> vector<256x256xf32>
    %c253_i32_35 = arith.constant 253 : i32
    %47 = tpu.dynamic_rotate %46 by %c253_i32_35 dim 0 : vector<256x256xf32>, i32 -> vector<256x256xf32>
    %48 = arith.addf %43, %47 : vector<256x256xf32>
    %c0_36 = arith.constant 0 : index
    %c2_37 = arith.constant 2 : index
    %c0_38 = arith.constant 0 : index
    %c0_39 = arith.constant 0 : index
    %49 = vector.load %arg4[%c0_36, %c2_37, %c0_38, %c0_39] : memref<3x3x256x256xbf16, #tpu.memory_space<vmem>>, vector<1x1x256x256xbf16>
    %50 = vector.shape_cast %49 : vector<1x1x256x256xbf16> to vector<256x256xbf16>
    %cst_40 = arith.constant dense<0.000000e+00> : vector<256x256xf32>
    %51 = tpu.matmul %40, %50, %cst_40 {dimension_numbers = #tpu.dot_dimension_numbers<[1], [0], [0], [1], [0, 0, 1, 1], [], []>} : vector<256x256xbf16>, vector<256x256xbf16>, vector<256x256xf32> -> vector<256x256xf32>
    %c250_i32_41 = arith.constant 250 : i32
    %52 = tpu.dynamic_rotate %51 by %c250_i32_41 dim 0 : vector<256x256xf32>, i32 -> vector<256x256xf32>
    %53 = arith.addf %48, %52 : vector<256x256xf32>
    %c0_42 = arith.constant 0 : index
    %c0_43 = arith.constant 0 : index
    %c0_44 = arith.constant 0 : index
    %54 = vector.load %arg5[%c0_42, %c0_43, %c0_44] : memref<3x1x256xf32, #tpu.memory_space<vmem>>, vector<1x1x256xf32>
    %55 = vector.shape_cast %54 : vector<1x1x256xf32> to vector<1x256xf32>
    %56 = vector.broadcast %55 : vector<1x256xf32> to vector<256x256xf32>
    %57 = arith.addf %53, %56 : vector<256x256xf32>
    %c253_i32_45 = arith.constant 253 : i32
    %58 = tpu.dynamic_rotate %36 by %c253_i32_45 dim 0 : vector<256x256xf32>, i32 -> vector<256x256xf32>
    %59 = arith.addf %57, %58 : vector<256x256xf32>
    %cst_46 = arith.constant 1.000000e-01 : f32
    %60 = vector.broadcast %cst_46 : f32 to vector<256x256xf32>
    %61 = arith.mulf %60, %59 : vector<256x256xf32>
    %62 = arith.maximumf %59, %61 : vector<256x256xf32>
    %63 = arith.truncf %62 : vector<256x256xf32> to vector<256x256xbf16>
    %c1_47 = arith.constant 1 : index
    %c0_48 = arith.constant 0 : index
    %c0_49 = arith.constant 0 : index
    %c0_50 = arith.constant 0 : index
    %64 = vector.load %arg4[%c1_47, %c0_48, %c0_49, %c0_50] : memref<3x3x256x256xbf16, #tpu.memory_space<vmem>>, vector<1x1x256x256xbf16>
    %65 = vector.shape_cast %64 : vector<1x1x256x256xbf16> to vector<256x256xbf16>
    %cst_51 = arith.constant dense<0.000000e+00> : vector<256x256xf32>
    %66 = tpu.matmul %63, %65, %cst_51 {dimension_numbers = #tpu.dot_dimension_numbers<[1], [0], [0], [1], [0, 0, 1, 1], [], []>} : vector<256x256xbf16>, vector<256x256xbf16>, vector<256x256xf32> -> vector<256x256xf32>
    %c1_52 = arith.constant 1 : index
    %c1_53 = arith.constant 1 : index
    %c0_54 = arith.constant 0 : index
    %c0_55 = arith.constant 0 : index
    %67 = vector.load %arg4[%c1_52, %c1_53, %c0_54, %c0_55] : memref<3x3x256x256xbf16, #tpu.memory_space<vmem>>, vector<1x1x256x256xbf16>
    %68 = vector.shape_cast %67 : vector<1x1x256x256xbf16> to vector<256x256xbf16>
    %cst_56 = arith.constant dense<0.000000e+00> : vector<256x256xf32>
    %69 = tpu.matmul %63, %68, %cst_56 {dimension_numbers = #tpu.dot_dimension_numbers<[1], [0], [0], [1], [0, 0, 1, 1], [], []>} : vector<256x256xbf16>, vector<256x256xbf16>, vector<256x256xf32> -> vector<256x256xf32>
    %c253_i32_57 = arith.constant 253 : i32
    %70 = tpu.dynamic_rotate %69 by %c253_i32_57 dim 0 : vector<256x256xf32>, i32 -> vector<256x256xf32>
    %71 = arith.addf %66, %70 : vector<256x256xf32>
    %c1_58 = arith.constant 1 : index
    %c2_59 = arith.constant 2 : index
    %c0_60 = arith.constant 0 : index
    %c0_61 = arith.constant 0 : index
    %72 = vector.load %arg4[%c1_58, %c2_59, %c0_60, %c0_61] : memref<3x3x256x256xbf16, #tpu.memory_space<vmem>>, vector<1x1x256x256xbf16>
    %73 = vector.shape_cast %72 : vector<1x1x256x256xbf16> to vector<256x256xbf16>
    %cst_62 = arith.constant dense<0.000000e+00> : vector<256x256xf32>
    %74 = tpu.matmul %63, %73, %cst_62 {dimension_numbers = #tpu.dot_dimension_numbers<[1], [0], [0], [1], [0, 0, 1, 1], [], []>} : vector<256x256xbf16>, vector<256x256xbf16>, vector<256x256xf32> -> vector<256x256xf32>
    %c250_i32_63 = arith.constant 250 : i32
    %75 = tpu.dynamic_rotate %74 by %c250_i32_63 dim 0 : vector<256x256xf32>, i32 -> vector<256x256xf32>
    %76 = arith.addf %71, %75 : vector<256x256xf32>
    %c1_64 = arith.constant 1 : index
    %c0_65 = arith.constant 0 : index
    %c0_66 = arith.constant 0 : index
    %77 = vector.load %arg5[%c1_64, %c0_65, %c0_66] : memref<3x1x256xf32, #tpu.memory_space<vmem>>, vector<1x1x256xf32>
    %78 = vector.shape_cast %77 : vector<1x1x256xf32> to vector<1x256xf32>
    %79 = vector.broadcast %78 : vector<1x256xf32> to vector<256x256xf32>
    %80 = arith.addf %76, %79 : vector<256x256xf32>
    %c253_i32_67 = arith.constant 253 : i32
    %81 = tpu.dynamic_rotate %59 by %c253_i32_67 dim 0 : vector<256x256xf32>, i32 -> vector<256x256xf32>
    %82 = arith.addf %80, %81 : vector<256x256xf32>
    %cst_68 = arith.constant 1.000000e-01 : f32
    %83 = vector.broadcast %cst_68 : f32 to vector<256x256xf32>
    %84 = arith.mulf %83, %82 : vector<256x256xf32>
    %85 = arith.maximumf %82, %84 : vector<256x256xf32>
    %86 = arith.truncf %85 : vector<256x256xf32> to vector<256x256xbf16>
    %c2_69 = arith.constant 2 : index
    %c0_70 = arith.constant 0 : index
    %c0_71 = arith.constant 0 : index
    %c0_72 = arith.constant 0 : index
    %87 = vector.load %arg4[%c2_69, %c0_70, %c0_71, %c0_72] : memref<3x3x256x256xbf16, #tpu.memory_space<vmem>>, vector<1x1x256x256xbf16>
    %88 = vector.shape_cast %87 : vector<1x1x256x256xbf16> to vector<256x256xbf16>
    %cst_73 = arith.constant dense<0.000000e+00> : vector<256x256xf32>
    %89 = tpu.matmul %86, %88, %cst_73 {dimension_numbers = #tpu.dot_dimension_numbers<[1], [0], [0], [1], [0, 0, 1, 1], [], []>} : vector<256x256xbf16>, vector<256x256xbf16>, vector<256x256xf32> -> vector<256x256xf32>
    %c2_74 = arith.constant 2 : index
    %c1_75 = arith.constant 1 : index
    %c0_76 = arith.constant 0 : index
    %c0_77 = arith.constant 0 : index
    %90 = vector.load %arg4[%c2_74, %c1_75, %c0_76, %c0_77] : memref<3x3x256x256xbf16, #tpu.memory_space<vmem>>, vector<1x1x256x256xbf16>
    %91 = vector.shape_cast %90 : vector<1x1x256x256xbf16> to vector<256x256xbf16>
    %cst_78 = arith.constant dense<0.000000e+00> : vector<256x256xf32>
    %92 = tpu.matmul %86, %91, %cst_78 {dimension_numbers = #tpu.dot_dimension_numbers<[1], [0], [0], [1], [0, 0, 1, 1], [], []>} : vector<256x256xbf16>, vector<256x256xbf16>, vector<256x256xf32> -> vector<256x256xf32>
    %c253_i32_79 = arith.constant 253 : i32
    %93 = tpu.dynamic_rotate %92 by %c253_i32_79 dim 0 : vector<256x256xf32>, i32 -> vector<256x256xf32>
    %94 = arith.addf %89, %93 : vector<256x256xf32>
    %c2_80 = arith.constant 2 : index
    %c2_81 = arith.constant 2 : index
    %c0_82 = arith.constant 0 : index
    %c0_83 = arith.constant 0 : index
    %95 = vector.load %arg4[%c2_80, %c2_81, %c0_82, %c0_83] : memref<3x3x256x256xbf16, #tpu.memory_space<vmem>>, vector<1x1x256x256xbf16>
    %96 = vector.shape_cast %95 : vector<1x1x256x256xbf16> to vector<256x256xbf16>
    %cst_84 = arith.constant dense<0.000000e+00> : vector<256x256xf32>
    %97 = tpu.matmul %86, %96, %cst_84 {dimension_numbers = #tpu.dot_dimension_numbers<[1], [0], [0], [1], [0, 0, 1, 1], [], []>} : vector<256x256xbf16>, vector<256x256xbf16>, vector<256x256xf32> -> vector<256x256xf32>
    %c250_i32_85 = arith.constant 250 : i32
    %98 = tpu.dynamic_rotate %97 by %c250_i32_85 dim 0 : vector<256x256xf32>, i32 -> vector<256x256xf32>
    %99 = arith.addf %94, %98 : vector<256x256xf32>
    %c2_86 = arith.constant 2 : index
    %c0_87 = arith.constant 0 : index
    %c0_88 = arith.constant 0 : index
    %100 = vector.load %arg5[%c2_86, %c0_87, %c0_88] : memref<3x1x256xf32, #tpu.memory_space<vmem>>, vector<1x1x256xf32>
    %101 = vector.shape_cast %100 : vector<1x1x256xf32> to vector<1x256xf32>
    %102 = vector.broadcast %101 : vector<1x256xf32> to vector<256x256xf32>
    %103 = arith.addf %99, %102 : vector<256x256xf32>
    %c253_i32_89 = arith.constant 253 : i32
    %104 = tpu.dynamic_rotate %82 by %c253_i32_89 dim 0 : vector<256x256xf32>, i32 -> vector<256x256xf32>
    %105 = arith.addf %103, %104 : vector<256x256xf32>
    %106 = vector.shape_cast %105 : vector<256x256xf32> to vector<8x32x256xf32>
    %107 = tpu.iota {dimensions = array<i32: 0>} : vector<32x256xi32>
    %c8_i32 = arith.constant 8 : i32
    %108 = vector.broadcast %c8_i32 : i32 to vector<32x256xi32>
    %109 = arith.cmpi slt, %107, %108 : vector<32x256xi32>
    %110 = arith.extui %109 : vector<32x256xi1> to vector<32x256xi32>
    %111 = arith.sitofp %110 : vector<32x256xi32> to vector<32x256xf32>
    %112 = vector.shape_cast %111 : vector<32x256xf32> to vector<1x32x256xf32>
    %113 = vector.broadcast %112 : vector<1x32x256xf32> to vector<8x32x256xf32>
    %114 = arith.mulf %106, %113 : vector<8x32x256xf32>
    %cst_90 = arith.constant dense<0.000000e+00> : vector<8x256xf32>
    %115 = vector.multi_reduction <add>, %114, %cst_90 [1] : vector<8x32x256xf32> to vector<8x256xf32>
    %cst_91 = arith.constant 1.250000e-01 : f32
    %116 = vector.broadcast %cst_91 : f32 to vector<8x256xf32>
    %117 = arith.mulf %115, %116 : vector<8x256xf32>
    %c0_92 = arith.constant 0 : index
    %c0_93 = arith.constant 0 : index
    %118 = vector.load %arg6[%c0_92, %c0_93] : memref<8x256xf32, #tpu.memory_space<vmem>>, vector<8x256xf32>
    tpu.vector_store %arg6[%c0_92, %c0_93], %117 {strides = array<i32>} : memref<8x256xf32, #tpu.memory_space<vmem>>, vector<8x256xf32>,
    return
  }
  func.func @transform_0(%arg0: i32) -> (i32, i32) {
    %c0_i32 = arith.constant 0 : i32
    %c0_i32_0 = arith.constant 0 : i32
    return %arg0, %c0_i32 : i32, i32
  }
  func.func @transform_1(%arg0: i32) -> (i32, i32, i32) {
    %c0_i32 = arith.constant 0 : i32
    %c0_i32_0 = arith.constant 0 : i32
    %c0_i32_1 = arith.constant 0 : i32
    %c0_i32_2 = arith.constant 0 : i32
    return %c0_i32, %c0_i32_0, %c0_i32_1 : i32, i32, i32
  }
  func.func @transform_2(%arg0: i32) -> (i32, i32) {
    %c0_i32 = arith.constant 0 : i32
    %c0_i32_0 = arith.constant 0 : i32
    %c0_i32_1 = arith.constant 0 : i32
    return %c0_i32, %c0_i32_0 : i32, i32
  }
  func.func @transform_3(%arg0: i32) -> (i32, i32, i32, i32) {
    %c0_i32 = arith.constant 0 : i32
    %c0_i32_0 = arith.constant 0 : i32
    %c0_i32_1 = arith.constant 0 : i32
    %c0_i32_2 = arith.constant 0 : i32
    %c0_i32_3 = arith.constant 0 : i32
    return %c0_i32, %c0_i32_0, %c0_i32_1, %c0_i32_2 : i32, i32, i32, i32
  }
  func.func @transform_4(%arg0: i32) -> (i32, i32, i32) {
    %c0_i32 = arith.constant 0 : i32
    %c0_i32_0 = arith.constant 0 : i32
    %c0_i32_1 = arith.constant 0 : i32
    %c0_i32_2 = arith.constant 0 : i32
    return %c0_i32, %c0_i32_0, %c0_i32_1 : i32, i32, i32
  }
  func.func @transform_5(%arg0: i32) -> (i32, i32) {
    %c0_i32 = arith.constant 0 : i32
    %c0_i32_0 = arith.constant 0 : i32
    return %arg0, %c0_i32 : i32, i32
  }
}

</mosaic_0001>

<llo_original>
// kernel: conv3dmm_forward.1
$region0: #{conv3dmm_forward.1}
  #allocation0 [shape = 'u32[]', space=smem, size = 0x4, offset = 0x4, fixed_abs, tag = 'smem constant byte address 0x4 - core index']
  #allocation1 [shape = 'u32[144,128]{1,0:T(1,128)}', space=vmem, size = 0x12000, scoped, tag = 'internal scratch']
  %s0 = inlined_call_operand.vmem [shape: bf16[256,128], index: 0, kind: input, shape index: {}]
  %s1 = inlined_call_operand.hbm [shape: bf16[7,128,256], index: 1, kind: input, shape index: {}]
  %s2 = inlined_call_operand.hbm [shape: f32[1,256], index: 2, kind: input, shape index: {}]
  %s3 = inlined_call_operand.hbm [shape: bf16[3,3,256,256], index: 3, kind: input, shape index: {}]
  %s4 = inlined_call_operand.hbm [shape: f32[3,1,256], index: 4, kind: input, shape index: {}]
  %s5 = inlined_call_operand.vmem [shape: f32[8,256], index: 5, kind: output, shape index: {}]
  %s6 = sld [smem:[#allocation0]]
  $region46: #{conv3dmm_forward.1} parent=0
    _
  %s8 = ssub.s32 1, %s6
  %s9 = scalar_select 0, %s8, %s6
  $region1: #{conv3dmm_forward.1} parent=0
    #allocation2 [shape = 'u8[458752]{0}', space=vmem, size = 0x70000, scoped, tag = 'input window, operand 1, single buffered']
    #allocation3 [shape = 's32[1]{0}', space=sflag, size = 0x4, scoped, tag = 'scoped memory for conv3dmm_forward.1']
    #allocation4 [shape = 'u8[1024]{0}', space=vmem, size = 0x400, scoped, tag = 'input window, operand 2, single buffered']
    #allocation5 [shape = 's32[1]{0}', space=sflag, size = 0x4, scoped, tag = 'scoped memory for conv3dmm_forward.1']
    #allocation6 [shape = 'u8[1179648]{0}', space=vmem, size = 0x120000, scoped, tag = 'input window, operand 3, single buffered']
    #allocation7 [shape = 'u8[3072]{0}', space=vmem, size = 0xc00, scoped, tag = 'input window, operand 4, single buffered']
    #allocation8 [shape = 's32[1]{0}', space=sflag, size = 0x4, scoped, tag = 'scoped memory for conv3dmm_forward.1']
    %10 = vsyncpa [#allocation3], 0
    %11 = vsyncpa [#allocation5], 0
    %12 = vsyncpa [#allocation8], 0
    // Predicated region
    $region2: #{conv3dmm_forward.1} parent=1 // pred_check
      _
    $region3: #{conv3dmm_forward.1} parent=1 // pred_check_branch
      %14 = sbr.rel (0) target = $region5
    $region4: #{conv3dmm_forward.1} parent=1 // pred_region
      _
    $region5: #{conv3dmm_forward.1} parent=1 // pred_fallthru
      _
    // Predicated region
    $region6: #{conv3dmm_forward.1} parent=1 // pred_check
      _
    $region7: #{conv3dmm_forward.1} parent=1 // pred_check_branch
      %16 = sbr.rel (0) target = $region9
    $region8: #{conv3dmm_forward.1} parent=1 // pred_region
      %s18 = ssub.s32 14336, 14336
      %19 = vsyncadd [#allocation3], %s18
      %s20 = sshll.u32 [#allocation2], 4
      %s21 = int_to_ptr.vmem [resolvable:$true] %s20
      %26 = dma.hbm_to_vmem [thread:$0]  %s1, 14336, %s21, [#allocation3], 128, 128, 8
    $region9: #{conv3dmm_forward.1} parent=1 // pred_fallthru
      _
    // Predicated region
    $region10: #{conv3dmm_forward.1} parent=1 // pred_check
      _
    $region11: #{conv3dmm_forward.1} parent=1 // pred_check_branch
      %28 = sbr.rel (0) target = $region13
    $region12: #{conv3dmm_forward.1} parent=1 // pred_region
      %s30 = ssub.s32 32, 32
      %31 = vsyncadd [#allocation5], %s30
      %s33 = sshll.u32 [#allocation4], 4
      %s34 = int_to_ptr.vmem [resolvable:$true] %s33
      %36 = dma.hbm_to_vmem [thread:$0]  %s2, 32, %s34, [#allocation5]
    $region13: #{conv3dmm_forward.1} parent=1 // pred_fallthru
      _
    // Predicated region
    $region14: #{conv3dmm_forward.1} parent=1 // pred_check
      _
    $region15: #{conv3dmm_forward.1} parent=1 // pred_check_branch
      %38 = sbr.rel (0) target = $region17
    $region16: #{conv3dmm_forward.1} parent=1 // pred_region
      %s40 = ssub.s32 36864, 36864
      %41 = vsyncadd [#allocation5], %s40
      %s42 = sshll.u32 [#allocation6], 4
      %s43 = int_to_ptr.vmem [resolvable:$true] %s42
      %48 = dma.hbm_to_vmem [thread:$0]  %s3, 36864, %s43, [#allocation5], 128, 128, 8
    $region17: #{conv3dmm_forward.1} parent=1 // pred_fallthru
      _
    // Predicated region
    $region18: #{conv3dmm_forward.1} parent=1 // pred_check
      _
    $region19: #{conv3dmm_forward.1} parent=1 // pred_check_branch
      %50 = sbr.rel (0) target = $region21
    $region20: #{conv3dmm_forward.1} parent=1 // pred_region
      %s52 = ssub.s32 96, 96
      %53 = vsyncadd [#allocation8], %s52
      %s54 = sshll.u32 [#allocation7], 4
      %s55 = int_to_ptr.vmem [resolvable:$true] %s54
      %60 = dma.hbm_to_vmem [thread:$0]  %s4, 96, %s55, [#allocation8], 32, 32, 2
    $region21: #{conv3dmm_forward.1} parent=1 // pred_fallthru
      _
    // Predicated region
    $region22: #{conv3dmm_forward.1} parent=1 // pred_check
      _
    $region23: #{conv3dmm_forward.1} parent=1 // pred_check_branch
      %62 = sbr.rel (0) target = $region25
    $region24: #{conv3dmm_forward.1} parent=1 // pred_region
      %63 = dma.done [#allocation3], 14336
    $region25: #{conv3dmm_forward.1} parent=1 // pred_fallthru
      _
    // Predicated region
    $region26: #{conv3dmm_forward.1} parent=1 // pred_check
      _
    $region27: #{conv3dmm_forward.1} parent=1 // pred_check_branch
      %65 = sbr.rel (0) target = $region29
    $region28: #{conv3dmm_forward.1} parent=1 // pred_region
      %66 = dma.done [#allocation5], 32
    $region29: #{conv3dmm_forward.1} parent=1 // pred_fallthru
      _
    // Predicated region
    $region30: #{conv3dmm_forward.1} parent=1 // pred_check
      _
    $region31: #{conv3dmm_forward.1} parent=1 // pred_check_branch
      %68 = sbr.rel (0) target = $region33
    $region32: #{conv3dmm_forward.1} parent=1 // pred_region
      %69 = dma.done [#allocation5], 36864
    $region33: #{conv3dmm_forward.1} parent=1 // pred_fallthru
      _
    // Predicated region
    $region34: #{conv3dmm_forward.1} parent=1 // pred_check
      _
    $region35: #{conv3dmm_forward.1} parent=1 // pred_check_branch
      %71 = sbr.rel (0) target = $region37
    $region36: #{conv3dmm_forward.1} parent=1 // pred_region
      %72 = dma.done [#allocation8], 96
    $region37: #{conv3dmm_forward.1} parent=1 // pred_fallthru
      _
    %v74 = vld [vmem:[%s0] sm:$0xf]
    %v75 = vld [vmem:[%s0 + $0x4] sm:$0xf]
    %v76 = vld [vmem:[%s0 + $0x8] sm:$0xf]
    %v77 = vld [vmem:[%s0 + $0xc] sm:$0xf]
    %v78 = vld [vmem:[%s0 + $0x10] sm:$0xf]
    %v79 = vld [vmem:[%s0 + $0x14] sm:$0xf]
    %v80 = vld [vmem:[%s0 + $0x18] sm:$0xf]
    %v81 = vld [vmem:[%s0 + $0x1c] sm:$0xf]
    %v82 = vld [vmem:[%s0 + $0x20] sm:$0xf]
    %v83 = vld [vmem:[%s0 + $0x24] sm:$0xf]
    %v84 = vld [vmem:[%s0 + $0x28] sm:$0xf]
    %v85 = vld [vmem:[%s0 + $0x2c] sm:$0xf]
    %v86 = vld [vmem:[%s0 + $0x30] sm:$0xf]
    %v87 = vld [vmem:[%s0 + $0x34] sm:$0xf]
    %v88 = vld [vmem:[%s0 + $0x38] sm:$0xf]
    %v89 = vld [vmem:[%s0 + $0x3c] sm:$0xf]
    %v90 = vld [vmem:[%s0 + $0x40] sm:$0xf]
    %v91 = vld [vmem:[%s0 + $0x44] sm:$0xf]
    %v92 = vld [vmem:[%s0 + $0x48] sm:$0xf]
    %v93 = vld [vmem:[%s0 + $0x4c] sm:$0xf]
    %v94 = vld [vmem:[%s0 + $0x50] sm:$0xf]
    %v95 = vld [vmem:[%s0 + $0x54] sm:$0xf]
    %v96 = vld [vmem:[%s0 + $0x58] sm:$0xf]
    %v97 = vld [vmem:[%s0 + $0x5c] sm:$0xf]
    %v98 = vld [vmem:[%s0 + $0x60] sm:$0xf]
    %v99 = vld [vmem:[%s0 + $0x64] sm:$0xf]
    %v100 = vld [vmem:[%s0 + $0x68] sm:$0xf]
    %v101 = vld [vmem:[%s0 + $0x6c] sm:$0xf]
    %v102 = vld [vmem:[%s0 + $0x70] sm:$0xf]
    %v103 = vld [vmem:[%s0 + $0x74] sm:$0xf]
    %v104 = vld [vmem:[%s0 + $0x78] sm:$0xf]
    %v105 = vld [vmem:[%s0 + $0x7c] sm:$0xf]
    %v106 = vld [vmem:[#allocation2] sm:$0xff]
    %v107 = vld [vmem:[#allocation2 + $0x8] sm:$0xff]
    %v108 = vld [vmem:[#allocation2 + $0x10] sm:$0xff]
    %v109 = vld [vmem:[#allocation2 + $0x18] sm:$0xff]
    %v110 = vld [vmem:[#allocation2 + $0x20] sm:$0xff]
    %v111 = vld [vmem:[#allocation2 + $0x28] sm:$0xff]
    %v112 = vld [vmem:[#allocation2 + $0x30] sm:$0xff]
    %v113 = vld [vmem:[#allocation2 + $0x38] sm:$0xff]
    %v114 = vld [vmem:[#allocation2 + $0x40] sm:$0xff]
    %v115 = vld [vmem:[#allocation2 + $0x48] sm:$0xff]
    %v116 = vld [vmem:[#allocation2 + $0x50] sm:$0xff]
    %v117 = vld [vmem:[#allocation2 + $0x58] sm:$0xff]
    %v118 = vld [vmem:[#allocation2 + $0x60] sm:$0xff]
    %v119 = vld [vmem:[#allocation2 + $0x68] sm:$0xff]
    %v120 = vld [vmem:[#allocation2 + $0x70] sm:$0xff]
    %v121 = vld [vmem:[#allocation2 + $0x78] sm:$0xff]
    %s122 = scalar_lea.vmem [#allocation2], 128
    %v123 = vld [vmem:[%s122] sm:$0xff]
    %v124 = vld [vmem:[%s122 + $0x8] sm:$0xff]
    %v125 = vld [vmem:[%s122 + $0x10] sm:$0xff]
    %v126 = vld [vmem:[%s122 + $0x18] sm:$0xff]
    %v127 = vld [vmem:[%s122 + $0x20] sm:$0xff]
    %v128 = vld [vmem:[%s122 + $0x28] sm:$0xff]
    %v129 = vld [vmem:[%s122 + $0x30] sm:$0xff]
    %v130 = vld [vmem:[%s122 + $0x38] sm:$0xff]
    %v131 = vld [vmem:[%s122 + $0x40] sm:$0xff]
    %v132 = vld [vmem:[%s122 + $0x48] sm:$0xff]
    %v133 = vld [vmem:[%s122 + $0x50] sm:$0xff]
    %v134 = vld [vmem:[%s122 + $0x58] sm:$0xff]
    %v135 = vld [vmem:[%s122 + $0x60] sm:$0xff]
    %v136 = vld [vmem:[%s122 + $0x68] sm:$0xff]
    %v137 = vld [vmem:[%s122 + $0x70] sm:$0xff]
    %v138 = vld [vmem:[%s122 + $0x78] sm:$0xff]
    %v171 = vunpack.c.l.b16 %v74
    %v172 = vunpack.c.l.b16 %v75
    %v173 = vunpack.c.l.b16 %v76
    %v174 = vunpack.c.l.b16 %v77
    %v175 = vunpack.c.l.b16 %v78
    %v176 = vunpack.c.l.b16 %v79
    %v177 = vunpack.c.l.b16 %v80
    %v178 = vunpack.c.l.b16 %v81
    %v179 = vunpack.c.l.b16 %v82
    %v180 = vunpack.c.l.b16 %v83
    %v181 = vunpack.c.l.b16 %v84
    %v182 = vunpack.c.l.b16 %v85
    %v183 = vunpack.c.l.b16 %v86
    %v184 = vunpack.c.l.b16 %v87
    %v185 = vunpack.c.l.b16 %v88
    %v186 = vunpack.c.l.b16 %v89
    %v187 = vunpack.c.l.b16 %v90
    %v188 = vunpack.c.l.b16 %v91
    %v189 = vunpack.c.l.b16 %v92
    %v190 = vunpack.c.l.b16 %v93
    %v191 = vunpack.c.l.b16 %v94
    %v192 = vunpack.c.l.b16 %v95
    %v193 = vunpack.c.l.b16 %v96
    %v194 = vunpack.c.l.b16 %v97
    %v195 = vunpack.c.l.b16 %v98
    %v196 = vunpack.c.l.b16 %v99
    %v197 = vunpack.c.l.b16 %v100
    %v198 = vunpack.c.l.b16 %v101
    %v199 = vunpack.c.l.b16 %v102
    %v200 = vunpack.c.l.b16 %v103
    %v201 = vunpack.c.l.b16 %v104
    %v202 = vunpack.c.l.b16 %v105
    %v203 = vpack.c.b16 %v172, %v171
    %v204 = vpack.c.b16 %v174, %v173
    %v205 = vpack.c.b16 %v176, %v175
    %v206 = vpack.c.b16 %v178, %v177
    %v207 = vpack.c.b16 %v180, %v179
    %v208 = vpack.c.b16 %v182, %v181
    %v209 = vpack.c.b16 %v184, %v183
    %v210 = vpack.c.b16 %v186, %v185
    %v211 = vpack.c.b16 %v188, %v187
    %v212 = vpack.c.b16 %v190, %v189
    %v213 = vpack.c.b16 %v192, %v191
    %v214 = vpack.c.b16 %v194, %v193
    %v215 = vpack.c.b16 %v196, %v195
    %v216 = vpack.c.b16 %v198, %v197
    %v217 = vpack.c.b16 %v200, %v199
    %v218 = vpack.c.b16 %v202, %v201
    %v251 = vunpack.c.l.b16 %v123
    %v252 = vunpack.c.h.b16 %v123
    %v253 = vunpack.c.l.b16 %v124
    %v254 = vunpack.c.h.b16 %v124
    %v255 = vunpack.c.l.b16 %v125
    %v256 = vunpack.c.h.b16 %v125
    %v257 = vunpack.c.l.b16 %v126
    %v258 = vunpack.c.h.b16 %v126
    %v259 = vunpack.c.l.b16 %v127
    %v260 = vunpack.c.h.b16 %v127
    %v261 = vunpack.c.l.b16 %v128
    %v262 = vunpack.c.h.b16 %v128
    %v263 = vunpack.c.l.b16 %v129
    %v264 = vunpack.c.h.b16 %v129
    %v265 = vunpack.c.l.b16 %v130
    %v266 = vunpack.c.h.b16 %v130
    %v267 = vunpack.c.l.b16 %v131
    %v268 = vunpack.c.h.b16 %v131
    %v269 = vunpack.c.l.b16 %v132
    %v270 = vunpack.c.h.b16 %v132
    %v271 = vunpack.c.l.b16 %v133
    %v272 = vunpack.c.h.b16 %v133
    %v273 = vunpack.c.l.b16 %v134
    %v274 = vunpack.c.h.b16 %v134
    %v275 = vunpack.c.l.b16 %v135
    %v276 = vunpack.c.h.b16 %v135
    %v277 = vunpack.c.l.b16 %v136
    %v278 = vunpack.c.h.b16 %v136
    %v279 = vunpack.c.l.b16 %v137
    %v280 = vunpack.c.h.b16 %v137
    %v281 = vunpack.c.l.b16 %v138
    %v282 = vunpack.c.h.b16 %v138
    %v283 = vpack.c.b16 %v253, %v251
    %v284 = vpack.c.b16 %v254, %v252
    %v285 = vpack.c.b16 %v257, %v255
    %v286 = vpack.c.b16 %v258, %v256
    %v287 = vpack.c.b16 %v261, %v259
    %v288 = vpack.c.b16 %v262, %v260
    %v289 = vpack.c.b16 %v265, %v263
    %v290 = vpack.c.b16 %v266, %v264
    %v291 = vpack.c.b16 %v269, %v267
    %v292 = vpack.c.b16 %v270, %v268
    %v293 = vpack.c.b16 %v273, %v271
    %v294 = vpack.c.b16 %v274, %v272
    %v295 = vpack.c.b16 %v277, %v275
    %v296 = vpack.c.b16 %v278, %v276
    %v297 = vpack.c.b16 %v281, %v279
    %v298 = vpack.c.b16 %v282, %v280
    %315 = vmatprep.subr.bf16.mxu0 %v298
    %316 = vmatpush1.bf16.msra.mxu0 %v297
    %317 = vmatprep.subr.bf16.mxu0 %v296
    %318 = vmatpush1.bf16.msra.mxu0 %v295
    %319 = vmatprep.subr.bf16.mxu0 %v294
    %320 = vmatpush1.bf16.msra.mxu0 %v293
    %321 = vmatprep.subr.bf16.mxu0 %v292
    %322 = vmatpush1.bf16.msra.mxu0 %v291
    %323 = vmatprep.subr.bf16.mxu0 %v290
    %324 = vmatpush1.bf16.msra.mxu0 %v289
    %325 = vmatprep.subr.bf16.mxu0 %v288
    %326 = vmatpush1.bf16.msra.mxu0 %v287
    %327 = vmatprep.subr.bf16.mxu0 %v286
    %328 = vmatpush1.bf16.msra.mxu0 %v285
    %329 = vmatprep.subr.bf16.mxu0 %v284
    %330 = vmatpush1.bf16.msra.mxu0 %v283
    %331 = vmatprep.subr.bf16.mxu0 0
    %332 = vmatpush2.bf16.msra.mxu0 0
    %333 = vmatprep.subr.bf16.mxu0 0
    %334 = vmatpush2.bf16.msra.mxu0 0
    %335 = vmatprep.subr.bf16.mxu0 0
    %336 = vmatpush2.bf16.msra.mxu0 0
    %337 = vmatprep.subr.bf16.mxu0 0
    %338 = vmatpush2.bf16.msra.mxu0 0
    %339 = vmatprep.subr.bf16.mxu0 0
    %340 = vmatpush2.bf16.msra.mxu0 0
    %341 = vmatprep.subr.bf16.mxu0 0
    %342 = vmatpush2.bf16.msra.mxu0 0
    %343 = vmatprep.subr.bf16.mxu0 0
    %344 = vmatpush2.bf16.msra.mxu0 0
    %345 = vmatprep.subr.bf16.mxu0 0
    %346 = vmatpush2.bf16.msra.mxu0 0
    %347 = vmatprep.mubr.bf16.mxu0 0
    %348 = vmatmul.mubr.bf16.gmra.mxu0 %v203
    %v349 = vpop.f32.mrf.mxu0
    %v350 = vadd.f32 0.0, %v349
    %v351 = vpop.f32.mrf.mxu0
    %v352 = vadd.f32 0.0, %v351
    %v353 = vpop.f32.mrf.mxu0
    %v354 = vadd.f32 0.0, %v353
    %v355 = vpop.f32.mrf.mxu0
    %v356 = vadd.f32 0.0, %v355
    %357 = vmatprep.mubr.bf16.mxu0 0
    %358 = vmatmul.mubr.bf16.gmra.mxu0 %v204
    %v359 = vpop.f32.mrf.mxu0
    %v360 = vadd.f32 0.0, %v359
    %v361 = vpop.f32.mrf.mxu0
    %v362 = vadd.f32 0.0, %v361
    %v363 = vpop.f32.mrf.mxu0
    %v364 = vadd.f32 0.0, %v363
    %v365 = vpop.f32.mrf.mxu0
    %v366 = vadd.f32 0.0, %v365
    %367 = vmatprep.mubr.bf16.mxu0 0
    %368 = vmatmul.mubr.bf16.gmra.mxu0 %v205
    %v369 = vpop.f32.mrf.mxu0
    %v370 = vadd.f32 0.0, %v369
    %v371 = vpop.f32.mrf.mxu0
    %v372 = vadd.f32 0.0, %v371
    %v373 = vpop.f32.mrf.mxu0
    %v374 = vadd.f32 0.0, %v373
    %v375 = vpop.f32.mrf.mxu0
    %v376 = vadd.f32 0.0, %v375
    %377 = vmatprep.mubr.bf16.mxu0 0
    %378 = vmatmul.mubr.bf16.gmra.mxu0 %v206
    %v379 = vpop.f32.mrf.mxu0
    %v380 = vadd.f32 0.0, %v379
    %v381 = vpop.f32.mrf.mxu0
    %v382 = vadd.f32 0.0, %v381
    %v383 = vpop.f32.mrf.mxu0
    %v384 = vadd.f32 0.0, %v383
    %v385 = vpop.f32.mrf.mxu0
    %v386 = vadd.f32 0.0, %v385
    %387 = vmatprep.mubr.bf16.mxu0 0
    %388 = vmatmul.mubr.bf16.gmra.mxu0 %v207
    %v389 = vpop.f32.mrf.mxu0
    %v390 = vadd.f32 0.0, %v389
    %v391 = vpop.f32.mrf.mxu0
    %v392 = vadd.f32 0.0, %v391
    %v393 = vpop.f32.mrf.mxu0
    %v394 = vadd.f32 0.0, %v393
    %v395 = vpop.f32.mrf.mxu0
    %v396 = vadd.f32 0.0, %v395
    %397 = vmatprep.mubr.bf16.mxu0 0
    %398 = vmatmul.mubr.bf16.gmra.mxu0 %v208
    %v399 = vpop.f32.mrf.mxu0
    %v400 = vadd.f32 0.0, %v399
    %v401 = vpop.f32.mrf.mxu0
    %v402 = vadd.f32 0.0, %v401
    %v403 = vpop.f32.mrf.mxu0
    %v404 = vadd.f32 0.0, %v403
    %v405 = vpop.f32.mrf.mxu0
    %v406 = vadd.f32 0.0, %v405
    %407 = vmatprep.mubr.bf16.mxu0 0
    %408 = vmatmul.mubr.bf16.gmra.mxu0 %v209
    %v409 = vpop.f32.mrf.mxu0
    %v410 = vadd.f32 0.0, %v409
    %v411 = vpop.f32.mrf.mxu0
    %v412 = vadd.f32 0.0, %v411
    %v413 = vpop.f32.mrf.mxu0
    %v414 = vadd.f32 0.0, %v413
    %v415 = vpop.f32.mrf.mxu0
    %v416 = vadd.f32 0.0, %v415
    %417 = vmatprep.mubr.bf16.mxu0 0
    %418 = vmatmul.mubr.bf16.gmra.mxu0 %v210
    %v419 = vpop.f32.mrf.mxu0
    %v420 = vadd.f32 0.0, %v419
    %v421 = vpop.f32.mrf.mxu0
    %v422 = vadd.f32 0.0, %v421
    %v423 = vpop.f32.mrf.mxu0
    %v424 = vadd.f32 0.0, %v423
    %v425 = vpop.f32.mrf.mxu0
    %v426 = vadd.f32 0.0, %v425
    %427 = vmatprep.mubr.bf16.mxu0 0
    %428 = vmatmul.mubr.bf16.gmra.mxu0 %v211
    %v429 = vpop.f32.mrf.mxu0
    %v430 = vadd.f32 0.0, %v429
    %v431 = vpop.f32.mrf.mxu0
    %v432 = vadd.f32 0.0, %v431
    %v433 = vpop.f32.mrf.mxu0
    %v434 = vadd.f32 0.0, %v433
    %v435 = vpop.f32.mrf.mxu0
    %v436 = vadd.f32 0.0, %v435
    %437 = vmatprep.mubr.bf16.mxu0 0
    %438 = vmatmul.mubr.bf16.gmra.mxu0 %v212
    %v439 = vpop.f32.mrf.mxu0
    %v440 = vadd.f32 0.0, %v439
    %v441 = vpop.f32.mrf.mxu0
    %v442 = vadd.f32 0.0, %v441
    %v443 = vpop.f32.mrf.mxu0
    %v444 = vadd.f32 0.0, %v443
    %v445 = vpop.f32.mrf.mxu0
    %v446 = vadd.f32 0.0, %v445
    %447 = vmatprep.mubr.bf16.mxu0 0
    %448 = vmatmul.mubr.bf16.gmra.mxu0 %v213
    %v449 = vpop.f32.mrf.mxu0
    %v450 = vadd.f32 0.0, %v449
    %v451 = vpop.f32.mrf.mxu0
    %v452 = vadd.f32 0.0, %v451
    %v453 = vpop.f32.mrf.mxu0
    %v454 = vadd.f32 0.0, %v453
    %v455 = vpop.f32.mrf.mxu0
    %v456 = vadd.f32 0.0, %v455
    %457 = vmatprep.mubr.bf16.mxu0 0
    %458 = vmatmul.mubr.bf16.gmra.mxu0 %v214
    %v459 = vpop.f32.mrf.mxu0
    %v460 = vadd.f32 0.0, %v459
    %v461 = vpop.f32.mrf.mxu0
    %v462 = vadd.f32 0.0, %v461
    %v463 = vpop.f32.mrf.mxu0
    %v464 = vadd.f32 0.0, %v463
    %v465 = vpop.f32.mrf.mxu0
    %v466 = vadd.f32 0.0, %v465
    %467 = vmatprep.mubr.bf16.mxu0 0
    %468 = vmatmul.mubr.bf16.gmra.mxu0 %v215
    %v469 = vpop.f32.mrf.mxu0
    %v470 = vadd.f32 0.0, %v469
    %v471 = vpop.f32.mrf.mxu0
    %v472 = vadd.f32 0.0, %v471
    %v473 = vpop.f32.mrf.mxu0
    %v474 = vadd.f32 0.0, %v473
    %v475 = vpop.f32.mrf.mxu0
    %v476 = vadd.f32 0.0, %v475
    %477 = vmatprep.mubr.bf16.mxu0 0
    %478 = vmatmul.mubr.bf16.gmra.mxu0 %v216
    %v479 = vpop.f32.mrf.mxu0
    %v480 = vadd.f32 0.0, %v479
    %v481 = vpop.f32.mrf.mxu0
    %v482 = vadd.f32 0.0, %v481
    %v483 = vpop.f32.mrf.mxu0
    %v484 = vadd.f32 0.0, %v483
    %v485 = vpop.f32.mrf.mxu0
    %v486 = vadd.f32 0.0, %v485
    %487 = vmatprep.mubr.bf16.mxu0 0
    %488 = vmatmul.mubr.bf16.gmra.mxu0 %v217
    %v489 = vpop.f32.mrf.mxu0
    %v490 = vadd.f32 0.0, %v489
    %v491 = vpop.f32.mrf.mxu0
    %v492 = vadd.f32 0.0, %v491
    %v493 = vpop.f32.mrf.mxu0
    %v494 = vadd.f32 0.0, %v493
    %v495 = vpop.f32.mrf.mxu0
    %v496 = vadd.f32 0.0, %v495
    %497 = vmatprep.mubr.bf16.mxu0 0
    %498 = vmatmul.mubr.bf16.gmra.mxu0 %v218
    %v499 = vpop.f32.mrf.mxu0
    %v500 = vadd.f32 0.0, %v499
    %v501 = vpop.f32.mrf.mxu0
    %v502 = vadd.f32 0.0, %v501
    %v503 = vpop.f32.mrf.mxu0
    %v504 = vadd.f32 0.0, %v503
    %v505 = vpop.f32.mrf.mxu0
    %v506 = vadd.f32 0.0, %v505
    %507 = vdwg.mxu0
    %v508 = vrot.slane %v350, 1
    %v509 = vrot.slane %v352, 1
    %v510 = vrot.slane %v354, 1
    %v511 = vrot.slane %v356, 1
    %v512 = vrot.slane %v360, 1
    %v513 = vrot.slane %v362, 1
    %v514 = vrot.slane %v364, 1
    %v515 = vrot.slane %v366, 1
    %v516 = vrot.slane %v370, 1
    %v517 = vrot.slane %v372, 1
    %v518 = vrot.slane %v374, 1
    %v519 = vrot.slane %v376, 1
    %v520 = vrot.slane %v380, 1
    %v521 = vrot.slane %v382, 1
    %v522 = vrot.slane %v384, 1
    %v523 = vrot.slane %v386, 1
    %v524 = vrot.slane %v390, 1
    %v525 = vrot.slane %v392, 1
    %v526 = vrot.slane %v394, 1
    %v527 = vrot.slane %v396, 1
    %v528 = vrot.slane %v400, 1
    %v529 = vrot.slane %v402, 1
    %v530 = vrot.slane %v404, 1
    %v531 = vrot.slane %v406, 1
    %v532 = vrot.slane %v410, 1
    %v533 = vrot.slane %v412, 1
    %v534 = vrot.slane %v414, 1
    %v535 = vrot.slane %v416, 1
    %v536 = vrot.slane %v420, 1
    %v537 = vrot.slane %v422, 1
    %v538 = vrot.slane %v424, 1
    %v539 = vrot.slane %v426, 1
    %v540 = vrot.slane %v430, 1
    %v541 = vrot.slane %v432, 1
    %v542 = vrot.slane %v434, 1
    %v543 = vrot.slane %v436, 1
    %v544 = vrot.slane %v440, 1
    %v545 = vrot.slane %v442, 1
    %v546 = vrot.slane %v444, 1
    %v547 = vrot.slane %v446, 1
    %v548 = vrot.slane %v450, 1
    %v549 = vrot.slane %v452, 1
    %v550 = vrot.slane %v454, 1
    %v551 = vrot.slane %v456, 1
    %v552 = vrot.slane %v460, 1
    %v553 = vrot.slane %v462, 1
    %v554 = vrot.slane %v464, 1
    %v555 = vrot.slane %v466, 1
    %v556 = vrot.slane %v470, 1
    %v557 = vrot.slane %v472, 1
    %v558 = vrot.slane %v474, 1
    %v559 = vrot.slane %v476, 1
    %v560 = vrot.slane %v480, 1
    %v561 = vrot.slane %v482, 1
    %v562 = vrot.slane %v484, 1
    %v563 = vrot.slane %v486, 1
    %v564 = vrot.slane %v490, 1
    %v565 = vrot.slane %v492, 1
    %v566 = vrot.slane %v494, 1
    %v567 = vrot.slane %v496, 1
    %v568 = vrot.slane %v500, 1
    %v569 = vrot.slane %v502, 1
    %v570 = vrot.slane %v504, 1
    %v571 = vrot.slane %v506, 1
    %v572 = vlaneseq
    %v573 = vshrl.u32 %v572, 7
    %vm574 = vcmp.lt.s32.totalorder %v573, 7
    %v575 = vsel %vm574, %v568, %v570
    %v576 = vsel %vm574, %v569, %v571
    %v577 = vsel %vm574, %v566, %v568
    %v578 = vsel %vm574, %v567, %v569
    %v579 = vsel %vm574, %v564, %v566
    %v580 = vsel %vm574, %v565, %v567
    %v581 = vsel %vm574, %v562, %v564
    %v582 = vsel %vm574, %v563, %v565
    %v583 = vsel %vm574, %v560, %v562
    %v584 = vsel %vm574, %v561, %v563
    %v585 = vsel %vm574, %v558, %v560
    %v586 = vsel %vm574, %v559, %v561
    %v587 = vsel %vm574, %v556, %v558
    %v588 = vsel %vm574, %v557, %v559
    %v589 = vsel %vm574, %v554, %v556
    %v590 = vsel %vm574, %v555, %v557
    %v591 = vsel %vm574, %v552, %v554
    %v592 = vsel %vm574, %v553, %v555
    %v593 = vsel %vm574, %v550, %v552
    %v594 = vsel %vm574, %v551, %v553
    %v595 = vsel %vm574, %v548, %v550
    %v596 = vsel %vm574, %v549, %v551
    %v597 = vsel %vm574, %v546, %v548
    %v598 = vsel %vm574, %v547, %v549
    %v599 = vsel %vm574, %v544, %v546
    %v600 = vsel %vm574, %v545, %v547
    %v601 = vsel %vm574, %v542, %v544
    %v602 = vsel %vm574, %v543, %v545
    %v603 = vsel %vm574, %v540, %v542
    %v604 = vsel %vm574, %v541, %v543
    %v605 = vsel %vm574, %v538, %v540
    %v606 = vsel %vm574, %v539, %v541
    %v607 = vsel %vm574, %v536, %v538
    %v608 = vsel %vm574, %v537, %v539
    %v609 = vsel %vm574, %v534, %v536
    %v610 = vsel %vm574, %v535, %v537
    %v611 = vsel %vm574, %v532, %v534
    %v612 = vsel %vm574, %v533, %v535
    %v613 = vsel %vm574, %v530, %v532
    %v614 = vsel %vm574, %v531, %v533
    %v615 = vsel %vm574, %v528, %v530
    %v616 = vsel %vm574, %v529, %v531
    %v617 = vsel %vm574, %v526, %v528
    %v618 = vsel %vm574, %v527, %v529
    %v619 = vsel %vm574, %v524, %v526
    %v620 = vsel %vm574, %v525, %v527
    %v621 = vsel %vm574, %v522, %v524
    %v622 = vsel %vm574, %v523, %v525
    %v623 = vsel %vm574, %v520, %v522
    %v624 = vsel %vm574, %v521, %v523
    %v625 = vsel %vm574, %v518, %v520
    %v626 = vsel %vm574, %v519, %v521
    %v627 = vsel %vm574, %v516, %v518
    %v628 = vsel %vm574, %v517, %v519
    %v629 = vsel %vm574, %v514, %v516
    %v630 = vsel %vm574, %v515, %v517
    %v631 = vsel %vm574, %v512, %v514
    %v632 = vsel %vm574, %v513, %v515
    %v633 = vsel %vm574, %v510, %v512
    %v634 = vsel %vm574, %v511, %v513
    %v635 = vsel %vm574, %v508, %v510
    %v636 = vsel %vm574, %v509, %v511
    %v637 = vsel %vm574, %v570, %v508
    %v638 = vsel %vm574, %v571, %v509
    %v655 = vunpack.c.l.b16 %v106
    %v656 = vunpack.c.h.b16 %v106
    %v657 = vunpack.c.l.b16 %v107
    %v658 = vunpack.c.h.b16 %v107
    %v659 = vunpack.c.l.b16 %v108
    %v660 = vunpack.c.h.b16 %v108
    %v661 = vunpack.c.l.b16 %v109
    %v662 = vunpack.c.h.b16 %v109
    %v663 = vunpack.c.l.b16 %v110
    %v664 = vunpack.c.h.b16 %v110
    %v665 = vunpack.c.l.b16 %v111
    %v666 = vunpack.c.h.b16 %v111
    %v667 = vunpack.c.l.b16 %v112
    %v668 = vunpack.c.h.b16 %v112
    %v669 = vunpack.c.l.b16 %v113
    %v670 = vunpack.c.h.b16 %v113
    %v671 = vunpack.c.l.b16 %v114
    %v672 = vunpack.c.h.b16 %v114
    %v673 = vunpack.c.l.b16 %v115
    %v674 = vunpack.c.h.b16 %v115
    %v675 = vunpack.c.l.b16 %v116
    %v676 = vunpack.c.h.b16 %v116
    %v677 = vunpack.c.l.b16 %v117
    %v678 = vunpack.c.h.b16 %v117
    %v679 = vunpack.c.l.b16 %v118
    %v680 = vunpack.c.h.b16 %v118
    %v681 = vunpack.c.l.b16 %v119
    %v682 = vunpack.c.h.b16 %v119
    %v683 = vunpack.c.l.b16 %v120
    %v684 = vunpack.c.h.b16 %v120
    %v685 = vunpack.c.l.b16 %v121
    %v686 = vunpack.c.h.b16 %v121
    %v687 = vpack.c.b16 %v657, %v655
    %v688 = vpack.c.b16 %v658, %v656
    %v689 = vpack.c.b16 %v661, %v659
    %v690 = vpack.c.b16 %v662, %v660
    %v691 = vpack.c.b16 %v665, %v663
    %v692 = vpack.c.b16 %v666, %v664
    %v693 = vpack.c.b16 %v669, %v667
    %v694 = vpack.c.b16 %v670, %v668
    %v695 = vpack.c.b16 %v673, %v671
    %v696 = vpack.c.b16 %v674, %v672
    %v697 = vpack.c.b16 %v677, %v675
    %v698 = vpack.c.b16 %v678, %v676
    %v699 = vpack.c.b16 %v681, %v679
    %v700 = vpack.c.b16 %v682, %v680
    %v701 = vpack.c.b16 %v685, %v683
    %v702 = vpack.c.b16 %v686, %v684
    %719 = vmatprep.subr.bf16.mxu0 %v702
    %720 = vmatpush1.bf16.msra.mxu0 %v701
    %721 = vmatprep.subr.bf16.mxu0 %v700
    %722 = vmatpush1.bf16.msra.mxu0 %v699
    %723 = vmatprep.subr.bf16.mxu0 %v698
    %724 = vmatpush1.bf16.msra.mxu0 %v697
    %725 = vmatprep.subr.bf16.mxu0 %v696
    %726 = vmatpush1.bf16.msra.mxu0 %v695
    %727 = vmatprep.subr.bf16.mxu0 %v694
    %728 = vmatpush1.bf16.msra.mxu0 %v693
    %729 = vmatprep.subr.bf16.mxu0 %v692
    %730 = vmatpush1.bf16.msra.mxu0 %v691
    %731 = vmatprep.subr.bf16.mxu0 %v690
    %732 = vmatpush1.bf16.msra.mxu0 %v689
    %733 = vmatprep.subr.bf16.mxu0 %v688
    %734 = vmatpush1.bf16.msra.mxu0 %v687
    %735 = vmatprep.subr.bf16.mxu0 0
    %736 = vmatpush2.bf16.msra.mxu0 0
    %737 = vmatprep.subr.bf16.mxu0 0
    %738 = vmatpush2.bf16.msra.mxu0 0
    %739 = vmatprep.subr.bf16.mxu0 0
    %740 = vmatpush2.bf16.msra.mxu0 0
    %741 = vmatprep.subr.bf16.mxu0 0
    %742 = vmatpush2.bf16.msra.mxu0 0
    %743 = vmatprep.subr.bf16.mxu0 0
    %744 = vmatpush2.bf16.msra.mxu0 0
    %745 = vmatprep.subr.bf16.mxu0 0
    %746 = vmatpush2.bf16.msra.mxu0 0
    %747 = vmatprep.subr.bf16.mxu0 0
    %748 = vmatpush2.bf16.msra.mxu0 0
    %749 = vmatprep.subr.bf16.mxu0 0
    %750 = vmatpush2.bf16.msra.mxu0 0
    %751 = vmatprep.mubr.bf16.mxu0 0
    %752 = vmatmul.mubr.bf16.gmra.mxu0 %v203
    %v753 = vpop.f32.mrf.mxu0
    %v754 = vadd.f32 %v635, %v753
    %v755 = vpop.f32.mrf.mxu0
    %v756 = vadd.f32 %v636, %v755
    %v757 = vpop.f32.mrf.mxu0
    %v758 = vadd.f32 %v633, %v757
    %v759 = vpop.f32.mrf.mxu0
    %v760 = vadd.f32 %v634, %v759
    %761 = vmatprep.mubr.bf16.mxu0 0
    %762 = vmatmul.mubr.bf16.gmra.mxu0 %v204
    %v763 = vpop.f32.mrf.mxu0
    %v764 = vadd.f32 %v631, %v763
    %v765 = vpop.f32.mrf.mxu0
    %v766 = vadd.f32 %v632, %v765
    %v767 = vpop.f32.mrf.mxu0
    %v768 = vadd.f32 %v629, %v767
    %v769 = vpop.f32.mrf.mxu0
    %v770 = vadd.f32 %v630, %v769
    %771 = vmatprep.mubr.bf16.mxu0 0
    %772 = vmatmul.mubr.bf16.gmra.mxu0 %v205
    %v773 = vpop.f32.mrf.mxu0
    %v774 = vadd.f32 %v627, %v773
    %v775 = vpop.f32.mrf.mxu0
    %v776 = vadd.f32 %v628, %v775
    %v777 = vpop.f32.mrf.mxu0
    %v778 = vadd.f32 %v625, %v777
    %v779 = vpop.f32.mrf.mxu0
    %v780 = vadd.f32 %v626, %v779
    %781 = vmatprep.mubr.bf16.mxu0 0
    %782 = vmatmul.mubr.bf16.gmra.mxu0 %v206
    %v783 = vpop.f32.mrf.mxu0
    %v784 = vadd.f32 %v623, %v783
    %v785 = vpop.f32.mrf.mxu0
    %v786 = vadd.f32 %v624, %v785
    %v787 = vpop.f32.mrf.mxu0
    %v788 = vadd.f32 %v621, %v787
    %v789 = vpop.f32.mrf.mxu0
    %v790 = vadd.f32 %v622, %v789
    %791 = vmatprep.mubr.bf16.mxu0 0
    %792 = vmatmul.mubr.bf16.gmra.mxu0 %v207
    %v793 = vpop.f32.mrf.mxu0
    %v794 = vadd.f32 %v619, %v793
    %v795 = vpop.f32.mrf.mxu0
    %v796 = vadd.f32 %v620, %v795
    %v797 = vpop.f32.mrf.mxu0
    %v798 = vadd.f32 %v617, %v797
    %v799 = vpop.f32.mrf.mxu0
    %v800 = vadd.f32 %v618, %v799
    %801 = vmatprep.mubr.bf16.mxu0 0
    %802 = vmatmul.mubr.bf16.gmra.mxu0 %v208
    %v803 = vpop.f32.mrf.mxu0
    %v804 = vadd.f32 %v615, %v803
    %v805 = vpop.f32.mrf.mxu0
    %v806 = vadd.f32 %v616, %v805
    %v807 = vpop.f32.mrf.mxu0
    %v808 = vadd.f32 %v613, %v807
    %v809 = vpop.f32.mrf.mxu0
    %v810 = vadd.f32 %v614, %v809
    %811 = vmatprep.mubr.bf16.mxu0 0
    %812 = vmatmul.mubr.bf16.gmra.mxu0 %v209
    %v813 = vpop.f32.mrf.mxu0
    %v814 = vadd.f32 %v611, %v813
    %v815 = vpop.f32.mrf.mxu0
    %v816 = vadd.f32 %v612, %v815
    %v817 = vpop.f32.mrf.mxu0
    %v818 = vadd.f32 %v609, %v817
    %v819 = vpop.f32.mrf.mxu0
    %v820 = vadd.f32 %v610, %v819
    %821 = vmatprep.mubr.bf16.mxu0 0
    %822 = vmatmul.mubr.bf16.gmra.mxu0 %v210
    %v823 = vpop.f32.mrf.mxu0
    %v824 = vadd.f32 %v607, %v823
    %v825 = vpop.f32.mrf.mxu0
    %v826 = vadd.f32 %v608, %v825
    %v827 = vpop.f32.mrf.mxu0
    %v828 = vadd.f32 %v605, %v827
    %v829 = vpop.f32.mrf.mxu0
    %v830 = vadd.f32 %v606, %v829
    %831 = vmatprep.mubr.bf16.mxu0 0
    %832 = vmatmul.mubr.bf16.gmra.mxu0 %v211
    %v833 = vpop.f32.mrf.mxu0
    %v834 = vadd.f32 %v603, %v833
    %v835 = vpop.f32.mrf.mxu0
    %v836 = vadd.f32 %v604, %v835
    %v837 = vpop.f32.mrf.mxu0
    %v838 = vadd.f32 %v601, %v837
    %v839 = vpop.f32.mrf.mxu0
    %v840 = vadd.f32 %v602, %v839
    %841 = vmatprep.mubr.bf16.mxu0 0
    %842 = vmatmul.mubr.bf16.gmra.mxu0 %v212
    %v843 = vpop.f32.mrf.mxu0
    %v844 = vadd.f32 %v599, %v843
    %v845 = vpop.f32.mrf.mxu0
    %v846 = vadd.f32 %v600, %v845
    %v847 = vpop.f32.mrf.mxu0
    %v848 = vadd.f32 %v597, %v847
    %v849 = vpop.f32.mrf.mxu0
    %v850 = vadd.f32 %v598, %v849
    %851 = vmatprep.mubr.bf16.mxu0 0
    %852 = vmatmul.mubr.bf16.gmra.mxu0 %v213
    %v853 = vpop.f32.mrf.mxu0
    %v854 = vadd.f32 %v595, %v853
    %v855 = vpop.f32.mrf.mxu0
    %v856 = vadd.f32 %v596, %v855
    %v857 = vpop.f32.mrf.mxu0
    %v858 = vadd.f32 %v593, %v857
    %v859 = vpop.f32.mrf.mxu0
    %v860 = vadd.f32 %v594, %v859
    %861 = vmatprep.mubr.bf16.mxu0 0
    %862 = vmatmul.mubr.bf16.gmra.mxu0 %v214
    %v863 = vpop.f32.mrf.mxu0
    %v864 = vadd.f32 %v591, %v863
    %v865 = vpop.f32.mrf.mxu0
    %v866 = vadd.f32 %v592, %v865
    %v867 = vpop.f32.mrf.mxu0
    %v868 = vadd.f32 %v589, %v867
    %v869 = vpop.f32.mrf.mxu0
    %v870 = vadd.f32 %v590, %v869
    %871 = vmatprep.mubr.bf16.mxu0 0
    %872 = vmatmul.mubr.bf16.gmra.mxu0 %v215
    %v873 = vpop.f32.mrf.mxu0
    %v874 = vadd.f32 %v587, %v873
    %v875 = vpop.f32.mrf.mxu0
    %v876 = vadd.f32 %v588, %v875
    %v877 = vpop.f32.mrf.mxu0
    %v878 = vadd.f32 %v585, %v877
    %v879 = vpop.f32.mrf.mxu0
    %v880 = vadd.f32 %v586, %v879
    %881 = vmatprep.mubr.bf16.mxu0 0
    %882 = vmatmul.mubr.bf16.gmra.mxu0 %v216
    %v883 = vpop.f32.mrf.mxu0
    %v884 = vadd.f32 %v583, %v883
    %v885 = vpop.f32.mrf.mxu0
    %v886 = vadd.f32 %v584, %v885
    %v887 = vpop.f32.mrf.mxu0
    %v888 = vadd.f32 %v581, %v887
    %v889 = vpop.f32.mrf.mxu0
    %v890 = vadd.f32 %v582, %v889
    %891 = vmatprep.mubr.bf16.mxu0 0
    %892 = vmatmul.mubr.bf16.gmra.mxu0 %v217
    %v893 = vpop.f32.mrf.mxu0
    %v894 = vadd.f32 %v579, %v893
    %v895 = vpop.f32.mrf.mxu0
    %v896 = vadd.f32 %v580, %v895
    %v897 = vpop.f32.mrf.mxu0
    %v898 = vadd.f32 %v577, %v897
    %v899 = vpop.f32.mrf.mxu0
    %v900 = vadd.f32 %v578, %v899
    %901 = vmatprep.mubr.bf16.mxu0 0
    %902 = vmatmul.mubr.bf16.gmra.mxu0 %v218
    %v903 = vpop.f32.mrf.mxu0
    %v904 = vadd.f32 %v575, %v903
    %v905 = vpop.f32.mrf.mxu0
    %v906 = vadd.f32 %v576, %v905
    %v907 = vpop.f32.mrf.mxu0
    %v908 = vadd.f32 %v637, %v907
    %v909 = vpop.f32.mrf.mxu0
    %v910 = vadd.f32 %v638, %v909
    %911 = vdwg.mxu0
    %s912 = scalar_lea.vmem [#allocation2], 256
    %v913 = vld [vmem:[%s912] sm:$0xff]
    %v914 = vld [vmem:[%s912 + $0x8] sm:$0xff]
    %v915 = vld [vmem:[%s912 + $0x10] sm:$0xff]
    %v916 = vld [vmem:[%s912 + $0x18] sm:$0xff]
    %v917 = vld [vmem:[%s912 + $0x20] sm:$0xff]
    %v918 = vld [vmem:[%s912 + $0x28] sm:$0xff]
    %v919 = vld [vmem:[%s912 + $0x30] sm:$0xff]
    %v920 = vld [vmem:[%s912 + $0x38] sm:$0xff]
    %v921 = vld [vmem:[%s912 + $0x40] sm:$0xff]
    %v922 = vld [vmem:[%s912 + $0x48] sm:$0xff]
    %v923 = vld [vmem:[%s912 + $0x50] sm:$0xff]
    %v924 = vld [vmem:[%s912 + $0x58] sm:$0xff]
    %v925 = vld [vmem:[%s912 + $0x60] sm:$0xff]
    %v926 = vld [vmem:[%s912 + $0x68] sm:$0xff]
    %v927 = vld [vmem:[%s912 + $0x70] sm:$0xff]
    %v928 = vld [vmem:[%s912 + $0x78] sm:$0xff]
    %v945 = vunpack.c.l.b16 %v913
    %v946 = vunpack.c.h.b16 %v913
    %v947 = vunpack.c.l.b16 %v914
    %v948 = vunpack.c.h.b16 %v914
    %v949 = vunpack.c.l.b16 %v915
    %v950 = vunpack.c.h.b16 %v915
    %v951 = vunpack.c.l.b16 %v916
    %v952 = vunpack.c.h.b16 %v916
    %v953 = vunpack.c.l.b16 %v917
    %v954 = vunpack.c.h.b16 %v917
    %v955 = vunpack.c.l.b16 %v918
    %v956 = vunpack.c.h.b16 %v918
    %v957 = vunpack.c.l.b16 %v919
    %v958 = vunpack.c.h.b16 %v919
    %v959 = vunpack.c.l.b16 %v920
    %v960 = vunpack.c.h.b16 %v920
    %v961 = vunpack.c.l.b16 %v921
    %v962 = vunpack.c.h.b16 %v921
    %v963 = vunpack.c.l.b16 %v922
    %v964 = vunpack.c.h.b16 %v922
    %v965 = vunpack.c.l.b16 %v923
    %v966 = vunpack.c.h.b16 %v923
    %v967 = vunpack.c.l.b16 %v924
    %v968 = vunpack.c.h.b16 %v924
    %v969 = vunpack.c.l.b16 %v925
    %v970 = vunpack.c.h.b16 %v925
    %v971 = vunpack.c.l.b16 %v926
    %v972 = vunpack.c.h.b16 %v926
    %v973 = vunpack.c.l.b16 %v927
    %v974 = vunpack.c.h.b16 %v927
    %v975 = vunpack.c.l.b16 %v928
    %v976 = vunpack.c.h.b16 %v928
    %v977 = vpack.c.b16 %v947, %v945
    %v978 = vpack.c.b16 %v948, %v946
    %v979 = vpack.c.b16 %v951, %v949
    %v980 = vpack.c.b16 %v952, %v950
    %v981 = vpack.c.b16 %v955, %v953
    %v982 = vpack.c.b16 %v956, %v954
    %v983 = vpack.c.b16 %v959, %v957
    %v984 = vpack.c.b16 %v960, %v958
    %v985 = vpack.c.b16 %v963, %v961
    %v986 = vpack.c.b16 %v964, %v962
    %v987 = vpack.c.b16 %v967, %v965
    %v988 = vpack.c.b16 %v968, %v966
    %v989 = vpack.c.b16 %v971, %v969
    %v990 = vpack.c.b16 %v972, %v970
    %v991 = vpack.c.b16 %v975, %v973
    %v992 = vpack.c.b16 %v976, %v974
    %1009 = vmatprep.subr.bf16.mxu0 %v992
    %1010 = vmatpush1.bf16.msra.mxu0 %v991
    %1011 = vmatprep.subr.bf16.mxu0 %v990
    %1012 = vmatpush1.bf16.msra.mxu0 %v989
    %1013 = vmatprep.subr.bf16.mxu0 %v988
    %1014 = vmatpush1.bf16.msra.mxu0 %v987
    %1015 = vmatprep.subr.bf16.mxu0 %v986
    %1016 = vmatpush1.bf16.msra.mxu0 %v985
    %1017 = vmatprep.subr.bf16.mxu0 %v984
    %1018 = vmatpush1.bf16.msra.mxu0 %v983
    %1019 = vmatprep.subr.bf16.mxu0 %v982
    %1020 = vmatpush1.bf16.msra.mxu0 %v981
    %1021 = vmatprep.subr.bf16.mxu0 %v980
    %1022 = vmatpush1.bf16.msra.mxu0 %v979
    %1023 = vmatprep.subr.bf16.mxu0 %v978
    %1024 = vmatpush1.bf16.msra.mxu0 %v977
    %1025 = vmatprep.subr.bf16.mxu0 0
    %1026 = vmatpush2.bf16.msra.mxu0 0
    %1027 = vmatprep.subr.bf16.mxu0 0
    %1028 = vmatpush2.bf16.msra.mxu0 0
    %1029 = vmatprep.subr.bf16.mxu0 0
    %1030 = vmatpush2.bf16.msra.mxu0 0
    %1031 = vmatprep.subr.bf16.mxu0 0
    %1032 = vmatpush2.bf16.msra.mxu0 0
    %1033 = vmatprep.subr.bf16.mxu0 0
    %1034 = vmatpush2.bf16.msra.mxu0 0
    %1035 = vmatprep.subr.bf16.mxu0 0
    %1036 = vmatpush2.bf16.msra.mxu0 0
    %1037 = vmatprep.subr.bf16.mxu0 0
    %1038 = vmatpush2.bf16.msra.mxu0 0
    %1039 = vmatprep.subr.bf16.mxu0 0
    %1040 = vmatpush2.bf16.msra.mxu0 0
    %1041 = vmatprep.mubr.bf16.mxu0 0
    %1042 = vmatmul.mubr.bf16.gmra.mxu0 %v203
    %v1043 = vpop.f32.mrf.mxu0
    %v1044 = vadd.f32 0.0, %v1043
    %v1045 = vpop.f32.mrf.mxu0
    %v1046 = vadd.f32 0.0, %v1045
    %v1047 = vpop.f32.mrf.mxu0
    %v1048 = vadd.f32 0.0, %v1047
    %v1049 = vpop.f32.mrf.mxu0
    %v1050 = vadd.f32 0.0, %v1049
    %1051 = vmatprep.mubr.bf16.mxu0 0
    %1052 = vmatmul.mubr.bf16.gmra.mxu0 %v204
    %v1053 = vpop.f32.mrf.mxu0
    %v1054 = vadd.f32 0.0, %v1053
    %v1055 = vpop.f32.mrf.mxu0
    %v1056 = vadd.f32 0.0, %v1055
    %v1057 = vpop.f32.mrf.mxu0
    %v1058 = vadd.f32 0.0, %v1057
    %v1059 = vpop.f32.mrf.mxu0
    %v1060 = vadd.f32 0.0, %v1059
    %1061 = vmatprep.mubr.bf16.mxu0 0
    %1062 = vmatmul.mubr.bf16.gmra.mxu0 %v205
    %v1063 = vpop.f32.mrf.mxu0
    %v1064 = vadd.f32 0.0, %v1063
    %v1065 = vpop.f32.mrf.mxu0
    %v1066 = vadd.f32 0.0, %v1065
    %v1067 = vpop.f32.mrf.mxu0
    %v1068 = vadd.f32 0.0, %v1067
    %v1069 = vpop.f32.mrf.mxu0
    %v1070 = vadd.f32 0.0, %v1069
    %1071 = vmatprep.mubr.bf16.mxu0 0
    %1072 = vmatmul.mubr.bf16.gmra.mxu0 %v206
    %v1073 = vpop.f32.mrf.mxu0
    %v1074 = vadd.f32 0.0, %v1073
    %v1075 = vpop.f32.mrf.mxu0
    %v1076 = vadd.f32 0.0, %v1075
    %v1077 = vpop.f32.mrf.mxu0
    %v1078 = vadd.f32 0.0, %v1077
    %v1079 = vpop.f32.mrf.mxu0
    %v1080 = vadd.f32 0.0, %v1079
    %1081 = vmatprep.mubr.bf16.mxu0 0
    %1082 = vmatmul.mubr.bf16.gmra.mxu0 %v207
    %v1083 = vpop.f32.mrf.mxu0
    %v1084 = vadd.f32 0.0, %v1083
    %v1085 = vpop.f32.mrf.mxu0
    %v1086 = vadd.f32 0.0, %v1085
    %v1087 = vpop.f32.mrf.mxu0
    %v1088 = vadd.f32 0.0, %v1087
    %v1089 = vpop.f32.mrf.mxu0
    %v1090 = vadd.f32 0.0, %v1089
    %1091 = vmatprep.mubr.bf16.mxu0 0
    %1092 = vmatmul.mubr.bf16.gmra.mxu0 %v208
    %v1093 = vpop.f32.mrf.mxu0
    %v1094 = vadd.f32 0.0, %v1093
    %v1095 = vpop.f32.mrf.mxu0
    %v1096 = vadd.f32 0.0, %v1095
    %v1097 = vpop.f32.mrf.mxu0
    %v1098 = vadd.f32 0.0, %v1097
    %v1099 = vpop.f32.mrf.mxu0
    %v1100 = vadd.f32 0.0, %v1099
    %1101 = vmatprep.mubr.bf16.mxu0 0
    %1102 = vmatmul.mubr.bf16.gmra.mxu0 %v209
    %v1103 = vpop.f32.mrf.mxu0
    %v1104 = vadd.f32 0.0, %v1103
    %v1105 = vpop.f32.mrf.mxu0
    %v1106 = vadd.f32 0.0, %v1105
    %v1107 = vpop.f32.mrf.mxu0
    %v1108 = vadd.f32 0.0, %v1107
    %v1109 = vpop.f32.mrf.mxu0
    %v1110 = vadd.f32 0.0, %v1109
    %1111 = vmatprep.mubr.bf16.mxu0 0
    %1112 = vmatmul.mubr.bf16.gmra.mxu0 %v210
    %v1113 = vpop.f32.mrf.mxu0
    %v1114 = vadd.f32 0.0, %v1113
    %v1115 = vpop.f32.mrf.mxu0
    %v1116 = vadd.f32 0.0, %v1115
    %v1117 = vpop.f32.mrf.mxu0
    %v1118 = vadd.f32 0.0, %v1117
    %v1119 = vpop.f32.mrf.mxu0
    %v1120 = vadd.f32 0.0, %v1119
    %1121 = vmatprep.mubr.bf16.mxu0 0
    %1122 = vmatmul.mubr.bf16.gmra.mxu0 %v211
    %v1123 = vpop.f32.mrf.mxu0
    %v1124 = vadd.f32 0.0, %v1123
    %v1125 = vpop.f32.mrf.mxu0
    %v1126 = vadd.f32 0.0, %v1125
    %v1127 = vpop.f32.mrf.mxu0
    %v1128 = vadd.f32 0.0, %v1127
    %v1129 = vpop.f32.mrf.mxu0
    %v1130 = vadd.f32 0.0, %v1129
    %1131 = vmatprep.mubr.bf16.mxu0 0
    %1132 = vmatmul.mubr.bf16.gmra.mxu0 %v212
    %v1133 = vpop.f32.mrf.mxu0
    %v1134 = vadd.f32 0.0, %v1133
    %v1135 = vpop.f32.mrf.mxu0
    %v1136 = vadd.f32 0.0, %v1135
    %v1137 = vpop.f32.mrf.mxu0
    %v1138 = vadd.f32 0.0, %v1137
    %v1139 = vpop.f32.mrf.mxu0
    %v1140 = vadd.f32 0.0, %v1139
    %1141 = vmatprep.mubr.bf16.mxu0 0
    %1142 = vmatmul.mubr.bf16.gmra.mxu0 %v213
    %v1143 = vpop.f32.mrf.mxu0
    %v1144 = vadd.f32 0.0, %v1143
    %v1145 = vpop.f32.mrf.mxu0
    %v1146 = vadd.f32 0.0, %v1145
    %v1147 = vpop.f32.mrf.mxu0
    %v1148 = vadd.f32 0.0, %v1147
    %v1149 = vpop.f32.mrf.mxu0
    %v1150 = vadd.f32 0.0, %v1149
    %1151 = vmatprep.mubr.bf16.mxu0 0
    %1152 = vmatmul.mubr.bf16.gmra.mxu0 %v214
    %v1153 = vpop.f32.mrf.mxu0
    %v1154 = vadd.f32 0.0, %v1153
    %v1155 = vpop.f32.mrf.mxu0
    %v1156 = vadd.f32 0.0, %v1155
    %v1157 = vpop.f32.mrf.mxu0
    %v1158 = vadd.f32 0.0, %v1157
    %v1159 = vpop.f32.mrf.mxu0
    %v1160 = vadd.f32 0.0, %v1159
    %1161 = vmatprep.mubr.bf16.mxu0 0
    %1162 = vmatmul.mubr.bf16.gmra.mxu0 %v215
    %v1163 = vpop.f32.mrf.mxu0
    %v1164 = vadd.f32 0.0, %v1163
    %v1165 = vpop.f32.mrf.mxu0
    %v1166 = vadd.f32 0.0, %v1165
    %v1167 = vpop.f32.mrf.mxu0
    %v1168 = vadd.f32 0.0, %v1167
    %v1169 = vpop.f32.mrf.mxu0
    %v1170 = vadd.f32 0.0, %v1169
    %1171 = vmatprep.mubr.bf16.mxu0 0
    %1172 = vmatmul.mubr.bf16.gmra.mxu0 %v216
    %v1173 = vpop.f32.mrf.mxu0
    %v1174 = vadd.f32 0.0, %v1173
    %v1175 = vpop.f32.mrf.mxu0
    %v1176 = vadd.f32 0.0, %v1175
    %v1177 = vpop.f32.mrf.mxu0
    %v1178 = vadd.f32 0.0, %v1177
    %v1179 = vpop.f32.mrf.mxu0
    %v1180 = vadd.f32 0.0, %v1179
    %1181 = vmatprep.mubr.bf16.mxu0 0
    %1182 = vmatmul.mubr.bf16.gmra.mxu0 %v217
    %v1183 = vpop.f32.mrf.mxu0
    %v1184 = vadd.f32 0.0, %v1183
    %v1185 = vpop.f32.mrf.mxu0
    %v1186 = vadd.f32 0.0, %v1185
    %v1187 = vpop.f32.mrf.mxu0
    %v1188 = vadd.f32 0.0, %v1187
    %v1189 = vpop.f32.mrf.mxu0
    %v1190 = vadd.f32 0.0, %v1189
    %1191 = vmatprep.mubr.bf16.mxu0 0
    %1192 = vmatmul.mubr.bf16.gmra.mxu0 %v218
    %v1193 = vpop.f32.mrf.mxu0
    %v1194 = vadd.f32 0.0, %v1193
    %v1195 = vpop.f32.mrf.mxu0
    %v1196 = vadd.f32 0.0, %v1195
    %v1197 = vpop.f32.mrf.mxu0
    %v1198 = vadd.f32 0.0, %v1197
    %v1199 = vpop.f32.mrf.mxu0
    %v1200 = vadd.f32 0.0, %v1199
    %1201 = vdwg.mxu0
    %v1202 = vrot.slane %v1044, 2
    %v1203 = vrot.slane %v1046, 2
    %v1204 = vrot.slane %v1048, 2
    %v1205 = vrot.slane %v1050, 2
    %v1206 = vrot.slane %v1054, 2
    %v1207 = vrot.slane %v1056, 2
    %v1208 = vrot.slane %v1058, 2
    %v1209 = vrot.slane %v1060, 2
    %v1210 = vrot.slane %v1064, 2
    %v1211 = vrot.slane %v1066, 2
    %v1212 = vrot.slane %v1068, 2
    %v1213 = vrot.slane %v1070, 2
    %v1214 = vrot.slane %v1074, 2
    %v1215 = vrot.slane %v1076, 2
    %v1216 = vrot.slane %v1078, 2
    %v1217 = vrot.slane %v1080, 2
    %v1218 = vrot.slane %v1084, 2
    %v1219 = vrot.slane %v1086, 2
    %v1220 = vrot.slane %v1088, 2
    %v1221 = vrot.slane %v1090, 2
    %v1222 = vrot.slane %v1094, 2
    %v1223 = vrot.slane %v1096, 2
    %v1224 = vrot.slane %v1098, 2
    %v1225 = vrot.slane %v1100, 2
    %v1226 = vrot.slane %v1104, 2
    %v1227 = vrot.slane %v1106, 2
    %v1228 = vrot.slane %v1108, 2
    %v1229 = vrot.slane %v1110, 2
    %v1230 = vrot.slane %v1114, 2
    %v1231 = vrot.slane %v1116, 2
    %v1232 = vrot.slane %v1118, 2
    %v1233 = vrot.slane %v1120, 2
    %v1234 = vrot.slane %v1124, 2
    %v1235 = vrot.slane %v1126, 2
    %v1236 = vrot.slane %v1128, 2
    %v1237 = vrot.slane %v1130, 2
    %v1238 = vrot.slane %v1134, 2
    %v1239 = vrot.slane %v1136, 2
    %v1240 = vrot.slane %v1138, 2
    %v1241 = vrot.slane %v1140, 2
    %v1242 = vrot.slane %v1144, 2
    %v1243 = vrot.slane %v1146, 2
    %v1244 = vrot.slane %v1148, 2
    %v1245 = vrot.slane %v1150, 2
    %v1246 = vrot.slane %v1154, 2
    %v1247 = vrot.slane %v1156, 2
    %v1248 = vrot.slane %v1158, 2
    %v1249 = vrot.slane %v1160, 2
    %v1250 = vrot.slane %v1164, 2
    %v1251 = vrot.slane %v1166, 2
    %v1252 = vrot.slane %v1168, 2
    %v1253 = vrot.slane %v1170, 2
    %v1254 = vrot.slane %v1174, 2
    %v1255 = vrot.slane %v1176, 2
    %v1256 = vrot.slane %v1178, 2
    %v1257 = vrot.slane %v1180, 2
    %v1258 = vrot.slane %v1184, 2
    %v1259 = vrot.slane %v1186, 2
    %v1260 = vrot.slane %v1188, 2
    %v1261 = vrot.slane %v1190, 2
    %v1262 = vrot.slane %v1194, 2
    %v1263 = vrot.slane %v1196, 2
    %v1264 = vrot.slane %v1198, 2
    %v1265 = vrot.slane %v1200, 2
    %vm1266 = vcmp.lt.s32.totalorder %v573, 6
    %v1267 = vsel %vm1266, %v1262, %v1264
    %v1268 = vsel %vm1266, %v1263, %v1265
    %v1269 = vsel %vm1266, %v1260, %v1262
    %v1270 = vsel %vm1266, %v1261, %v1263
    %v1271 = vsel %vm1266, %v1258, %v1260
    %v1272 = vsel %vm1266, %v1259, %v1261
    %v1273 = vsel %vm1266, %v1256, %v1258
    %v1274 = vsel %vm1266, %v1257, %v1259
    %v1275 = vsel %vm1266, %v1254, %v1256
    %v1276 = vsel %vm1266, %v1255, %v1257
    %v1277 = vsel %vm1266, %v1252, %v1254
    %v1278 = vsel %vm1266, %v1253, %v1255
    %v1279 = vsel %vm1266, %v1250, %v1252
    %v1280 = vsel %vm1266, %v1251, %v1253
    %v1281 = vsel %vm1266, %v1248, %v1250
    %v1282 = vsel %vm1266, %v1249, %v1251
    %v1283 = vsel %vm1266, %v1246, %v1248
    %v1284 = vsel %vm1266, %v1247, %v1249
    %v1285 = vsel %vm1266, %v1244, %v1246
    %v1286 = vsel %vm1266, %v1245, %v1247
    %v1287 = vsel %vm1266, %v1242, %v1244
    %v1288 = vsel %vm1266, %v1243, %v1245
    %v1289 = vsel %vm1266, %v1240, %v1242
    %v1290 = vsel %vm1266, %v1241, %v1243
    %v1291 = vsel %vm1266, %v1238, %v1240
    %v1292 = vsel %vm1266, %v1239, %v1241
    %v1293 = vsel %vm1266, %v1236, %v1238
    %v1294 = vsel %vm1266, %v1237, %v1239
    %v1295 = vsel %vm1266, %v1234, %v1236
    %v1296 = vsel %vm1266, %v1235, %v1237
    %v1297 = vsel %vm1266, %v1232, %v1234
    %v1298 = vsel %vm1266, %v1233, %v1235
    %v1299 = vsel %vm1266, %v1230, %v1232
    %v1300 = vsel %vm1266, %v1231, %v1233
    %v1301 = vsel %vm1266, %v1228, %v1230
    %v1302 = vsel %vm1266, %v1229, %v1231
    %v1303 = vsel %vm1266, %v1226, %v1228
    %v1304 = vsel %vm1266, %v1227, %v1229
    %v1305 = vsel %vm1266, %v1224, %v1226
    %v1306 = vsel %vm1266, %v1225, %v1227
    %v1307 = vsel %vm1266, %v1222, %v1224
    %v1308 = vsel %vm1266, %v1223, %v1225
    %v1309 = vsel %vm1266, %v1220, %v1222
    %v1310 = vsel %vm1266, %v1221, %v1223
    %v1311 = vsel %vm1266, %v1218, %v1220
    %v1312 = vsel %vm1266, %v1219, %v1221
    %v1313 = vsel %vm1266, %v1216, %v1218
    %v1314 = vsel %vm1266, %v1217, %v1219
    %v1315 = vsel %vm1266, %v1214, %v1216
    %v1316 = vsel %vm1266, %v1215, %v1217
    %v1317 = vsel %vm1266, %v1212, %v1214
    %v1318 = vsel %vm1266, %v1213, %v1215
    %v1319 = vsel %vm1266, %v1210, %v1212
    %v1320 = vsel %vm1266, %v1211, %v1213
    %v1321 = vsel %vm1266, %v1208, %v1210
    %v1322 = vsel %vm1266, %v1209, %v1211
    %v1323 = vsel %vm1266, %v1206, %v1208
    %v1324 = vsel %vm1266, %v1207, %v1209
    %v1325 = vsel %vm1266, %v1204, %v1206
    %v1326 = vsel %vm1266, %v1205, %v1207
    %v1327 = vsel %vm1266, %v1202, %v1204
    %v1328 = vsel %vm1266, %v1203, %v1205
    %v1329 = vsel %vm1266, %v1264, %v1202
    %v1330 = vsel %vm1266, %v1265, %v1203
    %v1331 = vadd.f32 %v754, %v1327
    %v1332 = vadd.f32 %v756, %v1328
    %v1333 = vadd.f32 %v758, %v1325
    %v1334 = vadd.f32 %v760, %v1326
    %v1335 = vadd.f32 %v764, %v1323
    %v1336 = vadd.f32 %v766, %v1324
    %v1337 = vadd.f32 %v768, %v1321
    %v1338 = vadd.f32 %v770, %v1322
    %v1339 = vadd.f32 %v774, %v1319
    %v1340 = vadd.f32 %v776, %v1320
    %v1341 = vadd.f32 %v778, %v1317
    %v1342 = vadd.f32 %v780, %v1318
    %v1343 = vadd.f32 %v784, %v1315
    %v1344 = vadd.f32 %v786, %v1316
    %v1345 = vadd.f32 %v788, %v1313
    %v1346 = vadd.f32 %v790, %v1314
    %v1347 = vadd.f32 %v794, %v1311
    %v1348 = vadd.f32 %v796, %v1312
    %v1349 = vadd.f32 %v798, %v1309
    %v1350 = vadd.f32 %v800, %v1310
    %v1351 = vadd.f32 %v804, %v1307
    %v1352 = vadd.f32 %v806, %v1308
    %v1353 = vadd.f32 %v808, %v1305
    %v1354 = vadd.f32 %v810, %v1306
    %v1355 = vadd.f32 %v814, %v1303
    %v1356 = vadd.f32 %v816, %v1304
    %v1357 = vadd.f32 %v818, %v1301
    %v1358 = vadd.f32 %v820, %v1302
    %v1359 = vadd.f32 %v824, %v1299
    %v1360 = vadd.f32 %v826, %v1300
    %v1361 = vadd.f32 %v828, %v1297
    %v1362 = vadd.f32 %v830, %v1298
    %v1363 = vadd.f32 %v834, %v1295
    %v1364 = vadd.f32 %v836, %v1296
    %v1365 = vadd.f32 %v838, %v1293
    %v1366 = vadd.f32 %v840, %v1294
    %v1367 = vadd.f32 %v844, %v1291
    %v1368 = vadd.f32 %v846, %v1292
    %v1369 = vadd.f32 %v848, %v1289
    %v1370 = vadd.f32 %v850, %v1290
    %v1371 = vadd.f32 %v854, %v1287
    %v1372 = vadd.f32 %v856, %v1288
    %v1373 = vadd.f32 %v858, %v1285
    %v1374 = vadd.f32 %v860, %v1286
    %v1375 = vadd.f32 %v864, %v1283
    %v1376 = vadd.f32 %v866, %v1284
    %v1377 = vadd.f32 %v868, %v1281
    %v1378 = vadd.f32 %v870, %v1282
    %v1379 = vadd.f32 %v874, %v1279
    %v1380 = vadd.f32 %v876, %v1280
    %v1381 = vadd.f32 %v878, %v1277
    %v1382 = vadd.f32 %v880, %v1278
    %v1383 = vadd.f32 %v884, %v1275
    %v1384 = vadd.f32 %v886, %v1276
    %v1385 = vadd.f32 %v888, %v1273
    %v1386 = vadd.f32 %v890, %v1274
    %v1387 = vadd.f32 %v894, %v1271
    %v1388 = vadd.f32 %v896, %v1272
    %v1389 = vadd.f32 %v898, %v1269
    %v1390 = vadd.f32 %v900, %v1270
    %v1391 = vadd.f32 %v904, %v1267
    %v1392 = vadd.f32 %v906, %v1268
    %v1393 = vadd.f32 %v908, %v1329
    %v1394 = vadd.f32 %v910, %v1330
    %s1395 = scalar_lea.vmem [#allocation2], 384
    %v1396 = vld [vmem:[%s1395] sm:$0xff]
    %v1397 = vld [vmem:[%s1395 + $0x8] sm:$0xff]
    %v1398 = vld [vmem:[%s1395 + $0x10] sm:$0xff]
    %v1399 = vld [vmem:[%s1395 + $0x18] sm:$0xff]
    %v1400 = vld [vmem:[%s1395 + $0x20] sm:$0xff]
    %v1401 = vld [vmem:[%s1395 + $0x28] sm:$0xff]
    %v1402 = vld [vmem:[%s1395 + $0x30] sm:$0xff]
    %v1403 = vld [vmem:[%s1395 + $0x38] sm:$0xff]
    %v1404 = vld [vmem:[%s1395 + $0x40] sm:$0xff]
    %v1405 = vld [vmem:[%s1395 + $0x48] sm:$0xff]
    %v1406 = vld [vmem:[%s1395 + $0x50] sm:$0xff]
    %v1407 = vld [vmem:[%s1395 + $0x58] sm:$0xff]
    %v1408 = vld [vmem:[%s1395 + $0x60] sm:$0xff]
    %v1409 = vld [vmem:[%s1395 + $0x68] sm:$0xff]
    %v1410 = vld [vmem:[%s1395 + $0x70] sm:$0xff]
    %v1411 = vld [vmem:[%s1395 + $0x78] sm:$0xff]
    %v1428 = vunpack.c.l.b16 %v1396
    %v1429 = vunpack.c.h.b16 %v1396
    %v1430 = vunpack.c.l.b16 %v1397
    %v1431 = vunpack.c.h.b16 %v1397
    %v1432 = vunpack.c.l.b16 %v1398
    %v1433 = vunpack.c.h.b16 %v1398
    %v1434 = vunpack.c.l.b16 %v1399
    %v1435 = vunpack.c.h.b16 %v1399
    %v1436 = vunpack.c.l.b16 %v1400
    %v1437 = vunpack.c.h.b16 %v1400
    %v1438 = vunpack.c.l.b16 %v1401
    %v1439 = vunpack.c.h.b16 %v1401
    %v1440 = vunpack.c.l.b16 %v1402
    %v1441 = vunpack.c.h.b16 %v1402
    %v1442 = vunpack.c.l.b16 %v1403
    %v1443 = vunpack.c.h.b16 %v1403
    %v1444 = vunpack.c.l.b16 %v1404
    %v1445 = vunpack.c.h.b16 %v1404
    %v1446 = vunpack.c.l.b16 %v1405
    %v1447 = vunpack.c.h.b16 %v1405
    %v1448 = vunpack.c.l.b16 %v1406
    %v1449 = vunpack.c.h.b16 %v1406
    %v1450 = vunpack.c.l.b16 %v1407
    %v1451 = vunpack.c.h.b16 %v1407
    %v1452 = vunpack.c.l.b16 %v1408
    %v1453 = vunpack.c.h.b16 %v1408
    %v1454 = vunpack.c.l.b16 %v1409
    %v1455 = vunpack.c.h.b16 %v1409
    %v1456 = vunpack.c.l.b16 %v1410
    %v1457 = vunpack.c.h.b16 %v1410
    %v1458 = vunpack.c.l.b16 %v1411
    %v1459 = vunpack.c.h.b16 %v1411
    %v1460 = vpack.c.b16 %v1430, %v1428
    %v1461 = vpack.c.b16 %v1431, %v1429
    %v1462 = vpack.c.b16 %v1434, %v1432
    %v1463 = vpack.c.b16 %v1435, %v1433
    %v1464 = vpack.c.b16 %v1438, %v1436
    %v1465 = vpack.c.b16 %v1439, %v1437
    %v1466 = vpack.c.b16 %v1442, %v1440
    %v1467 = vpack.c.b16 %v1443, %v1441
    %v1468 = vpack.c.b16 %v1446, %v1444
    %v1469 = vpack.c.b16 %v1447, %v1445
    %v1470 = vpack.c.b16 %v1450, %v1448
    %v1471 = vpack.c.b16 %v1451, %v1449
    %v1472 = vpack.c.b16 %v1454, %v1452
    %v1473 = vpack.c.b16 %v1455, %v1453
    %v1474 = vpack.c.b16 %v1458, %v1456
    %v1475 = vpack.c.b16 %v1459, %v1457
    %1492 = vmatprep.subr.bf16.mxu0 %v1475
    %1493 = vmatpush1.bf16.msra.mxu0 %v1474
    %1494 = vmatprep.subr.bf16.mxu0 %v1473
    %1495 = vmatpush1.bf16.msra.mxu0 %v1472
    %1496 = vmatprep.subr.bf16.mxu0 %v1471
    %1497 = vmatpush1.bf16.msra.mxu0 %v1470
    %1498 = vmatprep.subr.bf16.mxu0 %v1469
    %1499 = vmatpush1.bf16.msra.mxu0 %v1468
    %1500 = vmatprep.subr.bf16.mxu0 %v1467
    %1501 = vmatpush1.bf16.msra.mxu0 %v1466
    %1502 = vmatprep.subr.bf16.mxu0 %v1465
    %1503 = vmatpush1.bf16.msra.mxu0 %v1464
    %1504 = vmatprep.subr.bf16.mxu0 %v1463
    %1505 = vmatpush1.bf16.msra.mxu0 %v1462
    %1506 = vmatprep.subr.bf16.mxu0 %v1461
    %1507 = vmatpush1.bf16.msra.mxu0 %v1460
    %1508 = vmatprep.subr.bf16.mxu0 0
    %1509 = vmatpush2.bf16.msra.mxu0 0
    %1510 = vmatprep.subr.bf16.mxu0 0
    %1511 = vmatpush2.bf16.msra.mxu0 0
    %1512 = vmatprep.subr.bf16.mxu0 0
    %1513 = vmatpush2.bf16.msra.mxu0 0
    %1514 = vmatprep.subr.bf16.mxu0 0
    %1515 = vmatpush2.bf16.msra.mxu0 0
    %1516 = vmatprep.subr.bf16.mxu0 0
    %1517 = vmatpush2.bf16.msra.mxu0 0
    %1518 = vmatprep.subr.bf16.mxu0 0
    %1519 = vmatpush2.bf16.msra.mxu0 0
    %1520 = vmatprep.subr.bf16.mxu0 0
    %1521 = vmatpush2.bf16.msra.mxu0 0
    %1522 = vmatprep.subr.bf16.mxu0 0
    %1523 = vmatpush2.bf16.msra.mxu0 0
    %1524 = vmatprep.mubr.bf16.mxu0 0
    %1525 = vmatmul.mubr.bf16.gmra.mxu0 %v203
    %v1526 = vpop.f32.mrf.mxu0
    %v1527 = vadd.f32 0.0, %v1526
    %v1528 = vpop.f32.mrf.mxu0
    %v1529 = vadd.f32 0.0, %v1528
    %v1530 = vpop.f32.mrf.mxu0
    %v1531 = vadd.f32 0.0, %v1530
    %v1532 = vpop.f32.mrf.mxu0
    %v1533 = vadd.f32 0.0, %v1532
    %1534 = vmatprep.mubr.bf16.mxu0 0
    %1535 = vmatmul.mubr.bf16.gmra.mxu0 %v204
    %v1536 = vpop.f32.mrf.mxu0
    %v1537 = vadd.f32 0.0, %v1536
    %v1538 = vpop.f32.mrf.mxu0
    %v1539 = vadd.f32 0.0, %v1538
    %v1540 = vpop.f32.mrf.mxu0
    %v1541 = vadd.f32 0.0, %v1540
    %v1542 = vpop.f32.mrf.mxu0
    %v1543 = vadd.f32 0.0, %v1542
    %1544 = vmatprep.mubr.bf16.mxu0 0
    %1545 = vmatmul.mubr.bf16.gmra.mxu0 %v205
    %v1546 = vpop.f32.mrf.mxu0
    %v1547 = vadd.f32 0.0, %v1546
    %v1548 = vpop.f32.mrf.mxu0
    %v1549 = vadd.f32 0.0, %v1548
    %v1550 = vpop.f32.mrf.mxu0
    %v1551 = vadd.f32 0.0, %v1550
    %v1552 = vpop.f32.mrf.mxu0
    %v1553 = vadd.f32 0.0, %v1552
    %1554 = vmatprep.mubr.bf16.mxu0 0
    %1555 = vmatmul.mubr.bf16.gmra.mxu0 %v206
    %v1556 = vpop.f32.mrf.mxu0
    %v1557 = vadd.f32 0.0, %v1556
    %v1558 = vpop.f32.mrf.mxu0
    %v1559 = vadd.f32 0.0, %v1558
    %v1560 = vpop.f32.mrf.mxu0
    %v1561 = vadd.f32 0.0, %v1560
    %v1562 = vpop.f32.mrf.mxu0
    %v1563 = vadd.f32 0.0, %v1562
    %1564 = vmatprep.mubr.bf16.mxu0 0
    %1565 = vmatmul.mubr.bf16.gmra.mxu0 %v207
    %v1566 = vpop.f32.mrf.mxu0
    %v1567 = vadd.f32 0.0, %v1566
    %v1568 = vpop.f32.mrf.mxu0
    %v1569 = vadd.f32 0.0, %v1568
    %v1570 = vpop.f32.mrf.mxu0
    %v1571 = vadd.f32 0.0, %v1570
    %v1572 = vpop.f32.mrf.mxu0
    %v1573 = vadd.f32 0.0, %v1572
    %1574 = vmatprep.mubr.bf16.mxu0 0
    %1575 = vmatmul.mubr.bf16.gmra.mxu0 %v208
    %v1576 = vpop.f32.mrf.mxu0
    %v1577 = vadd.f32 0.0, %v1576
    %v1578 = vpop.f32.mrf.mxu0
    %v1579 = vadd.f32 0.0, %v1578
    %v1580 = vpop.f32.mrf.mxu0
    %v1581 = vadd.f32 0.0, %v1580
    %v1582 = vpop.f32.mrf.mxu0
    %v1583 = vadd.f32 0.0, %v1582
    %1584 = vmatprep.mubr.bf16.mxu0 0
    %1585 = vmatmul.mubr.bf16.gmra.mxu0 %v209
    %v1586 = vpop.f32.mrf.mxu0
    %v1587 = vadd.f32 0.0, %v1586
    %v1588 = vpop.f32.mrf.mxu0
    %v1589 = vadd.f32 0.0, %v1588
    %v1590 = vpop.f32.mrf.mxu0
    %v1591 = vadd.f32 0.0, %v1590
    %v1592 = vpop.f32.mrf.mxu0
    %v1593 = vadd.f32 0.0, %v1592
    %1594 = vmatprep.mubr.bf16.mxu0 0
    %1595 = vmatmul.mubr.bf16.gmra.mxu0 %v210
    %v1596 = vpop.f32.mrf.mxu0
    %v1597 = vadd.f32 0.0, %v1596
    %v1598 = vpop.f32.mrf.mxu0
    %v1599 = vadd.f32 0.0, %v1598
    %v1600 = vpop.f32.mrf.mxu0
    %v1601 = vadd.f32 0.0, %v1600
    %v1602 = vpop.f32.mrf.mxu0
    %v1603 = vadd.f32 0.0, %v1602
    %1604 = vmatprep.mubr.bf16.mxu0 0
    %1605 = vmatmul.mubr.bf16.gmra.mxu0 %v211
    %v1606 = vpop.f32.mrf.mxu0
    %v1607 = vadd.f32 0.0, %v1606
    %v1608 = vpop.f32.mrf.mxu0
    %v1609 = vadd.f32 0.0, %v1608
    %v1610 = vpop.f32.mrf.mxu0
    %v1611 = vadd.f32 0.0, %v1610
    %v1612 = vpop.f32.mrf.mxu0
    %v1613 = vadd.f32 0.0, %v1612
    %1614 = vmatprep.mubr.bf16.mxu0 0
    %1615 = vmatmul.mubr.bf16.gmra.mxu0 %v212
    %v1616 = vpop.f32.mrf.mxu0
    %v1617 = vadd.f32 0.0, %v1616
    %v1618 = vpop.f32.mrf.mxu0
    %v1619 = vadd.f32 0.0, %v1618
    %v1620 = vpop.f32.mrf.mxu0
    %v1621 = vadd.f32 0.0, %v1620
    %v1622 = vpop.f32.mrf.mxu0
    %v1623 = vadd.f32 0.0, %v1622
    %1624 = vmatprep.mubr.bf16.mxu0 0
    %1625 = vmatmul.mubr.bf16.gmra.mxu0 %v213
    %v1626 = vpop.f32.mrf.mxu0
    %v1627 = vadd.f32 0.0, %v1626
    %v1628 = vpop.f32.mrf.mxu0
    %v1629 = vadd.f32 0.0, %v1628
    %v1630 = vpop.f32.mrf.mxu0
    %v1631 = vadd.f32 0.0, %v1630
    %v1632 = vpop.f32.mrf.mxu0
    %v1633 = vadd.f32 0.0, %v1632
    %1634 = vmatprep.mubr.bf16.mxu0 0
    %1635 = vmatmul.mubr.bf16.gmra.mxu0 %v214
    %v1636 = vpop.f32.mrf.mxu0
    %v1637 = vadd.f32 0.0, %v1636
    %v1638 = vpop.f32.mrf.mxu0
    %v1639 = vadd.f32 0.0, %v1638
    %v1640 = vpop.f32.mrf.mxu0
    %v1641 = vadd.f32 0.0, %v1640
    %v1642 = vpop.f32.mrf.mxu0
    %v1643 = vadd.f32 0.0, %v1642
    %1644 = vmatprep.mubr.bf16.mxu0 0
    %1645 = vmatmul.mubr.bf16.gmra.mxu0 %v215
    %v1646 = vpop.f32.mrf.mxu0
    %v1647 = vadd.f32 0.0, %v1646
    %v1648 = vpop.f32.mrf.mxu0
    %v1649 = vadd.f32 0.0, %v1648
    %v1650 = vpop.f32.mrf.mxu0
    %v1651 = vadd.f32 0.0, %v1650
    %v1652 = vpop.f32.mrf.mxu0
    %v1653 = vadd.f32 0.0, %v1652
    %1654 = vmatprep.mubr.bf16.mxu0 0
    %1655 = vmatmul.mubr.bf16.gmra.mxu0 %v216
    %v1656 = vpop.f32.mrf.mxu0
    %v1657 = vadd.f32 0.0, %v1656
    %v1658 = vpop.f32.mrf.mxu0
    %v1659 = vadd.f32 0.0, %v1658
    %v1660 = vpop.f32.mrf.mxu0
    %v1661 = vadd.f32 0.0, %v1660
    %v1662 = vpop.f32.mrf.mxu0
    %v1663 = vadd.f32 0.0, %v1662
    %1664 = vmatprep.mubr.bf16.mxu0 0
    %1665 = vmatmul.mubr.bf16.gmra.mxu0 %v217
    %v1666 = vpop.f32.mrf.mxu0
    %v1667 = vadd.f32 0.0, %v1666
    %v1668 = vpop.f32.mrf.mxu0
    %v1669 = vadd.f32 0.0, %v1668
    %v1670 = vpop.f32.mrf.mxu0
    %v1671 = vadd.f32 0.0, %v1670
    %v1672 = vpop.f32.mrf.mxu0
    %v1673 = vadd.f32 0.0, %v1672
    %1674 = vmatprep.mubr.bf16.mxu0 0
    %1675 = vmatmul.mubr.bf16.gmra.mxu0 %v218
    %v1676 = vpop.f32.mrf.mxu0
    %v1677 = vadd.f32 0.0, %v1676
    %v1678 = vpop.f32.mrf.mxu0
    %v1679 = vadd.f32 0.0, %v1678
    %v1680 = vpop.f32.mrf.mxu0
    %v1681 = vadd.f32 0.0, %v1680
    %v1682 = vpop.f32.mrf.mxu0
    %v1683 = vadd.f32 0.0, %v1682
    %1684 = vdwg.mxu0
    %v1685 = vrot.slane %v1527, 3
    %v1686 = vrot.slane %v1529, 3
    %v1687 = vrot.slane %v1531, 3
    %v1688 = vrot.slane %v1533, 3
    %v1689 = vrot.slane %v1537, 3
    %v1690 = vrot.slane %v1539, 3
    %v1691 = vrot.slane %v1541, 3
    %v1692 = vrot.slane %v1543, 3
    %v1693 = vrot.slane %v1547, 3
    %v1694 = vrot.slane %v1549, 3
    %v1695 = vrot.slane %v1551, 3
    %v1696 = vrot.slane %v1553, 3
    %v1697 = vrot.slane %v1557, 3
    %v1698 = vrot.slane %v1559, 3
    %v1699 = vrot.slane %v1561, 3
    %v1700 = vrot.slane %v1563, 3
    %v1701 = vrot.slane %v1567, 3
    %v1702 = vrot.slane %v1569, 3
    %v1703 = vrot.slane %v1571, 3
    %v1704 = vrot.slane %v1573, 3
    %v1705 = vrot.slane %v1577, 3
    %v1706 = vrot.slane %v1579, 3
    %v1707 = vrot.slane %v1581, 3
    %v1708 = vrot.slane %v1583, 3
    %v1709 = vrot.slane %v1587, 3
    %v1710 = vrot.slane %v1589, 3
    %v1711 = vrot.slane %v1591, 3
    %v1712 = vrot.slane %v1593, 3
    %v1713 = vrot.slane %v1597, 3
    %v1714 = vrot.slane %v1599, 3
    %v1715 = vrot.slane %v1601, 3
    %v1716 = vrot.slane %v1603, 3
    %v1717 = vrot.slane %v1607, 3
    %v1718 = vrot.slane %v1609, 3
    %v1719 = vrot.slane %v1611, 3
    %v1720 = vrot.slane %v1613, 3
    %v1721 = vrot.slane %v1617, 3
    %v1722 = vrot.slane %v1619, 3
    %v1723 = vrot.slane %v1621, 3
    %v1724 = vrot.slane %v1623, 3
    %v1725 = vrot.slane %v1627, 3
    %v1726 = vrot.slane %v1629, 3
    %v1727 = vrot.slane %v1631, 3
    %v1728 = vrot.slane %v1633, 3
    %v1729 = vrot.slane %v1637, 3
    %v1730 = vrot.slane %v1639, 3
    %v1731 = vrot.slane %v1641, 3
    %v1732 = vrot.slane %v1643, 3
    %v1733 = vrot.slane %v1647, 3
    %v1734 = vrot.slane %v1649, 3
    %v1735 = vrot.slane %v1651, 3
    %v1736 = vrot.slane %v1653, 3
    %v1737 = vrot.slane %v1657, 3
    %v1738 = vrot.slane %v1659, 3
    %v1739 = vrot.slane %v1661, 3
    %v1740 = vrot.slane %v1663, 3
    %v1741 = vrot.slane %v1667, 3
    %v1742 = vrot.slane %v1669, 3
    %v1743 = vrot.slane %v1671, 3
    %v1744 = vrot.slane %v1673, 3
    %v1745 = vrot.slane %v1677, 3
    %v1746 = vrot.slane %v1679, 3
    %v1747 = vrot.slane %v1681, 3
    %v1748 = vrot.slane %v1683, 3
    %vm1749 = vcmp.lt.s32.totalorder %v573, 5
    %v1750 = vsel %vm1749, %v1745, %v1747
    %v1751 = vsel %vm1749, %v1746, %v1748
    %v1752 = vsel %vm1749, %v1743, %v1745
    %v1753 = vsel %vm1749, %v1744, %v1746
    %v1754 = vsel %vm1749, %v1741, %v1743
    %v1755 = vsel %vm1749, %v1742, %v1744
    %v1756 = vsel %vm1749, %v1739, %v1741
    %v1757 = vsel %vm1749, %v1740, %v1742
    %v1758 = vsel %vm1749, %v1737, %v1739
    %v1759 = vsel %vm1749, %v1738, %v1740
    %v1760 = vsel %vm1749, %v1735, %v1737
    %v1761 = vsel %vm1749, %v1736, %v1738
    %v1762 = vsel %vm1749, %v1733, %v1735
    %v1763 = vsel %vm1749, %v1734, %v1736
    %v1764 = vsel %vm1749, %v1731, %v1733
    %v1765 = vsel %vm1749, %v1732, %v1734
    %v1766 = vsel %vm1749, %v1729, %v1731
    %v1767 = vsel %vm1749, %v1730, %v1732
    %v1768 = vsel %vm1749, %v1727, %v1729
    %v1769 = vsel %vm1749, %v1728, %v1730
    %v1770 = vsel %vm1749, %v1725, %v1727
    %v1771 = vsel %vm1749, %v1726, %v1728
    %v1772 = vsel %vm1749, %v1723, %v1725
    %v1773 = vsel %vm1749, %v1724, %v1726
    %v1774 = vsel %vm1749, %v1721, %v1723
    %v1775 = vsel %vm1749, %v1722, %v1724
    %v1776 = vsel %vm1749, %v1719, %v1721
    %v1777 = vsel %vm1749, %v1720, %v1722
    %v1778 = vsel %vm1749, %v1717, %v1719
    %v1779 = vsel %vm1749, %v1718, %v1720
    %v1780 = vsel %vm1749, %v1715, %v1717
    %v1781 = vsel %vm1749, %v1716, %v1718
    %v1782 = vsel %vm1749, %v1713, %v1715
    %v1783 = vsel %vm1749, %v1714, %v1716
    %v1784 = vsel %vm1749, %v1711, %v1713
    %v1785 = vsel %vm1749, %v1712, %v1714
    %v1786 = vsel %vm1749, %v1709, %v1711
    %v1787 = vsel %vm1749, %v1710, %v1712
    %v1788 = vsel %vm1749, %v1707, %v1709
    %v1789 = vsel %vm1749, %v1708, %v1710
    %v1790 = vsel %vm1749, %v1705, %v1707
    %v1791 = vsel %vm1749, %v1706, %v1708
    %v1792 = vsel %vm1749, %v1703, %v1705
    %v1793 = vsel %vm1749, %v1704, %v1706
    %v1794 = vsel %vm1749, %v1701, %v1703
    %v1795 = vsel %vm1749, %v1702, %v1704
    %v1796 = vsel %vm1749, %v1699, %v1701
    %v1797 = vsel %vm1749, %v1700, %v1702
    %v1798 = vsel %vm1749, %v1697, %v1699
    %v1799 = vsel %vm1749, %v1698, %v1700
    %v1800 = vsel %vm1749, %v1695, %v1697
    %v1801 = vsel %vm1749, %v1696, %v1698
    %v1802 = vsel %vm1749, %v1693, %v1695
    %v1803 = vsel %vm1749, %v1694, %v1696
    %v1804 = vsel %vm1749, %v1691, %v1693
    %v1805 = vsel %vm1749, %v1692, %v1694
    %v1806 = vsel %vm1749, %v1689, %v1691
    %v1807 = vsel %vm1749, %v1690, %v1692
    %v1808 = vsel %vm1749, %v1687, %v1689
    %v1809 = vsel %vm1749, %v1688, %v1690
    %v1810 = vsel %vm1749, %v1685, %v1687
    %v1811 = vsel %vm1749, %v1686, %v1688
    %v1812 = vsel %vm1749, %v1747, %v1685
    %v1813 = vsel %vm1749, %v1748, %v1686
    %v1814 = vadd.f32 %v1331, %v1810
    %v1815 = vadd.f32 %v1332, %v1811
    %v1816 = vadd.f32 %v1333, %v1808
    %v1817 = vadd.f32 %v1334, %v1809
    %v1818 = vadd.f32 %v1335, %v1806
    %v1819 = vadd.f32 %v1336, %v1807
    %v1820 = vadd.f32 %v1337, %v1804
    %v1821 = vadd.f32 %v1338, %v1805
    %v1822 = vadd.f32 %v1339, %v1802
    %v1823 = vadd.f32 %v1340, %v1803
    %v1824 = vadd.f32 %v1341, %v1800
    %v1825 = vadd.f32 %v1342, %v1801
    %v1826 = vadd.f32 %v1343, %v1798
    %v1827 = vadd.f32 %v1344, %v1799
    %v1828 = vadd.f32 %v1345, %v1796
    %v1829 = vadd.f32 %v1346, %v1797
    %v1830 = vadd.f32 %v1347, %v1794
    %v1831 = vadd.f32 %v1348, %v1795
    %v1832 = vadd.f32 %v1349, %v1792
    %v1833 = vadd.f32 %v1350, %v1793
    %v1834 = vadd.f32 %v1351, %v1790
    %v1835 = vadd.f32 %v1352, %v1791
    %v1836 = vadd.f32 %v1353, %v1788
    %v1837 = vadd.f32 %v1354, %v1789
    %v1838 = vadd.f32 %v1355, %v1786
    %v1839 = vadd.f32 %v1356, %v1787
    %v1840 = vadd.f32 %v1357, %v1784
    %v1841 = vadd.f32 %v1358, %v1785
    %v1842 = vadd.f32 %v1359, %v1782
    %v1843 = vadd.f32 %v1360, %v1783
    %v1844 = vadd.f32 %v1361, %v1780
    %v1845 = vadd.f32 %v1362, %v1781
    %v1846 = vadd.f32 %v1363, %v1778
    %v1847 = vadd.f32 %v1364, %v1779
    %v1848 = vadd.f32 %v1365, %v1776
    %v1849 = vadd.f32 %v1366, %v1777
    %v1850 = vadd.f32 %v1367, %v1774
    %v1851 = vadd.f32 %v1368, %v1775
    %v1852 = vadd.f32 %v1369, %v1772
    %v1853 = vadd.f32 %v1370, %v1773
    %v1854 = vadd.f32 %v1371, %v1770
    %v1855 = vadd.f32 %v1372, %v1771
    %v1856 = vadd.f32 %v1373, %v1768
    %v1857 = vadd.f32 %v1374, %v1769
    %v1858 = vadd.f32 %v1375, %v1766
    %v1859 = vadd.f32 %v1376, %v1767
    %v1860 = vadd.f32 %v1377, %v1764
    %v1861 = vadd.f32 %v1378, %v1765
    %v1862 = vadd.f32 %v1379, %v1762
    %v1863 = vadd.f32 %v1380, %v1763
    %v1864 = vadd.f32 %v1381, %v1760
    %v1865 = vadd.f32 %v1382, %v1761
    %v1866 = vadd.f32 %v1383, %v1758
    %v1867 = vadd.f32 %v1384, %v1759
    %v1868 = vadd.f32 %v1385, %v1756
    %v1869 = vadd.f32 %v1386, %v1757
    %v1870 = vadd.f32 %v1387, %v1754
    %v1871 = vadd.f32 %v1388, %v1755
    %v1872 = vadd.f32 %v1389, %v1752
    %v1873 = vadd.f32 %v1390, %v1753
    %v1874 = vadd.f32 %v1391, %v1750
    %v1875 = vadd.f32 %v1392, %v1751
    %v1876 = vadd.f32 %v1393, %v1812
    %v1877 = vadd.f32 %v1394, %v1813
    %s1878 = scalar_lea.vmem [#allocation2], 512
    %v1879 = vld [vmem:[%s1878] sm:$0xff]
    %v1880 = vld [vmem:[%s1878 + $0x8] sm:$0xff]
    %v1881 = vld [vmem:[%s1878 + $0x10] sm:$0xff]
    %v1882 = vld [vmem:[%s1878 + $0x18] sm:$0xff]
    %v1883 = vld [vmem:[%s1878 + $0x20] sm:$0xff]
    %v1884 = vld [vmem:[%s1878 + $0x28] sm:$0xff]
    %v1885 = vld [vmem:[%s1878 + $0x30] sm:$0xff]
    %v1886 = vld [vmem:[%s1878 + $0x38] sm:$0xff]
    %v1887 = vld [vmem:[%s1878 + $0x40] sm:$0xff]
    %v1888 = vld [vmem:[%s1878 + $0x48] sm:$0xff]
    %v1889 = vld [vmem:[%s1878 + $0x50] sm:$0xff]
    %v1890 = vld [vmem:[%s1878 + $0x58] sm:$0xff]
    %v1891 = vld [vmem:[%s1878 + $0x60] sm:$0xff]
    %v1892 = vld [vmem:[%s1878 + $0x68] sm:$0xff]
    %v1893 = vld [vmem:[%s1878 + $0x70] sm:$0xff]
    %v1894 = vld [vmem:[%s1878 + $0x78] sm:$0xff]
    %v1911 = vunpack.c.l.b16 %v1879
    %v1912 = vunpack.c.h.b16 %v1879
    %v1913 = vunpack.c.l.b16 %v1880
    %v1914 = vunpack.c.h.b16 %v1880
    %v1915 = vunpack.c.l.b16 %v1881
    %v1916 = vunpack.c.h.b16 %v1881
    %v1917 = vunpack.c.l.b16 %v1882
    %v1918 = vunpack.c.h.b16 %v1882
    %v1919 = vunpack.c.l.b16 %v1883
    %v1920 = vunpack.c.h.b16 %v1883
    %v1921 = vunpack.c.l.b16 %v1884
    %v1922 = vunpack.c.h.b16 %v1884
    %v1923 = vunpack.c.l.b16 %v1885
    %v1924 = vunpack.c.h.b16 %v1885
    %v1925 = vunpack.c.l.b16 %v1886
    %v1926 = vunpack.c.h.b16 %v1886
    %v1927 = vunpack.c.l.b16 %v1887
    %v1928 = vunpack.c.h.b16 %v1887
    %v1929 = vunpack.c.l.b16 %v1888
    %v1930 = vunpack.c.h.b16 %v1888
    %v1931 = vunpack.c.l.b16 %v1889
    %v1932 = vunpack.c.h.b16 %v1889
    %v1933 = vunpack.c.l.b16 %v1890
    %v1934 = vunpack.c.h.b16 %v1890
    %v1935 = vunpack.c.l.b16 %v1891
    %v1936 = vunpack.c.h.b16 %v1891
    %v1937 = vunpack.c.l.b16 %v1892
    %v1938 = vunpack.c.h.b16 %v1892
    %v1939 = vunpack.c.l.b16 %v1893
    %v1940 = vunpack.c.h.b16 %v1893
    %v1941 = vunpack.c.l.b16 %v1894
    %v1942 = vunpack.c.h.b16 %v1894
    %v1943 = vpack.c.b16 %v1913, %v1911
    %v1944 = vpack.c.b16 %v1914, %v1912
    %v1945 = vpack.c.b16 %v1917, %v1915
    %v1946 = vpack.c.b16 %v1918, %v1916
    %v1947 = vpack.c.b16 %v1921, %v1919
    %v1948 = vpack.c.b16 %v1922, %v1920
    %v1949 = vpack.c.b16 %v1925, %v1923
    %v1950 = vpack.c.b16 %v1926, %v1924
    %v1951 = vpack.c.b16 %v1929, %v1927
    %v1952 = vpack.c.b16 %v1930, %v1928
    %v1953 = vpack.c.b16 %v1933, %v1931
    %v1954 = vpack.c.b16 %v1934, %v1932
    %v1955 = vpack.c.b16 %v1937, %v1935
    %v1956 = vpack.c.b16 %v1938, %v1936
    %v1957 = vpack.c.b16 %v1941, %v1939
    %v1958 = vpack.c.b16 %v1942, %v1940
    %1975 = vmatprep.subr.bf16.mxu0 %v1958
    %1976 = vmatpush1.bf16.msra.mxu0 %v1957
    %1977 = vmatprep.subr.bf16.mxu0 %v1956
    %1978 = vmatpush1.bf16.msra.mxu0 %v1955
    %1979 = vmatprep.subr.bf16.mxu0 %v1954
    %1980 = vmatpush1.bf16.msra.mxu0 %v1953
    %1981 = vmatprep.subr.bf16.mxu0 %v1952
    %1982 = vmatpush1.bf16.msra.mxu0 %v1951
    %1983 = vmatprep.subr.bf16.mxu0 %v1950
    %1984 = vmatpush1.bf16.msra.mxu0 %v1949
    %1985 = vmatprep.subr.bf16.mxu0 %v1948
    %1986 = vmatpush1.bf16.msra.mxu0 %v1947
    %1987 = vmatprep.subr.bf16.mxu0 %v1946
    %1988 = vmatpush1.bf16.msra.mxu0 %v1945
    %1989 = vmatprep.subr.bf16.mxu0 %v1944
    %1990 = vmatpush1.bf16.msra.mxu0 %v1943
    %1991 = vmatprep.subr.bf16.mxu0 0
    %1992 = vmatpush2.bf16.msra.mxu0 0
    %1993 = vmatprep.subr.bf16.mxu0 0
    %1994 = vmatpush2.bf16.msra.mxu0 0
    %1995 = vmatprep.subr.bf16.mxu0 0
    %1996 = vmatpush2.bf16.msra.mxu0 0
    %1997 = vmatprep.subr.bf16.mxu0 0
    %1998 = vmatpush2.bf16.msra.mxu0 0
    %1999 = vmatprep.subr.bf16.mxu0 0
    %2000 = vmatpush2.bf16.msra.mxu0 0
    %2001 = vmatprep.subr.bf16.mxu0 0
    %2002 = vmatpush2.bf16.msra.mxu0 0
    %2003 = vmatprep.subr.bf16.mxu0 0
    %2004 = vmatpush2.bf16.msra.mxu0 0
    %2005 = vmatprep.subr.bf16.mxu0 0
    %2006 = vmatpush2.bf16.msra.mxu0 0
    %2007 = vmatprep.mubr.bf16.mxu0 0
    %2008 = vmatmul.mubr.bf16.gmra.mxu0 %v203
    %v2009 = vpop.f32.mrf.mxu0
    %v2010 = vadd.f32 0.0, %v2009
    %v2011 = vpop.f32.mrf.mxu0
    %v2012 = vadd.f32 0.0, %v2011
    %v2013 = vpop.f32.mrf.mxu0
    %v2014 = vadd.f32 0.0, %v2013
    %v2015 = vpop.f32.mrf.mxu0
    %v2016 = vadd.f32 0.0, %v2015
    %2017 = vmatprep.mubr.bf16.mxu0 0
    %2018 = vmatmul.mubr.bf16.gmra.mxu0 %v204
    %v2019 = vpop.f32.mrf.mxu0
    %v2020 = vadd.f32 0.0, %v2019
    %v2021 = vpop.f32.mrf.mxu0
    %v2022 = vadd.f32 0.0, %v2021
    %v2023 = vpop.f32.mrf.mxu0
    %v2024 = vadd.f32 0.0, %v2023
    %v2025 = vpop.f32.mrf.mxu0
    %v2026 = vadd.f32 0.0, %v2025
    %2027 = vmatprep.mubr.bf16.mxu0 0
    %2028 = vmatmul.mubr.bf16.gmra.mxu0 %v205
    %v2029 = vpop.f32.mrf.mxu0
    %v2030 = vadd.f32 0.0, %v2029
    %v2031 = vpop.f32.mrf.mxu0
    %v2032 = vadd.f32 0.0, %v2031
    %v2033 = vpop.f32.mrf.mxu0
    %v2034 = vadd.f32 0.0, %v2033
    %v2035 = vpop.f32.mrf.mxu0
    %v2036 = vadd.f32 0.0, %v2035
    %2037 = vmatprep.mubr.bf16.mxu0 0
    %2038 = vmatmul.mubr.bf16.gmra.mxu0 %v206
    %v2039 = vpop.f32.mrf.mxu0
    %v2040 = vadd.f32 0.0, %v2039
    %v2041 = vpop.f32.mrf.mxu0
    %v2042 = vadd.f32 0.0, %v2041
    %v2043 = vpop.f32.mrf.mxu0
    %v2044 = vadd.f32 0.0, %v2043
    %v2045 = vpop.f32.mrf.mxu0
    %v2046 = vadd.f32 0.0, %v2045
    %2047 = vmatprep.mubr.bf16.mxu0 0
    %2048 = vmatmul.mubr.bf16.gmra.mxu0 %v207
    %v2049 = vpop.f32.mrf.mxu0
    %v2050 = vadd.f32 0.0, %v2049
    %v2051 = vpop.f32.mrf.mxu0
    %v2052 = vadd.f32 0.0, %v2051
    %v2053 = vpop.f32.mrf.mxu0
    %v2054 = vadd.f32 0.0, %v2053
    %v2055 = vpop.f32.mrf.mxu0
    %v2056 = vadd.f32 0.0, %v2055
    %2057 = vmatprep.mubr.bf16.mxu0 0
    %2058 = vmatmul.mubr.bf16.gmra.mxu0 %v208
    %v2059 = vpop.f32.mrf.mxu0
    %v2060 = vadd.f32 0.0, %v2059
    %v2061 = vpop.f32.mrf.mxu0
    %v2062 = vadd.f32 0.0, %v2061
    %v2063 = vpop.f32.mrf.mxu0
    %v2064 = vadd.f32 0.0, %v2063
    %v2065 = vpop.f32.mrf.mxu0
    %v2066 = vadd.f32 0.0, %v2065
    %2067 = vmatprep.mubr.bf16.mxu0 0
    %2068 = vmatmul.mubr.bf16.gmra.mxu0 %v209
    %v2069 = vpop.f32.mrf.mxu0
    %v2070 = vadd.f32 0.0, %v2069
    %v2071 = vpop.f32.mrf.mxu0
    %v2072 = vadd.f32 0.0, %v2071
    %v2073 = vpop.f32.mrf.mxu0
    %v2074 = vadd.f32 0.0, %v2073
    %v2075 = vpop.f32.mrf.mxu0
    %v2076 = vadd.f32 0.0, %v2075
    %2077 = vmatprep.mubr.bf16.mxu0 0
    %2078 = vmatmul.mubr.bf16.gmra.mxu0 %v210
    %v2079 = vpop.f32.mrf.mxu0
    %v2080 = vadd.f32 0.0, %v2079
    %v2081 = vpop.f32.mrf.mxu0
    %v2082 = vadd.f32 0.0, %v2081
    %v2083 = vpop.f32.mrf.mxu0
    %v2084 = vadd.f32 0.0, %v2083
    %v2085 = vpop.f32.mrf.mxu0
    %v2086 = vadd.f32 0.0, %v2085
    %2087 = vmatprep.mubr.bf16.mxu0 0
    %2088 = vmatmul.mubr.bf16.gmra.mxu0 %v211
    %v2089 = vpop.f32.mrf.mxu0
    %v2090 = vadd.f32 0.0, %v2089
    %v2091 = vpop.f32.mrf.mxu0
    %v2092 = vadd.f32 0.0, %v2091
    %v2093 = vpop.f32.mrf.mxu0
    %v2094 = vadd.f32 0.0, %v2093
    %v2095 = vpop.f32.mrf.mxu0
    %v2096 = vadd.f32 0.0, %v2095
    %2097 = vmatprep.mubr.bf16.mxu0 0
    %2098 = vmatmul.mubr.bf16.gmra.mxu0 %v212
    %v2099 = vpop.f32.mrf.mxu0
    %v2100 = vadd.f32 0.0, %v2099
    %v2101 = vpop.f32.mrf.mxu0
    %v2102 = vadd.f32 0.0, %v2101
    %v2103 = vpop.f32.mrf.mxu0
    %v2104 = vadd.f32 0.0, %v2103
    %v2105 = vpop.f32.mrf.mxu0
    %v2106 = vadd.f32 0.0, %v2105
    %2107 = vmatprep.mubr.bf16.mxu0 0
    %2108 = vmatmul.mubr.bf16.gmra.mxu0 %v213
    %v2109 = vpop.f32.mrf.mxu0
    %v2110 = vadd.f32 0.0, %v2109
    %v2111 = vpop.f32.mrf.mxu0
    %v2112 = vadd.f32 0.0, %v2111
    %v2113 = vpop.f32.mrf.mxu0
    %v2114 = vadd.f32 0.0, %v2113
    %v2115 = vpop.f32.mrf.mxu0
    %v2116 = vadd.f32 0.0, %v2115
    %2117 = vmatprep.mubr.bf16.mxu0 0
    %2118 = vmatmul.mubr.bf16.gmra.mxu0 %v214
    %v2119 = vpop.f32.mrf.mxu0
    %v2120 = vadd.f32 0.0, %v2119
    %v2121 = vpop.f32.mrf.mxu0
    %v2122 = vadd.f32 0.0, %v2121
    %v2123 = vpop.f32.mrf.mxu0
    %v2124 = vadd.f32 0.0, %v2123
    %v2125 = vpop.f32.mrf.mxu0
    %v2126 = vadd.f32 0.0, %v2125
    %2127 = vmatprep.mubr.bf16.mxu0 0
    %2128 = vmatmul.mubr.bf16.gmra.mxu0 %v215
    %v2129 = vpop.f32.mrf.mxu0
    %v2130 = vadd.f32 0.0, %v2129
    %v2131 = vpop.f32.mrf.mxu0
    %v2132 = vadd.f32 0.0, %v2131
    %v2133 = vpop.f32.mrf.mxu0
    %v2134 = vadd.f32 0.0, %v2133
    %v2135 = vpop.f32.mrf.mxu0
    %v2136 = vadd.f32 0.0, %v2135
    %2137 = vmatprep.mubr.bf16.mxu0 0
    %2138 = vmatmul.mubr.bf16.gmra.mxu0 %v216
    %v2139 = vpop.f32.mrf.mxu0
    %v2140 = vadd.f32 0.0, %v2139
    %v2141 = vpop.f32.mrf.mxu0
    %v2142 = vadd.f32 0.0, %v2141
    %v2143 = vpop.f32.mrf.mxu0
    %v2144 = vadd.f32 0.0, %v2143
    %v2145 = vpop.f32.mrf.mxu0
    %v2146 = vadd.f32 0.0, %v2145
    %2147 = vmatprep.mubr.bf16.mxu0 0
    %2148 = vmatmul.mubr.bf16.gmra.mxu0 %v217
    %v2149 = vpop.f32.mrf.mxu0
    %v2150 = vadd.f32 0.0, %v2149
    %v2151 = vpop.f32.mrf.mxu0
    %v2152 = vadd.f32 0.0, %v2151
    %v2153 = vpop.f32.mrf.mxu0
    %v2154 = vadd.f32 0.0, %v2153
    %v2155 = vpop.f32.mrf.mxu0
    %v2156 = vadd.f32 0.0, %v2155
    %2157 = vmatprep.mubr.bf16.mxu0 0
    %2158 = vmatmul.mubr.bf16.gmra.mxu0 %v218
    %v2159 = vpop.f32.mrf.mxu0
    %v2160 = vadd.f32 0.0, %v2159
    %v2161 = vpop.f32.mrf.mxu0
    %v2162 = vadd.f32 0.0, %v2161
    %v2163 = vpop.f32.mrf.mxu0
    %v2164 = vadd.f32 0.0, %v2163
    %v2165 = vpop.f32.mrf.mxu0
    %v2166 = vadd.f32 0.0, %v2165
    %2167 = vdwg.mxu0
    %v2168 = vrot.slane %v2010, 4
    %v2169 = vrot.slane %v2012, 4
    %v2170 = vrot.slane %v2014, 4
    %v2171 = vrot.slane %v2016, 4
    %v2172 = vrot.slane %v2020, 4
    %v2173 = vrot.slane %v2022, 4
    %v2174 = vrot.slane %v2024, 4
    %v2175 = vrot.slane %v2026, 4
    %v2176 = vrot.slane %v2030, 4
    %v2177 = vrot.slane %v2032, 4
    %v2178 = vrot.slane %v2034, 4
    %v2179 = vrot.slane %v2036, 4
    %v2180 = vrot.slane %v2040, 4
    %v2181 = vrot.slane %v2042, 4
    %v2182 = vrot.slane %v2044, 4
    %v2183 = vrot.slane %v2046, 4
    %v2184 = vrot.slane %v2050, 4
    %v2185 = vrot.slane %v2052, 4
    %v2186 = vrot.slane %v2054, 4
    %v2187 = vrot.slane %v2056, 4
    %v2188 = vrot.slane %v2060, 4
    %v2189 = vrot.slane %v2062, 4
    %v2190 = vrot.slane %v2064, 4
    %v2191 = vrot.slane %v2066, 4
    %v2192 = vrot.slane %v2070, 4
    %v2193 = vrot.slane %v2072, 4
    %v2194 = vrot.slane %v2074, 4
    %v2195 = vrot.slane %v2076, 4
    %v2196 = vrot.slane %v2080, 4
    %v2197 = vrot.slane %v2082, 4
    %v2198 = vrot.slane %v2084, 4
    %v2199 = vrot.slane %v2086, 4
    %v2200 = vrot.slane %v2090, 4
    %v2201 = vrot.slane %v2092, 4
    %v2202 = vrot.slane %v2094, 4
    %v2203 = vrot.slane %v2096, 4
    %v2204 = vrot.slane %v2100, 4
    %v2205 = vrot.slane %v2102, 4
    %v2206 = vrot.slane %v2104, 4
    %v2207 = vrot.slane %v2106, 4
    %v2208 = vrot.slane %v2110, 4
    %v2209 = vrot.slane %v2112, 4
    %v2210 = vrot.slane %v2114, 4
    %v2211 = vrot.slane %v2116, 4
    %v2212 = vrot.slane %v2120, 4
    %v2213 = vrot.slane %v2122, 4
    %v2214 = vrot.slane %v2124, 4
    %v2215 = vrot.slane %v2126, 4
    %v2216 = vrot.slane %v2130, 4
    %v2217 = vrot.slane %v2132, 4
    %v2218 = vrot.slane %v2134, 4
    %v2219 = vrot.slane %v2136, 4
    %v2220 = vrot.slane %v2140, 4
    %v2221 = vrot.slane %v2142, 4
    %v2222 = vrot.slane %v2144, 4
    %v2223 = vrot.slane %v2146, 4
    %v2224 = vrot.slane %v2150, 4
    %v2225 = vrot.slane %v2152, 4
    %v2226 = vrot.slane %v2154, 4
    %v2227 = vrot.slane %v2156, 4
    %v2228 = vrot.slane %v2160, 4
    %v2229 = vrot.slane %v2162, 4
    %v2230 = vrot.slane %v2164, 4
    %v2231 = vrot.slane %v2166, 4
    %vm2232 = vcmp.lt.s32.totalorder %v573, 4
    %v2233 = vsel %vm2232, %v2228, %v2230
    %v2234 = vsel %vm2232, %v2229, %v2231
    %v2235 = vsel %vm2232, %v2226, %v2228
    %v2236 = vsel %vm2232, %v2227, %v2229
    %v2237 = vsel %vm2232, %v2224, %v2226
    %v2238 = vsel %vm2232, %v2225, %v2227
    %v2239 = vsel %vm2232, %v2222, %v2224
    %v2240 = vsel %vm2232, %v2223, %v2225
    %v2241 = vsel %vm2232, %v2220, %v2222
    %v2242 = vsel %vm2232, %v2221, %v2223
    %v2243 = vsel %vm2232, %v2218, %v2220
    %v2244 = vsel %vm2232, %v2219, %v2221
    %v2245 = vsel %vm2232, %v2216, %v2218
    %v2246 = vsel %vm2232, %v2217, %v2219
    %v2247 = vsel %vm2232, %v2214, %v2216
    %v2248 = vsel %vm2232, %v2215, %v2217
    %v2249 = vsel %vm2232, %v2212, %v2214
    %v2250 = vsel %vm2232, %v2213, %v2215
    %v2251 = vsel %vm2232, %v2210, %v2212
    %v2252 = vsel %vm2232, %v2211, %v2213
    %v2253 = vsel %vm2232, %v2208, %v2210
    %v2254 = vsel %vm2232, %v2209, %v2211
    %v2255 = vsel %vm2232, %v2206, %v2208
    %v2256 = vsel %vm2232, %v2207, %v2209
    %v2257 = vsel %vm2232, %v2204, %v2206
    %v2258 = vsel %vm2232, %v2205, %v2207
    %v2259 = vsel %vm2232, %v2202, %v2204
    %v2260 = vsel %vm2232, %v2203, %v2205
    %v2261 = vsel %vm2232, %v2200, %v2202
    %v2262 = vsel %vm2232, %v2201, %v2203
    %v2263 = vsel %vm2232, %v2198, %v2200
    %v2264 = vsel %vm2232, %v2199, %v2201
    %v2265 = vsel %vm2232, %v2196, %v2198
    %v2266 = vsel %vm2232, %v2197, %v2199
    %v2267 = vsel %vm2232, %v2194, %v2196
    %v2268 = vsel %vm2232, %v2195, %v2197
    %v2269 = vsel %vm2232, %v2192, %v2194
    %v2270 = vsel %vm2232, %v2193, %v2195
    %v2271 = vsel %vm2232, %v2190, %v2192
    %v2272 = vsel %vm2232, %v2191, %v2193
    %v2273 = vsel %vm2232, %v2188, %v2190
    %v2274 = vsel %vm2232, %v2189, %v2191
    %v2275 = vsel %vm2232, %v2186, %v2188
    %v2276 = vsel %vm2232, %v2187, %v2189
    %v2277 = vsel %vm2232, %v2184, %v2186
    %v2278 = vsel %vm2232, %v2185, %v2187
    %v2279 = vsel %vm2232, %v2182, %v2184
    %v2280 = vsel %vm2232, %v2183, %v2185
    %v2281 = vsel %vm2232, %v2180, %v2182
    %v2282 = vsel %vm2232, %v2181, %v2183
    %v2283 = vsel %vm2232, %v2178, %v2180
    %v2284 = vsel %vm2232, %v2179, %v2181
    %v2285 = vsel %vm2232, %v2176, %v2178
    %v2286 = vsel %vm2232, %v2177, %v2179
    %v2287 = vsel %vm2232, %v2174, %v2176
    %v2288 = vsel %vm2232, %v2175, %v2177
    %v2289 = vsel %vm2232, %v2172, %v2174
    %v2290 = vsel %vm2232, %v2173, %v2175
    %v2291 = vsel %vm2232, %v2170, %v2172
    %v2292 = vsel %vm2232, %v2171, %v2173
    %v2293 = vsel %vm2232, %v2168, %v2170
    %v2294 = vsel %vm2232, %v2169, %v2171
    %v2295 = vsel %vm2232, %v2230, %v2168
    %v2296 = vsel %vm2232, %v2231, %v2169
    %v2297 = vadd.f32 %v1814, %v2293
    %v2298 = vadd.f32 %v1815, %v2294
    %v2299 = vadd.f32 %v1816, %v2291
    %v2300 = vadd.f32 %v1817, %v2292
    %v2301 = vadd.f32 %v1818, %v2289
    %v2302 = vadd.f32 %v1819, %v2290
    %v2303 = vadd.f32 %v1820, %v2287
    %v2304 = vadd.f32 %v1821, %v2288
    %v2305 = vadd.f32 %v1822, %v2285
    %v2306 = vadd.f32 %v1823, %v2286
    %v2307 = vadd.f32 %v1824, %v2283
    %v2308 = vadd.f32 %v1825, %v2284
    %v2309 = vadd.f32 %v1826, %v2281
    %v2310 = vadd.f32 %v1827, %v2282
    %v2311 = vadd.f32 %v1828, %v2279
    %v2312 = vadd.f32 %v1829, %v2280
    %v2313 = vadd.f32 %v1830, %v2277
    %v2314 = vadd.f32 %v1831, %v2278
    %v2315 = vadd.f32 %v1832, %v2275
    %v2316 = vadd.f32 %v1833, %v2276
    %v2317 = vadd.f32 %v1834, %v2273
    %v2318 = vadd.f32 %v1835, %v2274
    %v2319 = vadd.f32 %v1836, %v2271
    %v2320 = vadd.f32 %v1837, %v2272
    %v2321 = vadd.f32 %v1838, %v2269
    %v2322 = vadd.f32 %v1839, %v2270
    %v2323 = vadd.f32 %v1840, %v2267
    %v2324 = vadd.f32 %v1841, %v2268
    %v2325 = vadd.f32 %v1842, %v2265
    %v2326 = vadd.f32 %v1843, %v2266
    %v2327 = vadd.f32 %v1844, %v2263
    %v2328 = vadd.f32 %v1845, %v2264
    %v2329 = vadd.f32 %v1846, %v2261
    %v2330 = vadd.f32 %v1847, %v2262
    %v2331 = vadd.f32 %v1848, %v2259
    %v2332 = vadd.f32 %v1849, %v2260
    %v2333 = vadd.f32 %v1850, %v2257
    %v2334 = vadd.f32 %v1851, %v2258
    %v2335 = vadd.f32 %v1852, %v2255
    %v2336 = vadd.f32 %v1853, %v2256
    %v2337 = vadd.f32 %v1854, %v2253
    %v2338 = vadd.f32 %v1855, %v2254
    %v2339 = vadd.f32 %v1856, %v2251
    %v2340 = vadd.f32 %v1857, %v2252
    %v2341 = vadd.f32 %v1858, %v2249
    %v2342 = vadd.f32 %v1859, %v2250
    %v2343 = vadd.f32 %v1860, %v2247
    %v2344 = vadd.f32 %v1861, %v2248
    %v2345 = vadd.f32 %v1862, %v2245
    %v2346 = vadd.f32 %v1863, %v2246
    %v2347 = vadd.f32 %v1864, %v2243
    %v2348 = vadd.f32 %v1865, %v2244
    %v2349 = vadd.f32 %v1866, %v2241
    %v2350 = vadd.f32 %v1867, %v2242
    %v2351 = vadd.f32 %v1868, %v2239
    %v2352 = vadd.f32 %v1869, %v2240
    %v2353 = vadd.f32 %v1870, %v2237
    %v2354 = vadd.f32 %v1871, %v2238
    %v2355 = vadd.f32 %v1872, %v2235
    %v2356 = vadd.f32 %v1873, %v2236
    %v2357 = vadd.f32 %v1874, %v2233
    %v2358 = vadd.f32 %v1875, %v2234
    %v2359 = vadd.f32 %v1876, %v2295
    %v2360 = vadd.f32 %v1877, %v2296
    %s2361 = scalar_lea.vmem [#allocation2], 640
    %v2362 = vld [vmem:[%s2361] sm:$0xff]
    %v2363 = vld [vmem:[%s2361 + $0x8] sm:$0xff]
    %v2364 = vld [vmem:[%s2361 + $0x10] sm:$0xff]
    %v2365 = vld [vmem:[%s2361 + $0x18] sm:$0xff]
    %v2366 = vld [vmem:[%s2361 + $0x20] sm:$0xff]
    %v2367 = vld [vmem:[%s2361 + $0x28] sm:$0xff]
    %v2368 = vld [vmem:[%s2361 + $0x30] sm:$0xff]
    %v2369 = vld [vmem:[%s2361 + $0x38] sm:$0xff]
    %v2370 = vld [vmem:[%s2361 + $0x40] sm:$0xff]
    %v2371 = vld [vmem:[%s2361 + $0x48] sm:$0xff]
    %v2372 = vld [vmem:[%s2361 + $0x50] sm:$0xff]
    %v2373 = vld [vmem:[%s2361 + $0x58] sm:$0xff]
    %v2374 = vld [vmem:[%s2361 + $0x60] sm:$0xff]
    %v2375 = vld [vmem:[%s2361 + $0x68] sm:$0xff]
    %v2376 = vld [vmem:[%s2361 + $0x70] sm:$0xff]
    %v2377 = vld [vmem:[%s2361 + $0x78] sm:$0xff]
    %v2394 = vunpack.c.l.b16 %v2362
    %v2395 = vunpack.c.h.b16 %v2362
    %v2396 = vunpack.c.l.b16 %v2363
    %v2397 = vunpack.c.h.b16 %v2363
    %v2398 = vunpack.c.l.b16 %v2364
    %v2399 = vunpack.c.h.b16 %v2364
    %v2400 = vunpack.c.l.b16 %v2365
    %v2401 = vunpack.c.h.b16 %v2365
    %v2402 = vunpack.c.l.b16 %v2366
    %v2403 = vunpack.c.h.b16 %v2366
    %v2404 = vunpack.c.l.b16 %v2367
    %v2405 = vunpack.c.h.b16 %v2367
    %v2406 = vunpack.c.l.b16 %v2368
    %v2407 = vunpack.c.h.b16 %v2368
    %v2408 = vunpack.c.l.b16 %v2369
    %v2409 = vunpack.c.h.b16 %v2369
    %v2410 = vunpack.c.l.b16 %v2370
    %v2411 = vunpack.c.h.b16 %v2370
    %v2412 = vunpack.c.l.b16 %v2371
    %v2413 = vunpack.c.h.b16 %v2371
    %v2414 = vunpack.c.l.b16 %v2372
    %v2415 = vunpack.c.h.b16 %v2372
    %v2416 = vunpack.c.l.b16 %v2373
    %v2417 = vunpack.c.h.b16 %v2373
    %v2418 = vunpack.c.l.b16 %v2374
    %v2419 = vunpack.c.h.b16 %v2374
    %v2420 = vunpack.c.l.b16 %v2375
    %v2421 = vunpack.c.h.b16 %v2375
    %v2422 = vunpack.c.l.b16 %v2376
    %v2423 = vunpack.c.h.b16 %v2376
    %v2424 = vunpack.c.l.b16 %v2377
    %v2425 = vunpack.c.h.b16 %v2377
    %v2426 = vpack.c.b16 %v2396, %v2394
    %v2427 = vpack.c.b16 %v2397, %v2395
    %v2428 = vpack.c.b16 %v2400, %v2398
    %v2429 = vpack.c.b16 %v2401, %v2399
    %v2430 = vpack.c.b16 %v2404, %v2402
    %v2431 = vpack.c.b16 %v2405, %v2403
    %v2432 = vpack.c.b16 %v2408, %v2406
    %v2433 = vpack.c.b16 %v2409, %v2407
    %v2434 = vpack.c.b16 %v2412, %v2410
    %v2435 = vpack.c.b16 %v2413, %v2411
    %v2436 = vpack.c.b16 %v2416, %v2414
    %v2437 = vpack.c.b16 %v2417, %v2415
    %v2438 = vpack.c.b16 %v2420, %v2418
    %v2439 = vpack.c.b16 %v2421, %v2419
    %v2440 = vpack.c.b16 %v2424, %v2422
    %v2441 = vpack.c.b16 %v2425, %v2423
    %2458 = vmatprep.subr.bf16.mxu0 %v2441
    %2459 = vmatpush1.bf16.msra.mxu0 %v2440
    %2460 = vmatprep.subr.bf16.mxu0 %v2439
    %2461 = vmatpush1.bf16.msra.mxu0 %v2438
    %2462 = vmatprep.subr.bf16.mxu0 %v2437
    %2463 = vmatpush1.bf16.msra.mxu0 %v2436
    %2464 = vmatprep.subr.bf16.mxu0 %v2435
    %2465 = vmatpush1.bf16.msra.mxu0 %v2434
    %2466 = vmatprep.subr.bf16.mxu0 %v2433
    %2467 = vmatpush1.bf16.msra.mxu0 %v2432
    %2468 = vmatprep.subr.bf16.mxu0 %v2431
    %2469 = vmatpush1.bf16.msra.mxu0 %v2430
    %2470 = vmatprep.subr.bf16.mxu0 %v2429
    %2471 = vmatpush1.bf16.msra.mxu0 %v2428
    %2472 = vmatprep.subr.bf16.mxu0 %v2427
    %2473 = vmatpush1.bf16.msra.mxu0 %v2426
    %2474 = vmatprep.subr.bf16.mxu0 0
    %2475 = vmatpush2.bf16.msra.mxu0 0
    %2476 = vmatprep.subr.bf16.mxu0 0
    %2477 = vmatpush2.bf16.msra.mxu0 0
    %2478 = vmatprep.subr.bf16.mxu0 0
    %2479 = vmatpush2.bf16.msra.mxu0 0
    %2480 = vmatprep.subr.bf16.mxu0 0
    %2481 = vmatpush2.bf16.msra.mxu0 0
    %2482 = vmatprep.subr.bf16.mxu0 0
    %2483 = vmatpush2.bf16.msra.mxu0 0
    %2484 = vmatprep.subr.bf16.mxu0 0
    %2485 = vmatpush2.bf16.msra.mxu0 0
    %2486 = vmatprep.subr.bf16.mxu0 0
    %2487 = vmatpush2.bf16.msra.mxu0 0
    %2488 = vmatprep.subr.bf16.mxu0 0
    %2489 = vmatpush2.bf16.msra.mxu0 0
    %2490 = vmatprep.mubr.bf16.mxu0 0
    %2491 = vmatmul.mubr.bf16.gmra.mxu0 %v203
    %v2492 = vpop.f32.mrf.mxu0
    %v2493 = vadd.f32 0.0, %v2492
    %v2494 = vpop.f32.mrf.mxu0
    %v2495 = vadd.f32 0.0, %v2494
    %v2496 = vpop.f32.mrf.mxu0
    %v2497 = vadd.f32 0.0, %v2496
    %v2498 = vpop.f32.mrf.mxu0
    %v2499 = vadd.f32 0.0, %v2498
    %2500 = vmatprep.mubr.bf16.mxu0 0
    %2501 = vmatmul.mubr.bf16.gmra.mxu0 %v204
    %v2502 = vpop.f32.mrf.mxu0
    %v2503 = vadd.f32 0.0, %v2502
    %v2504 = vpop.f32.mrf.mxu0
    %v2505 = vadd.f32 0.0, %v2504
    %v2506 = vpop.f32.mrf.mxu0
    %v2507 = vadd.f32 0.0, %v2506
    %v2508 = vpop.f32.mrf.mxu0
    %v2509 = vadd.f32 0.0, %v2508
    %2510 = vmatprep.mubr.bf16.mxu0 0
    %2511 = vmatmul.mubr.bf16.gmra.mxu0 %v205
    %v2512 = vpop.f32.mrf.mxu0
    %v2513 = vadd.f32 0.0, %v2512
    %v2514 = vpop.f32.mrf.mxu0
    %v2515 = vadd.f32 0.0, %v2514
    %v2516 = vpop.f32.mrf.mxu0
    %v2517 = vadd.f32 0.0, %v2516
    %v2518 = vpop.f32.mrf.mxu0
    %v2519 = vadd.f32 0.0, %v2518
    %2520 = vmatprep.mubr.bf16.mxu0 0
    %2521 = vmatmul.mubr.bf16.gmra.mxu0 %v206
    %v2522 = vpop.f32.mrf.mxu0
    %v2523 = vadd.f32 0.0, %v2522
    %v2524 = vpop.f32.mrf.mxu0
    %v2525 = vadd.f32 0.0, %v2524
    %v2526 = vpop.f32.mrf.mxu0
    %v2527 = vadd.f32 0.0, %v2526
    %v2528 = vpop.f32.mrf.mxu0
    %v2529 = vadd.f32 0.0, %v2528
    %2530 = vmatprep.mubr.bf16.mxu0 0
    %2531 = vmatmul.mubr.bf16.gmra.mxu0 %v207
    %v2532 = vpop.f32.mrf.mxu0
    %v2533 = vadd.f32 0.0, %v2532
    %v2534 = vpop.f32.mrf.mxu0
    %v2535 = vadd.f32 0.0, %v2534
    %v2536 = vpop.f32.mrf.mxu0
    %v2537 = vadd.f32 0.0, %v2536
    %v2538 = vpop.f32.mrf.mxu0
    %v2539 = vadd.f32 0.0, %v2538
    %2540 = vmatprep.mubr.bf16.mxu0 0
    %2541 = vmatmul.mubr.bf16.gmra.mxu0 %v208
    %v2542 = vpop.f32.mrf.mxu0
    %v2543 = vadd.f32 0.0, %v2542
    %v2544 = vpop.f32.mrf.mxu0
    %v2545 = vadd.f32 0.0, %v2544
    %v2546 = vpop.f32.mrf.mxu0
    %v2547 = vadd.f32 0.0, %v2546
    %v2548 = vpop.f32.mrf.mxu0
    %v2549 = vadd.f32 0.0, %v2548
    %2550 = vmatprep.mubr.bf16.mxu0 0
    %2551 = vmatmul.mubr.bf16.gmra.mxu0 %v209
    %v2552 = vpop.f32.mrf.mxu0
    %v2553 = vadd.f32 0.0, %v2552
    %v2554 = vpop.f32.mrf.mxu0
    %v2555 = vadd.f32 0.0, %v2554
    %v2556 = vpop.f32.mrf.mxu0
    %v2557 = vadd.f32 0.0, %v2556
    %v2558 = vpop.f32.mrf.mxu0
    %v2559 = vadd.f32 0.0, %v2558
    %2560 = vmatprep.mubr.bf16.mxu0 0
    %2561 = vmatmul.mubr.bf16.gmra.mxu0 %v210
    %v2562 = vpop.f32.mrf.mxu0
    %v2563 = vadd.f32 0.0, %v2562
    %v2564 = vpop.f32.mrf.mxu0
    %v2565 = vadd.f32 0.0, %v2564
    %v2566 = vpop.f32.mrf.mxu0
    %v2567 = vadd.f32 0.0, %v2566
    %v2568 = vpop.f32.mrf.mxu0
    %v2569 = vadd.f32 0.0, %v2568
    %2570 = vmatprep.mubr.bf16.mxu0 0
    %2571 = vmatmul.mubr.bf16.gmra.mxu0 %v211
    %v2572 = vpop.f32.mrf.mxu0
    %v2573 = vadd.f32 0.0, %v2572
    %v2574 = vpop.f32.mrf.mxu0
    %v2575 = vadd.f32 0.0, %v2574
    %v2576 = vpop.f32.mrf.mxu0
    %v2577 = vadd.f32 0.0, %v2576
    %v2578 = vpop.f32.mrf.mxu0
    %v2579 = vadd.f32 0.0, %v2578
    %2580 = vmatprep.mubr.bf16.mxu0 0
    %2581 = vmatmul.mubr.bf16.gmra.mxu0 %v212
    %v2582 = vpop.f32.mrf.mxu0
    %v2583 = vadd.f32 0.0, %v2582
    %v2584 = vpop.f32.mrf.mxu0
    %v2585 = vadd.f32 0.0, %v2584
    %v2586 = vpop.f32.mrf.mxu0
    %v2587 = vadd.f32 0.0, %v2586
    %v2588 = vpop.f32.mrf.mxu0
    %v2589 = vadd.f32 0.0, %v2588
    %2590 = vmatprep.mubr.bf16.mxu0 0
    %2591 = vmatmul.mubr.bf16.gmra.mxu0 %v213
    %v2592 = vpop.f32.mrf.mxu0
    %v2593 = vadd.f32 0.0, %v2592
    %v2594 = vpop.f32.mrf.mxu0
    %v2595 = vadd.f32 0.0, %v2594
    %v2596 = vpop.f32.mrf.mxu0
    %v2597 = vadd.f32 0.0, %v2596
    %v2598 = vpop.f32.mrf.mxu0
    %v2599 = vadd.f32 0.0, %v2598
    %2600 = vmatprep.mubr.bf16.mxu0 0
    %2601 = vmatmul.mubr.bf16.gmra.mxu0 %v214
    %v2602 = vpop.f32.mrf.mxu0
    %v2603 = vadd.f32 0.0, %v2602
    %v2604 = vpop.f32.mrf.mxu0
    %v2605 = vadd.f32 0.0, %v2604
    %v2606 = vpop.f32.mrf.mxu0
    %v2607 = vadd.f32 0.0, %v2606
    %v2608 = vpop.f32.mrf.mxu0
    %v2609 = vadd.f32 0.0, %v2608
    %2610 = vmatprep.mubr.bf16.mxu0 0
    %2611 = vmatmul.mubr.bf16.gmra.mxu0 %v215
    %v2612 = vpop.f32.mrf.mxu0
    %v2613 = vadd.f32 0.0, %v2612
    %v2614 = vpop.f32.mrf.mxu0
    %v2615 = vadd.f32 0.0, %v2614
    %v2616 = vpop.f32.mrf.mxu0
    %v2617 = vadd.f32 0.0, %v2616
    %v2618 = vpop.f32.mrf.mxu0
    %v2619 = vadd.f32 0.0, %v2618
    %2620 = vmatprep.mubr.bf16.mxu0 0
    %2621 = vmatmul.mubr.bf16.gmra.mxu0 %v216
    %v2622 = vpop.f32.mrf.mxu0
    %v2623 = vadd.f32 0.0, %v2622
    %v2624 = vpop.f32.mrf.mxu0
    %v2625 = vadd.f32 0.0, %v2624
    %v2626 = vpop.f32.mrf.mxu0
    %v2627 = vadd.f32 0.0, %v2626
    %v2628 = vpop.f32.mrf.mxu0
    %v2629 = vadd.f32 0.0, %v2628
    %2630 = vmatprep.mubr.bf16.mxu0 0
    %2631 = vmatmul.mubr.bf16.gmra.mxu0 %v217
    %v2632 = vpop.f32.mrf.mxu0
    %v2633 = vadd.f32 0.0, %v2632
    %v2634 = vpop.f32.mrf.mxu0
    %v2635 = vadd.f32 0.0, %v2634
    %v2636 = vpop.f32.mrf.mxu0
    %v2637 = vadd.f32 0.0, %v2636
    %v2638 = vpop.f32.mrf.mxu0
    %v2639 = vadd.f32 0.0, %v2638
    %2640 = vmatprep.mubr.bf16.mxu0 0
    %2641 = vmatmul.mubr.bf16.gmra.mxu0 %v218
    %v2642 = vpop.f32.mrf.mxu0
    %v2643 = vadd.f32 0.0, %v2642
    %v2644 = vpop.f32.mrf.mxu0
    %v2645 = vadd.f32 0.0, %v2644
    %v2646 = vpop.f32.mrf.mxu0
    %v2647 = vadd.f32 0.0, %v2646
    %v2648 = vpop.f32.mrf.mxu0
    %v2649 = vadd.f32 0.0, %v2648
    %2650 = vdwg.mxu0
    %v2651 = vrot.slane %v2493, 5
    %v2652 = vrot.slane %v2495, 5
    %v2653 = vrot.slane %v2497, 5
    %v2654 = vrot.slane %v2499, 5
    %v2655 = vrot.slane %v2503, 5
    %v2656 = vrot.slane %v2505, 5
    %v2657 = vrot.slane %v2507, 5
    %v2658 = vrot.slane %v2509, 5
    %v2659 = vrot.slane %v2513, 5
    %v2660 = vrot.slane %v2515, 5
    %v2661 = vrot.slane %v2517, 5
    %v2662 = vrot.slane %v2519, 5
    %v2663 = vrot.slane %v2523, 5
    %v2664 = vrot.slane %v2525, 5
    %v2665 = vrot.slane %v2527, 5
    %v2666 = vrot.slane %v2529, 5
    %v2667 = vrot.slane %v2533, 5
    %v2668 = vrot.slane %v2535, 5
    %v2669 = vrot.slane %v2537, 5
    %v2670 = vrot.slane %v2539, 5
    %v2671 = vrot.slane %v2543, 5
    %v2672 = vrot.slane %v2545, 5
    %v2673 = vrot.slane %v2547, 5
    %v2674 = vrot.slane %v2549, 5
    %v2675 = vrot.slane %v2553, 5
    %v2676 = vrot.slane %v2555, 5
    %v2677 = vrot.slane %v2557, 5
    %v2678 = vrot.slane %v2559, 5
    %v2679 = vrot.slane %v2563, 5
    %v2680 = vrot.slane %v2565, 5
    %v2681 = vrot.slane %v2567, 5
    %v2682 = vrot.slane %v2569, 5
    %v2683 = vrot.slane %v2573, 5
    %v2684 = vrot.slane %v2575, 5
    %v2685 = vrot.slane %v2577, 5
    %v2686 = vrot.slane %v2579, 5
    %v2687 = vrot.slane %v2583, 5
    %v2688 = vrot.slane %v2585, 5
    %v2689 = vrot.slane %v2587, 5
    %v2690 = vrot.slane %v2589, 5
    %v2691 = vrot.slane %v2593, 5
    %v2692 = vrot.slane %v2595, 5
    %v2693 = vrot.slane %v2597, 5
    %v2694 = vrot.slane %v2599, 5
    %v2695 = vrot.slane %v2603, 5
    %v2696 = vrot.slane %v2605, 5
    %v2697 = vrot.slane %v2607, 5
    %v2698 = vrot.slane %v2609, 5
    %v2699 = vrot.slane %v2613, 5
    %v2700 = vrot.slane %v2615, 5
    %v2701 = vrot.slane %v2617, 5
    %v2702 = vrot.slane %v2619, 5
    %v2703 = vrot.slane %v2623, 5
    %v2704 = vrot.slane %v2625, 5
    %v2705 = vrot.slane %v2627, 5
    %v2706 = vrot.slane %v2629, 5
    %v2707 = vrot.slane %v2633, 5
    %v2708 = vrot.slane %v2635, 5
    %v2709 = vrot.slane %v2637, 5
    %v2710 = vrot.slane %v2639, 5
    %v2711 = vrot.slane %v2643, 5
    %v2712 = vrot.slane %v2645, 5
    %v2713 = vrot.slane %v2647, 5
    %v2714 = vrot.slane %v2649, 5
    %vm2715 = vcmp.lt.s32.totalorder %v573, 3
    %v2716 = vsel %vm2715, %v2711, %v2713
    %v2717 = vsel %vm2715, %v2712, %v2714
    %v2718 = vsel %vm2715, %v2709, %v2711
    %v2719 = vsel %vm2715, %v2710, %v2712
    %v2720 = vsel %vm2715, %v2707, %v2709
    %v2721 = vsel %vm2715, %v2708, %v2710
    %v2722 = vsel %vm2715, %v2705, %v2707
    %v2723 = vsel %vm2715, %v2706, %v2708
    %v2724 = vsel %vm2715, %v2703, %v2705
    %v2725 = vsel %vm2715, %v2704, %v2706
    %v2726 = vsel %vm2715, %v2701, %v2703
    %v2727 = vsel %vm2715, %v2702, %v2704
    %v2728 = vsel %vm2715, %v2699, %v2701
    %v2729 = vsel %vm2715, %v2700, %v2702
    %v2730 = vsel %vm2715, %v2697, %v2699
    %v2731 = vsel %vm2715, %v2698, %v2700
    %v2732 = vsel %vm2715, %v2695, %v2697
    %v2733 = vsel %vm2715, %v2696, %v2698
    %v2734 = vsel %vm2715, %v2693, %v2695
    %v2735 = vsel %vm2715, %v2694, %v2696
    %v2736 = vsel %vm2715, %v2691, %v2693
    %v2737 = vsel %vm2715, %v2692, %v2694
    %v2738 = vsel %vm2715, %v2689, %v2691
    %v2739 = vsel %vm2715, %v2690, %v2692
    %v2740 = vsel %vm2715, %v2687, %v2689
    %v2741 = vsel %vm2715, %v2688, %v2690
    %v2742 = vsel %vm2715, %v2685, %v2687
    %v2743 = vsel %vm2715, %v2686, %v2688
    %v2744 = vsel %vm2715, %v2683, %v2685
    %v2745 = vsel %vm2715, %v2684, %v2686
    %v2746 = vsel %vm2715, %v2681, %v2683
    %v2747 = vsel %vm2715, %v2682, %v2684
    %v2748 = vsel %vm2715, %v2679, %v2681
    %v2749 = vsel %vm2715, %v2680, %v2682
    %v2750 = vsel %vm2715, %v2677, %v2679
    %v2751 = vsel %vm2715, %v2678, %v2680
    %v2752 = vsel %vm2715, %v2675, %v2677
    %v2753 = vsel %vm2715, %v2676, %v2678
    %v2754 = vsel %vm2715, %v2673, %v2675
    %v2755 = vsel %vm2715, %v2674, %v2676
    %v2756 = vsel %vm2715, %v2671, %v2673
    %v2757 = vsel %vm2715, %v2672, %v2674
    %v2758 = vsel %vm2715, %v2669, %v2671
    %v2759 = vsel %vm2715, %v2670, %v2672
    %v2760 = vsel %vm2715, %v2667, %v2669
    %v2761 = vsel %vm2715, %v2668, %v2670
    %v2762 = vsel %vm2715, %v2665, %v2667
    %v2763 = vsel %vm2715, %v2666, %v2668
    %v2764 = vsel %vm2715, %v2663, %v2665
    %v2765 = vsel %vm2715, %v2664, %v2666
    %v2766 = vsel %vm2715, %v2661, %v2663
    %v2767 = vsel %vm2715, %v2662, %v2664
    %v2768 = vsel %vm2715, %v2659, %v2661
    %v2769 = vsel %vm2715, %v2660, %v2662
    %v2770 = vsel %vm2715, %v2657, %v2659
    %v2771 = vsel %vm2715, %v2658, %v2660
    %v2772 = vsel %vm2715, %v2655, %v2657
    %v2773 = vsel %vm2715, %v2656, %v2658
    %v2774 = vsel %vm2715, %v2653, %v2655
    %v2775 = vsel %vm2715, %v2654, %v2656
    %v2776 = vsel %vm2715, %v2651, %v2653
    %v2777 = vsel %vm2715, %v2652, %v2654
    %v2778 = vsel %vm2715, %v2713, %v2651
    %v2779 = vsel %vm2715, %v2714, %v2652
    %v2780 = vadd.f32 %v2297, %v2776
    %v2781 = vadd.f32 %v2298, %v2777
    %v2782 = vadd.f32 %v2299, %v2774
    %v2783 = vadd.f32 %v2300, %v2775
    %v2784 = vadd.f32 %v2301, %v2772
    %v2785 = vadd.f32 %v2302, %v2773
    %v2786 = vadd.f32 %v2303, %v2770
    %v2787 = vadd.f32 %v2304, %v2771
    %v2788 = vadd.f32 %v2305, %v2768
    %v2789 = vadd.f32 %v2306, %v2769
    %v2790 = vadd.f32 %v2307, %v2766
    %v2791 = vadd.f32 %v2308, %v2767
    %v2792 = vadd.f32 %v2309, %v2764
    %v2793 = vadd.f32 %v2310, %v2765
    %v2794 = vadd.f32 %v2311, %v2762
    %v2795 = vadd.f32 %v2312, %v2763
    %v2796 = vadd.f32 %v2313, %v2760
    %v2797 = vadd.f32 %v2314, %v2761
    %v2798 = vadd.f32 %v2315, %v2758
    %v2799 = vadd.f32 %v2316, %v2759
    %v2800 = vadd.f32 %v2317, %v2756
    %v2801 = vadd.f32 %v2318, %v2757
    %v2802 = vadd.f32 %v2319, %v2754
    %v2803 = vadd.f32 %v2320, %v2755
    %v2804 = vadd.f32 %v2321, %v2752
    %v2805 = vadd.f32 %v2322, %v2753
    %v2806 = vadd.f32 %v2323, %v2750
    %v2807 = vadd.f32 %v2324, %v2751
    %v2808 = vadd.f32 %v2325, %v2748
    %v2809 = vadd.f32 %v2326, %v2749
    %v2810 = vadd.f32 %v2327, %v2746
    %v2811 = vadd.f32 %v2328, %v2747
    %v2812 = vadd.f32 %v2329, %v2744
    %v2813 = vadd.f32 %v2330, %v2745
    %v2814 = vadd.f32 %v2331, %v2742
    %v2815 = vadd.f32 %v2332, %v2743
    %v2816 = vadd.f32 %v2333, %v2740
    %v2817 = vadd.f32 %v2334, %v2741
    %v2818 = vadd.f32 %v2335, %v2738
    %v2819 = vadd.f32 %v2336, %v2739
    %v2820 = vadd.f32 %v2337, %v2736
    %v2821 = vadd.f32 %v2338, %v2737
    %v2822 = vadd.f32 %v2339, %v2734
    %v2823 = vadd.f32 %v2340, %v2735
    %v2824 = vadd.f32 %v2341, %v2732
    %v2825 = vadd.f32 %v2342, %v2733
    %v2826 = vadd.f32 %v2343, %v2730
    %v2827 = vadd.f32 %v2344, %v2731
    %v2828 = vadd.f32 %v2345, %v2728
    %v2829 = vadd.f32 %v2346, %v2729
    %v2830 = vadd.f32 %v2347, %v2726
    %v2831 = vadd.f32 %v2348, %v2727
    %v2832 = vadd.f32 %v2349, %v2724
    %v2833 = vadd.f32 %v2350, %v2725
    %v2834 = vadd.f32 %v2351, %v2722
    %v2835 = vadd.f32 %v2352, %v2723
    %v2836 = vadd.f32 %v2353, %v2720
    %v2837 = vadd.f32 %v2354, %v2721
    %v2838 = vadd.f32 %v2355, %v2718
    %v2839 = vadd.f32 %v2356, %v2719
    %v2840 = vadd.f32 %v2357, %v2716
    %v2841 = vadd.f32 %v2358, %v2717
    %v2842 = vadd.f32 %v2359, %v2778
    %v2843 = vadd.f32 %v2360, %v2779
    %s2844 = scalar_lea.vmem [#allocation2], 768
    %v2845 = vld [vmem:[%s2844] sm:$0xff]
    %v2846 = vld [vmem:[%s2844 + $0x8] sm:$0xff]
    %v2847 = vld [vmem:[%s2844 + $0x10] sm:$0xff]
    %v2848 = vld [vmem:[%s2844 + $0x18] sm:$0xff]
    %v2849 = vld [vmem:[%s2844 + $0x20] sm:$0xff]
    %v2850 = vld [vmem:[%s2844 + $0x28] sm:$0xff]
    %v2851 = vld [vmem:[%s2844 + $0x30] sm:$0xff]
    %v2852 = vld [vmem:[%s2844 + $0x38] sm:$0xff]
    %v2853 = vld [vmem:[%s2844 + $0x40] sm:$0xff]
    %v2854 = vld [vmem:[%s2844 + $0x48] sm:$0xff]
    %v2855 = vld [vmem:[%s2844 + $0x50] sm:$0xff]
    %v2856 = vld [vmem:[%s2844 + $0x58] sm:$0xff]
    %v2857 = vld [vmem:[%s2844 + $0x60] sm:$0xff]
    %v2858 = vld [vmem:[%s2844 + $0x68] sm:$0xff]
    %v2859 = vld [vmem:[%s2844 + $0x70] sm:$0xff]
    %v2860 = vld [vmem:[%s2844 + $0x78] sm:$0xff]
    %v2877 = vunpack.c.l.b16 %v2845
    %v2878 = vunpack.c.h.b16 %v2845
    %v2879 = vunpack.c.l.b16 %v2846
    %v2880 = vunpack.c.h.b16 %v2846
    %v2881 = vunpack.c.l.b16 %v2847
    %v2882 = vunpack.c.h.b16 %v2847
    %v2883 = vunpack.c.l.b16 %v2848
    %v2884 = vunpack.c.h.b16 %v2848
    %v2885 = vunpack.c.l.b16 %v2849
    %v2886 = vunpack.c.h.b16 %v2849
    %v2887 = vunpack.c.l.b16 %v2850
    %v2888 = vunpack.c.h.b16 %v2850
    %v2889 = vunpack.c.l.b16 %v2851
    %v2890 = vunpack.c.h.b16 %v2851
    %v2891 = vunpack.c.l.b16 %v2852
    %v2892 = vunpack.c.h.b16 %v2852
    %v2893 = vunpack.c.l.b16 %v2853
    %v2894 = vunpack.c.h.b16 %v2853
    %v2895 = vunpack.c.l.b16 %v2854
    %v2896 = vunpack.c.h.b16 %v2854
    %v2897 = vunpack.c.l.b16 %v2855
    %v2898 = vunpack.c.h.b16 %v2855
    %v2899 = vunpack.c.l.b16 %v2856
    %v2900 = vunpack.c.h.b16 %v2856
    %v2901 = vunpack.c.l.b16 %v2857
    %v2902 = vunpack.c.h.b16 %v2857
    %v2903 = vunpack.c.l.b16 %v2858
    %v2904 = vunpack.c.h.b16 %v2858
    %v2905 = vunpack.c.l.b16 %v2859
    %v2906 = vunpack.c.h.b16 %v2859
    %v2907 = vunpack.c.l.b16 %v2860
    %v2908 = vunpack.c.h.b16 %v2860
    %v2909 = vpack.c.b16 %v2879, %v2877
    %v2910 = vpack.c.b16 %v2880, %v2878
    %v2911 = vpack.c.b16 %v2883, %v2881
    %v2912 = vpack.c.b16 %v2884, %v2882
    %v2913 = vpack.c.b16 %v2887, %v2885
    %v2914 = vpack.c.b16 %v2888, %v2886
    %v2915 = vpack.c.b16 %v2891, %v2889
    %v2916 = vpack.c.b16 %v2892, %v2890
    %v2917 = vpack.c.b16 %v2895, %v2893
    %v2918 = vpack.c.b16 %v2896, %v2894
    %v2919 = vpack.c.b16 %v2899, %v2897
    %v2920 = vpack.c.b16 %v2900, %v2898
    %v2921 = vpack.c.b16 %v2903, %v2901
    %v2922 = vpack.c.b16 %v2904, %v2902
    %v2923 = vpack.c.b16 %v2907, %v2905
    %v2924 = vpack.c.b16 %v2908, %v2906
    %2941 = vmatprep.subr.bf16.mxu0 %v2924
    %2942 = vmatpush1.bf16.msra.mxu0 %v2923
    %2943 = vmatprep.subr.bf16.mxu0 %v2922
    %2944 = vmatpush1.bf16.msra.mxu0 %v2921
    %2945 = vmatprep.subr.bf16.mxu0 %v2920
    %2946 = vmatpush1.bf16.msra.mxu0 %v2919
    %2947 = vmatprep.subr.bf16.mxu0 %v2918
    %2948 = vmatpush1.bf16.msra.mxu0 %v2917
    %2949 = vmatprep.subr.bf16.mxu0 %v2916
    %2950 = vmatpush1.bf16.msra.mxu0 %v2915
    %2951 = vmatprep.subr.bf16.mxu0 %v2914
    %2952 = vmatpush1.bf16.msra.mxu0 %v2913
    %2953 = vmatprep.subr.bf16.mxu0 %v2912
    %2954 = vmatpush1.bf16.msra.mxu0 %v2911
    %2955 = vmatprep.subr.bf16.mxu0 %v2910
    %2956 = vmatpush1.bf16.msra.mxu0 %v2909
    %2957 = vmatprep.subr.bf16.mxu0 0
    %2958 = vmatpush2.bf16.msra.mxu0 0
    %2959 = vmatprep.subr.bf16.mxu0 0
    %2960 = vmatpush2.bf16.msra.mxu0 0
    %2961 = vmatprep.subr.bf16.mxu0 0
    %2962 = vmatpush2.bf16.msra.mxu0 0
    %2963 = vmatprep.subr.bf16.mxu0 0
    %2964 = vmatpush2.bf16.msra.mxu0 0
    %2965 = vmatprep.subr.bf16.mxu0 0
    %2966 = vmatpush2.bf16.msra.mxu0 0
    %2967 = vmatprep.subr.bf16.mxu0 0
    %2968 = vmatpush2.bf16.msra.mxu0 0
    %2969 = vmatprep.subr.bf16.mxu0 0
    %2970 = vmatpush2.bf16.msra.mxu0 0
    %2971 = vmatprep.subr.bf16.mxu0 0
    %2972 = vmatpush2.bf16.msra.mxu0 0
    %2973 = vmatprep.mubr.bf16.mxu0 0
    %2974 = vmatmul.mubr.bf16.gmra.mxu0 %v203
    %v2975 = vpop.f32.mrf.mxu0
    %v2976 = vadd.f32 0.0, %v2975
    %v2977 = vpop.f32.mrf.mxu0
    %v2978 = vadd.f32 0.0, %v2977
    %v2979 = vpop.f32.mrf.mxu0
    %v2980 = vadd.f32 0.0, %v2979
    %v2981 = vpop.f32.mrf.mxu0
    %v2982 = vadd.f32 0.0, %v2981
    %2983 = vmatprep.mubr.bf16.mxu0 0
    %2984 = vmatmul.mubr.bf16.gmra.mxu0 %v204
    %v2985 = vpop.f32.mrf.mxu0
    %v2986 = vadd.f32 0.0, %v2985
    %v2987 = vpop.f32.mrf.mxu0
    %v2988 = vadd.f32 0.0, %v2987
    %v2989 = vpop.f32.mrf.mxu0
    %v2990 = vadd.f32 0.0, %v2989
    %v2991 = vpop.f32.mrf.mxu0
    %v2992 = vadd.f32 0.0, %v2991
    %2993 = vmatprep.mubr.bf16.mxu0 0
    %2994 = vmatmul.mubr.bf16.gmra.mxu0 %v205
    %v2995 = vpop.f32.mrf.mxu0
    %v2996 = vadd.f32 0.0, %v2995
    %v2997 = vpop.f32.mrf.mxu0
    %v2998 = vadd.f32 0.0, %v2997
    %v2999 = vpop.f32.mrf.mxu0
    %v3000 = vadd.f32 0.0, %v2999
    %v3001 = vpop.f32.mrf.mxu0
    %v3002 = vadd.f32 0.0, %v3001
    %3003 = vmatprep.mubr.bf16.mxu0 0
    %3004 = vmatmul.mubr.bf16.gmra.mxu0 %v206
    %v3005 = vpop.f32.mrf.mxu0
    %v3006 = vadd.f32 0.0, %v3005
    %v3007 = vpop.f32.mrf.mxu0
    %v3008 = vadd.f32 0.0, %v3007
    %v3009 = vpop.f32.mrf.mxu0
    %v3010 = vadd.f32 0.0, %v3009
    %v3011 = vpop.f32.mrf.mxu0
    %v3012 = vadd.f32 0.0, %v3011
    %3013 = vmatprep.mubr.bf16.mxu0 0
    %3014 = vmatmul.mubr.bf16.gmra.mxu0 %v207
    %v3015 = vpop.f32.mrf.mxu0
    %v3016 = vadd.f32 0.0, %v3015
    %v3017 = vpop.f32.mrf.mxu0
    %v3018 = vadd.f32 0.0, %v3017
    %v3019 = vpop.f32.mrf.mxu0
    %v3020 = vadd.f32 0.0, %v3019
    %v3021 = vpop.f32.mrf.mxu0
    %v3022 = vadd.f32 0.0, %v3021
    %3023 = vmatprep.mubr.bf16.mxu0 0
    %3024 = vmatmul.mubr.bf16.gmra.mxu0 %v208
    %v3025 = vpop.f32.mrf.mxu0
    %v3026 = vadd.f32 0.0, %v3025
    %v3027 = vpop.f32.mrf.mxu0
    %v3028 = vadd.f32 0.0, %v3027
    %v3029 = vpop.f32.mrf.mxu0
    %v3030 = vadd.f32 0.0, %v3029
    %v3031 = vpop.f32.mrf.mxu0
    %v3032 = vadd.f32 0.0, %v3031
    %3033 = vmatprep.mubr.bf16.mxu0 0
    %3034 = vmatmul.mubr.bf16.gmra.mxu0 %v209
    %v3035 = vpop.f32.mrf.mxu0
    %v3036 = vadd.f32 0.0, %v3035
    %v3037 = vpop.f32.mrf.mxu0
    %v3038 = vadd.f32 0.0, %v3037
    %v3039 = vpop.f32.mrf.mxu0
    %v3040 = vadd.f32 0.0, %v3039
    %v3041 = vpop.f32.mrf.mxu0
    %v3042 = vadd.f32 0.0, %v3041
    %3043 = vmatprep.mubr.bf16.mxu0 0
    %3044 = vmatmul.mubr.bf16.gmra.mxu0 %v210
    %v3045 = vpop.f32.mrf.mxu0
    %v3046 = vadd.f32 0.0, %v3045
    %v3047 = vpop.f32.mrf.mxu0
    %v3048 = vadd.f32 0.0, %v3047
    %v3049 = vpop.f32.mrf.mxu0
    %v3050 = vadd.f32 0.0, %v3049
    %v3051 = vpop.f32.mrf.mxu0
    %v3052 = vadd.f32 0.0, %v3051
    %3053 = vmatprep.mubr.bf16.mxu0 0
    %3054 = vmatmul.mubr.bf16.gmra.mxu0 %v211
    %v3055 = vpop.f32.mrf.mxu0
    %v3056 = vadd.f32 0.0, %v3055
    %v3057 = vpop.f32.mrf.mxu0
    %v3058 = vadd.f32 0.0, %v3057
    %v3059 = vpop.f32.mrf.mxu0
    %v3060 = vadd.f32 0.0, %v3059
    %v3061 = vpop.f32.mrf.mxu0
    %v3062 = vadd.f32 0.0, %v3061
    %3063 = vmatprep.mubr.bf16.mxu0 0
    %3064 = vmatmul.mubr.bf16.gmra.mxu0 %v212
    %v3065 = vpop.f32.mrf.mxu0
    %v3066 = vadd.f32 0.0, %v3065
    %v3067 = vpop.f32.mrf.mxu0
    %v3068 = vadd.f32 0.0, %v3067
    %v3069 = vpop.f32.mrf.mxu0
    %v3070 = vadd.f32 0.0, %v3069
    %v3071 = vpop.f32.mrf.mxu0
    %v3072 = vadd.f32 0.0, %v3071
    %3073 = vmatprep.mubr.bf16.mxu0 0
    %3074 = vmatmul.mubr.bf16.gmra.mxu0 %v213
    %v3075 = vpop.f32.mrf.mxu0
    %v3076 = vadd.f32 0.0, %v3075
    %v3077 = vpop.f32.mrf.mxu0
    %v3078 = vadd.f32 0.0, %v3077
    %v3079 = vpop.f32.mrf.mxu0
    %v3080 = vadd.f32 0.0, %v3079
    %v3081 = vpop.f32.mrf.mxu0
    %v3082 = vadd.f32 0.0, %v3081
    %3083 = vmatprep.mubr.bf16.mxu0 0
    %3084 = vmatmul.mubr.bf16.gmra.mxu0 %v214
    %v3085 = vpop.f32.mrf.mxu0
    %v3086 = vadd.f32 0.0, %v3085
    %v3087 = vpop.f32.mrf.mxu0
    %v3088 = vadd.f32 0.0, %v3087
    %v3089 = vpop.f32.mrf.mxu0
    %v3090 = vadd.f32 0.0, %v3089
    %v3091 = vpop.f32.mrf.mxu0
    %v3092 = vadd.f32 0.0, %v3091
    %3093 = vmatprep.mubr.bf16.mxu0 0
    %3094 = vmatmul.mubr.bf16.gmra.mxu0 %v215
    %v3095 = vpop.f32.mrf.mxu0
    %v3096 = vadd.f32 0.0, %v3095
    %v3097 = vpop.f32.mrf.mxu0
    %v3098 = vadd.f32 0.0, %v3097
    %v3099 = vpop.f32.mrf.mxu0
    %v3100 = vadd.f32 0.0, %v3099
    %v3101 = vpop.f32.mrf.mxu0
    %v3102 = vadd.f32 0.0, %v3101
    %3103 = vmatprep.mubr.bf16.mxu0 0
    %3104 = vmatmul.mubr.bf16.gmra.mxu0 %v216
    %v3105 = vpop.f32.mrf.mxu0
    %v3106 = vadd.f32 0.0, %v3105
    %v3107 = vpop.f32.mrf.mxu0
    %v3108 = vadd.f32 0.0, %v3107
    %v3109 = vpop.f32.mrf.mxu0
    %v3110 = vadd.f32 0.0, %v3109
    %v3111 = vpop.f32.mrf.mxu0
    %v3112 = vadd.f32 0.0, %v3111
    %3113 = vmatprep.mubr.bf16.mxu0 0
    %3114 = vmatmul.mubr.bf16.gmra.mxu0 %v217
    %v3115 = vpop.f32.mrf.mxu0
    %v3116 = vadd.f32 0.0, %v3115
    %v3117 = vpop.f32.mrf.mxu0
    %v3118 = vadd.f32 0.0, %v3117
    %v3119 = vpop.f32.mrf.mxu0
    %v3120 = vadd.f32 0.0, %v3119
    %v3121 = vpop.f32.mrf.mxu0
    %v3122 = vadd.f32 0.0, %v3121
    %3123 = vmatprep.mubr.bf16.mxu0 0
    %3124 = vmatmul.mubr.bf16.gmra.mxu0 %v218
    %v3125 = vpop.f32.mrf.mxu0
    %v3126 = vadd.f32 0.0, %v3125
    %v3127 = vpop.f32.mrf.mxu0
    %v3128 = vadd.f32 0.0, %v3127
    %v3129 = vpop.f32.mrf.mxu0
    %v3130 = vadd.f32 0.0, %v3129
    %v3131 = vpop.f32.mrf.mxu0
    %v3132 = vadd.f32 0.0, %v3131
    %3133 = vdwg.mxu0
    %v3134 = vrot.slane %v2976, 6
    %v3135 = vrot.slane %v2978, 6
    %v3136 = vrot.slane %v2980, 6
    %v3137 = vrot.slane %v2982, 6
    %v3138 = vrot.slane %v2986, 6
    %v3139 = vrot.slane %v2988, 6
    %v3140 = vrot.slane %v2990, 6
    %v3141 = vrot.slane %v2992, 6
    %v3142 = vrot.slane %v2996, 6
    %v3143 = vrot.slane %v2998, 6
    %v3144 = vrot.slane %v3000, 6
    %v3145 = vrot.slane %v3002, 6
    %v3146 = vrot.slane %v3006, 6
    %v3147 = vrot.slane %v3008, 6
    %v3148 = vrot.slane %v3010, 6
    %v3149 = vrot.slane %v3012, 6
    %v3150 = vrot.slane %v3016, 6
    %v3151 = vrot.slane %v3018, 6
    %v3152 = vrot.slane %v3020, 6
    %v3153 = vrot.slane %v3022, 6
    %v3154 = vrot.slane %v3026, 6
    %v3155 = vrot.slane %v3028, 6
    %v3156 = vrot.slane %v3030, 6
    %v3157 = vrot.slane %v3032, 6
    %v3158 = vrot.slane %v3036, 6
    %v3159 = vrot.slane %v3038, 6
    %v3160 = vrot.slane %v3040, 6
    %v3161 = vrot.slane %v3042, 6
    %v3162 = vrot.slane %v3046, 6
    %v3163 = vrot.slane %v3048, 6
    %v3164 = vrot.slane %v3050, 6
    %v3165 = vrot.slane %v3052, 6
    %v3166 = vrot.slane %v3056, 6
    %v3167 = vrot.slane %v3058, 6
    %v3168 = vrot.slane %v3060, 6
    %v3169 = vrot.slane %v3062, 6
    %v3170 = vrot.slane %v3066, 6
    %v3171 = vrot.slane %v3068, 6
    %v3172 = vrot.slane %v3070, 6
    %v3173 = vrot.slane %v3072, 6
    %v3174 = vrot.slane %v3076, 6
    %v3175 = vrot.slane %v3078, 6
    %v3176 = vrot.slane %v3080, 6
    %v3177 = vrot.slane %v3082, 6
    %v3178 = vrot.slane %v3086, 6
    %v3179 = vrot.slane %v3088, 6
    %v3180 = vrot.slane %v3090, 6
    %v3181 = vrot.slane %v3092, 6
    %v3182 = vrot.slane %v3096, 6
    %v3183 = vrot.slane %v3098, 6
    %v3184 = vrot.slane %v3100, 6
    %v3185 = vrot.slane %v3102, 6
    %v3186 = vrot.slane %v3106, 6
    %v3187 = vrot.slane %v3108, 6
    %v3188 = vrot.slane %v3110, 6
    %v3189 = vrot.slane %v3112, 6
    %v3190 = vrot.slane %v3116, 6
    %v3191 = vrot.slane %v3118, 6
    %v3192 = vrot.slane %v3120, 6
    %v3193 = vrot.slane %v3122, 6
    %v3194 = vrot.slane %v3126, 6
    %v3195 = vrot.slane %v3128, 6
    %v3196 = vrot.slane %v3130, 6
    %v3197 = vrot.slane %v3132, 6
    %vm3198 = vcmp.lt.s32.totalorder %v573, 2
    %v3199 = vsel %vm3198, %v3194, %v3196
    %v3200 = vsel %vm3198, %v3195, %v3197
    %v3201 = vsel %vm3198, %v3192, %v3194
    %v3202 = vsel %vm3198, %v3193, %v3195
    %v3203 = vsel %vm3198, %v3190, %v3192
    %v3204 = vsel %vm3198, %v3191, %v3193
    %v3205 = vsel %vm3198, %v3188, %v3190
    %v3206 = vsel %vm3198, %v3189, %v3191
    %v3207 = vsel %vm3198, %v3186, %v3188
    %v3208 = vsel %vm3198, %v3187, %v3189
    %v3209 = vsel %vm3198, %v3184, %v3186
    %v3210 = vsel %vm3198, %v3185, %v3187
    %v3211 = vsel %vm3198, %v3182, %v3184
    %v3212 = vsel %vm3198, %v3183, %v3185
    %v3213 = vsel %vm3198, %v3180, %v3182
    %v3214 = vsel %vm3198, %v3181, %v3183
    %v3215 = vsel %vm3198, %v3178, %v3180
    %v3216 = vsel %vm3198, %v3179, %v3181
    %v3217 = vsel %vm3198, %v3176, %v3178
    %v3218 = vsel %vm3198, %v3177, %v3179
    %v3219 = vsel %vm3198, %v3174, %v3176
    %v3220 = vsel %vm3198, %v3175, %v3177
    %v3221 = vsel %vm3198, %v3172, %v3174
    %v3222 = vsel %vm3198, %v3173, %v3175
    %v3223 = vsel %vm3198, %v3170, %v3172
    %v3224 = vsel %vm3198, %v3171, %v3173
    %v3225 = vsel %vm3198, %v3168, %v3170
    %v3226 = vsel %vm3198, %v3169, %v3171
    %v3227 = vsel %vm3198, %v3166, %v3168
    %v3228 = vsel %vm3198, %v3167, %v3169
    %v3229 = vsel %vm3198, %v3164, %v3166
    %v3230 = vsel %vm3198, %v3165, %v3167
    %v3231 = vsel %vm3198, %v3162, %v3164
    %v3232 = vsel %vm3198, %v3163, %v3165
    %v3233 = vsel %vm3198, %v3160, %v3162
    %v3234 = vsel %vm3198, %v3161, %v3163
    %v3235 = vsel %vm3198, %v3158, %v3160
    %v3236 = vsel %vm3198, %v3159, %v3161
    %v3237 = vsel %vm3198, %v3156, %v3158
    %v3238 = vsel %vm3198, %v3157, %v3159
    %v3239 = vsel %vm3198, %v3154, %v3156
    %v3240 = vsel %vm3198, %v3155, %v3157
    %v3241 = vsel %vm3198, %v3152, %v3154
    %v3242 = vsel %vm3198, %v3153, %v3155
    %v3243 = vsel %vm3198, %v3150, %v3152
    %v3244 = vsel %vm3198, %v3151, %v3153
    %v3245 = vsel %vm3198, %v3148, %v3150
    %v3246 = vsel %vm3198, %v3149, %v3151
    %v3247 = vsel %vm3198, %v3146, %v3148
    %v3248 = vsel %vm3198, %v3147, %v3149
    %v3249 = vsel %vm3198, %v3144, %v3146
    %v3250 = vsel %vm3198, %v3145, %v3147
    %v3251 = vsel %vm3198, %v3142, %v3144
    %v3252 = vsel %vm3198, %v3143, %v3145
    %v3253 = vsel %vm3198, %v3140, %v3142
    %v3254 = vsel %vm3198, %v3141, %v3143
    %v3255 = vsel %vm3198, %v3138, %v3140
    %v3256 = vsel %vm3198, %v3139, %v3141
    %v3257 = vsel %vm3198, %v3136, %v3138
    %v3258 = vsel %vm3198, %v3137, %v3139
    %v3259 = vsel %vm3198, %v3134, %v3136
    %v3260 = vsel %vm3198, %v3135, %v3137
    %v3261 = vsel %vm3198, %v3196, %v3134
    %v3262 = vsel %vm3198, %v3197, %v3135
    %v3263 = vadd.f32 %v2780, %v3259
    %v3264 = vadd.f32 %v2781, %v3260
    %v3265 = vadd.f32 %v2782, %v3257
    %v3266 = vadd.f32 %v2783, %v3258
    %v3267 = vadd.f32 %v2784, %v3255
    %v3268 = vadd.f32 %v2785, %v3256
    %v3269 = vadd.f32 %v2786, %v3253
    %v3270 = vadd.f32 %v2787, %v3254
    %v3271 = vadd.f32 %v2788, %v3251
    %v3272 = vadd.f32 %v2789, %v3252
    %v3273 = vadd.f32 %v2790, %v3249
    %v3274 = vadd.f32 %v2791, %v3250
    %v3275 = vadd.f32 %v2792, %v3247
    %v3276 = vadd.f32 %v2793, %v3248
    %v3277 = vadd.f32 %v2794, %v3245
    %v3278 = vadd.f32 %v2795, %v3246
    %v3279 = vadd.f32 %v2796, %v3243
    %v3280 = vadd.f32 %v2797, %v3244
    %v3281 = vadd.f32 %v2798, %v3241
    %v3282 = vadd.f32 %v2799, %v3242
    %v3283 = vadd.f32 %v2800, %v3239
    %v3284 = vadd.f32 %v2801, %v3240
    %v3285 = vadd.f32 %v2802, %v3237
    %v3286 = vadd.f32 %v2803, %v3238
    %v3287 = vadd.f32 %v2804, %v3235
    %v3288 = vadd.f32 %v2805, %v3236
    %v3289 = vadd.f32 %v2806, %v3233
    %v3290 = vadd.f32 %v2807, %v3234
    %v3291 = vadd.f32 %v2808, %v3231
    %v3292 = vadd.f32 %v2809, %v3232
    %v3293 = vadd.f32 %v2810, %v3229
    %v3294 = vadd.f32 %v2811, %v3230
    %v3295 = vadd.f32 %v2812, %v3227
    %v3296 = vadd.f32 %v2813, %v3228
    %v3297 = vadd.f32 %v2814, %v3225
    %v3298 = vadd.f32 %v2815, %v3226
    %v3299 = vadd.f32 %v2816, %v3223
    %v3300 = vadd.f32 %v2817, %v3224
    %v3301 = vadd.f32 %v2818, %v3221
    %v3302 = vadd.f32 %v2819, %v3222
    %v3303 = vadd.f32 %v2820, %v3219
    %v3304 = vadd.f32 %v2821, %v3220
    %v3305 = vadd.f32 %v2822, %v3217
    %v3306 = vadd.f32 %v2823, %v3218
    %v3307 = vadd.f32 %v2824, %v3215
    %v3308 = vadd.f32 %v2825, %v3216
    %v3309 = vadd.f32 %v2826, %v3213
    %v3310 = vadd.f32 %v2827, %v3214
    %v3311 = vadd.f32 %v2828, %v3211
    %v3312 = vadd.f32 %v2829, %v3212
    %v3313 = vadd.f32 %v2830, %v3209
    %v3314 = vadd.f32 %v2831, %v3210
    %v3315 = vadd.f32 %v2832, %v3207
    %v3316 = vadd.f32 %v2833, %v3208
    %v3317 = vadd.f32 %v2834, %v3205
    %v3318 = vadd.f32 %v2835, %v3206
    %v3319 = vadd.f32 %v2836, %v3203
    %v3320 = vadd.f32 %v2837, %v3204
    %v3321 = vadd.f32 %v2838, %v3201
    %v3322 = vadd.f32 %v2839, %v3202
    %v3323 = vadd.f32 %v2840, %v3199
    %v3324 = vadd.f32 %v2841, %v3200
    %v3325 = vadd.f32 %v2842, %v3261
    %v3326 = vadd.f32 %v2843, %v3262
    %v3327 = vld [vmem:[#allocation4] sm:$0x3]
    %v3329 = vlaneseq
    %v3330 = vshrl.u32 %v3329, 7
    %v3331 = vsub.s32 0, %v3330
    %v3332 = vrot.slane %v3327, %v3331
    %v3333 = vlaneseq
    %v3334 = vshrl.u32 %v3333, 7
    %v3335 = vsub.s32 1, %v3334
    %v3336 = vrot.slane %v3327, %v3335
    %v3339 = vadd.f32 %v3263, %v3332
    %v3340 = vadd.f32 %v3264, %v3336
    %v3341 = vadd.f32 %v3265, %v3332
    %v3342 = vadd.f32 %v3266, %v3336
    %v3343 = vadd.f32 %v3267, %v3332
    %v3344 = vadd.f32 %v3268, %v3336
    %v3345 = vadd.f32 %v3269, %v3332
    %v3346 = vadd.f32 %v3270, %v3336
    %v3347 = vadd.f32 %v3271, %v3332
    %v3348 = vadd.f32 %v3272, %v3336
    %v3349 = vadd.f32 %v3273, %v3332
    %v3350 = vadd.f32 %v3274, %v3336
    %v3351 = vadd.f32 %v3275, %v3332
    %v3352 = vadd.f32 %v3276, %v3336
    %v3353 = vadd.f32 %v3277, %v3332
    %v3354 = vadd.f32 %v3278, %v3336
    %v3355 = vadd.f32 %v3279, %v3332
    %v3356 = vadd.f32 %v3280, %v3336
    %v3357 = vadd.f32 %v3281, %v3332
    %v3358 = vadd.f32 %v3282, %v3336
    %v3359 = vadd.f32 %v3283, %v3332
    %v3360 = vadd.f32 %v3284, %v3336
    %v3361 = vadd.f32 %v3285, %v3332
    %v3362 = vadd.f32 %v3286, %v3336
    %v3363 = vadd.f32 %v3287, %v3332
    %v3364 = vadd.f32 %v3288, %v3336
    %v3365 = vadd.f32 %v3289, %v3332
    %v3366 = vadd.f32 %v3290, %v3336
    %v3367 = vadd.f32 %v3291, %v3332
    %v3368 = vadd.f32 %v3292, %v3336
    %v3369 = vadd.f32 %v3293, %v3332
    %v3370 = vadd.f32 %v3294, %v3336
    %v3371 = vadd.f32 %v3295, %v3332
    %v3372 = vadd.f32 %v3296, %v3336
    %v3373 = vadd.f32 %v3297, %v3332
    %v3374 = vadd.f32 %v3298, %v3336
    %v3375 = vadd.f32 %v3299, %v3332
    %v3376 = vadd.f32 %v3300, %v3336
    %v3377 = vadd.f32 %v3301, %v3332
    %v3378 = vadd.f32 %v3302, %v3336
    %v3379 = vadd.f32 %v3303, %v3332
    %v3380 = vadd.f32 %v3304, %v3336
    %v3381 = vadd.f32 %v3305, %v3332
    %v3382 = vadd.f32 %v3306, %v3336
    %v3383 = vadd.f32 %v3307, %v3332
    %v3384 = vadd.f32 %v3308, %v3336
    %v3385 = vadd.f32 %v3309, %v3332
    %v3386 = vadd.f32 %v3310, %v3336
    %v3387 = vadd.f32 %v3311, %v3332
    %v3388 = vadd.f32 %v3312, %v3336
    %v3389 = vadd.f32 %v3313, %v3332
    %v3390 = vadd.f32 %v3314, %v3336
    %v3391 = vadd.f32 %v3315, %v3332
    %v3392 = vadd.f32 %v3316, %v3336
    %v3393 = vadd.f32 %v3317, %v3332
    %v3394 = vadd.f32 %v3318, %v3336
    %v3395 = vadd.f32 %v3319, %v3332
    %v3396 = vadd.f32 %v3320, %v3336
    %v3397 = vadd.f32 %v3321, %v3332
    %v3398 = vadd.f32 %v3322, %v3336
    %v3399 = vadd.f32 %v3323, %v3332
    %v3400 = vadd.f32 %v3324, %v3336
    %v3401 = vadd.f32 %v3325, %v3332
    %v3402 = vadd.f32 %v3326, %v3336
    %v3403 = vmul.f32 %v3339, 0.1
    %v3404 = vmul.f32 %v3340, 0.1
    %v3405 = vmul.f32 %v3341, 0.1
    %v3406 = vmul.f32 %v3342, 0.1
    %v3407 = vmul.f32 %v3343, 0.1
    %v3408 = vmul.f32 %v3344, 0.1
    %v3409 = vmul.f32 %v3345, 0.1
    %v3410 = vmul.f32 %v3346, 0.1
    %v3411 = vmul.f32 %v3347, 0.1
    %v3412 = vmul.f32 %v3348, 0.1
    %v3413 = vmul.f32 %v3349, 0.1
    %v3414 = vmul.f32 %v3350, 0.1
    %v3415 = vmul.f32 %v3351, 0.1
    %v3416 = vmul.f32 %v3352, 0.1
    %v3417 = vmul.f32 %v3353, 0.1
    %v3418 = vmul.f32 %v3354, 0.1
    %v3419 = vmul.f32 %v3355, 0.1
    %v3420 = vmul.f32 %v3356, 0.1
    %v3421 = vmul.f32 %v3357, 0.1
    %v3422 = vmul.f32 %v3358, 0.1
    %v3423 = vmul.f32 %v3359, 0.1
    %v3424 = vmul.f32 %v3360, 0.1
    %v3425 = vmul.f32 %v3361, 0.1
    %v3426 = vmul.f32 %v3362, 0.1
    %v3427 = vmul.f32 %v3363, 0.1
    %v3428 = vmul.f32 %v3364, 0.1
    %v3429 = vmul.f32 %v3365, 0.1
    %v3430 = vmul.f32 %v3366, 0.1
    %v3431 = vmul.f32 %v3367, 0.1
    %v3432 = vmul.f32 %v3368, 0.1
    %v3433 = vmul.f32 %v3369, 0.1
    %v3434 = vmul.f32 %v3370, 0.1
    %v3435 = vmul.f32 %v3371, 0.1
    %v3436 = vmul.f32 %v3372, 0.1
    %v3437 = vmul.f32 %v3373, 0.1
    %v3438 = vmul.f32 %v3374, 0.1
    %v3439 = vmul.f32 %v3375, 0.1
    %v3440 = vmul.f32 %v3376, 0.1
    %v3441 = vmul.f32 %v3377, 0.1
    %v3442 = vmul.f32 %v3378, 0.1
    %v3443 = vmul.f32 %v3379, 0.1
    %v3444 = vmul.f32 %v3380, 0.1
    %v3445 = vmul.f32 %v3381, 0.1
    %v3446 = vmul.f32 %v3382, 0.1
    %v3447 = vmul.f32 %v3383, 0.1
    %v3448 = vmul.f32 %v3384, 0.1
    %v3449 = vmul.f32 %v3385, 0.1
    %v3450 = vmul.f32 %v3386, 0.1
    %v3451 = vmul.f32 %v3387, 0.1
    %v3452 = vmul.f32 %v3388, 0.1
    %v3453 = vmul.f32 %v3389, 0.1
    %v3454 = vmul.f32 %v3390, 0.1
    %v3455 = vmul.f32 %v3391, 0.1
    %v3456 = vmul.f32 %v3392, 0.1
    %v3457 = vmul.f32 %v3393, 0.1
    %v3458 = vmul.f32 %v3394, 0.1
    %v3459 = vmul.f32 %v3395, 0.1
    %v3460 = vmul.f32 %v3396, 0.1
    %v3461 = vmul.f32 %v3397, 0.1
    %v3462 = vmul.f32 %v3398, 0.1
    %v3463 = vmul.f32 %v3399, 0.1
    %v3464 = vmul.f32 %v3400, 0.1
    %v3465 = vmul.f32 %v3401, 0.1
    %v3466 = vmul.f32 %v3402, 0.1
    %v3467 = vmax.f32 %v3339, %v3403
    %v3468 = vmax.f32 %v3340, %v3404
    %v3469 = vmax.f32 %v3341, %v3405
    %v3470 = vmax.f32 %v3342, %v3406
    %v3471 = vmax.f32 %v3343, %v3407
    %v3472 = vmax.f32 %v3344, %v3408
    %v3473 = vmax.f32 %v3345, %v3409
    %v3474 = vmax.f32 %v3346, %v3410
    %v3475 = vmax.f32 %v3347, %v3411
    %v3476 = vmax.f32 %v3348, %v3412
    %v3477 = vmax.f32 %v3349, %v3413
    %v3478 = vmax.f32 %v3350, %v3414
    %v3479 = vmax.f32 %v3351, %v3415
    %v3480 = vmax.f32 %v3352, %v3416
    %v3481 = vmax.f32 %v3353, %v3417
    %v3482 = vmax.f32 %v3354, %v3418
    %v3483 = vmax.f32 %v3355, %v3419
    %v3484 = vmax.f32 %v3356, %v3420
    %v3485 = vmax.f32 %v3357, %v3421
    %v3486 = vmax.f32 %v3358, %v3422
    %v3487 = vmax.f32 %v3359, %v3423
    %v3488 = vmax.f32 %v3360, %v3424
    %v3489 = vmax.f32 %v3361, %v3425
    %v3490 = vmax.f32 %v3362, %v3426
    %v3491 = vmax.f32 %v3363, %v3427
    %v3492 = vmax.f32 %v3364, %v3428
    %v3493 = vmax.f32 %v3365, %v3429
    %v3494 = vmax.f32 %v3366, %v3430
    %v3495 = vmax.f32 %v3367, %v3431
    %v3496 = vmax.f32 %v3368, %v3432
    %v3497 = vmax.f32 %v3369, %v3433
    %v3498 = vmax.f32 %v3370, %v3434
    %v3499 = vmax.f32 %v3371, %v3435
    %v3500 = vmax.f32 %v3372, %v3436
    %v3501 = vmax.f32 %v3373, %v3437
    %v3502 = vmax.f32 %v3374, %v3438
    %v3503 = vmax.f32 %v3375, %v3439
    %v3504 = vmax.f32 %v3376, %v3440
    %v3505 = vmax.f32 %v3377, %v3441
    %v3506 = vmax.f32 %v3378, %v3442
    %v3507 = vmax.f32 %v3379, %v3443
    %v3508 = vmax.f32 %v3380, %v3444
    %v3509 = vmax.f32 %v3381, %v3445
    %v3510 = vmax.f32 %v3382, %v3446
    %v3511 = vmax.f32 %v3383, %v3447
    %v3512 = vmax.f32 %v3384, %v3448
    %v3513 = vmax.f32 %v3385, %v3449
    %v3514 = vmax.f32 %v3386, %v3450
    %v3515 = vmax.f32 %v3387, %v3451
    %v3516 = vmax.f32 %v3388, %v3452
    %v3517 = vmax.f32 %v3389, %v3453
    %v3518 = vmax.f32 %v3390, %v3454
    %v3519 = vmax.f32 %v3391, %v3455
    %v3520 = vmax.f32 %v3392, %v3456
    %v3521 = vmax.f32 %v3393, %v3457
    %v3522 = vmax.f32 %v3394, %v3458
    %v3523 = vmax.f32 %v3395, %v3459
    %v3524 = vmax.f32 %v3396, %v3460
    %v3525 = vmax.f32 %v3397, %v3461
    %v3526 = vmax.f32 %v3398, %v3462
    %v3527 = vmax.f32 %v3399, %v3463
    %v3528 = vmax.f32 %v3400, %v3464
    %v3529 = vmax.f32 %v3401, %v3465
    %v3530 = vmax.f32 %v3402, %v3466
    %v3531 = vpack.c.bf16 %v3469, %v3467
    %v3532 = vpack.c.bf16 %v3470, %v3468
    %v3533 = vpack.c.bf16 %v3473, %v3471
    %v3534 = vpack.c.bf16 %v3474, %v3472
    %v3535 = vpack.c.bf16 %v3477, %v3475
    %v3536 = vpack.c.bf16 %v3478, %v3476
    %v3537 = vpack.c.bf16 %v3481, %v3479
    %v3538 = vpack.c.bf16 %v3482, %v3480
    %v3539 = vpack.c.bf16 %v3485, %v3483
    %v3540 = vpack.c.bf16 %v3486, %v3484
    %v3541 = vpack.c.bf16 %v3489, %v3487
    %v3542 = vpack.c.bf16 %v3490, %v3488
    %v3543 = vpack.c.bf16 %v3493, %v3491
    %v3544 = vpack.c.bf16 %v3494, %v3492
    %v3545 = vpack.c.bf16 %v3497, %v3495
    %v3546 = vpack.c.bf16 %v3498, %v3496
    %v3547 = vpack.c.bf16 %v3501, %v3499
    %v3548 = vpack.c.bf16 %v3502, %v3500
    %v3549 = vpack.c.bf16 %v3505, %v3503
    %v3550 = vpack.c.bf16 %v3506, %v3504
    %v3551 = vpack.c.bf16 %v3509, %v3507
    %v3552 = vpack.c.bf16 %v3510, %v3508
    %v3553 = vpack.c.bf16 %v3513, %v3511
    %v3554 = vpack.c.bf16 %v3514, %v3512
    %v3555 = vpack.c.bf16 %v3517, %v3515
    %v3556 = vpack.c.bf16 %v3518, %v3516
    %v3557 = vpack.c.bf16 %v3521, %v3519
    %v3558 = vpack.c.bf16 %v3522, %v3520
    %v3559 = vpack.c.bf16 %v3525, %v3523
    %v3560 = vpack.c.bf16 %v3526, %v3524
    %v3561 = vpack.c.bf16 %v3529, %v3527
    %v3562 = vpack.c.bf16 %v3530, %v3528
    %v3563 = vld [vmem:[#allocation6] sm:$0xff]
    %v3564 = vld [vmem:[#allocation6 + $0x8] sm:$0xff]
    %v3565 = vld [vmem:[#allocation6 + $0x10] sm:$0xff]
    %v3566 = vld [vmem:[#allocation6 + $0x18] sm:$0xff]
    %v3567 = vld [vmem:[#allocation6 + $0x20] sm:$0xff]
    %v3568 = vld [vmem:[#allocation6 + $0x28] sm:$0xff]
    %v3569 = vld [vmem:[#allocation6 + $0x30] sm:$0xff]
    %v3570 = vld [vmem:[#allocation6 + $0x38] sm:$0xff]
    %v3571 = vld [vmem:[#allocation6 + $0x40] sm:$0xff]
    %v3572 = vld [vmem:[#allocation6 + $0x48] sm:$0xff]
    %v3573 = vld [vmem:[#allocation6 + $0x50] sm:$0xff]
    %v3574 = vld [vmem:[#allocation6 + $0x58] sm:$0xff]
    %v3575 = vld [vmem:[#allocation6 + $0x60] sm:$0xff]
    %v3576 = vld [vmem:[#allocation6 + $0x68] sm:$0xff]
    %v3577 = vld [vmem:[#allocation6 + $0x70] sm:$0xff]
    %v3578 = vld [vmem:[#allocation6 + $0x78] sm:$0xff]
    %v3579 = vld [vmem:[#allocation6 + $0x80] sm:$0xff]
    %v3580 = vld [vmem:[#allocation6 + $0x88] sm:$0xff]
    %v3581 = vld [vmem:[#allocation6 + $0x90] sm:$0xff]
    %v3582 = vld [vmem:[#allocation6 + $0x98] sm:$0xff]
    %v3583 = vld [vmem:[#allocation6 + $0xa0] sm:$0xff]
    %v3584 = vld [vmem:[#allocation6 + $0xa8] sm:$0xff]
    %v3585 = vld [vmem:[#allocation6 + $0xb0] sm:$0xff]
    %v3586 = vld [vmem:[#allocation6 + $0xb8] sm:$0xff]
    %v3587 = vld [vmem:[#allocation6 + $0xc0] sm:$0xff]
    %v3588 = vld [vmem:[#allocation6 + $0xc8] sm:$0xff]
    %v3589 = vld [vmem:[#allocation6 + $0xd0] sm:$0xff]
    %v3590 = vld [vmem:[#allocation6 + $0xd8] sm:$0xff]
    %v3591 = vld [vmem:[#allocation6 + $0xe0] sm:$0xff]
    %v3592 = vld [vmem:[#allocation6 + $0xe8] sm:$0xff]
    %v3593 = vld [vmem:[#allocation6 + $0xf0] sm:$0xff]
    %v3594 = vld [vmem:[#allocation6 + $0xf8] sm:$0xff]
    %s3595 = scalar_lea.vmem [#allocation6], 256
    %v3596 = vld [vmem:[%s3595] sm:$0xff]
    %v3597 = vld [vmem:[%s3595 + $0x8] sm:$0xff]
    %v3598 = vld [vmem:[%s3595 + $0x10] sm:$0xff]
    %v3599 = vld [vmem:[%s3595 + $0x18] sm:$0xff]
    %v3600 = vld [vmem:[%s3595 + $0x20] sm:$0xff]
    %v3601 = vld [vmem:[%s3595 + $0x28] sm:$0xff]
    %v3602 = vld [vmem:[%s3595 + $0x30] sm:$0xff]
    %v3603 = vld [vmem:[%s3595 + $0x38] sm:$0xff]
    %v3604 = vld [vmem:[%s3595 + $0x40] sm:$0xff]
    %v3605 = vld [vmem:[%s3595 + $0x48] sm:$0xff]
    %v3606 = vld [vmem:[%s3595 + $0x50] sm:$0xff]
    %v3607 = vld [vmem:[%s3595 + $0x58] sm:$0xff]
    %v3608 = vld [vmem:[%s3595 + $0x60] sm:$0xff]
    %v3609 = vld [vmem:[%s3595 + $0x68] sm:$0xff]
    %v3610 = vld [vmem:[%s3595 + $0x70] sm:$0xff]
    %v3611 = vld [vmem:[%s3595 + $0x78] sm:$0xff]
    %v3612 = vld [vmem:[%s3595 + $0x80] sm:$0xff]
    %v3613 = vld [vmem:[%s3595 + $0x88] sm:$0xff]
    %v3614 = vld [vmem:[%s3595 + $0x90] sm:$0xff]
    %v3615 = vld [vmem:[%s3595 + $0x98] sm:$0xff]
    %v3616 = vld [vmem:[%s3595 + $0xa0] sm:$0xff]
    %v3617 = vld [vmem:[%s3595 + $0xa8] sm:$0xff]
    %v3618 = vld [vmem:[%s3595 + $0xb0] sm:$0xff]
    %v3619 = vld [vmem:[%s3595 + $0xb8] sm:$0xff]
    %v3620 = vld [vmem:[%s3595 + $0xc0] sm:$0xff]
    %v3621 = vld [vmem:[%s3595 + $0xc8] sm:$0xff]
    %v3622 = vld [vmem:[%s3595 + $0xd0] sm:$0xff]
    %v3623 = vld [vmem:[%s3595 + $0xd8] sm:$0xff]
    %v3624 = vld [vmem:[%s3595 + $0xe0] sm:$0xff]
    %v3625 = vld [vmem:[%s3595 + $0xe8] sm:$0xff]
    %v3626 = vld [vmem:[%s3595 + $0xf0] sm:$0xff]
    %v3627 = vld [vmem:[%s3595 + $0xf8] sm:$0xff]
    %v3660 = vunpack.c.l.b16 %v3596
    %v3661 = vunpack.c.h.b16 %v3596
    %v3662 = vunpack.c.l.b16 %v3597
    %v3663 = vunpack.c.h.b16 %v3597
    %v3664 = vunpack.c.l.b16 %v3598
    %v3665 = vunpack.c.h.b16 %v3598
    %v3666 = vunpack.c.l.b16 %v3599
    %v3667 = vunpack.c.h.b16 %v3599
    %v3668 = vunpack.c.l.b16 %v3600
    %v3669 = vunpack.c.h.b16 %v3600
    %v3670 = vunpack.c.l.b16 %v3601
    %v3671 = vunpack.c.h.b16 %v3601
    %v3672 = vunpack.c.l.b16 %v3602
    %v3673 = vunpack.c.h.b16 %v3602
    %v3674 = vunpack.c.l.b16 %v3603
    %v3675 = vunpack.c.h.b16 %v3603
    %v3676 = vunpack.c.l.b16 %v3604
    %v3677 = vunpack.c.h.b16 %v3604
    %v3678 = vunpack.c.l.b16 %v3605
    %v3679 = vunpack.c.h.b16 %v3605
    %v3680 = vunpack.c.l.b16 %v3606
    %v3681 = vunpack.c.h.b16 %v3606
    %v3682 = vunpack.c.l.b16 %v3607
    %v3683 = vunpack.c.h.b16 %v3607
    %v3684 = vunpack.c.l.b16 %v3608
    %v3685 = vunpack.c.h.b16 %v3608
    %v3686 = vunpack.c.l.b16 %v3609
    %v3687 = vunpack.c.h.b16 %v3609
    %v3688 = vunpack.c.l.b16 %v3610
    %v3689 = vunpack.c.h.b16 %v3610
    %v3690 = vunpack.c.l.b16 %v3611
    %v3691 = vunpack.c.h.b16 %v3611
    %v3692 = vunpack.c.l.b16 %v3612
    %v3693 = vunpack.c.h.b16 %v3612
    %v3694 = vunpack.c.l.b16 %v3613
    %v3695 = vunpack.c.h.b16 %v3613
    %v3696 = vunpack.c.l.b16 %v3614
    %v3697 = vunpack.c.h.b16 %v3614
    %v3698 = vunpack.c.l.b16 %v3615
    %v3699 = vunpack.c.h.b16 %v3615
    %v3700 = vunpack.c.l.b16 %v3616
    %v3701 = vunpack.c.h.b16 %v3616
    %v3702 = vunpack.c.l.b16 %v3617
    %v3703 = vunpack.c.h.b16 %v3617
    %v3704 = vunpack.c.l.b16 %v3618
    %v3705 = vunpack.c.h.b16 %v3618
    %v3706 = vunpack.c.l.b16 %v3619
    %v3707 = vunpack.c.h.b16 %v3619
    %v3708 = vunpack.c.l.b16 %v3620
    %v3709 = vunpack.c.h.b16 %v3620
    %v3710 = vunpack.c.l.b16 %v3621
    %v3711 = vunpack.c.h.b16 %v3621
    %v3712 = vunpack.c.l.b16 %v3622
    %v3713 = vunpack.c.h.b16 %v3622
    %v3714 = vunpack.c.l.b16 %v3623
    %v3715 = vunpack.c.h.b16 %v3623
    %v3716 = vunpack.c.l.b16 %v3624
    %v3717 = vunpack.c.h.b16 %v3624
    %v3718 = vunpack.c.l.b16 %v3625
    %v3719 = vunpack.c.h.b16 %v3625
    %v3720 = vunpack.c.l.b16 %v3626
    %v3721 = vunpack.c.h.b16 %v3626
    %v3722 = vunpack.c.l.b16 %v3627
    %v3723 = vunpack.c.h.b16 %v3627
    %v3724 = vpack.c.b16 %v3662, %v3660
    %v3725 = vpack.c.b16 %v3663, %v3661
    %v3726 = vpack.c.b16 %v3666, %v3664
    %v3727 = vpack.c.b16 %v3667, %v3665
    %v3728 = vpack.c.b16 %v3670, %v3668
    %v3729 = vpack.c.b16 %v3671, %v3669
    %v3730 = vpack.c.b16 %v3674, %v3672
    %v3731 = vpack.c.b16 %v3675, %v3673
    %v3732 = vpack.c.b16 %v3678, %v3676
    %v3733 = vpack.c.b16 %v3679, %v3677
    %v3734 = vpack.c.b16 %v3682, %v3680
    %v3735 = vpack.c.b16 %v3683, %v3681
    %v3736 = vpack.c.b16 %v3686, %v3684
    %v3737 = vpack.c.b16 %v3687, %v3685
    %v3738 = vpack.c.b16 %v3690, %v3688
    %v3739 = vpack.c.b16 %v3691, %v3689
    %v3740 = vpack.c.b16 %v3694, %v3692
    %v3741 = vpack.c.b16 %v3695, %v3693
    %v3742 = vpack.c.b16 %v3698, %v3696
    %v3743 = vpack.c.b16 %v3699, %v3697
    %v3744 = vpack.c.b16 %v3702, %v3700
    %v3745 = vpack.c.b16 %v3703, %v3701
    %v3746 = vpack.c.b16 %v3706, %v3704
    %v3747 = vpack.c.b16 %v3707, %v3705
    %v3748 = vpack.c.b16 %v3710, %v3708
    %v3749 = vpack.c.b16 %v3711, %v3709
    %v3750 = vpack.c.b16 %v3714, %v3712
    %v3751 = vpack.c.b16 %v3715, %v3713
    %v3752 = vpack.c.b16 %v3718, %v3716
    %v3753 = vpack.c.b16 %v3719, %v3717
    %v3754 = vpack.c.b16 %v3722, %v3720
    %v3755 = vpack.c.b16 %v3723, %v3721
    %3788 = vmatprep.subr.bf16.mxu0 %v3739
    %3789 = vmatpush1.bf16.msra.mxu0 %v3738
    %3790 = vmatprep.subr.bf16.mxu0 %v3737
    %3791 = vmatpush1.bf16.msra.mxu0 %v3736
    %3792 = vmatprep.subr.bf16.mxu0 %v3735
    %3793 = vmatpush1.bf16.msra.mxu0 %v3734
    %3794 = vmatprep.subr.bf16.mxu0 %v3733
    %3795 = vmatpush1.bf16.msra.mxu0 %v3732
    %3796 = vmatprep.subr.bf16.mxu0 %v3731
    %3797 = vmatpush1.bf16.msra.mxu0 %v3730
    %3798 = vmatprep.subr.bf16.mxu0 %v3729
    %3799 = vmatpush1.bf16.msra.mxu0 %v3728
    %3800 = vmatprep.subr.bf16.mxu0 %v3727
    %3801 = vmatpush1.bf16.msra.mxu0 %v3726
    %3802 = vmatprep.subr.bf16.mxu0 %v3725
    %3803 = vmatpush1.bf16.msra.mxu0 %v3724
    %3804 = vmatprep.subr.bf16.mxu0 %v3755
    %3805 = vmatpush2.bf16.msra.mxu0 %v3754
    %3806 = vmatprep.subr.bf16.mxu0 %v3753
    %3807 = vmatpush2.bf16.msra.mxu0 %v3752
    %3808 = vmatprep.subr.bf16.mxu0 %v3751
    %3809 = vmatpush2.bf16.msra.mxu0 %v3750
    %3810 = vmatprep.subr.bf16.mxu0 %v3749
    %3811 = vmatpush2.bf16.msra.mxu0 %v3748
    %3812 = vmatprep.subr.bf16.mxu0 %v3747
    %3813 = vmatpush2.bf16.msra.mxu0 %v3746
    %3814 = vmatprep.subr.bf16.mxu0 %v3745
    %3815 = vmatpush2.bf16.msra.mxu0 %v3744
    %3816 = vmatprep.subr.bf16.mxu0 %v3743
    %3817 = vmatpush2.bf16.msra.mxu0 %v3742
    %3818 = vmatprep.subr.bf16.mxu0 %v3741
    %3819 = vmatpush2.bf16.msra.mxu0 %v3740
    %3820 = vmatprep.mubr.bf16.mxu0 %v3532
    %3821 = vmatmul.mubr.bf16.gmra.mxu0 %v3531
    %v3822 = vpop.f32.mrf.mxu0
    %v3823 = vadd.f32 0.0, %v3822
    %v3824 = vpop.f32.mrf.mxu0
    %v3825 = vadd.f32 0.0, %v3824
    %v3826 = vpop.f32.mrf.mxu0
    %v3827 = vadd.f32 0.0, %v3826
    %v3828 = vpop.f32.mrf.mxu0
    %v3829 = vadd.f32 0.0, %v3828
    %3830 = vmatprep.mubr.bf16.mxu0 %v3534
    %3831 = vmatmul.mubr.bf16.gmra.mxu0 %v3533
    %v3832 = vpop.f32.mrf.mxu0
    %v3833 = vadd.f32 0.0, %v3832
    %v3834 = vpop.f32.mrf.mxu0
    %v3835 = vadd.f32 0.0, %v3834
    %v3836 = vpop.f32.mrf.mxu0
    %v3837 = vadd.f32 0.0, %v3836
    %v3838 = vpop.f32.mrf.mxu0
    %v3839 = vadd.f32 0.0, %v3838
    %3840 = vmatprep.mubr.bf16.mxu0 %v3536
    %3841 = vmatmul.mubr.bf16.gmra.mxu0 %v3535
    %v3842 = vpop.f32.mrf.mxu0
    %v3843 = vadd.f32 0.0, %v3842
    %v3844 = vpop.f32.mrf.mxu0
    %v3845 = vadd.f32 0.0, %v3844
    %v3846 = vpop.f32.mrf.mxu0
    %v3847 = vadd.f32 0.0, %v3846
    %v3848 = vpop.f32.mrf.mxu0
    %v3849 = vadd.f32 0.0, %v3848
    %3850 = vmatprep.mubr.bf16.mxu0 %v3538
    %3851 = vmatmul.mubr.bf16.gmra.mxu0 %v3537
    %v3852 = vpop.f32.mrf.mxu0
    %v3853 = vadd.f32 0.0, %v3852
    %v3854 = vpop.f32.mrf.mxu0
    %v3855 = vadd.f32 0.0, %v3854
    %v3856 = vpop.f32.mrf.mxu0
    %v3857 = vadd.f32 0.0, %v3856
    %v3858 = vpop.f32.mrf.mxu0
    %v3859 = vadd.f32 0.0, %v3858
    %3860 = vmatprep.mubr.bf16.mxu0 %v3540
    %3861 = vmatmul.mubr.bf16.gmra.mxu0 %v3539
    %v3862 = vpop.f32.mrf.mxu0
    %v3863 = vadd.f32 0.0, %v3862
    %v3864 = vpop.f32.mrf.mxu0
    %v3865 = vadd.f32 0.0, %v3864
    %v3866 = vpop.f32.mrf.mxu0
    %v3867 = vadd.f32 0.0, %v3866
    %v3868 = vpop.f32.mrf.mxu0
    %v3869 = vadd.f32 0.0, %v3868
    %3870 = vmatprep.mubr.bf16.mxu0 %v3542
    %3871 = vmatmul.mubr.bf16.gmra.mxu0 %v3541
    %v3872 = vpop.f32.mrf.mxu0
    %v3873 = vadd.f32 0.0, %v3872
    %v3874 = vpop.f32.mrf.mxu0
    %v3875 = vadd.f32 0.0, %v3874
    %v3876 = vpop.f32.mrf.mxu0
    %v3877 = vadd.f32 0.0, %v3876
    %v3878 = vpop.f32.mrf.mxu0
    %v3879 = vadd.f32 0.0, %v3878
    %3880 = vmatprep.mubr.bf16.mxu0 %v3544
    %3881 = vmatmul.mubr.bf16.gmra.mxu0 %v3543
    %v3882 = vpop.f32.mrf.mxu0
    %v3883 = vadd.f32 0.0, %v3882
    %v3884 = vpop.f32.mrf.mxu0
    %v3885 = vadd.f32 0.0, %v3884
    %v3886 = vpop.f32.mrf.mxu0
    %v3887 = vadd.f32 0.0, %v3886
    %v3888 = vpop.f32.mrf.mxu0
    %v3889 = vadd.f32 0.0, %v3888
    %3890 = vmatprep.mubr.bf16.mxu0 %v3546
    %3891 = vmatmul.mubr.bf16.gmra.mxu0 %v3545
    %v3892 = vpop.f32.mrf.mxu0
    %v3893 = vadd.f32 0.0, %v3892
    %v3894 = vpop.f32.mrf.mxu0
    %v3895 = vadd.f32 0.0, %v3894
    %v3896 = vpop.f32.mrf.mxu0
    %v3897 = vadd.f32 0.0, %v3896
    %v3898 = vpop.f32.mrf.mxu0
    %v3899 = vadd.f32 0.0, %v3898
    %3900 = vmatprep.mubr.bf16.mxu0 %v3548
    %3901 = vmatmul.mubr.bf16.gmra.mxu0 %v3547
    %v3902 = vpop.f32.mrf.mxu0
    %v3903 = vadd.f32 0.0, %v3902
    %v3904 = vpop.f32.mrf.mxu0
    %v3905 = vadd.f32 0.0, %v3904
    %v3906 = vpop.f32.mrf.mxu0
    %v3907 = vadd.f32 0.0, %v3906
    %v3908 = vpop.f32.mrf.mxu0
    %v3909 = vadd.f32 0.0, %v3908
    %3910 = vmatprep.mubr.bf16.mxu0 %v3550
    %3911 = vmatmul.mubr.bf16.gmra.mxu0 %v3549
    %v3912 = vpop.f32.mrf.mxu0
    %v3913 = vadd.f32 0.0, %v3912
    %v3914 = vpop.f32.mrf.mxu0
    %v3915 = vadd.f32 0.0, %v3914
    %v3916 = vpop.f32.mrf.mxu0
    %v3917 = vadd.f32 0.0, %v3916
    %v3918 = vpop.f32.mrf.mxu0
    %v3919 = vadd.f32 0.0, %v3918
    %3920 = vmatprep.mubr.bf16.mxu0 %v3552
    %3921 = vmatmul.mubr.bf16.gmra.mxu0 %v3551
    %v3922 = vpop.f32.mrf.mxu0
    %v3923 = vadd.f32 0.0, %v3922
    %v3924 = vpop.f32.mrf.mxu0
    %v3925 = vadd.f32 0.0, %v3924
    %v3926 = vpop.f32.mrf.mxu0
    %v3927 = vadd.f32 0.0, %v3926
    %v3928 = vpop.f32.mrf.mxu0
    %v3929 = vadd.f32 0.0, %v3928
    %3930 = vmatprep.mubr.bf16.mxu0 %v3554
    %3931 = vmatmul.mubr.bf16.gmra.mxu0 %v3553
    %v3932 = vpop.f32.mrf.mxu0
    %v3933 = vadd.f32 0.0, %v3932
    %v3934 = vpop.f32.mrf.mxu0
    %v3935 = vadd.f32 0.0, %v3934
    %v3936 = vpop.f32.mrf.mxu0
    %v3937 = vadd.f32 0.0, %v3936
    %v3938 = vpop.f32.mrf.mxu0
    %v3939 = vadd.f32 0.0, %v3938
    %3940 = vmatprep.mubr.bf16.mxu0 %v3556
    %3941 = vmatmul.mubr.bf16.gmra.mxu0 %v3555
    %v3942 = vpop.f32.mrf.mxu0
    %v3943 = vadd.f32 0.0, %v3942
    %v3944 = vpop.f32.mrf.mxu0
    %v3945 = vadd.f32 0.0, %v3944
    %v3946 = vpop.f32.mrf.mxu0
    %v3947 = vadd.f32 0.0, %v3946
    %v3948 = vpop.f32.mrf.mxu0
    %v3949 = vadd.f32 0.0, %v3948
    %3950 = vmatprep.mubr.bf16.mxu0 %v3558
    %3951 = vmatmul.mubr.bf16.gmra.mxu0 %v3557
    %v3952 = vpop.f32.mrf.mxu0
    %v3953 = vadd.f32 0.0, %v3952
    %v3954 = vpop.f32.mrf.mxu0
    %v3955 = vadd.f32 0.0, %v3954
    %v3956 = vpop.f32.mrf.mxu0
    %v3957 = vadd.f32 0.0, %v3956
    %v3958 = vpop.f32.mrf.mxu0
    %v3959 = vadd.f32 0.0, %v3958
    %3960 = vmatprep.mubr.bf16.mxu0 %v3560
    %3961 = vmatmul.mubr.bf16.gmra.mxu0 %v3559
    %v3962 = vpop.f32.mrf.mxu0
    %v3963 = vadd.f32 0.0, %v3962
    %v3964 = vpop.f32.mrf.mxu0
    %v3965 = vadd.f32 0.0, %v3964
    %v3966 = vpop.f32.mrf.mxu0
    %v3967 = vadd.f32 0.0, %v3966
    %v3968 = vpop.f32.mrf.mxu0
    %v3969 = vadd.f32 0.0, %v3968
    %3970 = vmatprep.mubr.bf16.mxu0 %v3562
    %3971 = vmatmul.mubr.bf16.gmra.mxu0 %v3561
    %v3972 = vpop.f32.mrf.mxu0
    %v3973 = vadd.f32 0.0, %v3972
    %v3974 = vpop.f32.mrf.mxu0
    %v3975 = vadd.f32 0.0, %v3974
    %v3976 = vpop.f32.mrf.mxu0
    %v3977 = vadd.f32 0.0, %v3976
    %v3978 = vpop.f32.mrf.mxu0
    %v3979 = vadd.f32 0.0, %v3978
    %3980 = vdwg.mxu0
    %v3981 = vrot.slane %v3823, 3
    %v3982 = vrot.slane %v3825, 3
    %v3983 = vrot.slane %v3827, 3
    %v3984 = vrot.slane %v3829, 3
    %v3985 = vrot.slane %v3833, 3
    %v3986 = vrot.slane %v3835, 3
    %v3987 = vrot.slane %v3837, 3
    %v3988 = vrot.slane %v3839, 3
    %v3989 = vrot.slane %v3843, 3
    %v3990 = vrot.slane %v3845, 3
    %v3991 = vrot.slane %v3847, 3
    %v3992 = vrot.slane %v3849, 3
    %v3993 = vrot.slane %v3853, 3
    %v3994 = vrot.slane %v3855, 3
    %v3995 = vrot.slane %v3857, 3
    %v3996 = vrot.slane %v3859, 3
    %v3997 = vrot.slane %v3863, 3
    %v3998 = vrot.slane %v3865, 3
    %v3999 = vrot.slane %v3867, 3
    %v4000 = vrot.slane %v3869, 3
    %v4001 = vrot.slane %v3873, 3
    %v4002 = vrot.slane %v3875, 3
    %v4003 = vrot.slane %v3877, 3
    %v4004 = vrot.slane %v3879, 3
    %v4005 = vrot.slane %v3883, 3
    %v4006 = vrot.slane %v3885, 3
    %v4007 = vrot.slane %v3887, 3
    %v4008 = vrot.slane %v3889, 3
    %v4009 = vrot.slane %v3893, 3
    %v4010 = vrot.slane %v3895, 3
    %v4011 = vrot.slane %v3897, 3
    %v4012 = vrot.slane %v3899, 3
    %v4013 = vrot.slane %v3903, 3
    %v4014 = vrot.slane %v3905, 3
    %v4015 = vrot.slane %v3907, 3
    %v4016 = vrot.slane %v3909, 3
    %v4017 = vrot.slane %v3913, 3
    %v4018 = vrot.slane %v3915, 3
    %v4019 = vrot.slane %v3917, 3
    %v4020 = vrot.slane %v3919, 3
    %v4021 = vrot.slane %v3923, 3
    %v4022 = vrot.slane %v3925, 3
    %v4023 = vrot.slane %v3927, 3
    %v4024 = vrot.slane %v3929, 3
    %v4025 = vrot.slane %v3933, 3
    %v4026 = vrot.slane %v3935, 3
    %v4027 = vrot.slane %v3937, 3
    %v4028 = vrot.slane %v3939, 3
    %v4029 = vrot.slane %v3943, 3
    %v4030 = vrot.slane %v3945, 3
    %v4031 = vrot.slane %v3947, 3
    %v4032 = vrot.slane %v3949, 3
    %v4033 = vrot.slane %v3953, 3
    %v4034 = vrot.slane %v3955, 3
    %v4035 = vrot.slane %v3957, 3
    %v4036 = vrot.slane %v3959, 3
    %v4037 = vrot.slane %v3963, 3
    %v4038 = vrot.slane %v3965, 3
    %v4039 = vrot.slane %v3967, 3
    %v4040 = vrot.slane %v3969, 3
    %v4041 = vrot.slane %v3973, 3
    %v4042 = vrot.slane %v3975, 3
    %v4043 = vrot.slane %v3977, 3
    %v4044 = vrot.slane %v3979, 3
    %v4045 = vsel %vm1749, %v4041, %v4043
    %v4046 = vsel %vm1749, %v4042, %v4044
    %v4047 = vsel %vm1749, %v4039, %v4041
    %v4048 = vsel %vm1749, %v4040, %v4042
    %v4049 = vsel %vm1749, %v4037, %v4039
    %v4050 = vsel %vm1749, %v4038, %v4040
    %v4051 = vsel %vm1749, %v4035, %v4037
    %v4052 = vsel %vm1749, %v4036, %v4038
    %v4053 = vsel %vm1749, %v4033, %v4035
    %v4054 = vsel %vm1749, %v4034, %v4036
    %v4055 = vsel %vm1749, %v4031, %v4033
    %v4056 = vsel %vm1749, %v4032, %v4034
    %v4057 = vsel %vm1749, %v4029, %v4031
    %v4058 = vsel %vm1749, %v4030, %v4032
    %v4059 = vsel %vm1749, %v4027, %v4029
    %v4060 = vsel %vm1749, %v4028, %v4030
    %v4061 = vsel %vm1749, %v4025, %v4027
    %v4062 = vsel %vm1749, %v4026, %v4028
    %v4063 = vsel %vm1749, %v4023, %v4025
    %v4064 = vsel %vm1749, %v4024, %v4026
    %v4065 = vsel %vm1749, %v4021, %v4023
    %v4066 = vsel %vm1749, %v4022, %v4024
    %v4067 = vsel %vm1749, %v4019, %v4021
    %v4068 = vsel %vm1749, %v4020, %v4022
    %v4069 = vsel %vm1749, %v4017, %v4019
    %v4070 = vsel %vm1749, %v4018, %v4020
    %v4071 = vsel %vm1749, %v4015, %v4017
    %v4072 = vsel %vm1749, %v4016, %v4018
    %v4073 = vsel %vm1749, %v4013, %v4015
    %v4074 = vsel %vm1749, %v4014, %v4016
    %v4075 = vsel %vm1749, %v4011, %v4013
    %v4076 = vsel %vm1749, %v4012, %v4014
    %v4077 = vsel %vm1749, %v4009, %v4011
    %v4078 = vsel %vm1749, %v4010, %v4012
    %v4079 = vsel %vm1749, %v4007, %v4009
    %v4080 = vsel %vm1749, %v4008, %v4010
    %v4081 = vsel %vm1749, %v4005, %v4007
    %v4082 = vsel %vm1749, %v4006, %v4008
    %v4083 = vsel %vm1749, %v4003, %v4005
    %v4084 = vsel %vm1749, %v4004, %v4006
    %v4085 = vsel %vm1749, %v4001, %v4003
    %v4086 = vsel %vm1749, %v4002, %v4004
    %v4087 = vsel %vm1749, %v3999, %v4001
    %v4088 = vsel %vm1749, %v4000, %v4002
    %v4089 = vsel %vm1749, %v3997, %v3999
    %v4090 = vsel %vm1749, %v3998, %v4000
    %v4091 = vsel %vm1749, %v3995, %v3997
    %v4092 = vsel %vm1749, %v3996, %v3998
    %v4093 = vsel %vm1749, %v3993, %v3995
    %v4094 = vsel %vm1749, %v3994, %v3996
    %v4095 = vsel %vm1749, %v3991, %v3993
    %v4096 = vsel %vm1749, %v3992, %v3994
    %v4097 = vsel %vm1749, %v3989, %v3991
    %v4098 = vsel %vm1749, %v3990, %v3992
    %v4099 = vsel %vm1749, %v3987, %v3989
    %v4100 = vsel %vm1749, %v3988, %v3990
    %v4101 = vsel %vm1749, %v3985, %v3987
    %v4102 = vsel %vm1749, %v3986, %v3988
    %v4103 = vsel %vm1749, %v3983, %v3985
    %v4104 = vsel %vm1749, %v3984, %v3986
    %v4105 = vsel %vm1749, %v3981, %v3983
    %v4106 = vsel %vm1749, %v3982, %v3984
    %v4107 = vsel %vm1749, %v4043, %v3981
    %v4108 = vsel %vm1749, %v4044, %v3982
    %v4141 = vunpack.c.l.b16 %v3563
    %v4142 = vunpack.c.h.b16 %v3563
    %v4143 = vunpack.c.l.b16 %v3564
    %v4144 = vunpack.c.h.b16 %v3564
    %v4145 = vunpack.c.l.b16 %v3565
    %v4146 = vunpack.c.h.b16 %v3565
    %v4147 = vunpack.c.l.b16 %v3566
    %v4148 = vunpack.c.h.b16 %v3566
    %v4149 = vunpack.c.l.b16 %v3567
    %v4150 = vunpack.c.h.b16 %v3567
    %v4151 = vunpack.c.l.b16 %v3568
    %v4152 = vunpack.c.h.b16 %v3568
    %v4153 = vunpack.c.l.b16 %v3569
    %v4154 = vunpack.c.h.b16 %v3569
    %v4155 = vunpack.c.l.b16 %v3570
    %v4156 = vunpack.c.h.b16 %v3570
    %v4157 = vunpack.c.l.b16 %v3571
    %v4158 = vunpack.c.h.b16 %v3571
    %v4159 = vunpack.c.l.b16 %v3572
    %v4160 = vunpack.c.h.b16 %v3572
    %v4161 = vunpack.c.l.b16 %v3573
    %v4162 = vunpack.c.h.b16 %v3573
    %v4163 = vunpack.c.l.b16 %v3574
    %v4164 = vunpack.c.h.b16 %v3574
    %v4165 = vunpack.c.l.b16 %v3575
    %v4166 = vunpack.c.h.b16 %v3575
    %v4167 = vunpack.c.l.b16 %v3576
    %v4168 = vunpack.c.h.b16 %v3576
    %v4169 = vunpack.c.l.b16 %v3577
    %v4170 = vunpack.c.h.b16 %v3577
    %v4171 = vunpack.c.l.b16 %v3578
    %v4172 = vunpack.c.h.b16 %v3578
    %v4173 = vunpack.c.l.b16 %v3579
    %v4174 = vunpack.c.h.b16 %v3579
    %v4175 = vunpack.c.l.b16 %v3580
    %v4176 = vunpack.c.h.b16 %v3580
    %v4177 = vunpack.c.l.b16 %v3581
    %v4178 = vunpack.c.h.b16 %v3581
    %v4179 = vunpack.c.l.b16 %v3582
    %v4180 = vunpack.c.h.b16 %v3582
    %v4181 = vunpack.c.l.b16 %v3583
    %v4182 = vunpack.c.h.b16 %v3583
    %v4183 = vunpack.c.l.b16 %v3584
    %v4184 = vunpack.c.h.b16 %v3584
    %v4185 = vunpack.c.l.b16 %v3585
    %v4186 = vunpack.c.h.b16 %v3585
    %v4187 = vunpack.c.l.b16 %v3586
    %v4188 = vunpack.c.h.b16 %v3586
    %v4189 = vunpack.c.l.b16 %v3587
    %v4190 = vunpack.c.h.b16 %v3587
    %v4191 = vunpack.c.l.b16 %v3588
    %v4192 = vunpack.c.h.b16 %v3588
    %v4193 = vunpack.c.l.b16 %v3589
    %v4194 = vunpack.c.h.b16 %v3589
    %v4195 = vunpack.c.l.b16 %v3590
    %v4196 = vunpack.c.h.b16 %v3590
    %v4197 = vunpack.c.l.b16 %v3591
    %v4198 = vunpack.c.h.b16 %v3591
    %v4199 = vunpack.c.l.b16 %v3592
    %v4200 = vunpack.c.h.b16 %v3592
    %v4201 = vunpack.c.l.b16 %v3593
    %v4202 = vunpack.c.h.b16 %v3593
    %v4203 = vunpack.c.l.b16 %v3594
    %v4204 = vunpack.c.h.b16 %v3594
    %v4205 = vpack.c.b16 %v4143, %v4141
    %v4206 = vpack.c.b16 %v4144, %v4142
    %v4207 = vpack.c.b16 %v4147, %v4145
    %v4208 = vpack.c.b16 %v4148, %v4146
    %v4209 = vpack.c.b16 %v4151, %v4149
    %v4210 = vpack.c.b16 %v4152, %v4150
    %v4211 = vpack.c.b16 %v4155, %v4153
    %v4212 = vpack.c.b16 %v4156, %v4154
    %v4213 = vpack.c.b16 %v4159, %v4157
    %v4214 = vpack.c.b16 %v4160, %v4158
    %v4215 = vpack.c.b16 %v4163, %v4161
    %v4216 = vpack.c.b16 %v4164, %v4162
    %v4217 = vpack.c.b16 %v4167, %v4165
    %v4218 = vpack.c.b16 %v4168, %v4166
    %v4219 = vpack.c.b16 %v4171, %v4169
    %v4220 = vpack.c.b16 %v4172, %v4170
    %v4221 = vpack.c.b16 %v4175, %v4173
    %v4222 = vpack.c.b16 %v4176, %v4174
    %v4223 = vpack.c.b16 %v4179, %v4177
    %v4224 = vpack.c.b16 %v4180, %v4178
    %v4225 = vpack.c.b16 %v4183, %v4181
    %v4226 = vpack.c.b16 %v4184, %v4182
    %v4227 = vpack.c.b16 %v4187, %v4185
    %v4228 = vpack.c.b16 %v4188, %v4186
    %v4229 = vpack.c.b16 %v4191, %v4189
    %v4230 = vpack.c.b16 %v4192, %v4190
    %v4231 = vpack.c.b16 %v4195, %v4193
    %v4232 = vpack.c.b16 %v4196, %v4194
    %v4233 = vpack.c.b16 %v4199, %v4197
    %v4234 = vpack.c.b16 %v4200, %v4198
    %v4235 = vpack.c.b16 %v4203, %v4201
    %v4236 = vpack.c.b16 %v4204, %v4202
    %4269 = vmatprep.subr.bf16.mxu0 %v4220
    %4270 = vmatpush1.bf16.msra.mxu0 %v4219
    %4271 = vmatprep.subr.bf16.mxu0 %v4218
    %4272 = vmatpush1.bf16.msra.mxu0 %v4217
    %4273 = vmatprep.subr.bf16.mxu0 %v4216
    %4274 = vmatpush1.bf16.msra.mxu0 %v4215
    %4275 = vmatprep.subr.bf16.mxu0 %v4214
    %4276 = vmatpush1.bf16.msra.mxu0 %v4213
    %4277 = vmatprep.subr.bf16.mxu0 %v4212
    %4278 = vmatpush1.bf16.msra.mxu0 %v4211
    %4279 = vmatprep.subr.bf16.mxu0 %v4210
    %4280 = vmatpush1.bf16.msra.mxu0 %v4209
    %4281 = vmatprep.subr.bf16.mxu0 %v4208
    %4282 = vmatpush1.bf16.msra.mxu0 %v4207
    %4283 = vmatprep.subr.bf16.mxu0 %v4206
    %4284 = vmatpush1.bf16.msra.mxu0 %v4205
    %4285 = vmatprep.subr.bf16.mxu0 %v4236
    %4286 = vmatpush2.bf16.msra.mxu0 %v4235
    %4287 = vmatprep.subr.bf16.mxu0 %v4234
    %4288 = vmatpush2.bf16.msra.mxu0 %v4233
    %4289 = vmatprep.subr.bf16.mxu0 %v4232
    %4290 = vmatpush2.bf16.msra.mxu0 %v4231
    %4291 = vmatprep.subr.bf16.mxu0 %v4230
    %4292 = vmatpush2.bf16.msra.mxu0 %v4229
    %4293 = vmatprep.subr.bf16.mxu0 %v4228
    %4294 = vmatpush2.bf16.msra.mxu0 %v4227
    %4295 = vmatprep.subr.bf16.mxu0 %v4226
    %4296 = vmatpush2.bf16.msra.mxu0 %v4225
    %4297 = vmatprep.subr.bf16.mxu0 %v4224
    %4298 = vmatpush2.bf16.msra.mxu0 %v4223
    %4299 = vmatprep.subr.bf16.mxu0 %v4222
    %4300 = vmatpush2.bf16.msra.mxu0 %v4221
    %4301 = vmatprep.mubr.bf16.mxu0 %v3532
    %4302 = vmatmul.mubr.bf16.gmra.mxu0 %v3531
    %v4303 = vpop.f32.mrf.mxu0
    %v4304 = vadd.f32 %v4105, %v4303
    %v4305 = vpop.f32.mrf.mxu0
    %v4306 = vadd.f32 %v4106, %v4305
    %v4307 = vpop.f32.mrf.mxu0
    %v4308 = vadd.f32 %v4103, %v4307
    %v4309 = vpop.f32.mrf.mxu0
    %v4310 = vadd.f32 %v4104, %v4309
    %4311 = vmatprep.mubr.bf16.mxu0 %v3534
    %4312 = vmatmul.mubr.bf16.gmra.mxu0 %v3533
    %v4313 = vpop.f32.mrf.mxu0
    %v4314 = vadd.f32 %v4101, %v4313
    %v4315 = vpop.f32.mrf.mxu0
    %v4316 = vadd.f32 %v4102, %v4315
    %v4317 = vpop.f32.mrf.mxu0
    %v4318 = vadd.f32 %v4099, %v4317
    %v4319 = vpop.f32.mrf.mxu0
    %v4320 = vadd.f32 %v4100, %v4319
    %4321 = vmatprep.mubr.bf16.mxu0 %v3536
    %4322 = vmatmul.mubr.bf16.gmra.mxu0 %v3535
    %v4323 = vpop.f32.mrf.mxu0
    %v4324 = vadd.f32 %v4097, %v4323
    %v4325 = vpop.f32.mrf.mxu0
    %v4326 = vadd.f32 %v4098, %v4325
    %v4327 = vpop.f32.mrf.mxu0
    %v4328 = vadd.f32 %v4095, %v4327
    %v4329 = vpop.f32.mrf.mxu0
    %v4330 = vadd.f32 %v4096, %v4329
    %4331 = vmatprep.mubr.bf16.mxu0 %v3538
    %4332 = vmatmul.mubr.bf16.gmra.mxu0 %v3537
    %v4333 = vpop.f32.mrf.mxu0
    %v4334 = vadd.f32 %v4093, %v4333
    %v4335 = vpop.f32.mrf.mxu0
    %v4336 = vadd.f32 %v4094, %v4335
    %v4337 = vpop.f32.mrf.mxu0
    %v4338 = vadd.f32 %v4091, %v4337
    %v4339 = vpop.f32.mrf.mxu0
    %v4340 = vadd.f32 %v4092, %v4339
    %4341 = vmatprep.mubr.bf16.mxu0 %v3540
    %4342 = vmatmul.mubr.bf16.gmra.mxu0 %v3539
    %v4343 = vpop.f32.mrf.mxu0
    %v4344 = vadd.f32 %v4089, %v4343
    %v4345 = vpop.f32.mrf.mxu0
    %v4346 = vadd.f32 %v4090, %v4345
    %v4347 = vpop.f32.mrf.mxu0
    %v4348 = vadd.f32 %v4087, %v4347
    %v4349 = vpop.f32.mrf.mxu0
    %v4350 = vadd.f32 %v4088, %v4349
    %4351 = vmatprep.mubr.bf16.mxu0 %v3542
    %4352 = vmatmul.mubr.bf16.gmra.mxu0 %v3541
    %v4353 = vpop.f32.mrf.mxu0
    %v4354 = vadd.f32 %v4085, %v4353
    %v4355 = vpop.f32.mrf.mxu0
    %v4356 = vadd.f32 %v4086, %v4355
    %v4357 = vpop.f32.mrf.mxu0
    %v4358 = vadd.f32 %v4083, %v4357
    %v4359 = vpop.f32.mrf.mxu0
    %v4360 = vadd.f32 %v4084, %v4359
    %4361 = vmatprep.mubr.bf16.mxu0 %v3544
    %4362 = vmatmul.mubr.bf16.gmra.mxu0 %v3543
    %v4363 = vpop.f32.mrf.mxu0
    %v4364 = vadd.f32 %v4081, %v4363
    %v4365 = vpop.f32.mrf.mxu0
    %v4366 = vadd.f32 %v4082, %v4365
    %v4367 = vpop.f32.mrf.mxu0
    %v4368 = vadd.f32 %v4079, %v4367
    %v4369 = vpop.f32.mrf.mxu0
    %v4370 = vadd.f32 %v4080, %v4369
    %4371 = vmatprep.mubr.bf16.mxu0 %v3546
    %4372 = vmatmul.mubr.bf16.gmra.mxu0 %v3545
    %v4373 = vpop.f32.mrf.mxu0
    %v4374 = vadd.f32 %v4077, %v4373
    %v4375 = vpop.f32.mrf.mxu0
    %v4376 = vadd.f32 %v4078, %v4375
    %v4377 = vpop.f32.mrf.mxu0
    %v4378 = vadd.f32 %v4075, %v4377
    %v4379 = vpop.f32.mrf.mxu0
    %v4380 = vadd.f32 %v4076, %v4379
    %4381 = vmatprep.mubr.bf16.mxu0 %v3548
    %4382 = vmatmul.mubr.bf16.gmra.mxu0 %v3547
    %v4383 = vpop.f32.mrf.mxu0
    %v4384 = vadd.f32 %v4073, %v4383
    %v4385 = vpop.f32.mrf.mxu0
    %v4386 = vadd.f32 %v4074, %v4385
    %v4387 = vpop.f32.mrf.mxu0
    %v4388 = vadd.f32 %v4071, %v4387
    %v4389 = vpop.f32.mrf.mxu0
    %v4390 = vadd.f32 %v4072, %v4389
    %4391 = vmatprep.mubr.bf16.mxu0 %v3550
    %4392 = vmatmul.mubr.bf16.gmra.mxu0 %v3549
    %v4393 = vpop.f32.mrf.mxu0
    %v4394 = vadd.f32 %v4069, %v4393
    %v4395 = vpop.f32.mrf.mxu0
    %v4396 = vadd.f32 %v4070, %v4395
    %v4397 = vpop.f32.mrf.mxu0
    %v4398 = vadd.f32 %v4067, %v4397
    %v4399 = vpop.f32.mrf.mxu0
    %v4400 = vadd.f32 %v4068, %v4399
    %4401 = vmatprep.mubr.bf16.mxu0 %v3552
    %4402 = vmatmul.mubr.bf16.gmra.mxu0 %v3551
    %v4403 = vpop.f32.mrf.mxu0
    %v4404 = vadd.f32 %v4065, %v4403
    %v4405 = vpop.f32.mrf.mxu0
    %v4406 = vadd.f32 %v4066, %v4405
    %v4407 = vpop.f32.mrf.mxu0
    %v4408 = vadd.f32 %v4063, %v4407
    %v4409 = vpop.f32.mrf.mxu0
    %v4410 = vadd.f32 %v4064, %v4409
    %4411 = vmatprep.mubr.bf16.mxu0 %v3554
    %4412 = vmatmul.mubr.bf16.gmra.mxu0 %v3553
    %v4413 = vpop.f32.mrf.mxu0
    %v4414 = vadd.f32 %v4061, %v4413
    %v4415 = vpop.f32.mrf.mxu0
    %v4416 = vadd.f32 %v4062, %v4415
    %v4417 = vpop.f32.mrf.mxu0
    %v4418 = vadd.f32 %v4059, %v4417
    %v4419 = vpop.f32.mrf.mxu0
    %v4420 = vadd.f32 %v4060, %v4419
    %4421 = vmatprep.mubr.bf16.mxu0 %v3556
    %4422 = vmatmul.mubr.bf16.gmra.mxu0 %v3555
    %v4423 = vpop.f32.mrf.mxu0
    %v4424 = vadd.f32 %v4057, %v4423
    %v4425 = vpop.f32.mrf.mxu0
    %v4426 = vadd.f32 %v4058, %v4425
    %v4427 = vpop.f32.mrf.mxu0
    %v4428 = vadd.f32 %v4055, %v4427
    %v4429 = vpop.f32.mrf.mxu0
    %v4430 = vadd.f32 %v4056, %v4429
    %4431 = vmatprep.mubr.bf16.mxu0 %v3558
    %4432 = vmatmul.mubr.bf16.gmra.mxu0 %v3557
    %v4433 = vpop.f32.mrf.mxu0
    %v4434 = vadd.f32 %v4053, %v4433
    %v4435 = vpop.f32.mrf.mxu0
    %v4436 = vadd.f32 %v4054, %v4435
    %v4437 = vpop.f32.mrf.mxu0
    %v4438 = vadd.f32 %v4051, %v4437
    %v4439 = vpop.f32.mrf.mxu0
    %v4440 = vadd.f32 %v4052, %v4439
    %4441 = vmatprep.mubr.bf16.mxu0 %v3560
    %4442 = vmatmul.mubr.bf16.gmra.mxu0 %v3559
    %v4443 = vpop.f32.mrf.mxu0
    %v4444 = vadd.f32 %v4049, %v4443
    %v4445 = vpop.f32.mrf.mxu0
    %v4446 = vadd.f32 %v4050, %v4445
    %v4447 = vpop.f32.mrf.mxu0
    %v4448 = vadd.f32 %v4047, %v4447
    %v4449 = vpop.f32.mrf.mxu0
    %v4450 = vadd.f32 %v4048, %v4449
    %4451 = vmatprep.mubr.bf16.mxu0 %v3562
    %4452 = vmatmul.mubr.bf16.gmra.mxu0 %v3561
    %v4453 = vpop.f32.mrf.mxu0
    %v4454 = vadd.f32 %v4045, %v4453
    %v4455 = vpop.f32.mrf.mxu0
    %v4456 = vadd.f32 %v4046, %v4455
    %v4457 = vpop.f32.mrf.mxu0
    %v4458 = vadd.f32 %v4107, %v4457
    %v4459 = vpop.f32.mrf.mxu0
    %v4460 = vadd.f32 %v4108, %v4459
    %4461 = vdwg.mxu0
    %s4462 = scalar_lea.vmem [#allocation6], 512
    %v4463 = vld [vmem:[%s4462] sm:$0xff]
    %v4464 = vld [vmem:[%s4462 + $0x8] sm:$0xff]
    %v4465 = vld [vmem:[%s4462 + $0x10] sm:$0xff]
    %v4466 = vld [vmem:[%s4462 + $0x18] sm:$0xff]
    %v4467 = vld [vmem:[%s4462 + $0x20] sm:$0xff]
    %v4468 = vld [vmem:[%s4462 + $0x28] sm:$0xff]
    %v4469 = vld [vmem:[%s4462 + $0x30] sm:$0xff]
    %v4470 = vld [vmem:[%s4462 + $0x38] sm:$0xff]
    %v4471 = vld [vmem:[%s4462 + $0x40] sm:$0xff]
    %v4472 = vld [vmem:[%s4462 + $0x48] sm:$0xff]
    %v4473 = vld [vmem:[%s4462 + $0x50] sm:$0xff]
    %v4474 = vld [vmem:[%s4462 + $0x58] sm:$0xff]
    %v4475 = vld [vmem:[%s4462 + $0x60] sm:$0xff]
    %v4476 = vld [vmem:[%s4462 + $0x68] sm:$0xff]
    %v4477 = vld [vmem:[%s4462 + $0x70] sm:$0xff]
    %v4478 = vld [vmem:[%s4462 + $0x78] sm:$0xff]
    %v4479 = vld [vmem:[%s4462 + $0x80] sm:$0xff]
    %v4480 = vld [vmem:[%s4462 + $0x88] sm:$0xff]
    %v4481 = vld [vmem:[%s4462 + $0x90] sm:$0xff]
    %v4482 = vld [vmem:[%s4462 + $0x98] sm:$0xff]
    %v4483 = vld [vmem:[%s4462 + $0xa0] sm:$0xff]
    %v4484 = vld [vmem:[%s4462 + $0xa8] sm:$0xff]
    %v4485 = vld [vmem:[%s4462 + $0xb0] sm:$0xff]
    %v4486 = vld [vmem:[%s4462 + $0xb8] sm:$0xff]
    %v4487 = vld [vmem:[%s4462 + $0xc0] sm:$0xff]
    %v4488 = vld [vmem:[%s4462 + $0xc8] sm:$0xff]
    %v4489 = vld [vmem:[%s4462 + $0xd0] sm:$0xff]
    %v4490 = vld [vmem:[%s4462 + $0xd8] sm:$0xff]
    %v4491 = vld [vmem:[%s4462 + $0xe0] sm:$0xff]
    %v4492 = vld [vmem:[%s4462 + $0xe8] sm:$0xff]
    %v4493 = vld [vmem:[%s4462 + $0xf0] sm:$0xff]
    %v4494 = vld [vmem:[%s4462 + $0xf8] sm:$0xff]
    %v4527 = vunpack.c.l.b16 %v4463
    %v4528 = vunpack.c.h.b16 %v4463
    %v4529 = vunpack.c.l.b16 %v4464
    %v4530 = vunpack.c.h.b16 %v4464
    %v4531 = vunpack.c.l.b16 %v4465
    %v4532 = vunpack.c.h.b16 %v4465
    %v4533 = vunpack.c.l.b16 %v4466
    %v4534 = vunpack.c.h.b16 %v4466
    %v4535 = vunpack.c.l.b16 %v4467
    %v4536 = vunpack.c.h.b16 %v4467
    %v4537 = vunpack.c.l.b16 %v4468
    %v4538 = vunpack.c.h.b16 %v4468
    %v4539 = vunpack.c.l.b16 %v4469
    %v4540 = vunpack.c.h.b16 %v4469
    %v4541 = vunpack.c.l.b16 %v4470
    %v4542 = vunpack.c.h.b16 %v4470
    %v4543 = vunpack.c.l.b16 %v4471
    %v4544 = vunpack.c.h.b16 %v4471
    %v4545 = vunpack.c.l.b16 %v4472
    %v4546 = vunpack.c.h.b16 %v4472
    %v4547 = vunpack.c.l.b16 %v4473
    %v4548 = vunpack.c.h.b16 %v4473
    %v4549 = vunpack.c.l.b16 %v4474
    %v4550 = vunpack.c.h.b16 %v4474
    %v4551 = vunpack.c.l.b16 %v4475
    %v4552 = vunpack.c.h.b16 %v4475
    %v4553 = vunpack.c.l.b16 %v4476
    %v4554 = vunpack.c.h.b16 %v4476
    %v4555 = vunpack.c.l.b16 %v4477
    %v4556 = vunpack.c.h.b16 %v4477
    %v4557 = vunpack.c.l.b16 %v4478
    %v4558 = vunpack.c.h.b16 %v4478
    %v4559 = vunpack.c.l.b16 %v4479
    %v4560 = vunpack.c.h.b16 %v4479
    %v4561 = vunpack.c.l.b16 %v4480
    %v4562 = vunpack.c.h.b16 %v4480
    %v4563 = vunpack.c.l.b16 %v4481
    %v4564 = vunpack.c.h.b16 %v4481
    %v4565 = vunpack.c.l.b16 %v4482
    %v4566 = vunpack.c.h.b16 %v4482
    %v4567 = vunpack.c.l.b16 %v4483
    %v4568 = vunpack.c.h.b16 %v4483
    %v4569 = vunpack.c.l.b16 %v4484
    %v4570 = vunpack.c.h.b16 %v4484
    %v4571 = vunpack.c.l.b16 %v4485
    %v4572 = vunpack.c.h.b16 %v4485
    %v4573 = vunpack.c.l.b16 %v4486
    %v4574 = vunpack.c.h.b16 %v4486
    %v4575 = vunpack.c.l.b16 %v4487
    %v4576 = vunpack.c.h.b16 %v4487
    %v4577 = vunpack.c.l.b16 %v4488
    %v4578 = vunpack.c.h.b16 %v4488
    %v4579 = vunpack.c.l.b16 %v4489
    %v4580 = vunpack.c.h.b16 %v4489
    %v4581 = vunpack.c.l.b16 %v4490
    %v4582 = vunpack.c.h.b16 %v4490
    %v4583 = vunpack.c.l.b16 %v4491
    %v4584 = vunpack.c.h.b16 %v4491
    %v4585 = vunpack.c.l.b16 %v4492
    %v4586 = vunpack.c.h.b16 %v4492
    %v4587 = vunpack.c.l.b16 %v4493
    %v4588 = vunpack.c.h.b16 %v4493
    %v4589 = vunpack.c.l.b16 %v4494
    %v4590 = vunpack.c.h.b16 %v4494
    %v4591 = vpack.c.b16 %v4529, %v4527
    %v4592 = vpack.c.b16 %v4530, %v4528
    %v4593 = vpack.c.b16 %v4533, %v4531
    %v4594 = vpack.c.b16 %v4534, %v4532
    %v4595 = vpack.c.b16 %v4537, %v4535
    %v4596 = vpack.c.b16 %v4538, %v4536
    %v4597 = vpack.c.b16 %v4541, %v4539
    %v4598 = vpack.c.b16 %v4542, %v4540
    %v4599 = vpack.c.b16 %v4545, %v4543
    %v4600 = vpack.c.b16 %v4546, %v4544
    %v4601 = vpack.c.b16 %v4549, %v4547
    %v4602 = vpack.c.b16 %v4550, %v4548
    %v4603 = vpack.c.b16 %v4553, %v4551
    %v4604 = vpack.c.b16 %v4554, %v4552
    %v4605 = vpack.c.b16 %v4557, %v4555
    %v4606 = vpack.c.b16 %v4558, %v4556
    %v4607 = vpack.c.b16 %v4561, %v4559
    %v4608 = vpack.c.b16 %v4562, %v4560
    %v4609 = vpack.c.b16 %v4565, %v4563
    %v4610 = vpack.c.b16 %v4566, %v4564
    %v4611 = vpack.c.b16 %v4569, %v4567
    %v4612 = vpack.c.b16 %v4570, %v4568
    %v4613 = vpack.c.b16 %v4573, %v4571
    %v4614 = vpack.c.b16 %v4574, %v4572
    %v4615 = vpack.c.b16 %v4577, %v4575
    %v4616 = vpack.c.b16 %v4578, %v4576
    %v4617 = vpack.c.b16 %v4581, %v4579
    %v4618 = vpack.c.b16 %v4582, %v4580
    %v4619 = vpack.c.b16 %v4585, %v4583
    %v4620 = vpack.c.b16 %v4586, %v4584
    %v4621 = vpack.c.b16 %v4589, %v4587
    %v4622 = vpack.c.b16 %v4590, %v4588
    %4655 = vmatprep.subr.bf16.mxu0 %v4606
    %4656 = vmatpush1.bf16.msra.mxu0 %v4605
    %4657 = vmatprep.subr.bf16.mxu0 %v4604
    %4658 = vmatpush1.bf16.msra.mxu0 %v4603
    %4659 = vmatprep.subr.bf16.mxu0 %v4602
    %4660 = vmatpush1.bf16.msra.mxu0 %v4601
    %4661 = vmatprep.subr.bf16.mxu0 %v4600
    %4662 = vmatpush1.bf16.msra.mxu0 %v4599
    %4663 = vmatprep.subr.bf16.mxu0 %v4598
    %4664 = vmatpush1.bf16.msra.mxu0 %v4597
    %4665 = vmatprep.subr.bf16.mxu0 %v4596
    %4666 = vmatpush1.bf16.msra.mxu0 %v4595
    %4667 = vmatprep.subr.bf16.mxu0 %v4594
    %4668 = vmatpush1.bf16.msra.mxu0 %v4593
    %4669 = vmatprep.subr.bf16.mxu0 %v4592
    %4670 = vmatpush1.bf16.msra.mxu0 %v4591
    %4671 = vmatprep.subr.bf16.mxu0 %v4622
    %4672 = vmatpush2.bf16.msra.mxu0 %v4621
    %4673 = vmatprep.subr.bf16.mxu0 %v4620
    %4674 = vmatpush2.bf16.msra.mxu0 %v4619
    %4675 = vmatprep.subr.bf16.mxu0 %v4618
    %4676 = vmatpush2.bf16.msra.mxu0 %v4617
    %4677 = vmatprep.subr.bf16.mxu0 %v4616
    %4678 = vmatpush2.bf16.msra.mxu0 %v4615
    %4679 = vmatprep.subr.bf16.mxu0 %v4614
    %4680 = vmatpush2.bf16.msra.mxu0 %v4613
    %4681 = vmatprep.subr.bf16.mxu0 %v4612
    %4682 = vmatpush2.bf16.msra.mxu0 %v4611
    %4683 = vmatprep.subr.bf16.mxu0 %v4610
    %4684 = vmatpush2.bf16.msra.mxu0 %v4609
    %4685 = vmatprep.subr.bf16.mxu0 %v4608
    %4686 = vmatpush2.bf16.msra.mxu0 %v4607
    %4687 = vmatprep.mubr.bf16.mxu0 %v3532
    %4688 = vmatmul.mubr.bf16.gmra.mxu0 %v3531
    %v4689 = vpop.f32.mrf.mxu0
    %v4690 = vadd.f32 0.0, %v4689
    %v4691 = vpop.f32.mrf.mxu0
    %v4692 = vadd.f32 0.0, %v4691
    %v4693 = vpop.f32.mrf.mxu0
    %v4694 = vadd.f32 0.0, %v4693
    %v4695 = vpop.f32.mrf.mxu0
    %v4696 = vadd.f32 0.0, %v4695
    %4697 = vmatprep.mubr.bf16.mxu0 %v3534
    %4698 = vmatmul.mubr.bf16.gmra.mxu0 %v3533
    %v4699 = vpop.f32.mrf.mxu0
    %v4700 = vadd.f32 0.0, %v4699
    %v4701 = vpop.f32.mrf.mxu0
    %v4702 = vadd.f32 0.0, %v4701
    %v4703 = vpop.f32.mrf.mxu0
    %v4704 = vadd.f32 0.0, %v4703
    %v4705 = vpop.f32.mrf.mxu0
    %v4706 = vadd.f32 0.0, %v4705
    %4707 = vmatprep.mubr.bf16.mxu0 %v3536
    %4708 = vmatmul.mubr.bf16.gmra.mxu0 %v3535
    %v4709 = vpop.f32.mrf.mxu0
    %v4710 = vadd.f32 0.0, %v4709
    %v4711 = vpop.f32.mrf.mxu0
    %v4712 = vadd.f32 0.0, %v4711
    %v4713 = vpop.f32.mrf.mxu0
    %v4714 = vadd.f32 0.0, %v4713
    %v4715 = vpop.f32.mrf.mxu0
    %v4716 = vadd.f32 0.0, %v4715
    %4717 = vmatprep.mubr.bf16.mxu0 %v3538
    %4718 = vmatmul.mubr.bf16.gmra.mxu0 %v3537
    %v4719 = vpop.f32.mrf.mxu0
    %v4720 = vadd.f32 0.0, %v4719
    %v4721 = vpop.f32.mrf.mxu0
    %v4722 = vadd.f32 0.0, %v4721
    %v4723 = vpop.f32.mrf.mxu0
    %v4724 = vadd.f32 0.0, %v4723
    %v4725 = vpop.f32.mrf.mxu0
    %v4726 = vadd.f32 0.0, %v4725
    %4727 = vmatprep.mubr.bf16.mxu0 %v3540
    %4728 = vmatmul.mubr.bf16.gmra.mxu0 %v3539
    %v4729 = vpop.f32.mrf.mxu0
    %v4730 = vadd.f32 0.0, %v4729
    %v4731 = vpop.f32.mrf.mxu0
    %v4732 = vadd.f32 0.0, %v4731
    %v4733 = vpop.f32.mrf.mxu0
    %v4734 = vadd.f32 0.0, %v4733
    %v4735 = vpop.f32.mrf.mxu0
    %v4736 = vadd.f32 0.0, %v4735
    %4737 = vmatprep.mubr.bf16.mxu0 %v3542
    %4738 = vmatmul.mubr.bf16.gmra.mxu0 %v3541
    %v4739 = vpop.f32.mrf.mxu0
    %v4740 = vadd.f32 0.0, %v4739
    %v4741 = vpop.f32.mrf.mxu0
    %v4742 = vadd.f32 0.0, %v4741
    %v4743 = vpop.f32.mrf.mxu0
    %v4744 = vadd.f32 0.0, %v4743
    %v4745 = vpop.f32.mrf.mxu0
    %v4746 = vadd.f32 0.0, %v4745
    %4747 = vmatprep.mubr.bf16.mxu0 %v3544
    %4748 = vmatmul.mubr.bf16.gmra.mxu0 %v3543
    %v4749 = vpop.f32.mrf.mxu0
    %v4750 = vadd.f32 0.0, %v4749
    %v4751 = vpop.f32.mrf.mxu0
    %v4752 = vadd.f32 0.0, %v4751
    %v4753 = vpop.f32.mrf.mxu0
    %v4754 = vadd.f32 0.0, %v4753
    %v4755 = vpop.f32.mrf.mxu0
    %v4756 = vadd.f32 0.0, %v4755
    %4757 = vmatprep.mubr.bf16.mxu0 %v3546
    %4758 = vmatmul.mubr.bf16.gmra.mxu0 %v3545
    %v4759 = vpop.f32.mrf.mxu0
    %v4760 = vadd.f32 0.0, %v4759
    %v4761 = vpop.f32.mrf.mxu0
    %v4762 = vadd.f32 0.0, %v4761
    %v4763 = vpop.f32.mrf.mxu0
    %v4764 = vadd.f32 0.0, %v4763
    %v4765 = vpop.f32.mrf.mxu0
    %v4766 = vadd.f32 0.0, %v4765
    %4767 = vmatprep.mubr.bf16.mxu0 %v3548
    %4768 = vmatmul.mubr.bf16.gmra.mxu0 %v3547
    %v4769 = vpop.f32.mrf.mxu0
    %v4770 = vadd.f32 0.0, %v4769
    %v4771 = vpop.f32.mrf.mxu0
    %v4772 = vadd.f32 0.0, %v4771
    %v4773 = vpop.f32.mrf.mxu0
    %v4774 = vadd.f32 0.0, %v4773
    %v4775 = vpop.f32.mrf.mxu0
    %v4776 = vadd.f32 0.0, %v4775
    %4777 = vmatprep.mubr.bf16.mxu0 %v3550
    %4778 = vmatmul.mubr.bf16.gmra.mxu0 %v3549
    %v4779 = vpop.f32.mrf.mxu0
    %v4780 = vadd.f32 0.0, %v4779
    %v4781 = vpop.f32.mrf.mxu0
    %v4782 = vadd.f32 0.0, %v4781
    %v4783 = vpop.f32.mrf.mxu0
    %v4784 = vadd.f32 0.0, %v4783
    %v4785 = vpop.f32.mrf.mxu0
    %v4786 = vadd.f32 0.0, %v4785
    %4787 = vmatprep.mubr.bf16.mxu0 %v3552
    %4788 = vmatmul.mubr.bf16.gmra.mxu0 %v3551
    %v4789 = vpop.f32.mrf.mxu0
    %v4790 = vadd.f32 0.0, %v4789
    %v4791 = vpop.f32.mrf.mxu0
    %v4792 = vadd.f32 0.0, %v4791
    %v4793 = vpop.f32.mrf.mxu0
    %v4794 = vadd.f32 0.0, %v4793
    %v4795 = vpop.f32.mrf.mxu0
    %v4796 = vadd.f32 0.0, %v4795
    %4797 = vmatprep.mubr.bf16.mxu0 %v3554
    %4798 = vmatmul.mubr.bf16.gmra.mxu0 %v3553
    %v4799 = vpop.f32.mrf.mxu0
    %v4800 = vadd.f32 0.0, %v4799
    %v4801 = vpop.f32.mrf.mxu0
    %v4802 = vadd.f32 0.0, %v4801
    %v4803 = vpop.f32.mrf.mxu0
    %v4804 = vadd.f32 0.0, %v4803
    %v4805 = vpop.f32.mrf.mxu0
    %v4806 = vadd.f32 0.0, %v4805
    %4807 = vmatprep.mubr.bf16.mxu0 %v3556
    %4808 = vmatmul.mubr.bf16.gmra.mxu0 %v3555
    %v4809 = vpop.f32.mrf.mxu0
    %v4810 = vadd.f32 0.0, %v4809
    %v4811 = vpop.f32.mrf.mxu0
    %v4812 = vadd.f32 0.0, %v4811
    %v4813 = vpop.f32.mrf.mxu0
    %v4814 = vadd.f32 0.0, %v4813
    %v4815 = vpop.f32.mrf.mxu0
    %v4816 = vadd.f32 0.0, %v4815
    %4817 = vmatprep.mubr.bf16.mxu0 %v3558
    %4818 = vmatmul.mubr.bf16.gmra.mxu0 %v3557
    %v4819 = vpop.f32.mrf.mxu0
    %v4820 = vadd.f32 0.0, %v4819
    %v4821 = vpop.f32.mrf.mxu0
    %v4822 = vadd.f32 0.0, %v4821
    %v4823 = vpop.f32.mrf.mxu0
    %v4824 = vadd.f32 0.0, %v4823
    %v4825 = vpop.f32.mrf.mxu0
    %v4826 = vadd.f32 0.0, %v4825
    %4827 = vmatprep.mubr.bf16.mxu0 %v3560
    %4828 = vmatmul.mubr.bf16.gmra.mxu0 %v3559
    %v4829 = vpop.f32.mrf.mxu0
    %v4830 = vadd.f32 0.0, %v4829
    %v4831 = vpop.f32.mrf.mxu0
    %v4832 = vadd.f32 0.0, %v4831
    %v4833 = vpop.f32.mrf.mxu0
    %v4834 = vadd.f32 0.0, %v4833
    %v4835 = vpop.f32.mrf.mxu0
    %v4836 = vadd.f32 0.0, %v4835
    %4837 = vmatprep.mubr.bf16.mxu0 %v3562
    %4838 = vmatmul.mubr.bf16.gmra.mxu0 %v3561
    %v4839 = vpop.f32.mrf.mxu0
    %v4840 = vadd.f32 0.0, %v4839
    %v4841 = vpop.f32.mrf.mxu0
    %v4842 = vadd.f32 0.0, %v4841
    %v4843 = vpop.f32.mrf.mxu0
    %v4844 = vadd.f32 0.0, %v4843
    %v4845 = vpop.f32.mrf.mxu0
    %v4846 = vadd.f32 0.0, %v4845
    %4847 = vdwg.mxu0
    %v4848 = vrot.slane %v4690, 6
    %v4849 = vrot.slane %v4692, 6
    %v4850 = vrot.slane %v4694, 6
    %v4851 = vrot.slane %v4696, 6
    %v4852 = vrot.slane %v4700, 6
    %v4853 = vrot.slane %v4702, 6
    %v4854 = vrot.slane %v4704, 6
    %v4855 = vrot.slane %v4706, 6
    %v4856 = vrot.slane %v4710, 6
    %v4857 = vrot.slane %v4712, 6
    %v4858 = vrot.slane %v4714, 6
    %v4859 = vrot.slane %v4716, 6
    %v4860 = vrot.slane %v4720, 6
    %v4861 = vrot.slane %v4722, 6
    %v4862 = vrot.slane %v4724, 6
    %v4863 = vrot.slane %v4726, 6
    %v4864 = vrot.slane %v4730, 6
    %v4865 = vrot.slane %v4732, 6
    %v4866 = vrot.slane %v4734, 6
    %v4867 = vrot.slane %v4736, 6
    %v4868 = vrot.slane %v4740, 6
    %v4869 = vrot.slane %v4742, 6
    %v4870 = vrot.slane %v4744, 6
    %v4871 = vrot.slane %v4746, 6
    %v4872 = vrot.slane %v4750, 6
    %v4873 = vrot.slane %v4752, 6
    %v4874 = vrot.slane %v4754, 6
    %v4875 = vrot.slane %v4756, 6
    %v4876 = vrot.slane %v4760, 6
    %v4877 = vrot.slane %v4762, 6
    %v4878 = vrot.slane %v4764, 6
    %v4879 = vrot.slane %v4766, 6
    %v4880 = vrot.slane %v4770, 6
    %v4881 = vrot.slane %v4772, 6
    %v4882 = vrot.slane %v4774, 6
    %v4883 = vrot.slane %v4776, 6
    %v4884 = vrot.slane %v4780, 6
    %v4885 = vrot.slane %v4782, 6
    %v4886 = vrot.slane %v4784, 6
    %v4887 = vrot.slane %v4786, 6
    %v4888 = vrot.slane %v4790, 6
    %v4889 = vrot.slane %v4792, 6
    %v4890 = vrot.slane %v4794, 6
    %v4891 = vrot.slane %v4796, 6
    %v4892 = vrot.slane %v4800, 6
    %v4893 = vrot.slane %v4802, 6
    %v4894 = vrot.slane %v4804, 6
    %v4895 = vrot.slane %v4806, 6
    %v4896 = vrot.slane %v4810, 6
    %v4897 = vrot.slane %v4812, 6
    %v4898 = vrot.slane %v4814, 6
    %v4899 = vrot.slane %v4816, 6
    %v4900 = vrot.slane %v4820, 6
    %v4901 = vrot.slane %v4822, 6
    %v4902 = vrot.slane %v4824, 6
    %v4903 = vrot.slane %v4826, 6
    %v4904 = vrot.slane %v4830, 6
    %v4905 = vrot.slane %v4832, 6
    %v4906 = vrot.slane %v4834, 6
    %v4907 = vrot.slane %v4836, 6
    %v4908 = vrot.slane %v4840, 6
    %v4909 = vrot.slane %v4842, 6
    %v4910 = vrot.slane %v4844, 6
    %v4911 = vrot.slane %v4846, 6
    %v4912 = vsel %vm3198, %v4908, %v4910
    %v4913 = vsel %vm3198, %v4909, %v4911
    %v4914 = vsel %vm3198, %v4906, %v4908
    %v4915 = vsel %vm3198, %v4907, %v4909
    %v4916 = vsel %vm3198, %v4904, %v4906
    %v4917 = vsel %vm3198, %v4905, %v4907
    %v4918 = vsel %vm3198, %v4902, %v4904
    %v4919 = vsel %vm3198, %v4903, %v4905
    %v4920 = vsel %vm3198, %v4900, %v4902
    %v4921 = vsel %vm3198, %v4901, %v4903
    %v4922 = vsel %vm3198, %v4898, %v4900
    %v4923 = vsel %vm3198, %v4899, %v4901
    %v4924 = vsel %vm3198, %v4896, %v4898
    %v4925 = vsel %vm3198, %v4897, %v4899
    %v4926 = vsel %vm3198, %v4894, %v4896
    %v4927 = vsel %vm3198, %v4895, %v4897
    %v4928 = vsel %vm3198, %v4892, %v4894
    %v4929 = vsel %vm3198, %v4893, %v4895
    %v4930 = vsel %vm3198, %v4890, %v4892
    %v4931 = vsel %vm3198, %v4891, %v4893
    %v4932 = vsel %vm3198, %v4888, %v4890
    %v4933 = vsel %vm3198, %v4889, %v4891
    %v4934 = vsel %vm3198, %v4886, %v4888
    %v4935 = vsel %vm3198, %v4887, %v4889
    %v4936 = vsel %vm3198, %v4884, %v4886
    %v4937 = vsel %vm3198, %v4885, %v4887
    %v4938 = vsel %vm3198, %v4882, %v4884
    %v4939 = vsel %vm3198, %v4883, %v4885
    %v4940 = vsel %vm3198, %v4880, %v4882
    %v4941 = vsel %vm3198, %v4881, %v4883
    %v4942 = vsel %vm3198, %v4878, %v4880
    %v4943 = vsel %vm3198, %v4879, %v4881
    %v4944 = vsel %vm3198, %v4876, %v4878
    %v4945 = vsel %vm3198, %v4877, %v4879
    %v4946 = vsel %vm3198, %v4874, %v4876
    %v4947 = vsel %vm3198, %v4875, %v4877
    %v4948 = vsel %vm3198, %v4872, %v4874
    %v4949 = vsel %vm3198, %v4873, %v4875
    %v4950 = vsel %vm3198, %v4870, %v4872
    %v4951 = vsel %vm3198, %v4871, %v4873
    %v4952 = vsel %vm3198, %v4868, %v4870
    %v4953 = vsel %vm3198, %v4869, %v4871
    %v4954 = vsel %vm3198, %v4866, %v4868
    %v4955 = vsel %vm3198, %v4867, %v4869
    %v4956 = vsel %vm3198, %v4864, %v4866
    %v4957 = vsel %vm3198, %v4865, %v4867
    %v4958 = vsel %vm3198, %v4862, %v4864
    %v4959 = vsel %vm3198, %v4863, %v4865
    %v4960 = vsel %vm3198, %v4860, %v4862
    %v4961 = vsel %vm3198, %v4861, %v4863
    %v4962 = vsel %vm3198, %v4858, %v4860
    %v4963 = vsel %vm3198, %v4859, %v4861
    %v4964 = vsel %vm3198, %v4856, %v4858
    %v4965 = vsel %vm3198, %v4857, %v4859
    %v4966 = vsel %vm3198, %v4854, %v4856
    %v4967 = vsel %vm3198, %v4855, %v4857
    %v4968 = vsel %vm3198, %v4852, %v4854
    %v4969 = vsel %vm3198, %v4853, %v4855
    %v4970 = vsel %vm3198, %v4850, %v4852
    %v4971 = vsel %vm3198, %v4851, %v4853
    %v4972 = vsel %vm3198, %v4848, %v4850
    %v4973 = vsel %vm3198, %v4849, %v4851
    %v4974 = vsel %vm3198, %v4910, %v4848
    %v4975 = vsel %vm3198, %v4911, %v4849
    %v4976 = vadd.f32 %v4304, %v4972
    %v4977 = vadd.f32 %v4306, %v4973
    %v4978 = vadd.f32 %v4308, %v4970
    %v4979 = vadd.f32 %v4310, %v4971
    %v4980 = vadd.f32 %v4314, %v4968
    %v4981 = vadd.f32 %v4316, %v4969
    %v4982 = vadd.f32 %v4318, %v4966
    %v4983 = vadd.f32 %v4320, %v4967
    %v4984 = vadd.f32 %v4324, %v4964
    %v4985 = vadd.f32 %v4326, %v4965
    %v4986 = vadd.f32 %v4328, %v4962
    %v4987 = vadd.f32 %v4330, %v4963
    %v4988 = vadd.f32 %v4334, %v4960
    %v4989 = vadd.f32 %v4336, %v4961
    %v4990 = vadd.f32 %v4338, %v4958
    %v4991 = vadd.f32 %v4340, %v4959
    %v4992 = vadd.f32 %v4344, %v4956
    %v4993 = vadd.f32 %v4346, %v4957
    %v4994 = vadd.f32 %v4348, %v4954
    %v4995 = vadd.f32 %v4350, %v4955
    %v4996 = vadd.f32 %v4354, %v4952
    %v4997 = vadd.f32 %v4356, %v4953
    %v4998 = vadd.f32 %v4358, %v4950
    %v4999 = vadd.f32 %v4360, %v4951
    %v5000 = vadd.f32 %v4364, %v4948
    %v5001 = vadd.f32 %v4366, %v4949
    %v5002 = vadd.f32 %v4368, %v4946
    %v5003 = vadd.f32 %v4370, %v4947
    %v5004 = vadd.f32 %v4374, %v4944
    %v5005 = vadd.f32 %v4376, %v4945
    %v5006 = vadd.f32 %v4378, %v4942
    %v5007 = vadd.f32 %v4380, %v4943
    %v5008 = vadd.f32 %v4384, %v4940
    %v5009 = vadd.f32 %v4386, %v4941
    %v5010 = vadd.f32 %v4388, %v4938
    %v5011 = vadd.f32 %v4390, %v4939
    %v5012 = vadd.f32 %v4394, %v4936
    %v5013 = vadd.f32 %v4396, %v4937
    %v5014 = vadd.f32 %v4398, %v4934
    %v5015 = vadd.f32 %v4400, %v4935
    %v5016 = vadd.f32 %v4404, %v4932
    %v5017 = vadd.f32 %v4406, %v4933
    %v5018 = vadd.f32 %v4408, %v4930
    %v5019 = vadd.f32 %v4410, %v4931
    %v5020 = vadd.f32 %v4414, %v4928
    %v5021 = vadd.f32 %v4416, %v4929
    %v5022 = vadd.f32 %v4418, %v4926
    %v5023 = vadd.f32 %v4420, %v4927
    %v5024 = vadd.f32 %v4424, %v4924
    %v5025 = vadd.f32 %v4426, %v4925
    %v5026 = vadd.f32 %v4428, %v4922
    %v5027 = vadd.f32 %v4430, %v4923
    %v5028 = vadd.f32 %v4434, %v4920
    %v5029 = vadd.f32 %v4436, %v4921
    %v5030 = vadd.f32 %v4438, %v4918
    %v5031 = vadd.f32 %v4440, %v4919
    %v5032 = vadd.f32 %v4444, %v4916
    %v5033 = vadd.f32 %v4446, %v4917
    %v5034 = vadd.f32 %v4448, %v4914
    %v5035 = vadd.f32 %v4450, %v4915
    %v5036 = vadd.f32 %v4454, %v4912
    %v5037 = vadd.f32 %v4456, %v4913
    %v5038 = vadd.f32 %v4458, %v4974
    %v5039 = vadd.f32 %v4460, %v4975
    %v5040 = vld [vmem:[#allocation7] sm:$0x3]
    %v5042 = vlaneseq
    %v5043 = vshrl.u32 %v5042, 7
    %v5044 = vsub.s32 0, %v5043
    %v5045 = vrot.slane %v5040, %v5044
    %v5046 = vlaneseq
    %v5047 = vshrl.u32 %v5046, 7
    %v5048 = vsub.s32 1, %v5047
    %v5049 = vrot.slane %v5040, %v5048
    %v5052 = vadd.f32 %v4976, %v5045
    %v5053 = vadd.f32 %v4977, %v5049
    %v5054 = vadd.f32 %v4978, %v5045
    %v5055 = vadd.f32 %v4979, %v5049
    %v5056 = vadd.f32 %v4980, %v5045
    %v5057 = vadd.f32 %v4981, %v5049
    %v5058 = vadd.f32 %v4982, %v5045
    %v5059 = vadd.f32 %v4983, %v5049
    %v5060 = vadd.f32 %v4984, %v5045
    %v5061 = vadd.f32 %v4985, %v5049
    %v5062 = vadd.f32 %v4986, %v5045
    %v5063 = vadd.f32 %v4987, %v5049
    %v5064 = vadd.f32 %v4988, %v5045
    %v5065 = vadd.f32 %v4989, %v5049
    %v5066 = vadd.f32 %v4990, %v5045
    %v5067 = vadd.f32 %v4991, %v5049
    %v5068 = vadd.f32 %v4992, %v5045
    %v5069 = vadd.f32 %v4993, %v5049
    %v5070 = vadd.f32 %v4994, %v5045
    %v5071 = vadd.f32 %v4995, %v5049
    %v5072 = vadd.f32 %v4996, %v5045
    %v5073 = vadd.f32 %v4997, %v5049
    %v5074 = vadd.f32 %v4998, %v5045
    %v5075 = vadd.f32 %v4999, %v5049
    %v5076 = vadd.f32 %v5000, %v5045
    %v5077 = vadd.f32 %v5001, %v5049
    %v5078 = vadd.f32 %v5002, %v5045
    %v5079 = vadd.f32 %v5003, %v5049
    %v5080 = vadd.f32 %v5004, %v5045
    %v5081 = vadd.f32 %v5005, %v5049
    %v5082 = vadd.f32 %v5006, %v5045
    %v5083 = vadd.f32 %v5007, %v5049
    %v5084 = vadd.f32 %v5008, %v5045
    %v5085 = vadd.f32 %v5009, %v5049
    %v5086 = vadd.f32 %v5010, %v5045
    %v5087 = vadd.f32 %v5011, %v5049
    %v5088 = vadd.f32 %v5012, %v5045
    %v5089 = vadd.f32 %v5013, %v5049
    %v5090 = vadd.f32 %v5014, %v5045
    %v5091 = vadd.f32 %v5015, %v5049
    %v5092 = vadd.f32 %v5016, %v5045
    %v5093 = vadd.f32 %v5017, %v5049
    %v5094 = vadd.f32 %v5018, %v5045
    %v5095 = vadd.f32 %v5019, %v5049
    %v5096 = vadd.f32 %v5020, %v5045
    %v5097 = vadd.f32 %v5021, %v5049
    %v5098 = vadd.f32 %v5022, %v5045
    %v5099 = vadd.f32 %v5023, %v5049
    %v5100 = vadd.f32 %v5024, %v5045
    %v5101 = vadd.f32 %v5025, %v5049
    %v5102 = vadd.f32 %v5026, %v5045
    %v5103 = vadd.f32 %v5027, %v5049
    %v5104 = vadd.f32 %v5028, %v5045
    %v5105 = vadd.f32 %v5029, %v5049
    %v5106 = vadd.f32 %v5030, %v5045
    %v5107 = vadd.f32 %v5031, %v5049
    %v5108 = vadd.f32 %v5032, %v5045
    %v5109 = vadd.f32 %v5033, %v5049
    %v5110 = vadd.f32 %v5034, %v5045
    %v5111 = vadd.f32 %v5035, %v5049
    %v5112 = vadd.f32 %v5036, %v5045
    %v5113 = vadd.f32 %v5037, %v5049
    %v5114 = vadd.f32 %v5038, %v5045
    %v5115 = vadd.f32 %v5039, %v5049
    %v5116 = vrot.slane %v3339, 3
    %v5117 = vrot.slane %v3340, 3
    %v5118 = vrot.slane %v3341, 3
    %v5119 = vrot.slane %v3342, 3
    %v5120 = vrot.slane %v3343, 3
    %v5121 = vrot.slane %v3344, 3
    %v5122 = vrot.slane %v3345, 3
    %v5123 = vrot.slane %v3346, 3
    %v5124 = vrot.slane %v3347, 3
    %v5125 = vrot.slane %v3348, 3
    %v5126 = vrot.slane %v3349, 3
    %v5127 = vrot.slane %v3350, 3
    %v5128 = vrot.slane %v3351, 3
    %v5129 = vrot.slane %v3352, 3
    %v5130 = vrot.slane %v3353, 3
    %v5131 = vrot.slane %v3354, 3
    %v5132 = vrot.slane %v3355, 3
    %v5133 = vrot.slane %v3356, 3
    %v5134 = vrot.slane %v3357, 3
    %v5135 = vrot.slane %v3358, 3
    %v5136 = vrot.slane %v3359, 3
    %v5137 = vrot.slane %v3360, 3
    %v5138 = vrot.slane %v3361, 3
    %v5139 = vrot.slane %v3362, 3
    %v5140 = vrot.slane %v3363, 3
    %v5141 = vrot.slane %v3364, 3
    %v5142 = vrot.slane %v3365, 3
    %v5143 = vrot.slane %v3366, 3
    %v5144 = vrot.slane %v3367, 3
    %v5145 = vrot.slane %v3368, 3
    %v5146 = vrot.slane %v3369, 3
    %v5147 = vrot.slane %v3370, 3
    %v5148 = vrot.slane %v3371, 3
    %v5149 = vrot.slane %v3372, 3
    %v5150 = vrot.slane %v3373, 3
    %v5151 = vrot.slane %v3374, 3
    %v5152 = vrot.slane %v3375, 3
    %v5153 = vrot.slane %v3376, 3
    %v5154 = vrot.slane %v3377, 3
    %v5155 = vrot.slane %v3378, 3
    %v5156 = vrot.slane %v3379, 3
    %v5157 = vrot.slane %v3380, 3
    %v5158 = vrot.slane %v3381, 3
    %v5159 = vrot.slane %v3382, 3
    %v5160 = vrot.slane %v3383, 3
    %v5161 = vrot.slane %v3384, 3
    %v5162 = vrot.slane %v3385, 3
    %v5163 = vrot.slane %v3386, 3
    %v5164 = vrot.slane %v3387, 3
    %v5165 = vrot.slane %v3388, 3
    %v5166 = vrot.slane %v3389, 3
    %v5167 = vrot.slane %v3390, 3
    %v5168 = vrot.slane %v3391, 3
    %v5169 = vrot.slane %v3392, 3
    %v5170 = vrot.slane %v3393, 3
    %v5171 = vrot.slane %v3394, 3
    %v5172 = vrot.slane %v3395, 3
    %v5173 = vrot.slane %v3396, 3
    %v5174 = vrot.slane %v3397, 3
    %v5175 = vrot.slane %v3398, 3
    %v5176 = vrot.slane %v3399, 3
    %v5177 = vrot.slane %v3400, 3
    %v5178 = vrot.slane %v3401, 3
    %v5179 = vrot.slane %v3402, 3
    %v5180 = vsel %vm1749, %v5176, %v5178
    %v5181 = vsel %vm1749, %v5177, %v5179
    %v5182 = vsel %vm1749, %v5174, %v5176
    %v5183 = vsel %vm1749, %v5175, %v5177
    %v5184 = vsel %vm1749, %v5172, %v5174
    %v5185 = vsel %vm1749, %v5173, %v5175
    %v5186 = vsel %vm1749, %v5170, %v5172
    %v5187 = vsel %vm1749, %v5171, %v5173
    %v5188 = vsel %vm1749, %v5168, %v5170
    %v5189 = vsel %vm1749, %v5169, %v5171
    %v5190 = vsel %vm1749, %v5166, %v5168
    %v5191 = vsel %vm1749, %v5167, %v5169
    %v5192 = vsel %vm1749, %v5164, %v5166
    %v5193 = vsel %vm1749, %v5165, %v5167
    %v5194 = vsel %vm1749, %v5162, %v5164
    %v5195 = vsel %vm1749, %v5163, %v5165
    %v5196 = vsel %vm1749, %v5160, %v5162
    %v5197 = vsel %vm1749, %v5161, %v5163
    %v5198 = vsel %vm1749, %v5158, %v5160
    %v5199 = vsel %vm1749, %v5159, %v5161
    %v5200 = vsel %vm1749, %v5156, %v5158
    %v5201 = vsel %vm1749, %v5157, %v5159
    %v5202 = vsel %vm1749, %v5154, %v5156
    %v5203 = vsel %vm1749, %v5155, %v5157
    %v5204 = vsel %vm1749, %v5152, %v5154
    %v5205 = vsel %vm1749, %v5153, %v5155
    %v5206 = vsel %vm1749, %v5150, %v5152
    %v5207 = vsel %vm1749, %v5151, %v5153
    %v5208 = vsel %vm1749, %v5148, %v5150
    %v5209 = vsel %vm1749, %v5149, %v5151
    %v5210 = vsel %vm1749, %v5146, %v5148
    %v5211 = vsel %vm1749, %v5147, %v5149
    %v5212 = vsel %vm1749, %v5144, %v5146
    %v5213 = vsel %vm1749, %v5145, %v5147
    %v5214 = vsel %vm1749, %v5142, %v5144
    %v5215 = vsel %vm1749, %v5143, %v5145
    %v5216 = vsel %vm1749, %v5140, %v5142
    %v5217 = vsel %vm1749, %v5141, %v5143
    %v5218 = vsel %vm1749, %v5138, %v5140
    %v5219 = vsel %vm1749, %v5139, %v5141
    %v5220 = vsel %vm1749, %v5136, %v5138
    %v5221 = vsel %vm1749, %v5137, %v5139
    %v5222 = vsel %vm1749, %v5134, %v5136
    %v5223 = vsel %vm1749, %v5135, %v5137
    %v5224 = vsel %vm1749, %v5132, %v5134
    %v5225 = vsel %vm1749, %v5133, %v5135
    %v5226 = vsel %vm1749, %v5130, %v5132
    %v5227 = vsel %vm1749, %v5131, %v5133
    %v5228 = vsel %vm1749, %v5128, %v5130
    %v5229 = vsel %vm1749, %v5129, %v5131
    %v5230 = vsel %vm1749, %v5126, %v5128
    %v5231 = vsel %vm1749, %v5127, %v5129
    %v5232 = vsel %vm1749, %v5124, %v5126
    %v5233 = vsel %vm1749, %v5125, %v5127
    %v5234 = vsel %vm1749, %v5122, %v5124
    %v5235 = vsel %vm1749, %v5123, %v5125
    %v5236 = vsel %vm1749, %v5120, %v5122
    %v5237 = vsel %vm1749, %v5121, %v5123
    %v5238 = vsel %vm1749, %v5118, %v5120
    %v5239 = vsel %vm1749, %v5119, %v5121
    %v5240 = vsel %vm1749, %v5116, %v5118
    %v5241 = vsel %vm1749, %v5117, %v5119
    %v5242 = vsel %vm1749, %v5178, %v5116
    %v5243 = vsel %vm1749, %v5179, %v5117
    %v5244 = vadd.f32 %v5052, %v5240
    %v5245 = vadd.f32 %v5053, %v5241
    %v5246 = vadd.f32 %v5054, %v5238
    %v5247 = vadd.f32 %v5055, %v5239
    %v5248 = vadd.f32 %v5056, %v5236
    %v5249 = vadd.f32 %v5057, %v5237
    %v5250 = vadd.f32 %v5058, %v5234
    %v5251 = vadd.f32 %v5059, %v5235
    %v5252 = vadd.f32 %v5060, %v5232
    %v5253 = vadd.f32 %v5061, %v5233
    %v5254 = vadd.f32 %v5062, %v5230
    %v5255 = vadd.f32 %v5063, %v5231
    %v5256 = vadd.f32 %v5064, %v5228
    %v5257 = vadd.f32 %v5065, %v5229
    %v5258 = vadd.f32 %v5066, %v5226
    %v5259 = vadd.f32 %v5067, %v5227
    %v5260 = vadd.f32 %v5068, %v5224
    %v5261 = vadd.f32 %v5069, %v5225
    %v5262 = vadd.f32 %v5070, %v5222
    %v5263 = vadd.f32 %v5071, %v5223
    %v5264 = vadd.f32 %v5072, %v5220
    %v5265 = vadd.f32 %v5073, %v5221
    %v5266 = vadd.f32 %v5074, %v5218
    %v5267 = vadd.f32 %v5075, %v5219
    %v5268 = vadd.f32 %v5076, %v5216
    %v5269 = vadd.f32 %v5077, %v5217
    %v5270 = vadd.f32 %v5078, %v5214
    %v5271 = vadd.f32 %v5079, %v5215
    %v5272 = vadd.f32 %v5080, %v5212
    %v5273 = vadd.f32 %v5081, %v5213
    %v5274 = vadd.f32 %v5082, %v5210
    %v5275 = vadd.f32 %v5083, %v5211
    %v5276 = vadd.f32 %v5084, %v5208
    %v5277 = vadd.f32 %v5085, %v5209
    %v5278 = vadd.f32 %v5086, %v5206
    %v5279 = vadd.f32 %v5087, %v5207
    %v5280 = vadd.f32 %v5088, %v5204
    %v5281 = vadd.f32 %v5089, %v5205
    %v5282 = vadd.f32 %v5090, %v5202
    %v5283 = vadd.f32 %v5091, %v5203
    %v5284 = vadd.f32 %v5092, %v5200
    %v5285 = vadd.f32 %v5093, %v5201
    %v5286 = vadd.f32 %v5094, %v5198
    %v5287 = vadd.f32 %v5095, %v5199
    %v5288 = vadd.f32 %v5096, %v5196
    %v5289 = vadd.f32 %v5097, %v5197
    %v5290 = vadd.f32 %v5098, %v5194
    %v5291 = vadd.f32 %v5099, %v5195
    %v5292 = vadd.f32 %v5100, %v5192
    %v5293 = vadd.f32 %v5101, %v5193
    %v5294 = vadd.f32 %v5102, %v5190
    %v5295 = vadd.f32 %v5103, %v5191
    %v5296 = vadd.f32 %v5104, %v5188
    %v5297 = vadd.f32 %v5105, %v5189
    %v5298 = vadd.f32 %v5106, %v5186
    %v5299 = vadd.f32 %v5107, %v5187
    %v5300 = vadd.f32 %v5108, %v5184
    %v5301 = vadd.f32 %v5109, %v5185
    %v5302 = vadd.f32 %v5110, %v5182
    %v5303 = vadd.f32 %v5111, %v5183
    %v5304 = vadd.f32 %v5112, %v5180
    %v5305 = vadd.f32 %v5113, %v5181
    %v5306 = vadd.f32 %v5114, %v5242
    %v5307 = vadd.f32 %v5115, %v5243
    %v5308 = vmul.f32 %v5244, 0.1
    %v5309 = vmul.f32 %v5245, 0.1
    %v5310 = vmul.f32 %v5246, 0.1
    %v5311 = vmul.f32 %v5247, 0.1
    %v5312 = vmul.f32 %v5248, 0.1
    %v5313 = vmul.f32 %v5249, 0.1
    %v5314 = vmul.f32 %v5250, 0.1
    %v5315 = vmul.f32 %v5251, 0.1
    %v5316 = vmul.f32 %v5252, 0.1
    %v5317 = vmul.f32 %v5253, 0.1
    %v5318 = vmul.f32 %v5254, 0.1
    %v5319 = vmul.f32 %v5255, 0.1
    %v5320 = vmul.f32 %v5256, 0.1
    %v5321 = vmul.f32 %v5257, 0.1
    %v5322 = vmul.f32 %v5258, 0.1
    %v5323 = vmul.f32 %v5259, 0.1
    %v5324 = vmul.f32 %v5260, 0.1
    %v5325 = vmul.f32 %v5261, 0.1
    %v5326 = vmul.f32 %v5262, 0.1
    %v5327 = vmul.f32 %v5263, 0.1
    %v5328 = vmul.f32 %v5264, 0.1
    %v5329 = vmul.f32 %v5265, 0.1
    %v5330 = vmul.f32 %v5266, 0.1
    %v5331 = vmul.f32 %v5267, 0.1
    %v5332 = vmul.f32 %v5268, 0.1
    %v5333 = vmul.f32 %v5269, 0.1
    %v5334 = vmul.f32 %v5270, 0.1
    %v5335 = vmul.f32 %v5271, 0.1
    %v5336 = vmul.f32 %v5272, 0.1
    %v5337 = vmul.f32 %v5273, 0.1
    %v5338 = vmul.f32 %v5274, 0.1
    %v5339 = vmul.f32 %v5275, 0.1
    %v5340 = vmul.f32 %v5276, 0.1
    %v5341 = vmul.f32 %v5277, 0.1
    %v5342 = vmul.f32 %v5278, 0.1
    %v5343 = vmul.f32 %v5279, 0.1
    %v5344 = vmul.f32 %v5280, 0.1
    %v5345 = vmul.f32 %v5281, 0.1
    %v5346 = vmul.f32 %v5282, 0.1
    %v5347 = vmul.f32 %v5283, 0.1
    %v5348 = vmul.f32 %v5284, 0.1
    %v5349 = vmul.f32 %v5285, 0.1
    %v5350 = vmul.f32 %v5286, 0.1
    %v5351 = vmul.f32 %v5287, 0.1
    %v5352 = vmul.f32 %v5288, 0.1
    %v5353 = vmul.f32 %v5289, 0.1
    %v5354 = vmul.f32 %v5290, 0.1
    %v5355 = vmul.f32 %v5291, 0.1
    %v5356 = vmul.f32 %v5292, 0.1
    %v5357 = vmul.f32 %v5293, 0.1
    %v5358 = vmul.f32 %v5294, 0.1
    %v5359 = vmul.f32 %v5295, 0.1
    %v5360 = vmul.f32 %v5296, 0.1
    %v5361 = vmul.f32 %v5297, 0.1
    %v5362 = vmul.f32 %v5298, 0.1
    %v5363 = vmul.f32 %v5299, 0.1
    %v5364 = vmul.f32 %v5300, 0.1
    %v5365 = vmul.f32 %v5301, 0.1
    %v5366 = vmul.f32 %v5302, 0.1
    %v5367 = vmul.f32 %v5303, 0.1
    %v5368 = vmul.f32 %v5304, 0.1
    %v5369 = vmul.f32 %v5305, 0.1
    %v5370 = vmul.f32 %v5306, 0.1
    %v5371 = vmul.f32 %v5307, 0.1
    %v5372 = vmax.f32 %v5244, %v5308
    %v5373 = vmax.f32 %v5245, %v5309
    %v5374 = vmax.f32 %v5246, %v5310
    %v5375 = vmax.f32 %v5247, %v5311
    %v5376 = vmax.f32 %v5248, %v5312
    %v5377 = vmax.f32 %v5249, %v5313
    %v5378 = vmax.f32 %v5250, %v5314
    %v5379 = vmax.f32 %v5251, %v5315
    %v5380 = vmax.f32 %v5252, %v5316
    %v5381 = vmax.f32 %v5253, %v5317
    %v5382 = vmax.f32 %v5254, %v5318
    %v5383 = vmax.f32 %v5255, %v5319
    %v5384 = vmax.f32 %v5256, %v5320
    %v5385 = vmax.f32 %v5257, %v5321
    %v5386 = vmax.f32 %v5258, %v5322
    %v5387 = vmax.f32 %v5259, %v5323
    %v5388 = vmax.f32 %v5260, %v5324
    %v5389 = vmax.f32 %v5261, %v5325
    %v5390 = vmax.f32 %v5262, %v5326
    %v5391 = vmax.f32 %v5263, %v5327
    %v5392 = vmax.f32 %v5264, %v5328
    %v5393 = vmax.f32 %v5265, %v5329
    %v5394 = vmax.f32 %v5266, %v5330
    %v5395 = vmax.f32 %v5267, %v5331
    %v5396 = vmax.f32 %v5268, %v5332
    %v5397 = vmax.f32 %v5269, %v5333
    %v5398 = vmax.f32 %v5270, %v5334
    %v5399 = vmax.f32 %v5271, %v5335
    %v5400 = vmax.f32 %v5272, %v5336
    %v5401 = vmax.f32 %v5273, %v5337
    %v5402 = vmax.f32 %v5274, %v5338
    %v5403 = vmax.f32 %v5275, %v5339
    %v5404 = vmax.f32 %v5276, %v5340
    %v5405 = vmax.f32 %v5277, %v5341
    %v5406 = vmax.f32 %v5278, %v5342
    %v5407 = vmax.f32 %v5279, %v5343
    %v5408 = vmax.f32 %v5280, %v5344
    %v5409 = vmax.f32 %v5281, %v5345
    %v5410 = vmax.f32 %v5282, %v5346
    %v5411 = vmax.f32 %v5283, %v5347
    %v5412 = vmax.f32 %v5284, %v5348
    %v5413 = vmax.f32 %v5285, %v5349
    %v5414 = vmax.f32 %v5286, %v5350
    %v5415 = vmax.f32 %v5287, %v5351
    %v5416 = vmax.f32 %v5288, %v5352
    %v5417 = vmax.f32 %v5289, %v5353
    %v5418 = vmax.f32 %v5290, %v5354
    %v5419 = vmax.f32 %v5291, %v5355
    %v5420 = vmax.f32 %v5292, %v5356
    %v5421 = vmax.f32 %v5293, %v5357
    %v5422 = vmax.f32 %v5294, %v5358
    %v5423 = vmax.f32 %v5295, %v5359
    %v5424 = vmax.f32 %v5296, %v5360
    %v5425 = vmax.f32 %v5297, %v5361
    %v5426 = vmax.f32 %v5298, %v5362
    %v5427 = vmax.f32 %v5299, %v5363
    %v5428 = vmax.f32 %v5300, %v5364
    %v5429 = vmax.f32 %v5301, %v5365
    %v5430 = vmax.f32 %v5302, %v5366
    %v5431 = vmax.f32 %v5303, %v5367
    %v5432 = vmax.f32 %v5304, %v5368
    %v5433 = vmax.f32 %v5305, %v5369
    %v5434 = vmax.f32 %v5306, %v5370
    %v5435 = vmax.f32 %v5307, %v5371
    %v5436 = vpack.c.bf16 %v5374, %v5372
    %v5437 = vpack.c.bf16 %v5375, %v5373
    %v5438 = vpack.c.bf16 %v5378, %v5376
    %v5439 = vpack.c.bf16 %v5379, %v5377
    %v5440 = vpack.c.bf16 %v5382, %v5380
    %v5441 = vpack.c.bf16 %v5383, %v5381
    %v5442 = vpack.c.bf16 %v5386, %v5384
    %v5443 = vpack.c.bf16 %v5387, %v5385
    %v5444 = vpack.c.bf16 %v5390, %v5388
    %v5445 = vpack.c.bf16 %v5391, %v5389
    %v5446 = vpack.c.bf16 %v5394, %v5392
    %v5447 = vpack.c.bf16 %v5395, %v5393
    %v5448 = vpack.c.bf16 %v5398, %v5396
    %v5449 = vpack.c.bf16 %v5399, %v5397
    %v5450 = vpack.c.bf16 %v5402, %v5400
    %v5451 = vpack.c.bf16 %v5403, %v5401
    %v5452 = vpack.c.bf16 %v5406, %v5404
    %v5453 = vpack.c.bf16 %v5407, %v5405
    %v5454 = vpack.c.bf16 %v5410, %v5408
    %v5455 = vpack.c.bf16 %v5411, %v5409
    %v5456 = vpack.c.bf16 %v5414, %v5412
    %v5457 = vpack.c.bf16 %v5415, %v5413
    %v5458 = vpack.c.bf16 %v5418, %v5416
    %v5459 = vpack.c.bf16 %v5419, %v5417
    %v5460 = vpack.c.bf16 %v5422, %v5420
    %v5461 = vpack.c.bf16 %v5423, %v5421
    %v5462 = vpack.c.bf16 %v5426, %v5424
    %v5463 = vpack.c.bf16 %v5427, %v5425
    %v5464 = vpack.c.bf16 %v5430, %v5428
    %v5465 = vpack.c.bf16 %v5431, %v5429
    %v5466 = vpack.c.bf16 %v5434, %v5432
    %v5467 = vpack.c.bf16 %v5435, %v5433
    %s5468 = scalar_lea.vmem [#allocation6], 768
    %v5469 = vld [vmem:[%s5468] sm:$0xff]
    %v5470 = vld [vmem:[%s5468 + $0x8] sm:$0xff]
    %v5471 = vld [vmem:[%s5468 + $0x10] sm:$0xff]
    %v5472 = vld [vmem:[%s5468 + $0x18] sm:$0xff]
    %v5473 = vld [vmem:[%s5468 + $0x20] sm:$0xff]
    %v5474 = vld [vmem:[%s5468 + $0x28] sm:$0xff]
    %v5475 = vld [vmem:[%s5468 + $0x30] sm:$0xff]
    %v5476 = vld [vmem:[%s5468 + $0x38] sm:$0xff]
    %v5477 = vld [vmem:[%s5468 + $0x40] sm:$0xff]
    %v5478 = vld [vmem:[%s5468 + $0x48] sm:$0xff]
    %v5479 = vld [vmem:[%s5468 + $0x50] sm:$0xff]
    %v5480 = vld [vmem:[%s5468 + $0x58] sm:$0xff]
    %v5481 = vld [vmem:[%s5468 + $0x60] sm:$0xff]
    %v5482 = vld [vmem:[%s5468 + $0x68] sm:$0xff]
    %v5483 = vld [vmem:[%s5468 + $0x70] sm:$0xff]
    %v5484 = vld [vmem:[%s5468 + $0x78] sm:$0xff]
    %v5485 = vld [vmem:[%s5468 + $0x80] sm:$0xff]
    %v5486 = vld [vmem:[%s5468 + $0x88] sm:$0xff]
    %v5487 = vld [vmem:[%s5468 + $0x90] sm:$0xff]
    %v5488 = vld [vmem:[%s5468 + $0x98] sm:$0xff]
    %v5489 = vld [vmem:[%s5468 + $0xa0] sm:$0xff]
    %v5490 = vld [vmem:[%s5468 + $0xa8] sm:$0xff]
    %v5491 = vld [vmem:[%s5468 + $0xb0] sm:$0xff]
    %v5492 = vld [vmem:[%s5468 + $0xb8] sm:$0xff]
    %v5493 = vld [vmem:[%s5468 + $0xc0] sm:$0xff]
    %v5494 = vld [vmem:[%s5468 + $0xc8] sm:$0xff]
    %v5495 = vld [vmem:[%s5468 + $0xd0] sm:$0xff]
    %v5496 = vld [vmem:[%s5468 + $0xd8] sm:$0xff]
    %v5497 = vld [vmem:[%s5468 + $0xe0] sm:$0xff]
    %v5498 = vld [vmem:[%s5468 + $0xe8] sm:$0xff]
    %v5499 = vld [vmem:[%s5468 + $0xf0] sm:$0xff]
    %v5500 = vld [vmem:[%s5468 + $0xf8] sm:$0xff]
    %s5501 = scalar_lea.vmem [#allocation6], 1024
    %v5502 = vld [vmem:[%s5501] sm:$0xff]
    %v5503 = vld [vmem:[%s5501 + $0x8] sm:$0xff]
    %v5504 = vld [vmem:[%s5501 + $0x10] sm:$0xff]
    %v5505 = vld [vmem:[%s5501 + $0x18] sm:$0xff]
    %v5506 = vld [vmem:[%s5501 + $0x20] sm:$0xff]
    %v5507 = vld [vmem:[%s5501 + $0x28] sm:$0xff]
    %v5508 = vld [vmem:[%s5501 + $0x30] sm:$0xff]
    %v5509 = vld [vmem:[%s5501 + $0x38] sm:$0xff]
    %v5510 = vld [vmem:[%s5501 + $0x40] sm:$0xff]
    %v5511 = vld [vmem:[%s5501 + $0x48] sm:$0xff]
    %v5512 = vld [vmem:[%s5501 + $0x50] sm:$0xff]
    %v5513 = vld [vmem:[%s5501 + $0x58] sm:$0xff]
    %v5514 = vld [vmem:[%s5501 + $0x60] sm:$0xff]
    %v5515 = vld [vmem:[%s5501 + $0x68] sm:$0xff]
    %v5516 = vld [vmem:[%s5501 + $0x70] sm:$0xff]
    %v5517 = vld [vmem:[%s5501 + $0x78] sm:$0xff]
    %v5518 = vld [vmem:[%s5501 + $0x80] sm:$0xff]
    %v5519 = vld [vmem:[%s5501 + $0x88] sm:$0xff]
    %v5520 = vld [vmem:[%s5501 + $0x90] sm:$0xff]
    %v5521 = vld [vmem:[%s5501 + $0x98] sm:$0xff]
    %v5522 = vld [vmem:[%s5501 + $0xa0] sm:$0xff]
    %v5523 = vld [vmem:[%s5501 + $0xa8] sm:$0xff]
    %v5524 = vld [vmem:[%s5501 + $0xb0] sm:$0xff]
    %v5525 = vld [vmem:[%s5501 + $0xb8] sm:$0xff]
    %v5526 = vld [vmem:[%s5501 + $0xc0] sm:$0xff]
    %v5527 = vld [vmem:[%s5501 + $0xc8] sm:$0xff]
    %v5528 = vld [vmem:[%s5501 + $0xd0] sm:$0xff]
    %v5529 = vld [vmem:[%s5501 + $0xd8] sm:$0xff]
    %v5530 = vld [vmem:[%s5501 + $0xe0] sm:$0xff]
    %v5531 = vld [vmem:[%s5501 + $0xe8] sm:$0xff]
    %v5532 = vld [vmem:[%s5501 + $0xf0] sm:$0xff]
    %v5533 = vld [vmem:[%s5501 + $0xf8] sm:$0xff]
    %v5566 = vunpack.c.l.b16 %v5502
    %v5567 = vunpack.c.h.b16 %v5502
    %v5568 = vunpack.c.l.b16 %v5503
    %v5569 = vunpack.c.h.b16 %v5503
    %v5570 = vunpack.c.l.b16 %v5504
    %v5571 = vunpack.c.h.b16 %v5504
    %v5572 = vunpack.c.l.b16 %v5505
    %v5573 = vunpack.c.h.b16 %v5505
    %v5574 = vunpack.c.l.b16 %v5506
    %v5575 = vunpack.c.h.b16 %v5506
    %v5576 = vunpack.c.l.b16 %v5507
    %v5577 = vunpack.c.h.b16 %v5507
    %v5578 = vunpack.c.l.b16 %v5508
    %v5579 = vunpack.c.h.b16 %v5508
    %v5580 = vunpack.c.l.b16 %v5509
    %v5581 = vunpack.c.h.b16 %v5509
    %v5582 = vunpack.c.l.b16 %v5510
    %v5583 = vunpack.c.h.b16 %v5510
    %v5584 = vunpack.c.l.b16 %v5511
    %v5585 = vunpack.c.h.b16 %v5511
    %v5586 = vunpack.c.l.b16 %v5512
    %v5587 = vunpack.c.h.b16 %v5512
    %v5588 = vunpack.c.l.b16 %v5513
    %v5589 = vunpack.c.h.b16 %v5513
    %v5590 = vunpack.c.l.b16 %v5514
    %v5591 = vunpack.c.h.b16 %v5514
    %v5592 = vunpack.c.l.b16 %v5515
    %v5593 = vunpack.c.h.b16 %v5515
    %v5594 = vunpack.c.l.b16 %v5516
    %v5595 = vunpack.c.h.b16 %v5516
    %v5596 = vunpack.c.l.b16 %v5517
    %v5597 = vunpack.c.h.b16 %v5517
    %v5598 = vunpack.c.l.b16 %v5518
    %v5599 = vunpack.c.h.b16 %v5518
    %v5600 = vunpack.c.l.b16 %v5519
    %v5601 = vunpack.c.h.b16 %v5519
    %v5602 = vunpack.c.l.b16 %v5520
    %v5603 = vunpack.c.h.b16 %v5520
    %v5604 = vunpack.c.l.b16 %v5521
    %v5605 = vunpack.c.h.b16 %v5521
    %v5606 = vunpack.c.l.b16 %v5522
    %v5607 = vunpack.c.h.b16 %v5522
    %v5608 = vunpack.c.l.b16 %v5523
    %v5609 = vunpack.c.h.b16 %v5523
    %v5610 = vunpack.c.l.b16 %v5524
    %v5611 = vunpack.c.h.b16 %v5524
    %v5612 = vunpack.c.l.b16 %v5525
    %v5613 = vunpack.c.h.b16 %v5525
    %v5614 = vunpack.c.l.b16 %v5526
    %v5615 = vunpack.c.h.b16 %v5526
    %v5616 = vunpack.c.l.b16 %v5527
    %v5617 = vunpack.c.h.b16 %v5527
    %v5618 = vunpack.c.l.b16 %v5528
    %v5619 = vunpack.c.h.b16 %v5528
    %v5620 = vunpack.c.l.b16 %v5529
    %v5621 = vunpack.c.h.b16 %v5529
    %v5622 = vunpack.c.l.b16 %v5530
    %v5623 = vunpack.c.h.b16 %v5530
    %v5624 = vunpack.c.l.b16 %v5531
    %v5625 = vunpack.c.h.b16 %v5531
    %v5626 = vunpack.c.l.b16 %v5532
    %v5627 = vunpack.c.h.b16 %v5532
    %v5628 = vunpack.c.l.b16 %v5533
    %v5629 = vunpack.c.h.b16 %v5533
    %v5630 = vpack.c.b16 %v5568, %v5566
    %v5631 = vpack.c.b16 %v5569, %v5567
    %v5632 = vpack.c.b16 %v5572, %v5570
    %v5633 = vpack.c.b16 %v5573, %v5571
    %v5634 = vpack.c.b16 %v5576, %v5574
    %v5635 = vpack.c.b16 %v5577, %v5575
    %v5636 = vpack.c.b16 %v5580, %v5578
    %v5637 = vpack.c.b16 %v5581, %v5579
    %v5638 = vpack.c.b16 %v5584, %v5582
    %v5639 = vpack.c.b16 %v5585, %v5583
    %v5640 = vpack.c.b16 %v5588, %v5586
    %v5641 = vpack.c.b16 %v5589, %v5587
    %v5642 = vpack.c.b16 %v5592, %v5590
    %v5643 = vpack.c.b16 %v5593, %v5591
    %v5644 = vpack.c.b16 %v5596, %v5594
    %v5645 = vpack.c.b16 %v5597, %v5595
    %v5646 = vpack.c.b16 %v5600, %v5598
    %v5647 = vpack.c.b16 %v5601, %v5599
    %v5648 = vpack.c.b16 %v5604, %v5602
    %v5649 = vpack.c.b16 %v5605, %v5603
    %v5650 = vpack.c.b16 %v5608, %v5606
    %v5651 = vpack.c.b16 %v5609, %v5607
    %v5652 = vpack.c.b16 %v5612, %v5610
    %v5653 = vpack.c.b16 %v5613, %v5611
    %v5654 = vpack.c.b16 %v5616, %v5614
    %v5655 = vpack.c.b16 %v5617, %v5615
    %v5656 = vpack.c.b16 %v5620, %v5618
    %v5657 = vpack.c.b16 %v5621, %v5619
    %v5658 = vpack.c.b16 %v5624, %v5622
    %v5659 = vpack.c.b16 %v5625, %v5623
    %v5660 = vpack.c.b16 %v5628, %v5626
    %v5661 = vpack.c.b16 %v5629, %v5627
    %5694 = vmatprep.subr.bf16.mxu0 %v5645
    %5695 = vmatpush1.bf16.msra.mxu0 %v5644
    %5696 = vmatprep.subr.bf16.mxu0 %v5643
    %5697 = vmatpush1.bf16.msra.mxu0 %v5642
    %5698 = vmatprep.subr.bf16.mxu0 %v5641
    %5699 = vmatpush1.bf16.msra.mxu0 %v5640
    %5700 = vmatprep.subr.bf16.mxu0 %v5639
    %5701 = vmatpush1.bf16.msra.mxu0 %v5638
    %5702 = vmatprep.subr.bf16.mxu0 %v5637
    %5703 = vmatpush1.bf16.msra.mxu0 %v5636
    %5704 = vmatprep.subr.bf16.mxu0 %v5635
    %5705 = vmatpush1.bf16.msra.mxu0 %v5634
    %5706 = vmatprep.subr.bf16.mxu0 %v5633
    %5707 = vmatpush1.bf16.msra.mxu0 %v5632
    %5708 = vmatprep.subr.bf16.mxu0 %v5631
    %5709 = vmatpush1.bf16.msra.mxu0 %v5630
    %5710 = vmatprep.subr.bf16.mxu0 %v5661
    %5711 = vmatpush2.bf16.msra.mxu0 %v5660
    %5712 = vmatprep.subr.bf16.mxu0 %v5659
    %5713 = vmatpush2.bf16.msra.mxu0 %v5658
    %5714 = vmatprep.subr.bf16.mxu0 %v5657
    %5715 = vmatpush2.bf16.msra.mxu0 %v5656
    %5716 = vmatprep.subr.bf16.mxu0 %v5655
    %5717 = vmatpush2.bf16.msra.mxu0 %v5654
    %5718 = vmatprep.subr.bf16.mxu0 %v5653
    %5719 = vmatpush2.bf16.msra.mxu0 %v5652
    %5720 = vmatprep.subr.bf16.mxu0 %v5651
    %5721 = vmatpush2.bf16.msra.mxu0 %v5650
    %5722 = vmatprep.subr.bf16.mxu0 %v5649
    %5723 = vmatpush2.bf16.msra.mxu0 %v5648
    %5724 = vmatprep.subr.bf16.mxu0 %v5647
    %5725 = vmatpush2.bf16.msra.mxu0 %v5646
    %5726 = vmatprep.mubr.bf16.mxu0 %v5437
    %5727 = vmatmul.mubr.bf16.gmra.mxu0 %v5436
    %v5728 = vpop.f32.mrf.mxu0
    %v5729 = vadd.f32 0.0, %v5728
    %v5730 = vpop.f32.mrf.mxu0
    %v5731 = vadd.f32 0.0, %v5730
    %v5732 = vpop.f32.mrf.mxu0
    %v5733 = vadd.f32 0.0, %v5732
    %v5734 = vpop.f32.mrf.mxu0
    %v5735 = vadd.f32 0.0, %v5734
    %5736 = vmatprep.mubr.bf16.mxu0 %v5439
    %5737 = vmatmul.mubr.bf16.gmra.mxu0 %v5438
    %v5738 = vpop.f32.mrf.mxu0
    %v5739 = vadd.f32 0.0, %v5738
    %v5740 = vpop.f32.mrf.mxu0
    %v5741 = vadd.f32 0.0, %v5740
    %v5742 = vpop.f32.mrf.mxu0
    %v5743 = vadd.f32 0.0, %v5742
    %v5744 = vpop.f32.mrf.mxu0
    %v5745 = vadd.f32 0.0, %v5744
    %5746 = vmatprep.mubr.bf16.mxu0 %v5441
    %5747 = vmatmul.mubr.bf16.gmra.mxu0 %v5440
    %v5748 = vpop.f32.mrf.mxu0
    %v5749 = vadd.f32 0.0, %v5748
    %v5750 = vpop.f32.mrf.mxu0
    %v5751 = vadd.f32 0.0, %v5750
    %v5752 = vpop.f32.mrf.mxu0
    %v5753 = vadd.f32 0.0, %v5752
    %v5754 = vpop.f32.mrf.mxu0
    %v5755 = vadd.f32 0.0, %v5754
    %5756 = vmatprep.mubr.bf16.mxu0 %v5443
    %5757 = vmatmul.mubr.bf16.gmra.mxu0 %v5442
    %v5758 = vpop.f32.mrf.mxu0
    %v5759 = vadd.f32 0.0, %v5758
    %v5760 = vpop.f32.mrf.mxu0
    %v5761 = vadd.f32 0.0, %v5760
    %v5762 = vpop.f32.mrf.mxu0
    %v5763 = vadd.f32 0.0, %v5762
    %v5764 = vpop.f32.mrf.mxu0
    %v5765 = vadd.f32 0.0, %v5764
    %5766 = vmatprep.mubr.bf16.mxu0 %v5445
    %5767 = vmatmul.mubr.bf16.gmra.mxu0 %v5444
    %v5768 = vpop.f32.mrf.mxu0
    %v5769 = vadd.f32 0.0, %v5768
    %v5770 = vpop.f32.mrf.mxu0
    %v5771 = vadd.f32 0.0, %v5770
    %v5772 = vpop.f32.mrf.mxu0
    %v5773 = vadd.f32 0.0, %v5772
    %v5774 = vpop.f32.mrf.mxu0
    %v5775 = vadd.f32 0.0, %v5774
    %5776 = vmatprep.mubr.bf16.mxu0 %v5447
    %5777 = vmatmul.mubr.bf16.gmra.mxu0 %v5446
    %v5778 = vpop.f32.mrf.mxu0
    %v5779 = vadd.f32 0.0, %v5778
    %v5780 = vpop.f32.mrf.mxu0
    %v5781 = vadd.f32 0.0, %v5780
    %v5782 = vpop.f32.mrf.mxu0
    %v5783 = vadd.f32 0.0, %v5782
    %v5784 = vpop.f32.mrf.mxu0
    %v5785 = vadd.f32 0.0, %v5784
    %5786 = vmatprep.mubr.bf16.mxu0 %v5449
    %5787 = vmatmul.mubr.bf16.gmra.mxu0 %v5448
    %v5788 = vpop.f32.mrf.mxu0
    %v5789 = vadd.f32 0.0, %v5788
    %v5790 = vpop.f32.mrf.mxu0
    %v5791 = vadd.f32 0.0, %v5790
    %v5792 = vpop.f32.mrf.mxu0
    %v5793 = vadd.f32 0.0, %v5792
    %v5794 = vpop.f32.mrf.mxu0
    %v5795 = vadd.f32 0.0, %v5794
    %5796 = vmatprep.mubr.bf16.mxu0 %v5451
    %5797 = vmatmul.mubr.bf16.gmra.mxu0 %v5450
    %v5798 = vpop.f32.mrf.mxu0
    %v5799 = vadd.f32 0.0, %v5798
    %v5800 = vpop.f32.mrf.mxu0
    %v5801 = vadd.f32 0.0, %v5800
    %v5802 = vpop.f32.mrf.mxu0
    %v5803 = vadd.f32 0.0, %v5802
    %v5804 = vpop.f32.mrf.mxu0
    %v5805 = vadd.f32 0.0, %v5804
    %5806 = vmatprep.mubr.bf16.mxu0 %v5453
    %5807 = vmatmul.mubr.bf16.gmra.mxu0 %v5452
    %v5808 = vpop.f32.mrf.mxu0
    %v5809 = vadd.f32 0.0, %v5808
    %v5810 = vpop.f32.mrf.mxu0
    %v5811 = vadd.f32 0.0, %v5810
    %v5812 = vpop.f32.mrf.mxu0
    %v5813 = vadd.f32 0.0, %v5812
    %v5814 = vpop.f32.mrf.mxu0
    %v5815 = vadd.f32 0.0, %v5814
    %5816 = vmatprep.mubr.bf16.mxu0 %v5455
    %5817 = vmatmul.mubr.bf16.gmra.mxu0 %v5454
    %v5818 = vpop.f32.mrf.mxu0
    %v5819 = vadd.f32 0.0, %v5818
    %v5820 = vpop.f32.mrf.mxu0
    %v5821 = vadd.f32 0.0, %v5820
    %v5822 = vpop.f32.mrf.mxu0
    %v5823 = vadd.f32 0.0, %v5822
    %v5824 = vpop.f32.mrf.mxu0
    %v5825 = vadd.f32 0.0, %v5824
    %5826 = vmatprep.mubr.bf16.mxu0 %v5457
    %5827 = vmatmul.mubr.bf16.gmra.mxu0 %v5456
    %v5828 = vpop.f32.mrf.mxu0
    %v5829 = vadd.f32 0.0, %v5828
    %v5830 = vpop.f32.mrf.mxu0
    %v5831 = vadd.f32 0.0, %v5830
    %v5832 = vpop.f32.mrf.mxu0
    %v5833 = vadd.f32 0.0, %v5832
    %v5834 = vpop.f32.mrf.mxu0
    %v5835 = vadd.f32 0.0, %v5834
    %5836 = vmatprep.mubr.bf16.mxu0 %v5459
    %5837 = vmatmul.mubr.bf16.gmra.mxu0 %v5458
    %v5838 = vpop.f32.mrf.mxu0
    %v5839 = vadd.f32 0.0, %v5838
    %v5840 = vpop.f32.mrf.mxu0
    %v5841 = vadd.f32 0.0, %v5840
    %v5842 = vpop.f32.mrf.mxu0
    %v5843 = vadd.f32 0.0, %v5842
    %v5844 = vpop.f32.mrf.mxu0
    %v5845 = vadd.f32 0.0, %v5844
    %5846 = vmatprep.mubr.bf16.mxu0 %v5461
    %5847 = vmatmul.mubr.bf16.gmra.mxu0 %v5460
    %v5848 = vpop.f32.mrf.mxu0
    %v5849 = vadd.f32 0.0, %v5848
    %v5850 = vpop.f32.mrf.mxu0
    %v5851 = vadd.f32 0.0, %v5850
    %v5852 = vpop.f32.mrf.mxu0
    %v5853 = vadd.f32 0.0, %v5852
    %v5854 = vpop.f32.mrf.mxu0
    %v5855 = vadd.f32 0.0, %v5854
    %5856 = vmatprep.mubr.bf16.mxu0 %v5463
    %5857 = vmatmul.mubr.bf16.gmra.mxu0 %v5462
    %v5858 = vpop.f32.mrf.mxu0
    %v5859 = vadd.f32 0.0, %v5858
    %v5860 = vpop.f32.mrf.mxu0
    %v5861 = vadd.f32 0.0, %v5860
    %v5862 = vpop.f32.mrf.mxu0
    %v5863 = vadd.f32 0.0, %v5862
    %v5864 = vpop.f32.mrf.mxu0
    %v5865 = vadd.f32 0.0, %v5864
    %5866 = vmatprep.mubr.bf16.mxu0 %v5465
    %5867 = vmatmul.mubr.bf16.gmra.mxu0 %v5464
    %v5868 = vpop.f32.mrf.mxu0
    %v5869 = vadd.f32 0.0, %v5868
    %v5870 = vpop.f32.mrf.mxu0
    %v5871 = vadd.f32 0.0, %v5870
    %v5872 = vpop.f32.mrf.mxu0
    %v5873 = vadd.f32 0.0, %v5872
    %v5874 = vpop.f32.mrf.mxu0
    %v5875 = vadd.f32 0.0, %v5874
    %5876 = vmatprep.mubr.bf16.mxu0 %v5467
    %5877 = vmatmul.mubr.bf16.gmra.mxu0 %v5466
    %v5878 = vpop.f32.mrf.mxu0
    %v5879 = vadd.f32 0.0, %v5878
    %v5880 = vpop.f32.mrf.mxu0
    %v5881 = vadd.f32 0.0, %v5880
    %v5882 = vpop.f32.mrf.mxu0
    %v5883 = vadd.f32 0.0, %v5882
    %v5884 = vpop.f32.mrf.mxu0
    %v5885 = vadd.f32 0.0, %v5884
    %5886 = vdwg.mxu0
    %v5887 = vrot.slane %v5729, 3
    %v5888 = vrot.slane %v5731, 3
    %v5889 = vrot.slane %v5733, 3
    %v5890 = vrot.slane %v5735, 3
    %v5891 = vrot.slane %v5739, 3
    %v5892 = vrot.slane %v5741, 3
    %v5893 = vrot.slane %v5743, 3
    %v5894 = vrot.slane %v5745, 3
    %v5895 = vrot.slane %v5749, 3
    %v5896 = vrot.slane %v5751, 3
    %v5897 = vrot.slane %v5753, 3
    %v5898 = vrot.slane %v5755, 3
    %v5899 = vrot.slane %v5759, 3
    %v5900 = vrot.slane %v5761, 3
    %v5901 = vrot.slane %v5763, 3
    %v5902 = vrot.slane %v5765, 3
    %v5903 = vrot.slane %v5769, 3
    %v5904 = vrot.slane %v5771, 3
    %v5905 = vrot.slane %v5773, 3
    %v5906 = vrot.slane %v5775, 3
    %v5907 = vrot.slane %v5779, 3
    %v5908 = vrot.slane %v5781, 3
    %v5909 = vrot.slane %v5783, 3
    %v5910 = vrot.slane %v5785, 3
    %v5911 = vrot.slane %v5789, 3
    %v5912 = vrot.slane %v5791, 3
    %v5913 = vrot.slane %v5793, 3
    %v5914 = vrot.slane %v5795, 3
    %v5915 = vrot.slane %v5799, 3
    %v5916 = vrot.slane %v5801, 3
    %v5917 = vrot.slane %v5803, 3
    %v5918 = vrot.slane %v5805, 3
    %v5919 = vrot.slane %v5809, 3
    %v5920 = vrot.slane %v5811, 3
    %v5921 = vrot.slane %v5813, 3
    %v5922 = vrot.slane %v5815, 3
    %v5923 = vrot.slane %v5819, 3
    %v5924 = vrot.slane %v5821, 3
    %v5925 = vrot.slane %v5823, 3
    %v5926 = vrot.slane %v5825, 3
    %v5927 = vrot.slane %v5829, 3
    %v5928 = vrot.slane %v5831, 3
    %v5929 = vrot.slane %v5833, 3
    %v5930 = vrot.slane %v5835, 3
    %v5931 = vrot.slane %v5839, 3
    %v5932 = vrot.slane %v5841, 3
    %v5933 = vrot.slane %v5843, 3
    %v5934 = vrot.slane %v5845, 3
    %v5935 = vrot.slane %v5849, 3
    %v5936 = vrot.slane %v5851, 3
    %v5937 = vrot.slane %v5853, 3
    %v5938 = vrot.slane %v5855, 3
    %v5939 = vrot.slane %v5859, 3
    %v5940 = vrot.slane %v5861, 3
    %v5941 = vrot.slane %v5863, 3
    %v5942 = vrot.slane %v5865, 3
    %v5943 = vrot.slane %v5869, 3
    %v5944 = vrot.slane %v5871, 3
    %v5945 = vrot.slane %v5873, 3
    %v5946 = vrot.slane %v5875, 3
    %v5947 = vrot.slane %v5879, 3
    %v5948 = vrot.slane %v5881, 3
    %v5949 = vrot.slane %v5883, 3
    %v5950 = vrot.slane %v5885, 3
    %v5951 = vsel %vm1749, %v5947, %v5949
    %v5952 = vsel %vm1749, %v5948, %v5950
    %v5953 = vsel %vm1749, %v5945, %v5947
    %v5954 = vsel %vm1749, %v5946, %v5948
    %v5955 = vsel %vm1749, %v5943, %v5945
    %v5956 = vsel %vm1749, %v5944, %v5946
    %v5957 = vsel %vm1749, %v5941, %v5943
    %v5958 = vsel %vm1749, %v5942, %v5944
    %v5959 = vsel %vm1749, %v5939, %v5941
    %v5960 = vsel %vm1749, %v5940, %v5942
    %v5961 = vsel %vm1749, %v5937, %v5939
    %v5962 = vsel %vm1749, %v5938, %v5940
    %v5963 = vsel %vm1749, %v5935, %v5937
    %v5964 = vsel %vm1749, %v5936, %v5938
    %v5965 = vsel %vm1749, %v5933, %v5935
    %v5966 = vsel %vm1749, %v5934, %v5936
    %v5967 = vsel %vm1749, %v5931, %v5933
    %v5968 = vsel %vm1749, %v5932, %v5934
    %v5969 = vsel %vm1749, %v5929, %v5931
    %v5970 = vsel %vm1749, %v5930, %v5932
    %v5971 = vsel %vm1749, %v5927, %v5929
    %v5972 = vsel %vm1749, %v5928, %v5930
    %v5973 = vsel %vm1749, %v5925, %v5927
    %v5974 = vsel %vm1749, %v5926, %v5928
    %v5975 = vsel %vm1749, %v5923, %v5925
    %v5976 = vsel %vm1749, %v5924, %v5926
    %v5977 = vsel %vm1749, %v5921, %v5923
    %v5978 = vsel %vm1749, %v5922, %v5924
    %v5979 = vsel %vm1749, %v5919, %v5921
    %v5980 = vsel %vm1749, %v5920, %v5922
    %v5981 = vsel %vm1749, %v5917, %v5919
    %v5982 = vsel %vm1749, %v5918, %v5920
    %v5983 = vsel %vm1749, %v5915, %v5917
    %v5984 = vsel %vm1749, %v5916, %v5918
    %v5985 = vsel %vm1749, %v5913, %v5915
    %v5986 = vsel %vm1749, %v5914, %v5916
    %v5987 = vsel %vm1749, %v5911, %v5913
    %v5988 = vsel %vm1749, %v5912, %v5914
    %v5989 = vsel %vm1749, %v5909, %v5911
    %v5990 = vsel %vm1749, %v5910, %v5912
    %v5991 = vsel %vm1749, %v5907, %v5909
    %v5992 = vsel %vm1749, %v5908, %v5910
    %v5993 = vsel %vm1749, %v5905, %v5907
    %v5994 = vsel %vm1749, %v5906, %v5908
    %v5995 = vsel %vm1749, %v5903, %v5905
    %v5996 = vsel %vm1749, %v5904, %v5906
    %v5997 = vsel %vm1749, %v5901, %v5903
    %v5998 = vsel %vm1749, %v5902, %v5904
    %v5999 = vsel %vm1749, %v5899, %v5901
    %v6000 = vsel %vm1749, %v5900, %v5902
    %v6001 = vsel %vm1749, %v5897, %v5899
    %v6002 = vsel %vm1749, %v5898, %v5900
    %v6003 = vsel %vm1749, %v5895, %v5897
    %v6004 = vsel %vm1749, %v5896, %v5898
    %v6005 = vsel %vm1749, %v5893, %v5895
    %v6006 = vsel %vm1749, %v5894, %v5896
    %v6007 = vsel %vm1749, %v5891, %v5893
    %v6008 = vsel %vm1749, %v5892, %v5894
    %v6009 = vsel %vm1749, %v5889, %v5891
    %v6010 = vsel %vm1749, %v5890, %v5892
    %v6011 = vsel %vm1749, %v5887, %v5889
    %v6012 = vsel %vm1749, %v5888, %v5890
    %v6013 = vsel %vm1749, %v5949, %v5887
    %v6014 = vsel %vm1749, %v5950, %v5888
    %v6047 = vunpack.c.l.b16 %v5469
    %v6048 = vunpack.c.h.b16 %v5469
    %v6049 = vunpack.c.l.b16 %v5470
    %v6050 = vunpack.c.h.b16 %v5470
    %v6051 = vunpack.c.l.b16 %v5471
    %v6052 = vunpack.c.h.b16 %v5471
    %v6053 = vunpack.c.l.b16 %v5472
    %v6054 = vunpack.c.h.b16 %v5472
    %v6055 = vunpack.c.l.b16 %v5473
    %v6056 = vunpack.c.h.b16 %v5473
    %v6057 = vunpack.c.l.b16 %v5474
    %v6058 = vunpack.c.h.b16 %v5474
    %v6059 = vunpack.c.l.b16 %v5475
    %v6060 = vunpack.c.h.b16 %v5475
    %v6061 = vunpack.c.l.b16 %v5476
    %v6062 = vunpack.c.h.b16 %v5476
    %v6063 = vunpack.c.l.b16 %v5477
    %v6064 = vunpack.c.h.b16 %v5477
    %v6065 = vunpack.c.l.b16 %v5478
    %v6066 = vunpack.c.h.b16 %v5478
    %v6067 = vunpack.c.l.b16 %v5479
    %v6068 = vunpack.c.h.b16 %v5479
    %v6069 = vunpack.c.l.b16 %v5480
    %v6070 = vunpack.c.h.b16 %v5480
    %v6071 = vunpack.c.l.b16 %v5481
    %v6072 = vunpack.c.h.b16 %v5481
    %v6073 = vunpack.c.l.b16 %v5482
    %v6074 = vunpack.c.h.b16 %v5482
    %v6075 = vunpack.c.l.b16 %v5483
    %v6076 = vunpack.c.h.b16 %v5483
    %v6077 = vunpack.c.l.b16 %v5484
    %v6078 = vunpack.c.h.b16 %v5484
    %v6079 = vunpack.c.l.b16 %v5485
    %v6080 = vunpack.c.h.b16 %v5485
    %v6081 = vunpack.c.l.b16 %v5486
    %v6082 = vunpack.c.h.b16 %v5486
    %v6083 = vunpack.c.l.b16 %v5487
    %v6084 = vunpack.c.h.b16 %v5487
    %v6085 = vunpack.c.l.b16 %v5488
    %v6086 = vunpack.c.h.b16 %v5488
    %v6087 = vunpack.c.l.b16 %v5489
    %v6088 = vunpack.c.h.b16 %v5489
    %v6089 = vunpack.c.l.b16 %v5490
    %v6090 = vunpack.c.h.b16 %v5490
    %v6091 = vunpack.c.l.b16 %v5491
    %v6092 = vunpack.c.h.b16 %v5491
    %v6093 = vunpack.c.l.b16 %v5492
    %v6094 = vunpack.c.h.b16 %v5492
    %v6095 = vunpack.c.l.b16 %v5493
    %v6096 = vunpack.c.h.b16 %v5493
    %v6097 = vunpack.c.l.b16 %v5494
    %v6098 = vunpack.c.h.b16 %v5494
    %v6099 = vunpack.c.l.b16 %v5495
    %v6100 = vunpack.c.h.b16 %v5495
    %v6101 = vunpack.c.l.b16 %v5496
    %v6102 = vunpack.c.h.b16 %v5496
    %v6103 = vunpack.c.l.b16 %v5497
    %v6104 = vunpack.c.h.b16 %v5497
    %v6105 = vunpack.c.l.b16 %v5498
    %v6106 = vunpack.c.h.b16 %v5498
    %v6107 = vunpack.c.l.b16 %v5499
    %v6108 = vunpack.c.h.b16 %v5499
    %v6109 = vunpack.c.l.b16 %v5500
    %v6110 = vunpack.c.h.b16 %v5500
    %v6111 = vpack.c.b16 %v6049, %v6047
    %v6112 = vpack.c.b16 %v6050, %v6048
    %v6113 = vpack.c.b16 %v6053, %v6051
    %v6114 = vpack.c.b16 %v6054, %v6052
    %v6115 = vpack.c.b16 %v6057, %v6055
    %v6116 = vpack.c.b16 %v6058, %v6056
    %v6117 = vpack.c.b16 %v6061, %v6059
    %v6118 = vpack.c.b16 %v6062, %v6060
    %v6119 = vpack.c.b16 %v6065, %v6063
    %v6120 = vpack.c.b16 %v6066, %v6064
    %v6121 = vpack.c.b16 %v6069, %v6067
    %v6122 = vpack.c.b16 %v6070, %v6068
    %v6123 = vpack.c.b16 %v6073, %v6071
    %v6124 = vpack.c.b16 %v6074, %v6072
    %v6125 = vpack.c.b16 %v6077, %v6075
    %v6126 = vpack.c.b16 %v6078, %v6076
    %v6127 = vpack.c.b16 %v6081, %v6079
    %v6128 = vpack.c.b16 %v6082, %v6080
    %v6129 = vpack.c.b16 %v6085, %v6083
    %v6130 = vpack.c.b16 %v6086, %v6084
    %v6131 = vpack.c.b16 %v6089, %v6087
    %v6132 = vpack.c.b16 %v6090, %v6088
    %v6133 = vpack.c.b16 %v6093, %v6091
    %v6134 = vpack.c.b16 %v6094, %v6092
    %v6135 = vpack.c.b16 %v6097, %v6095
    %v6136 = vpack.c.b16 %v6098, %v6096
    %v6137 = vpack.c.b16 %v6101, %v6099
    %v6138 = vpack.c.b16 %v6102, %v6100
    %v6139 = vpack.c.b16 %v6105, %v6103
    %v6140 = vpack.c.b16 %v6106, %v6104
    %v6141 = vpack.c.b16 %v6109, %v6107
    %v6142 = vpack.c.b16 %v6110, %v6108
    %6175 = vmatprep.subr.bf16.mxu0 %v6126
    %6176 = vmatpush1.bf16.msra.mxu0 %v6125
    %6177 = vmatprep.subr.bf16.mxu0 %v6124
    %6178 = vmatpush1.bf16.msra.mxu0 %v6123
    %6179 = vmatprep.subr.bf16.mxu0 %v6122
    %6180 = vmatpush1.bf16.msra.mxu0 %v6121
    %6181 = vmatprep.subr.bf16.mxu0 %v6120
    %6182 = vmatpush1.bf16.msra.mxu0 %v6119
    %6183 = vmatprep.subr.bf16.mxu0 %v6118
    %6184 = vmatpush1.bf16.msra.mxu0 %v6117
    %6185 = vmatprep.subr.bf16.mxu0 %v6116
    %6186 = vmatpush1.bf16.msra.mxu0 %v6115
    %6187 = vmatprep.subr.bf16.mxu0 %v6114
    %6188 = vmatpush1.bf16.msra.mxu0 %v6113
    %6189 = vmatprep.subr.bf16.mxu0 %v6112
    %6190 = vmatpush1.bf16.msra.mxu0 %v6111
    %6191 = vmatprep.subr.bf16.mxu0 %v6142
    %6192 = vmatpush2.bf16.msra.mxu0 %v6141
    %6193 = vmatprep.subr.bf16.mxu0 %v6140
    %6194 = vmatpush2.bf16.msra.mxu0 %v6139
    %6195 = vmatprep.subr.bf16.mxu0 %v6138
    %6196 = vmatpush2.bf16.msra.mxu0 %v6137
    %6197 = vmatprep.subr.bf16.mxu0 %v6136
    %6198 = vmatpush2.bf16.msra.mxu0 %v6135
    %6199 = vmatprep.subr.bf16.mxu0 %v6134
    %6200 = vmatpush2.bf16.msra.mxu0 %v6133
    %6201 = vmatprep.subr.bf16.mxu0 %v6132
    %6202 = vmatpush2.bf16.msra.mxu0 %v6131
    %6203 = vmatprep.subr.bf16.mxu0 %v6130
    %6204 = vmatpush2.bf16.msra.mxu0 %v6129
    %6205 = vmatprep.subr.bf16.mxu0 %v6128
    %6206 = vmatpush2.bf16.msra.mxu0 %v6127
    %6207 = vmatprep.mubr.bf16.mxu0 %v5437
    %6208 = vmatmul.mubr.bf16.gmra.mxu0 %v5436
    %v6209 = vpop.f32.mrf.mxu0
    %v6210 = vadd.f32 %v6011, %v6209
    %v6211 = vpop.f32.mrf.mxu0
    %v6212 = vadd.f32 %v6012, %v6211
    %v6213 = vpop.f32.mrf.mxu0
    %v6214 = vadd.f32 %v6009, %v6213
    %v6215 = vpop.f32.mrf.mxu0
    %v6216 = vadd.f32 %v6010, %v6215
    %6217 = vmatprep.mubr.bf16.mxu0 %v5439
    %6218 = vmatmul.mubr.bf16.gmra.mxu0 %v5438
    %v6219 = vpop.f32.mrf.mxu0
    %v6220 = vadd.f32 %v6007, %v6219
    %v6221 = vpop.f32.mrf.mxu0
    %v6222 = vadd.f32 %v6008, %v6221
    %v6223 = vpop.f32.mrf.mxu0
    %v6224 = vadd.f32 %v6005, %v6223
    %v6225 = vpop.f32.mrf.mxu0
    %v6226 = vadd.f32 %v6006, %v6225
    %6227 = vmatprep.mubr.bf16.mxu0 %v5441
    %6228 = vmatmul.mubr.bf16.gmra.mxu0 %v5440
    %v6229 = vpop.f32.mrf.mxu0
    %v6230 = vadd.f32 %v6003, %v6229
    %v6231 = vpop.f32.mrf.mxu0
    %v6232 = vadd.f32 %v6004, %v6231
    %v6233 = vpop.f32.mrf.mxu0
    %v6234 = vadd.f32 %v6001, %v6233
    %v6235 = vpop.f32.mrf.mxu0
    %v6236 = vadd.f32 %v6002, %v6235
    %6237 = vmatprep.mubr.bf16.mxu0 %v5443
    %6238 = vmatmul.mubr.bf16.gmra.mxu0 %v5442
    %v6239 = vpop.f32.mrf.mxu0
    %v6240 = vadd.f32 %v5999, %v6239
    %v6241 = vpop.f32.mrf.mxu0
    %v6242 = vadd.f32 %v6000, %v6241
    %v6243 = vpop.f32.mrf.mxu0
    %v6244 = vadd.f32 %v5997, %v6243
    %v6245 = vpop.f32.mrf.mxu0
    %v6246 = vadd.f32 %v5998, %v6245
    %6247 = vmatprep.mubr.bf16.mxu0 %v5445
    %6248 = vmatmul.mubr.bf16.gmra.mxu0 %v5444
    %v6249 = vpop.f32.mrf.mxu0
    %v6250 = vadd.f32 %v5995, %v6249
    %v6251 = vpop.f32.mrf.mxu0
    %v6252 = vadd.f32 %v5996, %v6251
    %v6253 = vpop.f32.mrf.mxu0
    %v6254 = vadd.f32 %v5993, %v6253
    %v6255 = vpop.f32.mrf.mxu0
    %v6256 = vadd.f32 %v5994, %v6255
    %6257 = vmatprep.mubr.bf16.mxu0 %v5447
    %6258 = vmatmul.mubr.bf16.gmra.mxu0 %v5446
    %v6259 = vpop.f32.mrf.mxu0
    %v6260 = vadd.f32 %v5991, %v6259
    %v6261 = vpop.f32.mrf.mxu0
    %v6262 = vadd.f32 %v5992, %v6261
    %v6263 = vpop.f32.mrf.mxu0
    %v6264 = vadd.f32 %v5989, %v6263
    %v6265 = vpop.f32.mrf.mxu0
    %v6266 = vadd.f32 %v5990, %v6265
    %6267 = vmatprep.mubr.bf16.mxu0 %v5449
    %6268 = vmatmul.mubr.bf16.gmra.mxu0 %v5448
    %v6269 = vpop.f32.mrf.mxu0
    %v6270 = vadd.f32 %v5987, %v6269
    %v6271 = vpop.f32.mrf.mxu0
    %v6272 = vadd.f32 %v5988, %v6271
    %v6273 = vpop.f32.mrf.mxu0
    %v6274 = vadd.f32 %v5985, %v6273
    %v6275 = vpop.f32.mrf.mxu0
    %v6276 = vadd.f32 %v5986, %v6275
    %6277 = vmatprep.mubr.bf16.mxu0 %v5451
    %6278 = vmatmul.mubr.bf16.gmra.mxu0 %v5450
    %v6279 = vpop.f32.mrf.mxu0
    %v6280 = vadd.f32 %v5983, %v6279
    %v6281 = vpop.f32.mrf.mxu0
    %v6282 = vadd.f32 %v5984, %v6281
    %v6283 = vpop.f32.mrf.mxu0
    %v6284 = vadd.f32 %v5981, %v6283
    %v6285 = vpop.f32.mrf.mxu0
    %v6286 = vadd.f32 %v5982, %v6285
    %6287 = vmatprep.mubr.bf16.mxu0 %v5453
    %6288 = vmatmul.mubr.bf16.gmra.mxu0 %v5452
    %v6289 = vpop.f32.mrf.mxu0
    %v6290 = vadd.f32 %v5979, %v6289
    %v6291 = vpop.f32.mrf.mxu0
    %v6292 = vadd.f32 %v5980, %v6291
    %v6293 = vpop.f32.mrf.mxu0
    %v6294 = vadd.f32 %v5977, %v6293
    %v6295 = vpop.f32.mrf.mxu0
    %v6296 = vadd.f32 %v5978, %v6295
    %6297 = vmatprep.mubr.bf16.mxu0 %v5455
    %6298 = vmatmul.mubr.bf16.gmra.mxu0 %v5454
    %v6299 = vpop.f32.mrf.mxu0
    %v6300 = vadd.f32 %v5975, %v6299
    %v6301 = vpop.f32.mrf.mxu0
    %v6302 = vadd.f32 %v5976, %v6301
    %v6303 = vpop.f32.mrf.mxu0
    %v6304 = vadd.f32 %v5973, %v6303
    %v6305 = vpop.f32.mrf.mxu0
    %v6306 = vadd.f32 %v5974, %v6305
    %6307 = vmatprep.mubr.bf16.mxu0 %v5457
    %6308 = vmatmul.mubr.bf16.gmra.mxu0 %v5456
    %v6309 = vpop.f32.mrf.mxu0
    %v6310 = vadd.f32 %v5971, %v6309
    %v6311 = vpop.f32.mrf.mxu0
    %v6312 = vadd.f32 %v5972, %v6311
    %v6313 = vpop.f32.mrf.mxu0
    %v6314 = vadd.f32 %v5969, %v6313
    %v6315 = vpop.f32.mrf.mxu0
    %v6316 = vadd.f32 %v5970, %v6315
    %6317 = vmatprep.mubr.bf16.mxu0 %v5459
    %6318 = vmatmul.mubr.bf16.gmra.mxu0 %v5458
    %v6319 = vpop.f32.mrf.mxu0
    %v6320 = vadd.f32 %v5967, %v6319
    %v6321 = vpop.f32.mrf.mxu0
    %v6322 = vadd.f32 %v5968, %v6321
    %v6323 = vpop.f32.mrf.mxu0
    %v6324 = vadd.f32 %v5965, %v6323
    %v6325 = vpop.f32.mrf.mxu0
    %v6326 = vadd.f32 %v5966, %v6325
    %6327 = vmatprep.mubr.bf16.mxu0 %v5461
    %6328 = vmatmul.mubr.bf16.gmra.mxu0 %v5460
    %v6329 = vpop.f32.mrf.mxu0
    %v6330 = vadd.f32 %v5963, %v6329
    %v6331 = vpop.f32.mrf.mxu0
    %v6332 = vadd.f32 %v5964, %v6331
    %v6333 = vpop.f32.mrf.mxu0
    %v6334 = vadd.f32 %v5961, %v6333
    %v6335 = vpop.f32.mrf.mxu0
    %v6336 = vadd.f32 %v5962, %v6335
    %6337 = vmatprep.mubr.bf16.mxu0 %v5463
    %6338 = vmatmul.mubr.bf16.gmra.mxu0 %v5462
    %v6339 = vpop.f32.mrf.mxu0
    %v6340 = vadd.f32 %v5959, %v6339
    %v6341 = vpop.f32.mrf.mxu0
    %v6342 = vadd.f32 %v5960, %v6341
    %v6343 = vpop.f32.mrf.mxu0
    %v6344 = vadd.f32 %v5957, %v6343
    %v6345 = vpop.f32.mrf.mxu0
    %v6346 = vadd.f32 %v5958, %v6345
    %6347 = vmatprep.mubr.bf16.mxu0 %v5465
    %6348 = vmatmul.mubr.bf16.gmra.mxu0 %v5464
    %v6349 = vpop.f32.mrf.mxu0
    %v6350 = vadd.f32 %v5955, %v6349
    %v6351 = vpop.f32.mrf.mxu0
    %v6352 = vadd.f32 %v5956, %v6351
    %v6353 = vpop.f32.mrf.mxu0
    %v6354 = vadd.f32 %v5953, %v6353
    %v6355 = vpop.f32.mrf.mxu0
    %v6356 = vadd.f32 %v5954, %v6355
    %6357 = vmatprep.mubr.bf16.mxu0 %v5467
    %6358 = vmatmul.mubr.bf16.gmra.mxu0 %v5466
    %v6359 = vpop.f32.mrf.mxu0
    %v6360 = vadd.f32 %v5951, %v6359
    %v6361 = vpop.f32.mrf.mxu0
    %v6362 = vadd.f32 %v5952, %v6361
    %v6363 = vpop.f32.mrf.mxu0
    %v6364 = vadd.f32 %v6013, %v6363
    %v6365 = vpop.f32.mrf.mxu0
    %v6366 = vadd.f32 %v6014, %v6365
    %6367 = vdwg.mxu0
    %s6368 = scalar_lea.vmem [#allocation6], 1280
    %v6369 = vld [vmem:[%s6368] sm:$0xff]
    %v6370 = vld [vmem:[%s6368 + $0x8] sm:$0xff]
    %v6371 = vld [vmem:[%s6368 + $0x10] sm:$0xff]
    %v6372 = vld [vmem:[%s6368 + $0x18] sm:$0xff]
    %v6373 = vld [vmem:[%s6368 + $0x20] sm:$0xff]
    %v6374 = vld [vmem:[%s6368 + $0x28] sm:$0xff]
    %v6375 = vld [vmem:[%s6368 + $0x30] sm:$0xff]
    %v6376 = vld [vmem:[%s6368 + $0x38] sm:$0xff]
    %v6377 = vld [vmem:[%s6368 + $0x40] sm:$0xff]
    %v6378 = vld [vmem:[%s6368 + $0x48] sm:$0xff]
    %v6379 = vld [vmem:[%s6368 + $0x50] sm:$0xff]
    %v6380 = vld [vmem:[%s6368 + $0x58] sm:$0xff]
    %v6381 = vld [vmem:[%s6368 + $0x60] sm:$0xff]
    %v6382 = vld [vmem:[%s6368 + $0x68] sm:$0xff]
    %v6383 = vld [vmem:[%s6368 + $0x70] sm:$0xff]
    %v6384 = vld [vmem:[%s6368 + $0x78] sm:$0xff]
    %v6385 = vld [vmem:[%s6368 + $0x80] sm:$0xff]
    %v6386 = vld [vmem:[%s6368 + $0x88] sm:$0xff]
    %v6387 = vld [vmem:[%s6368 + $0x90] sm:$0xff]
    %v6388 = vld [vmem:[%s6368 + $0x98] sm:$0xff]
    %v6389 = vld [vmem:[%s6368 + $0xa0] sm:$0xff]
    %v6390 = vld [vmem:[%s6368 + $0xa8] sm:$0xff]
    %v6391 = vld [vmem:[%s6368 + $0xb0] sm:$0xff]
    %v6392 = vld [vmem:[%s6368 + $0xb8] sm:$0xff]
    %v6393 = vld [vmem:[%s6368 + $0xc0] sm:$0xff]
    %v6394 = vld [vmem:[%s6368 + $0xc8] sm:$0xff]
    %v6395 = vld [vmem:[%s6368 + $0xd0] sm:$0xff]
    %v6396 = vld [vmem:[%s6368 + $0xd8] sm:$0xff]
    %v6397 = vld [vmem:[%s6368 + $0xe0] sm:$0xff]
    %v6398 = vld [vmem:[%s6368 + $0xe8] sm:$0xff]
    %v6399 = vld [vmem:[%s6368 + $0xf0] sm:$0xff]
    %v6400 = vld [vmem:[%s6368 + $0xf8] sm:$0xff]
    %v6433 = vunpack.c.l.b16 %v6369
    %v6434 = vunpack.c.h.b16 %v6369
    %v6435 = vunpack.c.l.b16 %v6370
    %v6436 = vunpack.c.h.b16 %v6370
    %v6437 = vunpack.c.l.b16 %v6371
    %v6438 = vunpack.c.h.b16 %v6371
    %v6439 = vunpack.c.l.b16 %v6372
    %v6440 = vunpack.c.h.b16 %v6372
    %v6441 = vunpack.c.l.b16 %v6373
    %v6442 = vunpack.c.h.b16 %v6373
    %v6443 = vunpack.c.l.b16 %v6374
    %v6444 = vunpack.c.h.b16 %v6374
    %v6445 = vunpack.c.l.b16 %v6375
    %v6446 = vunpack.c.h.b16 %v6375
    %v6447 = vunpack.c.l.b16 %v6376
    %v6448 = vunpack.c.h.b16 %v6376
    %v6449 = vunpack.c.l.b16 %v6377
    %v6450 = vunpack.c.h.b16 %v6377
    %v6451 = vunpack.c.l.b16 %v6378
    %v6452 = vunpack.c.h.b16 %v6378
    %v6453 = vunpack.c.l.b16 %v6379
    %v6454 = vunpack.c.h.b16 %v6379
    %v6455 = vunpack.c.l.b16 %v6380
    %v6456 = vunpack.c.h.b16 %v6380
    %v6457 = vunpack.c.l.b16 %v6381
    %v6458 = vunpack.c.h.b16 %v6381
    %v6459 = vunpack.c.l.b16 %v6382
    %v6460 = vunpack.c.h.b16 %v6382
    %v6461 = vunpack.c.l.b16 %v6383
    %v6462 = vunpack.c.h.b16 %v6383
    %v6463 = vunpack.c.l.b16 %v6384
    %v6464 = vunpack.c.h.b16 %v6384
    %v6465 = vunpack.c.l.b16 %v6385
    %v6466 = vunpack.c.h.b16 %v6385
    %v6467 = vunpack.c.l.b16 %v6386
    %v6468 = vunpack.c.h.b16 %v6386
    %v6469 = vunpack.c.l.b16 %v6387
    %v6470 = vunpack.c.h.b16 %v6387
    %v6471 = vunpack.c.l.b16 %v6388
    %v6472 = vunpack.c.h.b16 %v6388
    %v6473 = vunpack.c.l.b16 %v6389
    %v6474 = vunpack.c.h.b16 %v6389
    %v6475 = vunpack.c.l.b16 %v6390
    %v6476 = vunpack.c.h.b16 %v6390
    %v6477 = vunpack.c.l.b16 %v6391
    %v6478 = vunpack.c.h.b16 %v6391
    %v6479 = vunpack.c.l.b16 %v6392
    %v6480 = vunpack.c.h.b16 %v6392
    %v6481 = vunpack.c.l.b16 %v6393
    %v6482 = vunpack.c.h.b16 %v6393
    %v6483 = vunpack.c.l.b16 %v6394
    %v6484 = vunpack.c.h.b16 %v6394
    %v6485 = vunpack.c.l.b16 %v6395
    %v6486 = vunpack.c.h.b16 %v6395
    %v6487 = vunpack.c.l.b16 %v6396
    %v6488 = vunpack.c.h.b16 %v6396
    %v6489 = vunpack.c.l.b16 %v6397
    %v6490 = vunpack.c.h.b16 %v6397
    %v6491 = vunpack.c.l.b16 %v6398
    %v6492 = vunpack.c.h.b16 %v6398
    %v6493 = vunpack.c.l.b16 %v6399
    %v6494 = vunpack.c.h.b16 %v6399
    %v6495 = vunpack.c.l.b16 %v6400
    %v6496 = vunpack.c.h.b16 %v6400
    %v6497 = vpack.c.b16 %v6435, %v6433
    %v6498 = vpack.c.b16 %v6436, %v6434
    %v6499 = vpack.c.b16 %v6439, %v6437
    %v6500 = vpack.c.b16 %v6440, %v6438
    %v6501 = vpack.c.b16 %v6443, %v6441
    %v6502 = vpack.c.b16 %v6444, %v6442
    %v6503 = vpack.c.b16 %v6447, %v6445
    %v6504 = vpack.c.b16 %v6448, %v6446
    %v6505 = vpack.c.b16 %v6451, %v6449
    %v6506 = vpack.c.b16 %v6452, %v6450
    %v6507 = vpack.c.b16 %v6455, %v6453
    %v6508 = vpack.c.b16 %v6456, %v6454
    %v6509 = vpack.c.b16 %v6459, %v6457
    %v6510 = vpack.c.b16 %v6460, %v6458
    %v6511 = vpack.c.b16 %v6463, %v6461
    %v6512 = vpack.c.b16 %v6464, %v6462
    %v6513 = vpack.c.b16 %v6467, %v6465
    %v6514 = vpack.c.b16 %v6468, %v6466
    %v6515 = vpack.c.b16 %v6471, %v6469
    %v6516 = vpack.c.b16 %v6472, %v6470
    %v6517 = vpack.c.b16 %v6475, %v6473
    %v6518 = vpack.c.b16 %v6476, %v6474
    %v6519 = vpack.c.b16 %v6479, %v6477
    %v6520 = vpack.c.b16 %v6480, %v6478
    %v6521 = vpack.c.b16 %v6483, %v6481
    %v6522 = vpack.c.b16 %v6484, %v6482
    %v6523 = vpack.c.b16 %v6487, %v6485
    %v6524 = vpack.c.b16 %v6488, %v6486
    %v6525 = vpack.c.b16 %v6491, %v6489
    %v6526 = vpack.c.b16 %v6492, %v6490
    %v6527 = vpack.c.b16 %v6495, %v6493
    %v6528 = vpack.c.b16 %v6496, %v6494
    %6561 = vmatprep.subr.bf16.mxu0 %v6512
    %6562 = vmatpush1.bf16.msra.mxu0 %v6511
    %6563 = vmatprep.subr.bf16.mxu0 %v6510
    %6564 = vmatpush1.bf16.msra.mxu0 %v6509
    %6565 = vmatprep.subr.bf16.mxu0 %v6508
    %6566 = vmatpush1.bf16.msra.mxu0 %v6507
    %6567 = vmatprep.subr.bf16.mxu0 %v6506
    %6568 = vmatpush1.bf16.msra.mxu0 %v6505
    %6569 = vmatprep.subr.bf16.mxu0 %v6504
    %6570 = vmatpush1.bf16.msra.mxu0 %v6503
    %6571 = vmatprep.subr.bf16.mxu0 %v6502
    %6572 = vmatpush1.bf16.msra.mxu0 %v6501
    %6573 = vmatprep.subr.bf16.mxu0 %v6500
    %6574 = vmatpush1.bf16.msra.mxu0 %v6499
    %6575 = vmatprep.subr.bf16.mxu0 %v6498
    %6576 = vmatpush1.bf16.msra.mxu0 %v6497
    %6577 = vmatprep.subr.bf16.mxu0 %v6528
    %6578 = vmatpush2.bf16.msra.mxu0 %v6527
    %6579 = vmatprep.subr.bf16.mxu0 %v6526
    %6580 = vmatpush2.bf16.msra.mxu0 %v6525
    %6581 = vmatprep.subr.bf16.mxu0 %v6524
    %6582 = vmatpush2.bf16.msra.mxu0 %v6523
    %6583 = vmatprep.subr.bf16.mxu0 %v6522
    %6584 = vmatpush2.bf16.msra.mxu0 %v6521
    %6585 = vmatprep.subr.bf16.mxu0 %v6520
    %6586 = vmatpush2.bf16.msra.mxu0 %v6519
    %6587 = vmatprep.subr.bf16.mxu0 %v6518
    %6588 = vmatpush2.bf16.msra.mxu0 %v6517
    %6589 = vmatprep.subr.bf16.mxu0 %v6516
    %6590 = vmatpush2.bf16.msra.mxu0 %v6515
    %6591 = vmatprep.subr.bf16.mxu0 %v6514
    %6592 = vmatpush2.bf16.msra.mxu0 %v6513
    %6593 = vmatprep.mubr.bf16.mxu0 %v5437
    %6594 = vmatmul.mubr.bf16.gmra.mxu0 %v5436
    %v6595 = vpop.f32.mrf.mxu0
    %v6596 = vadd.f32 0.0, %v6595
    %v6597 = vpop.f32.mrf.mxu0
    %v6598 = vadd.f32 0.0, %v6597
    %v6599 = vpop.f32.mrf.mxu0
    %v6600 = vadd.f32 0.0, %v6599
    %v6601 = vpop.f32.mrf.mxu0
    %v6602 = vadd.f32 0.0, %v6601
    %6603 = vmatprep.mubr.bf16.mxu0 %v5439
    %6604 = vmatmul.mubr.bf16.gmra.mxu0 %v5438
    %v6605 = vpop.f32.mrf.mxu0
    %v6606 = vadd.f32 0.0, %v6605
    %v6607 = vpop.f32.mrf.mxu0
    %v6608 = vadd.f32 0.0, %v6607
    %v6609 = vpop.f32.mrf.mxu0
    %v6610 = vadd.f32 0.0, %v6609
    %v6611 = vpop.f32.mrf.mxu0
    %v6612 = vadd.f32 0.0, %v6611
    %6613 = vmatprep.mubr.bf16.mxu0 %v5441
    %6614 = vmatmul.mubr.bf16.gmra.mxu0 %v5440
    %v6615 = vpop.f32.mrf.mxu0
    %v6616 = vadd.f32 0.0, %v6615
    %v6617 = vpop.f32.mrf.mxu0
    %v6618 = vadd.f32 0.0, %v6617
    %v6619 = vpop.f32.mrf.mxu0
    %v6620 = vadd.f32 0.0, %v6619
    %v6621 = vpop.f32.mrf.mxu0
    %v6622 = vadd.f32 0.0, %v6621
    %6623 = vmatprep.mubr.bf16.mxu0 %v5443
    %6624 = vmatmul.mubr.bf16.gmra.mxu0 %v5442
    %v6625 = vpop.f32.mrf.mxu0
    %v6626 = vadd.f32 0.0, %v6625
    %v6627 = vpop.f32.mrf.mxu0
    %v6628 = vadd.f32 0.0, %v6627
    %v6629 = vpop.f32.mrf.mxu0
    %v6630 = vadd.f32 0.0, %v6629
    %v6631 = vpop.f32.mrf.mxu0
    %v6632 = vadd.f32 0.0, %v6631
    %6633 = vmatprep.mubr.bf16.mxu0 %v5445
    %6634 = vmatmul.mubr.bf16.gmra.mxu0 %v5444
    %v6635 = vpop.f32.mrf.mxu0
    %v6636 = vadd.f32 0.0, %v6635
    %v6637 = vpop.f32.mrf.mxu0
    %v6638 = vadd.f32 0.0, %v6637
    %v6639 = vpop.f32.mrf.mxu0
    %v6640 = vadd.f32 0.0, %v6639
    %v6641 = vpop.f32.mrf.mxu0
    %v6642 = vadd.f32 0.0, %v6641
    %6643 = vmatprep.mubr.bf16.mxu0 %v5447
    %6644 = vmatmul.mubr.bf16.gmra.mxu0 %v5446
    %v6645 = vpop.f32.mrf.mxu0
    %v6646 = vadd.f32 0.0, %v6645
    %v6647 = vpop.f32.mrf.mxu0
    %v6648 = vadd.f32 0.0, %v6647
    %v6649 = vpop.f32.mrf.mxu0
    %v6650 = vadd.f32 0.0, %v6649
    %v6651 = vpop.f32.mrf.mxu0
    %v6652 = vadd.f32 0.0, %v6651
    %6653 = vmatprep.mubr.bf16.mxu0 %v5449
    %6654 = vmatmul.mubr.bf16.gmra.mxu0 %v5448
    %v6655 = vpop.f32.mrf.mxu0
    %v6656 = vadd.f32 0.0, %v6655
    %v6657 = vpop.f32.mrf.mxu0
    %v6658 = vadd.f32 0.0, %v6657
    %v6659 = vpop.f32.mrf.mxu0
    %v6660 = vadd.f32 0.0, %v6659
    %v6661 = vpop.f32.mrf.mxu0
    %v6662 = vadd.f32 0.0, %v6661
    %6663 = vmatprep.mubr.bf16.mxu0 %v5451
    %6664 = vmatmul.mubr.bf16.gmra.mxu0 %v5450
    %v6665 = vpop.f32.mrf.mxu0
    %v6666 = vadd.f32 0.0, %v6665
    %v6667 = vpop.f32.mrf.mxu0
    %v6668 = vadd.f32 0.0, %v6667
    %v6669 = vpop.f32.mrf.mxu0
    %v6670 = vadd.f32 0.0, %v6669
    %v6671 = vpop.f32.mrf.mxu0
    %v6672 = vadd.f32 0.0, %v6671
    %6673 = vmatprep.mubr.bf16.mxu0 %v5453
    %6674 = vmatmul.mubr.bf16.gmra.mxu0 %v5452
    %v6675 = vpop.f32.mrf.mxu0
    %v6676 = vadd.f32 0.0, %v6675
    %v6677 = vpop.f32.mrf.mxu0
    %v6678 = vadd.f32 0.0, %v6677
    %v6679 = vpop.f32.mrf.mxu0
    %v6680 = vadd.f32 0.0, %v6679
    %v6681 = vpop.f32.mrf.mxu0
    %v6682 = vadd.f32 0.0, %v6681
    %6683 = vmatprep.mubr.bf16.mxu0 %v5455
    %6684 = vmatmul.mubr.bf16.gmra.mxu0 %v5454
    %v6685 = vpop.f32.mrf.mxu0
    %v6686 = vadd.f32 0.0, %v6685
    %v6687 = vpop.f32.mrf.mxu0
    %v6688 = vadd.f32 0.0, %v6687
    %v6689 = vpop.f32.mrf.mxu0
    %v6690 = vadd.f32 0.0, %v6689
    %v6691 = vpop.f32.mrf.mxu0
    %v6692 = vadd.f32 0.0, %v6691
    %6693 = vmatprep.mubr.bf16.mxu0 %v5457
    %6694 = vmatmul.mubr.bf16.gmra.mxu0 %v5456
    %v6695 = vpop.f32.mrf.mxu0
    %v6696 = vadd.f32 0.0, %v6695
    %v6697 = vpop.f32.mrf.mxu0
    %v6698 = vadd.f32 0.0, %v6697
    %v6699 = vpop.f32.mrf.mxu0
    %v6700 = vadd.f32 0.0, %v6699
    %v6701 = vpop.f32.mrf.mxu0
    %v6702 = vadd.f32 0.0, %v6701
    %6703 = vmatprep.mubr.bf16.mxu0 %v5459
    %6704 = vmatmul.mubr.bf16.gmra.mxu0 %v5458
    %v6705 = vpop.f32.mrf.mxu0
    %v6706 = vadd.f32 0.0, %v6705
    %v6707 = vpop.f32.mrf.mxu0
    %v6708 = vadd.f32 0.0, %v6707
    %v6709 = vpop.f32.mrf.mxu0
    %v6710 = vadd.f32 0.0, %v6709
    %v6711 = vpop.f32.mrf.mxu0
    %v6712 = vadd.f32 0.0, %v6711
    %6713 = vmatprep.mubr.bf16.mxu0 %v5461
    %6714 = vmatmul.mubr.bf16.gmra.mxu0 %v5460
    %v6715 = vpop.f32.mrf.mxu0
    %v6716 = vadd.f32 0.0, %v6715
    %v6717 = vpop.f32.mrf.mxu0
    %v6718 = vadd.f32 0.0, %v6717
    %v6719 = vpop.f32.mrf.mxu0
    %v6720 = vadd.f32 0.0, %v6719
    %v6721 = vpop.f32.mrf.mxu0
    %v6722 = vadd.f32 0.0, %v6721
    %6723 = vmatprep.mubr.bf16.mxu0 %v5463
    %6724 = vmatmul.mubr.bf16.gmra.mxu0 %v5462
    %v6725 = vpop.f32.mrf.mxu0
    %v6726 = vadd.f32 0.0, %v6725
    %v6727 = vpop.f32.mrf.mxu0
    %v6728 = vadd.f32 0.0, %v6727
    %v6729 = vpop.f32.mrf.mxu0
    %v6730 = vadd.f32 0.0, %v6729
    %v6731 = vpop.f32.mrf.mxu0
    %v6732 = vadd.f32 0.0, %v6731
    %6733 = vmatprep.mubr.bf16.mxu0 %v5465
    %6734 = vmatmul.mubr.bf16.gmra.mxu0 %v5464
    %v6735 = vpop.f32.mrf.mxu0
    %v6736 = vadd.f32 0.0, %v6735
    %v6737 = vpop.f32.mrf.mxu0
    %v6738 = vadd.f32 0.0, %v6737
    %v6739 = vpop.f32.mrf.mxu0
    %v6740 = vadd.f32 0.0, %v6739
    %v6741 = vpop.f32.mrf.mxu0
    %v6742 = vadd.f32 0.0, %v6741
    %6743 = vmatprep.mubr.bf16.mxu0 %v5467
    %6744 = vmatmul.mubr.bf16.gmra.mxu0 %v5466
    %v6745 = vpop.f32.mrf.mxu0
    %v6746 = vadd.f32 0.0, %v6745
    %v6747 = vpop.f32.mrf.mxu0
    %v6748 = vadd.f32 0.0, %v6747
    %v6749 = vpop.f32.mrf.mxu0
    %v6750 = vadd.f32 0.0, %v6749
    %v6751 = vpop.f32.mrf.mxu0
    %v6752 = vadd.f32 0.0, %v6751
    %6753 = vdwg.mxu0
    %v6754 = vrot.slane %v6596, 6
    %v6755 = vrot.slane %v6598, 6
    %v6756 = vrot.slane %v6600, 6
    %v6757 = vrot.slane %v6602, 6
    %v6758 = vrot.slane %v6606, 6
    %v6759 = vrot.slane %v6608, 6
    %v6760 = vrot.slane %v6610, 6
    %v6761 = vrot.slane %v6612, 6
    %v6762 = vrot.slane %v6616, 6
    %v6763 = vrot.slane %v6618, 6
    %v6764 = vrot.slane %v6620, 6
    %v6765 = vrot.slane %v6622, 6
    %v6766 = vrot.slane %v6626, 6
    %v6767 = vrot.slane %v6628, 6
    %v6768 = vrot.slane %v6630, 6
    %v6769 = vrot.slane %v6632, 6
    %v6770 = vrot.slane %v6636, 6
    %v6771 = vrot.slane %v6638, 6
    %v6772 = vrot.slane %v6640, 6
    %v6773 = vrot.slane %v6642, 6
    %v6774 = vrot.slane %v6646, 6
    %v6775 = vrot.slane %v6648, 6
    %v6776 = vrot.slane %v6650, 6
    %v6777 = vrot.slane %v6652, 6
    %v6778 = vrot.slane %v6656, 6
    %v6779 = vrot.slane %v6658, 6
    %v6780 = vrot.slane %v6660, 6
    %v6781 = vrot.slane %v6662, 6
    %v6782 = vrot.slane %v6666, 6
    %v6783 = vrot.slane %v6668, 6
    %v6784 = vrot.slane %v6670, 6
    %v6785 = vrot.slane %v6672, 6
    %v6786 = vrot.slane %v6676, 6
    %v6787 = vrot.slane %v6678, 6
    %v6788 = vrot.slane %v6680, 6
    %v6789 = vrot.slane %v6682, 6
    %v6790 = vrot.slane %v6686, 6
    %v6791 = vrot.slane %v6688, 6
    %v6792 = vrot.slane %v6690, 6
    %v6793 = vrot.slane %v6692, 6
    %v6794 = vrot.slane %v6696, 6
    %v6795 = vrot.slane %v6698, 6
    %v6796 = vrot.slane %v6700, 6
    %v6797 = vrot.slane %v6702, 6
    %v6798 = vrot.slane %v6706, 6
    %v6799 = vrot.slane %v6708, 6
    %v6800 = vrot.slane %v6710, 6
    %v6801 = vrot.slane %v6712, 6
    %v6802 = vrot.slane %v6716, 6
    %v6803 = vrot.slane %v6718, 6
    %v6804 = vrot.slane %v6720, 6
    %v6805 = vrot.slane %v6722, 6
    %v6806 = vrot.slane %v6726, 6
    %v6807 = vrot.slane %v6728, 6
    %v6808 = vrot.slane %v6730, 6
    %v6809 = vrot.slane %v6732, 6
    %v6810 = vrot.slane %v6736, 6
    %v6811 = vrot.slane %v6738, 6
    %v6812 = vrot.slane %v6740, 6
    %v6813 = vrot.slane %v6742, 6
    %v6814 = vrot.slane %v6746, 6
    %v6815 = vrot.slane %v6748, 6
    %v6816 = vrot.slane %v6750, 6
    %v6817 = vrot.slane %v6752, 6
    %v6818 = vsel %vm3198, %v6814, %v6816
    %v6819 = vsel %vm3198, %v6815, %v6817
    %v6820 = vsel %vm3198, %v6812, %v6814
    %v6821 = vsel %vm3198, %v6813, %v6815
    %v6822 = vsel %vm3198, %v6810, %v6812
    %v6823 = vsel %vm3198, %v6811, %v6813
    %v6824 = vsel %vm3198, %v6808, %v6810
    %v6825 = vsel %vm3198, %v6809, %v6811
    %v6826 = vsel %vm3198, %v6806, %v6808
    %v6827 = vsel %vm3198, %v6807, %v6809
    %v6828 = vsel %vm3198, %v6804, %v6806
    %v6829 = vsel %vm3198, %v6805, %v6807
    %v6830 = vsel %vm3198, %v6802, %v6804
    %v6831 = vsel %vm3198, %v6803, %v6805
    %v6832 = vsel %vm3198, %v6800, %v6802
    %v6833 = vsel %vm3198, %v6801, %v6803
    %v6834 = vsel %vm3198, %v6798, %v6800
    %v6835 = vsel %vm3198, %v6799, %v6801
    %v6836 = vsel %vm3198, %v6796, %v6798
    %v6837 = vsel %vm3198, %v6797, %v6799
    %v6838 = vsel %vm3198, %v6794, %v6796
    %v6839 = vsel %vm3198, %v6795, %v6797
    %v6840 = vsel %vm3198, %v6792, %v6794
    %v6841 = vsel %vm3198, %v6793, %v6795
    %v6842 = vsel %vm3198, %v6790, %v6792
    %v6843 = vsel %vm3198, %v6791, %v6793
    %v6844 = vsel %vm3198, %v6788, %v6790
    %v6845 = vsel %vm3198, %v6789, %v6791
    %v6846 = vsel %vm3198, %v6786, %v6788
    %v6847 = vsel %vm3198, %v6787, %v6789
    %v6848 = vsel %vm3198, %v6784, %v6786
    %v6849 = vsel %vm3198, %v6785, %v6787
    %v6850 = vsel %vm3198, %v6782, %v6784
    %v6851 = vsel %vm3198, %v6783, %v6785
    %v6852 = vsel %vm3198, %v6780, %v6782
    %v6853 = vsel %vm3198, %v6781, %v6783
    %v6854 = vsel %vm3198, %v6778, %v6780
    %v6855 = vsel %vm3198, %v6779, %v6781
    %v6856 = vsel %vm3198, %v6776, %v6778
    %v6857 = vsel %vm3198, %v6777, %v6779
    %v6858 = vsel %vm3198, %v6774, %v6776
    %v6859 = vsel %vm3198, %v6775, %v6777
    %v6860 = vsel %vm3198, %v6772, %v6774
    %v6861 = vsel %vm3198, %v6773, %v6775
    %v6862 = vsel %vm3198, %v6770, %v6772
    %v6863 = vsel %vm3198, %v6771, %v6773
    %v6864 = vsel %vm3198, %v6768, %v6770
    %v6865 = vsel %vm3198, %v6769, %v6771
    %v6866 = vsel %vm3198, %v6766, %v6768
    %v6867 = vsel %vm3198, %v6767, %v6769
    %v6868 = vsel %vm3198, %v6764, %v6766
    %v6869 = vsel %vm3198, %v6765, %v6767
    %v6870 = vsel %vm3198, %v6762, %v6764
    %v6871 = vsel %vm3198, %v6763, %v6765
    %v6872 = vsel %vm3198, %v6760, %v6762
    %v6873 = vsel %vm3198, %v6761, %v6763
    %v6874 = vsel %vm3198, %v6758, %v6760
    %v6875 = vsel %vm3198, %v6759, %v6761
    %v6876 = vsel %vm3198, %v6756, %v6758
    %v6877 = vsel %vm3198, %v6757, %v6759
    %v6878 = vsel %vm3198, %v6754, %v6756
    %v6879 = vsel %vm3198, %v6755, %v6757
    %v6880 = vsel %vm3198, %v6816, %v6754
    %v6881 = vsel %vm3198, %v6817, %v6755
    %v6882 = vadd.f32 %v6210, %v6878
    %v6883 = vadd.f32 %v6212, %v6879
    %v6884 = vadd.f32 %v6214, %v6876
    %v6885 = vadd.f32 %v6216, %v6877
    %v6886 = vadd.f32 %v6220, %v6874
    %v6887 = vadd.f32 %v6222, %v6875
    %v6888 = vadd.f32 %v6224, %v6872
    %v6889 = vadd.f32 %v6226, %v6873
    %v6890 = vadd.f32 %v6230, %v6870
    %v6891 = vadd.f32 %v6232, %v6871
    %v6892 = vadd.f32 %v6234, %v6868
    %v6893 = vadd.f32 %v6236, %v6869
    %v6894 = vadd.f32 %v6240, %v6866
    %v6895 = vadd.f32 %v6242, %v6867
    %v6896 = vadd.f32 %v6244, %v6864
    %v6897 = vadd.f32 %v6246, %v6865
    %v6898 = vadd.f32 %v6250, %v6862
    %v6899 = vadd.f32 %v6252, %v6863
    %v6900 = vadd.f32 %v6254, %v6860
    %v6901 = vadd.f32 %v6256, %v6861
    %v6902 = vadd.f32 %v6260, %v6858
    %v6903 = vadd.f32 %v6262, %v6859
    %v6904 = vadd.f32 %v6264, %v6856
    %v6905 = vadd.f32 %v6266, %v6857
    %v6906 = vadd.f32 %v6270, %v6854
    %v6907 = vadd.f32 %v6272, %v6855
    %v6908 = vadd.f32 %v6274, %v6852
    %v6909 = vadd.f32 %v6276, %v6853
    %v6910 = vadd.f32 %v6280, %v6850
    %v6911 = vadd.f32 %v6282, %v6851
    %v6912 = vadd.f32 %v6284, %v6848
    %v6913 = vadd.f32 %v6286, %v6849
    %v6914 = vadd.f32 %v6290, %v6846
    %v6915 = vadd.f32 %v6292, %v6847
    %v6916 = vadd.f32 %v6294, %v6844
    %v6917 = vadd.f32 %v6296, %v6845
    %v6918 = vadd.f32 %v6300, %v6842
    %v6919 = vadd.f32 %v6302, %v6843
    %v6920 = vadd.f32 %v6304, %v6840
    %v6921 = vadd.f32 %v6306, %v6841
    %v6922 = vadd.f32 %v6310, %v6838
    %v6923 = vadd.f32 %v6312, %v6839
    %v6924 = vadd.f32 %v6314, %v6836
    %v6925 = vadd.f32 %v6316, %v6837
    %v6926 = vadd.f32 %v6320, %v6834
    %v6927 = vadd.f32 %v6322, %v6835
    %v6928 = vadd.f32 %v6324, %v6832
    %v6929 = vadd.f32 %v6326, %v6833
    %v6930 = vadd.f32 %v6330, %v6830
    %v6931 = vadd.f32 %v6332, %v6831
    %v6932 = vadd.f32 %v6334, %v6828
    %v6933 = vadd.f32 %v6336, %v6829
    %v6934 = vadd.f32 %v6340, %v6826
    %v6935 = vadd.f32 %v6342, %v6827
    %v6936 = vadd.f32 %v6344, %v6824
    %v6937 = vadd.f32 %v6346, %v6825
    %v6938 = vadd.f32 %v6350, %v6822
    %v6939 = vadd.f32 %v6352, %v6823
    %v6940 = vadd.f32 %v6354, %v6820
    %v6941 = vadd.f32 %v6356, %v6821
    %v6942 = vadd.f32 %v6360, %v6818
    %v6943 = vadd.f32 %v6362, %v6819
    %v6944 = vadd.f32 %v6364, %v6880
    %v6945 = vadd.f32 %v6366, %v6881
    %s6946 = scalar_lea.vmem [#allocation7], 2
    %v6947 = vld [vmem:[%s6946] sm:$0x3]
    %v6949 = vlaneseq
    %v6950 = vshrl.u32 %v6949, 7
    %v6951 = vsub.s32 0, %v6950
    %v6952 = vrot.slane %v6947, %v6951
    %v6953 = vlaneseq
    %v6954 = vshrl.u32 %v6953, 7
    %v6955 = vsub.s32 1, %v6954
    %v6956 = vrot.slane %v6947, %v6955
    %v6959 = vadd.f32 %v6882, %v6952
    %v6960 = vadd.f32 %v6883, %v6956
    %v6961 = vadd.f32 %v6884, %v6952
    %v6962 = vadd.f32 %v6885, %v6956
    %v6963 = vadd.f32 %v6886, %v6952
    %v6964 = vadd.f32 %v6887, %v6956
    %v6965 = vadd.f32 %v6888, %v6952
    %v6966 = vadd.f32 %v6889, %v6956
    %v6967 = vadd.f32 %v6890, %v6952
    %v6968 = vadd.f32 %v6891, %v6956
    %v6969 = vadd.f32 %v6892, %v6952
    %v6970 = vadd.f32 %v6893, %v6956
    %v6971 = vadd.f32 %v6894, %v6952
    %v6972 = vadd.f32 %v6895, %v6956
    %v6973 = vadd.f32 %v6896, %v6952
    %v6974 = vadd.f32 %v6897, %v6956
    %v6975 = vadd.f32 %v6898, %v6952
    %v6976 = vadd.f32 %v6899, %v6956
    %v6977 = vadd.f32 %v6900, %v6952
    %v6978 = vadd.f32 %v6901, %v6956
    %v6979 = vadd.f32 %v6902, %v6952
    %v6980 = vadd.f32 %v6903, %v6956
    %v6981 = vadd.f32 %v6904, %v6952
    %v6982 = vadd.f32 %v6905, %v6956
    %v6983 = vadd.f32 %v6906, %v6952
    %v6984 = vadd.f32 %v6907, %v6956
    %v6985 = vadd.f32 %v6908, %v6952
    %v6986 = vadd.f32 %v6909, %v6956
    %v6987 = vadd.f32 %v6910, %v6952
    %v6988 = vadd.f32 %v6911, %v6956
    %v6989 = vadd.f32 %v6912, %v6952
    %v6990 = vadd.f32 %v6913, %v6956
    %v6991 = vadd.f32 %v6914, %v6952
    %v6992 = vadd.f32 %v6915, %v6956
    %v6993 = vadd.f32 %v6916, %v6952
    %v6994 = vadd.f32 %v6917, %v6956
    %v6995 = vadd.f32 %v6918, %v6952
    %v6996 = vadd.f32 %v6919, %v6956
    %v6997 = vadd.f32 %v6920, %v6952
    %v6998 = vadd.f32 %v6921, %v6956
    %v6999 = vadd.f32 %v6922, %v6952
    %v7000 = vadd.f32 %v6923, %v6956
    %v7001 = vadd.f32 %v6924, %v6952
    %v7002 = vadd.f32 %v6925, %v6956
    %v7003 = vadd.f32 %v6926, %v6952
    %v7004 = vadd.f32 %v6927, %v6956
    %v7005 = vadd.f32 %v6928, %v6952
    %v7006 = vadd.f32 %v6929, %v6956
    %v7007 = vadd.f32 %v6930, %v6952
    %v7008 = vadd.f32 %v6931, %v6956
    %v7009 = vadd.f32 %v6932, %v6952
    %v7010 = vadd.f32 %v6933, %v6956
    %v7011 = vadd.f32 %v6934, %v6952
    %v7012 = vadd.f32 %v6935, %v6956
    %v7013 = vadd.f32 %v6936, %v6952
    %v7014 = vadd.f32 %v6937, %v6956
    %v7015 = vadd.f32 %v6938, %v6952
    %v7016 = vadd.f32 %v6939, %v6956
    %v7017 = vadd.f32 %v6940, %v6952
    %v7018 = vadd.f32 %v6941, %v6956
    %v7019 = vadd.f32 %v6942, %v6952
    %v7020 = vadd.f32 %v6943, %v6956
    %v7021 = vadd.f32 %v6944, %v6952
    %v7022 = vadd.f32 %v6945, %v6956
    %v7023 = vrot.slane %v5244, 3
    %v7024 = vrot.slane %v5245, 3
    %v7025 = vrot.slane %v5246, 3
    %v7026 = vrot.slane %v5247, 3
    %v7027 = vrot.slane %v5248, 3
    %v7028 = vrot.slane %v5249, 3
    %v7029 = vrot.slane %v5250, 3
    %v7030 = vrot.slane %v5251, 3
    %v7031 = vrot.slane %v5252, 3
    %v7032 = vrot.slane %v5253, 3
    %v7033 = vrot.slane %v5254, 3
    %v7034 = vrot.slane %v5255, 3
    %v7035 = vrot.slane %v5256, 3
    %v7036 = vrot.slane %v5257, 3
    %v7037 = vrot.slane %v5258, 3
    %v7038 = vrot.slane %v5259, 3
    %v7039 = vrot.slane %v5260, 3
    %v7040 = vrot.slane %v5261, 3
    %v7041 = vrot.slane %v5262, 3
    %v7042 = vrot.slane %v5263, 3
    %v7043 = vrot.slane %v5264, 3
    %v7044 = vrot.slane %v5265, 3
    %v7045 = vrot.slane %v5266, 3
    %v7046 = vrot.slane %v5267, 3
    %v7047 = vrot.slane %v5268, 3
    %v7048 = vrot.slane %v5269, 3
    %v7049 = vrot.slane %v5270, 3
    %v7050 = vrot.slane %v5271, 3
    %v7051 = vrot.slane %v5272, 3
    %v7052 = vrot.slane %v5273, 3
    %v7053 = vrot.slane %v5274, 3
    %v7054 = vrot.slane %v5275, 3
    %v7055 = vrot.slane %v5276, 3
    %v7056 = vrot.slane %v5277, 3
    %v7057 = vrot.slane %v5278, 3
    %v7058 = vrot.slane %v5279, 3
    %v7059 = vrot.slane %v5280, 3
    %v7060 = vrot.slane %v5281, 3
    %v7061 = vrot.slane %v5282, 3
    %v7062 = vrot.slane %v5283, 3
    %v7063 = vrot.slane %v5284, 3
    %v7064 = vrot.slane %v5285, 3
    %v7065 = vrot.slane %v5286, 3
    %v7066 = vrot.slane %v5287, 3
    %v7067 = vrot.slane %v5288, 3
    %v7068 = vrot.slane %v5289, 3
    %v7069 = vrot.slane %v5290, 3
    %v7070 = vrot.slane %v5291, 3
    %v7071 = vrot.slane %v5292, 3
    %v7072 = vrot.slane %v5293, 3
    %v7073 = vrot.slane %v5294, 3
    %v7074 = vrot.slane %v5295, 3
    %v7075 = vrot.slane %v5296, 3
    %v7076 = vrot.slane %v5297, 3
    %v7077 = vrot.slane %v5298, 3
    %v7078 = vrot.slane %v5299, 3
    %v7079 = vrot.slane %v5300, 3
    %v7080 = vrot.slane %v5301, 3
    %v7081 = vrot.slane %v5302, 3
    %v7082 = vrot.slane %v5303, 3
    %v7083 = vrot.slane %v5304, 3
    %v7084 = vrot.slane %v5305, 3
    %v7085 = vrot.slane %v5306, 3
    %v7086 = vrot.slane %v5307, 3
    %v7087 = vsel %vm1749, %v7083, %v7085
    %v7088 = vsel %vm1749, %v7084, %v7086
    %v7089 = vsel %vm1749, %v7081, %v7083
    %v7090 = vsel %vm1749, %v7082, %v7084
    %v7091 = vsel %vm1749, %v7079, %v7081
    %v7092 = vsel %vm1749, %v7080, %v7082
    %v7093 = vsel %vm1749, %v7077, %v7079
    %v7094 = vsel %vm1749, %v7078, %v7080
    %v7095 = vsel %vm1749, %v7075, %v7077
    %v7096 = vsel %vm1749, %v7076, %v7078
    %v7097 = vsel %vm1749, %v7073, %v7075
    %v7098 = vsel %vm1749, %v7074, %v7076
    %v7099 = vsel %vm1749, %v7071, %v7073
    %v7100 = vsel %vm1749, %v7072, %v7074
    %v7101 = vsel %vm1749, %v7069, %v7071
    %v7102 = vsel %vm1749, %v7070, %v7072
    %v7103 = vsel %vm1749, %v7067, %v7069
    %v7104 = vsel %vm1749, %v7068, %v7070
    %v7105 = vsel %vm1749, %v7065, %v7067
    %v7106 = vsel %vm1749, %v7066, %v7068
    %v7107 = vsel %vm1749, %v7063, %v7065
    %v7108 = vsel %vm1749, %v7064, %v7066
    %v7109 = vsel %vm1749, %v7061, %v7063
    %v7110 = vsel %vm1749, %v7062, %v7064
    %v7111 = vsel %vm1749, %v7059, %v7061
    %v7112 = vsel %vm1749, %v7060, %v7062
    %v7113 = vsel %vm1749, %v7057, %v7059
    %v7114 = vsel %vm1749, %v7058, %v7060
    %v7115 = vsel %vm1749, %v7055, %v7057
    %v7116 = vsel %vm1749, %v7056, %v7058
    %v7117 = vsel %vm1749, %v7053, %v7055
    %v7118 = vsel %vm1749, %v7054, %v7056
    %v7119 = vsel %vm1749, %v7051, %v7053
    %v7120 = vsel %vm1749, %v7052, %v7054
    %v7121 = vsel %vm1749, %v7049, %v7051
    %v7122 = vsel %vm1749, %v7050, %v7052
    %v7123 = vsel %vm1749, %v7047, %v7049
    %v7124 = vsel %vm1749, %v7048, %v7050
    %v7125 = vsel %vm1749, %v7045, %v7047
    %v7126 = vsel %vm1749, %v7046, %v7048
    %v7127 = vsel %vm1749, %v7043, %v7045
    %v7128 = vsel %vm1749, %v7044, %v7046
    %v7129 = vsel %vm1749, %v7041, %v7043
    %v7130 = vsel %vm1749, %v7042, %v7044
    %v7131 = vsel %vm1749, %v7039, %v7041
    %v7132 = vsel %vm1749, %v7040, %v7042
    %v7133 = vsel %vm1749, %v7037, %v7039
    %v7134 = vsel %vm1749, %v7038, %v7040
    %v7135 = vsel %vm1749, %v7035, %v7037
    %v7136 = vsel %vm1749, %v7036, %v7038
    %v7137 = vsel %vm1749, %v7033, %v7035
    %v7138 = vsel %vm1749, %v7034, %v7036
    %v7139 = vsel %vm1749, %v7031, %v7033
    %v7140 = vsel %vm1749, %v7032, %v7034
    %v7141 = vsel %vm1749, %v7029, %v7031
    %v7142 = vsel %vm1749, %v7030, %v7032
    %v7143 = vsel %vm1749, %v7027, %v7029
    %v7144 = vsel %vm1749, %v7028, %v7030
    %v7145 = vsel %vm1749, %v7025, %v7027
    %v7146 = vsel %vm1749, %v7026, %v7028
    %v7147 = vsel %vm1749, %v7023, %v7025
    %v7148 = vsel %vm1749, %v7024, %v7026
    %v7149 = vsel %vm1749, %v7085, %v7023
    %v7150 = vsel %vm1749, %v7086, %v7024
    %v7151 = vadd.f32 %v6959, %v7147
    %v7152 = vadd.f32 %v6960, %v7148
    %v7153 = vadd.f32 %v6961, %v7145
    %v7154 = vadd.f32 %v6962, %v7146
    %v7155 = vadd.f32 %v6963, %v7143
    %v7156 = vadd.f32 %v6964, %v7144
    %v7157 = vadd.f32 %v6965, %v7141
    %v7158 = vadd.f32 %v6966, %v7142
    %v7159 = vadd.f32 %v6967, %v7139
    %v7160 = vadd.f32 %v6968, %v7140
    %v7161 = vadd.f32 %v6969, %v7137
    %v7162 = vadd.f32 %v6970, %v7138
    %v7163 = vadd.f32 %v6971, %v7135
    %v7164 = vadd.f32 %v6972, %v7136
    %v7165 = vadd.f32 %v6973, %v7133
    %v7166 = vadd.f32 %v6974, %v7134
    %v7167 = vadd.f32 %v6975, %v7131
    %v7168 = vadd.f32 %v6976, %v7132
    %v7169 = vadd.f32 %v6977, %v7129
    %v7170 = vadd.f32 %v6978, %v7130
    %v7171 = vadd.f32 %v6979, %v7127
    %v7172 = vadd.f32 %v6980, %v7128
    %v7173 = vadd.f32 %v6981, %v7125
    %v7174 = vadd.f32 %v6982, %v7126
    %v7175 = vadd.f32 %v6983, %v7123
    %v7176 = vadd.f32 %v6984, %v7124
    %v7177 = vadd.f32 %v6985, %v7121
    %v7178 = vadd.f32 %v6986, %v7122
    %v7179 = vadd.f32 %v6987, %v7119
    %v7180 = vadd.f32 %v6988, %v7120
    %v7181 = vadd.f32 %v6989, %v7117
    %v7182 = vadd.f32 %v6990, %v7118
    %v7183 = vadd.f32 %v6991, %v7115
    %v7184 = vadd.f32 %v6992, %v7116
    %v7185 = vadd.f32 %v6993, %v7113
    %v7186 = vadd.f32 %v6994, %v7114
    %v7187 = vadd.f32 %v6995, %v7111
    %v7188 = vadd.f32 %v6996, %v7112
    %v7189 = vadd.f32 %v6997, %v7109
    %v7190 = vadd.f32 %v6998, %v7110
    %v7191 = vadd.f32 %v6999, %v7107
    %v7192 = vadd.f32 %v7000, %v7108
    %v7193 = vadd.f32 %v7001, %v7105
    %v7194 = vadd.f32 %v7002, %v7106
    %v7195 = vadd.f32 %v7003, %v7103
    %v7196 = vadd.f32 %v7004, %v7104
    %v7197 = vadd.f32 %v7005, %v7101
    %v7198 = vadd.f32 %v7006, %v7102
    %v7199 = vadd.f32 %v7007, %v7099
    %v7200 = vadd.f32 %v7008, %v7100
    %v7201 = vadd.f32 %v7009, %v7097
    %v7202 = vadd.f32 %v7010, %v7098
    %v7203 = vadd.f32 %v7011, %v7095
    %v7204 = vadd.f32 %v7012, %v7096
    %v7205 = vadd.f32 %v7013, %v7093
    %v7206 = vadd.f32 %v7014, %v7094
    %v7207 = vadd.f32 %v7015, %v7091
    %v7208 = vadd.f32 %v7016, %v7092
    %v7209 = vadd.f32 %v7017, %v7089
    %v7210 = vadd.f32 %v7018, %v7090
    %v7211 = vadd.f32 %v7019, %v7087
    %v7212 = vadd.f32 %v7020, %v7088
    %v7213 = vadd.f32 %v7021, %v7149
    %v7214 = vadd.f32 %v7022, %v7150
    %v7215 = vmul.f32 %v7151, 0.1
    %v7216 = vmul.f32 %v7152, 0.1
    %v7217 = vmul.f32 %v7153, 0.1
    %v7218 = vmul.f32 %v7154, 0.1
    %v7219 = vmul.f32 %v7155, 0.1
    %v7220 = vmul.f32 %v7156, 0.1
    %v7221 = vmul.f32 %v7157, 0.1
    %v7222 = vmul.f32 %v7158, 0.1
    %v7223 = vmul.f32 %v7159, 0.1
    %v7224 = vmul.f32 %v7160, 0.1
    %v7225 = vmul.f32 %v7161, 0.1
    %v7226 = vmul.f32 %v7162, 0.1
    %v7227 = vmul.f32 %v7163, 0.1
    %v7228 = vmul.f32 %v7164, 0.1
    %v7229 = vmul.f32 %v7165, 0.1
    %v7230 = vmul.f32 %v7166, 0.1
    %v7231 = vmul.f32 %v7167, 0.1
    %v7232 = vmul.f32 %v7168, 0.1
    %v7233 = vmul.f32 %v7169, 0.1
    %v7234 = vmul.f32 %v7170, 0.1
    %v7235 = vmul.f32 %v7171, 0.1
    %v7236 = vmul.f32 %v7172, 0.1
    %v7237 = vmul.f32 %v7173, 0.1
    %v7238 = vmul.f32 %v7174, 0.1
    %v7239 = vmul.f32 %v7175, 0.1
    %v7240 = vmul.f32 %v7176, 0.1
    %v7241 = vmul.f32 %v7177, 0.1
    %v7242 = vmul.f32 %v7178, 0.1
    %v7243 = vmul.f32 %v7179, 0.1
    %v7244 = vmul.f32 %v7180, 0.1
    %v7245 = vmul.f32 %v7181, 0.1
    %v7246 = vmul.f32 %v7182, 0.1
    %v7247 = vmul.f32 %v7183, 0.1
    %v7248 = vmul.f32 %v7184, 0.1
    %v7249 = vmul.f32 %v7185, 0.1
    %v7250 = vmul.f32 %v7186, 0.1
    %v7251 = vmul.f32 %v7187, 0.1
    %v7252 = vmul.f32 %v7188, 0.1
    %v7253 = vmul.f32 %v7189, 0.1
    %v7254 = vmul.f32 %v7190, 0.1
    %v7255 = vmul.f32 %v7191, 0.1
    %v7256 = vmul.f32 %v7192, 0.1
    %v7257 = vmul.f32 %v7193, 0.1
    %v7258 = vmul.f32 %v7194, 0.1
    %v7259 = vmul.f32 %v7195, 0.1
    %v7260 = vmul.f32 %v7196, 0.1
    %v7261 = vmul.f32 %v7197, 0.1
    %v7262 = vmul.f32 %v7198, 0.1
    %v7263 = vmul.f32 %v7199, 0.1
    %v7264 = vmul.f32 %v7200, 0.1
    %v7265 = vmul.f32 %v7201, 0.1
    %v7266 = vmul.f32 %v7202, 0.1
    %v7267 = vmul.f32 %v7203, 0.1
    %v7268 = vmul.f32 %v7204, 0.1
    %v7269 = vmul.f32 %v7205, 0.1
    %v7270 = vmul.f32 %v7206, 0.1
    %v7271 = vmul.f32 %v7207, 0.1
    %v7272 = vmul.f32 %v7208, 0.1
    %v7273 = vmul.f32 %v7209, 0.1
    %v7274 = vmul.f32 %v7210, 0.1
    %v7275 = vmul.f32 %v7211, 0.1
    %v7276 = vmul.f32 %v7212, 0.1
    %v7277 = vmul.f32 %v7213, 0.1
    %v7278 = vmul.f32 %v7214, 0.1
    %v7279 = vmax.f32 %v7151, %v7215
    %v7280 = vmax.f32 %v7152, %v7216
    %v7281 = vmax.f32 %v7153, %v7217
    %v7282 = vmax.f32 %v7154, %v7218
    %v7283 = vmax.f32 %v7155, %v7219
    %v7284 = vmax.f32 %v7156, %v7220
    %v7285 = vmax.f32 %v7157, %v7221
    %v7286 = vmax.f32 %v7158, %v7222
    %v7287 = vmax.f32 %v7159, %v7223
    %v7288 = vmax.f32 %v7160, %v7224
    %v7289 = vmax.f32 %v7161, %v7225
    %v7290 = vmax.f32 %v7162, %v7226
    %v7291 = vmax.f32 %v7163, %v7227
    %v7292 = vmax.f32 %v7164, %v7228
    %v7293 = vmax.f32 %v7165, %v7229
    %v7294 = vmax.f32 %v7166, %v7230
    %v7295 = vmax.f32 %v7167, %v7231
    %v7296 = vmax.f32 %v7168, %v7232
    %v7297 = vmax.f32 %v7169, %v7233
    %v7298 = vmax.f32 %v7170, %v7234
    %v7299 = vmax.f32 %v7171, %v7235
    %v7300 = vmax.f32 %v7172, %v7236
    %v7301 = vmax.f32 %v7173, %v7237
    %v7302 = vmax.f32 %v7174, %v7238
    %v7303 = vmax.f32 %v7175, %v7239
    %v7304 = vmax.f32 %v7176, %v7240
    %v7305 = vmax.f32 %v7177, %v7241
    %v7306 = vmax.f32 %v7178, %v7242
    %v7307 = vmax.f32 %v7179, %v7243
    %v7308 = vmax.f32 %v7180, %v7244
    %v7309 = vmax.f32 %v7181, %v7245
    %v7310 = vmax.f32 %v7182, %v7246
    %v7311 = vmax.f32 %v7183, %v7247
    %v7312 = vmax.f32 %v7184, %v7248
    %v7313 = vmax.f32 %v7185, %v7249
    %v7314 = vmax.f32 %v7186, %v7250
    %v7315 = vmax.f32 %v7187, %v7251
    %v7316 = vmax.f32 %v7188, %v7252
    %v7317 = vmax.f32 %v7189, %v7253
    %v7318 = vmax.f32 %v7190, %v7254
    %v7319 = vmax.f32 %v7191, %v7255
    %v7320 = vmax.f32 %v7192, %v7256
    %v7321 = vmax.f32 %v7193, %v7257
    %v7322 = vmax.f32 %v7194, %v7258
    %v7323 = vmax.f32 %v7195, %v7259
    %v7324 = vmax.f32 %v7196, %v7260
    %v7325 = vmax.f32 %v7197, %v7261
    %v7326 = vmax.f32 %v7198, %v7262
    %v7327 = vmax.f32 %v7199, %v7263
    %v7328 = vmax.f32 %v7200, %v7264
    %v7329 = vmax.f32 %v7201, %v7265
    %v7330 = vmax.f32 %v7202, %v7266
    %v7331 = vmax.f32 %v7203, %v7267
    %v7332 = vmax.f32 %v7204, %v7268
    %v7333 = vmax.f32 %v7205, %v7269
    %v7334 = vmax.f32 %v7206, %v7270
    %v7335 = vmax.f32 %v7207, %v7271
    %v7336 = vmax.f32 %v7208, %v7272
    %v7337 = vmax.f32 %v7209, %v7273
    %v7338 = vmax.f32 %v7210, %v7274
    %v7339 = vmax.f32 %v7211, %v7275
    %v7340 = vmax.f32 %v7212, %v7276
    %v7341 = vmax.f32 %v7213, %v7277
    %v7342 = vmax.f32 %v7214, %v7278
    %v7343 = vpack.c.bf16 %v7281, %v7279
    %v7344 = vpack.c.bf16 %v7282, %v7280
    %v7345 = vpack.c.bf16 %v7285, %v7283
    %v7346 = vpack.c.bf16 %v7286, %v7284
    %v7347 = vpack.c.bf16 %v7289, %v7287
    %v7348 = vpack.c.bf16 %v7290, %v7288
    %v7349 = vpack.c.bf16 %v7293, %v7291
    %v7350 = vpack.c.bf16 %v7294, %v7292
    %v7351 = vpack.c.bf16 %v7297, %v7295
    %v7352 = vpack.c.bf16 %v7298, %v7296
    %v7353 = vpack.c.bf16 %v7301, %v7299
    %v7354 = vpack.c.bf16 %v7302, %v7300
    %v7355 = vpack.c.bf16 %v7305, %v7303
    %v7356 = vpack.c.bf16 %v7306, %v7304
    %v7357 = vpack.c.bf16 %v7309, %v7307
    %v7358 = vpack.c.bf16 %v7310, %v7308
    %v7359 = vpack.c.bf16 %v7313, %v7311
    %v7360 = vpack.c.bf16 %v7314, %v7312
    %v7361 = vpack.c.bf16 %v7317, %v7315
    %v7362 = vpack.c.bf16 %v7318, %v7316
    %v7363 = vpack.c.bf16 %v7321, %v7319
    %v7364 = vpack.c.bf16 %v7322, %v7320
    %v7365 = vpack.c.bf16 %v7325, %v7323
    %v7366 = vpack.c.bf16 %v7326, %v7324
    %v7367 = vpack.c.bf16 %v7329, %v7327
    %v7368 = vpack.c.bf16 %v7330, %v7328
    %v7369 = vpack.c.bf16 %v7333, %v7331
    %v7370 = vpack.c.bf16 %v7334, %v7332
    %v7371 = vpack.c.bf16 %v7337, %v7335
    %v7372 = vpack.c.bf16 %v7338, %v7336
    %v7373 = vpack.c.bf16 %v7341, %v7339
    %v7374 = vpack.c.bf16 %v7342, %v7340
    %s7375 = scalar_lea.vmem [#allocation6], 1536
    %v7376 = vld [vmem:[%s7375] sm:$0xff]
    %v7377 = vld [vmem:[%s7375 + $0x8] sm:$0xff]
    %v7378 = vld [vmem:[%s7375 + $0x10] sm:$0xff]
    %v7379 = vld [vmem:[%s7375 + $0x18] sm:$0xff]
    %v7380 = vld [vmem:[%s7375 + $0x20] sm:$0xff]
    %v7381 = vld [vmem:[%s7375 + $0x28] sm:$0xff]
    %v7382 = vld [vmem:[%s7375 + $0x30] sm:$0xff]
    %v7383 = vld [vmem:[%s7375 + $0x38] sm:$0xff]
    %v7384 = vld [vmem:[%s7375 + $0x40] sm:$0xff]
    %v7385 = vld [vmem:[%s7375 + $0x48] sm:$0xff]
    %v7386 = vld [vmem:[%s7375 + $0x50] sm:$0xff]
    %v7387 = vld [vmem:[%s7375 + $0x58] sm:$0xff]
    %v7388 = vld [vmem:[%s7375 + $0x60] sm:$0xff]
    %v7389 = vld [vmem:[%s7375 + $0x68] sm:$0xff]
    %v7390 = vld [vmem:[%s7375 + $0x70] sm:$0xff]
    %v7391 = vld [vmem:[%s7375 + $0x78] sm:$0xff]
    %v7392 = vld [vmem:[%s7375 + $0x80] sm:$0xff]
    %v7393 = vld [vmem:[%s7375 + $0x88] sm:$0xff]
    %v7394 = vld [vmem:[%s7375 + $0x90] sm:$0xff]
    %v7395 = vld [vmem:[%s7375 + $0x98] sm:$0xff]
    %v7396 = vld [vmem:[%s7375 + $0xa0] sm:$0xff]
    %v7397 = vld [vmem:[%s7375 + $0xa8] sm:$0xff]
    %v7398 = vld [vmem:[%s7375 + $0xb0] sm:$0xff]
    %v7399 = vld [vmem:[%s7375 + $0xb8] sm:$0xff]
    %v7400 = vld [vmem:[%s7375 + $0xc0] sm:$0xff]
    %v7401 = vld [vmem:[%s7375 + $0xc8] sm:$0xff]
    %v7402 = vld [vmem:[%s7375 + $0xd0] sm:$0xff]
    %v7403 = vld [vmem:[%s7375 + $0xd8] sm:$0xff]
    %v7404 = vld [vmem:[%s7375 + $0xe0] sm:$0xff]
    %v7405 = vld [vmem:[%s7375 + $0xe8] sm:$0xff]
    %v7406 = vld [vmem:[%s7375 + $0xf0] sm:$0xff]
    %v7407 = vld [vmem:[%s7375 + $0xf8] sm:$0xff]
    %s7408 = scalar_lea.vmem [#allocation6], 1792
    %v7409 = vld [vmem:[%s7408] sm:$0xff]
    %v7410 = vld [vmem:[%s7408 + $0x8] sm:$0xff]
    %v7411 = vld [vmem:[%s7408 + $0x10] sm:$0xff]
    %v7412 = vld [vmem:[%s7408 + $0x18] sm:$0xff]
    %v7413 = vld [vmem:[%s7408 + $0x20] sm:$0xff]
    %v7414 = vld [vmem:[%s7408 + $0x28] sm:$0xff]
    %v7415 = vld [vmem:[%s7408 + $0x30] sm:$0xff]
    %v7416 = vld [vmem:[%s7408 + $0x38] sm:$0xff]
    %v7417 = vld [vmem:[%s7408 + $0x40] sm:$0xff]
    %v7418 = vld [vmem:[%s7408 + $0x48] sm:$0xff]
    %v7419 = vld [vmem:[%s7408 + $0x50] sm:$0xff]
    %v7420 = vld [vmem:[%s7408 + $0x58] sm:$0xff]
    %v7421 = vld [vmem:[%s7408 + $0x60] sm:$0xff]
    %v7422 = vld [vmem:[%s7408 + $0x68] sm:$0xff]
    %v7423 = vld [vmem:[%s7408 + $0x70] sm:$0xff]
    %v7424 = vld [vmem:[%s7408 + $0x78] sm:$0xff]
    %v7425 = vld [vmem:[%s7408 + $0x80] sm:$0xff]
    %v7426 = vld [vmem:[%s7408 + $0x88] sm:$0xff]
    %v7427 = vld [vmem:[%s7408 + $0x90] sm:$0xff]
    %v7428 = vld [vmem:[%s7408 + $0x98] sm:$0xff]
    %v7429 = vld [vmem:[%s7408 + $0xa0] sm:$0xff]
    %v7430 = vld [vmem:[%s7408 + $0xa8] sm:$0xff]
    %v7431 = vld [vmem:[%s7408 + $0xb0] sm:$0xff]
    %v7432 = vld [vmem:[%s7408 + $0xb8] sm:$0xff]
    %v7433 = vld [vmem:[%s7408 + $0xc0] sm:$0xff]
    %v7434 = vld [vmem:[%s7408 + $0xc8] sm:$0xff]
    %v7435 = vld [vmem:[%s7408 + $0xd0] sm:$0xff]
    %v7436 = vld [vmem:[%s7408 + $0xd8] sm:$0xff]
    %v7437 = vld [vmem:[%s7408 + $0xe0] sm:$0xff]
    %v7438 = vld [vmem:[%s7408 + $0xe8] sm:$0xff]
    %v7439 = vld [vmem:[%s7408 + $0xf0] sm:$0xff]
    %v7440 = vld [vmem:[%s7408 + $0xf8] sm:$0xff]
    %v7473 = vunpack.c.l.b16 %v7409
    %v7474 = vunpack.c.h.b16 %v7409
    %v7475 = vunpack.c.l.b16 %v7410
    %v7476 = vunpack.c.h.b16 %v7410
    %v7477 = vunpack.c.l.b16 %v7411
    %v7478 = vunpack.c.h.b16 %v7411
    %v7479 = vunpack.c.l.b16 %v7412
    %v7480 = vunpack.c.h.b16 %v7412
    %v7481 = vunpack.c.l.b16 %v7413
    %v7482 = vunpack.c.h.b16 %v7413
    %v7483 = vunpack.c.l.b16 %v7414
    %v7484 = vunpack.c.h.b16 %v7414
    %v7485 = vunpack.c.l.b16 %v7415
    %v7486 = vunpack.c.h.b16 %v7415
    %v7487 = vunpack.c.l.b16 %v7416
    %v7488 = vunpack.c.h.b16 %v7416
    %v7489 = vunpack.c.l.b16 %v7417
    %v7490 = vunpack.c.h.b16 %v7417
    %v7491 = vunpack.c.l.b16 %v7418
    %v7492 = vunpack.c.h.b16 %v7418
    %v7493 = vunpack.c.l.b16 %v7419
    %v7494 = vunpack.c.h.b16 %v7419
    %v7495 = vunpack.c.l.b16 %v7420
    %v7496 = vunpack.c.h.b16 %v7420
    %v7497 = vunpack.c.l.b16 %v7421
    %v7498 = vunpack.c.h.b16 %v7421
    %v7499 = vunpack.c.l.b16 %v7422
    %v7500 = vunpack.c.h.b16 %v7422
    %v7501 = vunpack.c.l.b16 %v7423
    %v7502 = vunpack.c.h.b16 %v7423
    %v7503 = vunpack.c.l.b16 %v7424
    %v7504 = vunpack.c.h.b16 %v7424
    %v7505 = vunpack.c.l.b16 %v7425
    %v7506 = vunpack.c.h.b16 %v7425
    %v7507 = vunpack.c.l.b16 %v7426
    %v7508 = vunpack.c.h.b16 %v7426
    %v7509 = vunpack.c.l.b16 %v7427
    %v7510 = vunpack.c.h.b16 %v7427
    %v7511 = vunpack.c.l.b16 %v7428
    %v7512 = vunpack.c.h.b16 %v7428
    %v7513 = vunpack.c.l.b16 %v7429
    %v7514 = vunpack.c.h.b16 %v7429
    %v7515 = vunpack.c.l.b16 %v7430
    %v7516 = vunpack.c.h.b16 %v7430
    %v7517 = vunpack.c.l.b16 %v7431
    %v7518 = vunpack.c.h.b16 %v7431
    %v7519 = vunpack.c.l.b16 %v7432
    %v7520 = vunpack.c.h.b16 %v7432
    %v7521 = vunpack.c.l.b16 %v7433
    %v7522 = vunpack.c.h.b16 %v7433
    %v7523 = vunpack.c.l.b16 %v7434
    %v7524 = vunpack.c.h.b16 %v7434
    %v7525 = vunpack.c.l.b16 %v7435
    %v7526 = vunpack.c.h.b16 %v7435
    %v7527 = vunpack.c.l.b16 %v7436
    %v7528 = vunpack.c.h.b16 %v7436
    %v7529 = vunpack.c.l.b16 %v7437
    %v7530 = vunpack.c.h.b16 %v7437
    %v7531 = vunpack.c.l.b16 %v7438
    %v7532 = vunpack.c.h.b16 %v7438
    %v7533 = vunpack.c.l.b16 %v7439
    %v7534 = vunpack.c.h.b16 %v7439
    %v7535 = vunpack.c.l.b16 %v7440
    %v7536 = vunpack.c.h.b16 %v7440
    %v7537 = vpack.c.b16 %v7475, %v7473
    %v7538 = vpack.c.b16 %v7476, %v7474
    %v7539 = vpack.c.b16 %v7479, %v7477
    %v7540 = vpack.c.b16 %v7480, %v7478
    %v7541 = vpack.c.b16 %v7483, %v7481
    %v7542 = vpack.c.b16 %v7484, %v7482
    %v7543 = vpack.c.b16 %v7487, %v7485
    %v7544 = vpack.c.b16 %v7488, %v7486
    %v7545 = vpack.c.b16 %v7491, %v7489
    %v7546 = vpack.c.b16 %v7492, %v7490
    %v7547 = vpack.c.b16 %v7495, %v7493
    %v7548 = vpack.c.b16 %v7496, %v7494
    %v7549 = vpack.c.b16 %v7499, %v7497
    %v7550 = vpack.c.b16 %v7500, %v7498
    %v7551 = vpack.c.b16 %v7503, %v7501
    %v7552 = vpack.c.b16 %v7504, %v7502
    %v7553 = vpack.c.b16 %v7507, %v7505
    %v7554 = vpack.c.b16 %v7508, %v7506
    %v7555 = vpack.c.b16 %v7511, %v7509
    %v7556 = vpack.c.b16 %v7512, %v7510
    %v7557 = vpack.c.b16 %v7515, %v7513
    %v7558 = vpack.c.b16 %v7516, %v7514
    %v7559 = vpack.c.b16 %v7519, %v7517
    %v7560 = vpack.c.b16 %v7520, %v7518
    %v7561 = vpack.c.b16 %v7523, %v7521
    %v7562 = vpack.c.b16 %v7524, %v7522
    %v7563 = vpack.c.b16 %v7527, %v7525
    %v7564 = vpack.c.b16 %v7528, %v7526
    %v7565 = vpack.c.b16 %v7531, %v7529
    %v7566 = vpack.c.b16 %v7532, %v7530
    %v7567 = vpack.c.b16 %v7535, %v7533
    %v7568 = vpack.c.b16 %v7536, %v7534
    %7601 = vmatprep.subr.bf16.mxu0 %v7552
    %7602 = vmatpush1.bf16.msra.mxu0 %v7551
    %7603 = vmatprep.subr.bf16.mxu0 %v7550
    %7604 = vmatpush1.bf16.msra.mxu0 %v7549
    %7605 = vmatprep.subr.bf16.mxu0 %v7548
    %7606 = vmatpush1.bf16.msra.mxu0 %v7547
    %7607 = vmatprep.subr.bf16.mxu0 %v7546
    %7608 = vmatpush1.bf16.msra.mxu0 %v7545
    %7609 = vmatprep.subr.bf16.mxu0 %v7544
    %7610 = vmatpush1.bf16.msra.mxu0 %v7543
    %7611 = vmatprep.subr.bf16.mxu0 %v7542
    %7612 = vmatpush1.bf16.msra.mxu0 %v7541
    %7613 = vmatprep.subr.bf16.mxu0 %v7540
    %7614 = vmatpush1.bf16.msra.mxu0 %v7539
    %7615 = vmatprep.subr.bf16.mxu0 %v7538
    %7616 = vmatpush1.bf16.msra.mxu0 %v7537
    %7617 = vmatprep.subr.bf16.mxu0 %v7568
    %7618 = vmatpush2.bf16.msra.mxu0 %v7567
    %7619 = vmatprep.subr.bf16.mxu0 %v7566
    %7620 = vmatpush2.bf16.msra.mxu0 %v7565
    %7621 = vmatprep.subr.bf16.mxu0 %v7564
    %7622 = vmatpush2.bf16.msra.mxu0 %v7563
    %7623 = vmatprep.subr.bf16.mxu0 %v7562
    %7624 = vmatpush2.bf16.msra.mxu0 %v7561
    %7625 = vmatprep.subr.bf16.mxu0 %v7560
    %7626 = vmatpush2.bf16.msra.mxu0 %v7559
    %7627 = vmatprep.subr.bf16.mxu0 %v7558
    %7628 = vmatpush2.bf16.msra.mxu0 %v7557
    %7629 = vmatprep.subr.bf16.mxu0 %v7556
    %7630 = vmatpush2.bf16.msra.mxu0 %v7555
    %7631 = vmatprep.subr.bf16.mxu0 %v7554
    %7632 = vmatpush2.bf16.msra.mxu0 %v7553
    %7633 = vmatprep.mubr.bf16.mxu0 %v7344
    %7634 = vmatmul.mubr.bf16.gmra.mxu0 %v7343
    %v7635 = vpop.f32.mrf.mxu0
    %v7636 = vadd.f32 0.0, %v7635
    %v7637 = vpop.f32.mrf.mxu0
    %v7638 = vadd.f32 0.0, %v7637
    %v7639 = vpop.f32.mrf.mxu0
    %v7640 = vadd.f32 0.0, %v7639
    %v7641 = vpop.f32.mrf.mxu0
    %v7642 = vadd.f32 0.0, %v7641
    %7643 = vmatprep.mubr.bf16.mxu0 %v7346
    %7644 = vmatmul.mubr.bf16.gmra.mxu0 %v7345
    %v7645 = vpop.f32.mrf.mxu0
    %v7646 = vadd.f32 0.0, %v7645
    %v7647 = vpop.f32.mrf.mxu0
    %v7648 = vadd.f32 0.0, %v7647
    %v7649 = vpop.f32.mrf.mxu0
    %v7650 = vadd.f32 0.0, %v7649
    %v7651 = vpop.f32.mrf.mxu0
    %v7652 = vadd.f32 0.0, %v7651
    %7653 = vmatprep.mubr.bf16.mxu0 %v7348
    %7654 = vmatmul.mubr.bf16.gmra.mxu0 %v7347
    %v7655 = vpop.f32.mrf.mxu0
    %v7656 = vadd.f32 0.0, %v7655
    %v7657 = vpop.f32.mrf.mxu0
    %v7658 = vadd.f32 0.0, %v7657
    %v7659 = vpop.f32.mrf.mxu0
    %v7660 = vadd.f32 0.0, %v7659
    %v7661 = vpop.f32.mrf.mxu0
    %v7662 = vadd.f32 0.0, %v7661
    %7663 = vmatprep.mubr.bf16.mxu0 %v7350
    %7664 = vmatmul.mubr.bf16.gmra.mxu0 %v7349
    %v7665 = vpop.f32.mrf.mxu0
    %v7666 = vadd.f32 0.0, %v7665
    %v7667 = vpop.f32.mrf.mxu0
    %v7668 = vadd.f32 0.0, %v7667
    %v7669 = vpop.f32.mrf.mxu0
    %v7670 = vadd.f32 0.0, %v7669
    %v7671 = vpop.f32.mrf.mxu0
    %v7672 = vadd.f32 0.0, %v7671
    %7673 = vmatprep.mubr.bf16.mxu0 %v7352
    %7674 = vmatmul.mubr.bf16.gmra.mxu0 %v7351
    %v7675 = vpop.f32.mrf.mxu0
    %v7676 = vadd.f32 0.0, %v7675
    %v7677 = vpop.f32.mrf.mxu0
    %v7678 = vadd.f32 0.0, %v7677
    %v7679 = vpop.f32.mrf.mxu0
    %v7680 = vadd.f32 0.0, %v7679
    %v7681 = vpop.f32.mrf.mxu0
    %v7682 = vadd.f32 0.0, %v7681
    %7683 = vmatprep.mubr.bf16.mxu0 %v7354
    %7684 = vmatmul.mubr.bf16.gmra.mxu0 %v7353
    %v7685 = vpop.f32.mrf.mxu0
    %v7686 = vadd.f32 0.0, %v7685
    %v7687 = vpop.f32.mrf.mxu0
    %v7688 = vadd.f32 0.0, %v7687
    %v7689 = vpop.f32.mrf.mxu0
    %v7690 = vadd.f32 0.0, %v7689
    %v7691 = vpop.f32.mrf.mxu0
    %v7692 = vadd.f32 0.0, %v7691
    %7693 = vmatprep.mubr.bf16.mxu0 %v7356
    %7694 = vmatmul.mubr.bf16.gmra.mxu0 %v7355
    %v7695 = vpop.f32.mrf.mxu0
    %v7696 = vadd.f32 0.0, %v7695
    %v7697 = vpop.f32.mrf.mxu0
    %v7698 = vadd.f32 0.0, %v7697
    %v7699 = vpop.f32.mrf.mxu0
    %v7700 = vadd.f32 0.0, %v7699
    %v7701 = vpop.f32.mrf.mxu0
    %v7702 = vadd.f32 0.0, %v7701
    %7703 = vmatprep.mubr.bf16.mxu0 %v7358
    %7704 = vmatmul.mubr.bf16.gmra.mxu0 %v7357
    %v7705 = vpop.f32.mrf.mxu0
    %v7706 = vadd.f32 0.0, %v7705
    %v7707 = vpop.f32.mrf.mxu0
    %v7708 = vadd.f32 0.0, %v7707
    %v7709 = vpop.f32.mrf.mxu0
    %v7710 = vadd.f32 0.0, %v7709
    %v7711 = vpop.f32.mrf.mxu0
    %v7712 = vadd.f32 0.0, %v7711
    %7713 = vmatprep.mubr.bf16.mxu0 %v7360
    %7714 = vmatmul.mubr.bf16.gmra.mxu0 %v7359
    %v7715 = vpop.f32.mrf.mxu0
    %v7716 = vadd.f32 0.0, %v7715
    %v7717 = vpop.f32.mrf.mxu0
    %v7718 = vadd.f32 0.0, %v7717
    %v7719 = vpop.f32.mrf.mxu0
    %v7720 = vadd.f32 0.0, %v7719
    %v7721 = vpop.f32.mrf.mxu0
    %v7722 = vadd.f32 0.0, %v7721
    %7723 = vmatprep.mubr.bf16.mxu0 %v7362
    %7724 = vmatmul.mubr.bf16.gmra.mxu0 %v7361
    %v7725 = vpop.f32.mrf.mxu0
    %v7726 = vadd.f32 0.0, %v7725
    %v7727 = vpop.f32.mrf.mxu0
    %v7728 = vadd.f32 0.0, %v7727
    %v7729 = vpop.f32.mrf.mxu0
    %v7730 = vadd.f32 0.0, %v7729
    %v7731 = vpop.f32.mrf.mxu0
    %v7732 = vadd.f32 0.0, %v7731
    %7733 = vmatprep.mubr.bf16.mxu0 %v7364
    %7734 = vmatmul.mubr.bf16.gmra.mxu0 %v7363
    %v7735 = vpop.f32.mrf.mxu0
    %v7736 = vadd.f32 0.0, %v7735
    %v7737 = vpop.f32.mrf.mxu0
    %v7738 = vadd.f32 0.0, %v7737
    %v7739 = vpop.f32.mrf.mxu0
    %v7740 = vadd.f32 0.0, %v7739
    %v7741 = vpop.f32.mrf.mxu0
    %v7742 = vadd.f32 0.0, %v7741
    %7743 = vmatprep.mubr.bf16.mxu0 %v7366
    %7744 = vmatmul.mubr.bf16.gmra.mxu0 %v7365
    %v7745 = vpop.f32.mrf.mxu0
    %v7746 = vadd.f32 0.0, %v7745
    %v7747 = vpop.f32.mrf.mxu0
    %v7748 = vadd.f32 0.0, %v7747
    %v7749 = vpop.f32.mrf.mxu0
    %v7750 = vadd.f32 0.0, %v7749
    %v7751 = vpop.f32.mrf.mxu0
    %v7752 = vadd.f32 0.0, %v7751
    %7753 = vmatprep.mubr.bf16.mxu0 %v7368
    %7754 = vmatmul.mubr.bf16.gmra.mxu0 %v7367
    %v7755 = vpop.f32.mrf.mxu0
    %v7756 = vadd.f32 0.0, %v7755
    %v7757 = vpop.f32.mrf.mxu0
    %v7758 = vadd.f32 0.0, %v7757
    %v7759 = vpop.f32.mrf.mxu0
    %v7760 = vadd.f32 0.0, %v7759
    %v7761 = vpop.f32.mrf.mxu0
    %v7762 = vadd.f32 0.0, %v7761
    %7763 = vmatprep.mubr.bf16.mxu0 %v7370
    %7764 = vmatmul.mubr.bf16.gmra.mxu0 %v7369
    %v7765 = vpop.f32.mrf.mxu0
    %v7766 = vadd.f32 0.0, %v7765
    %v7767 = vpop.f32.mrf.mxu0
    %v7768 = vadd.f32 0.0, %v7767
    %v7769 = vpop.f32.mrf.mxu0
    %v7770 = vadd.f32 0.0, %v7769
    %v7771 = vpop.f32.mrf.mxu0
    %v7772 = vadd.f32 0.0, %v7771
    %7773 = vmatprep.mubr.bf16.mxu0 %v7372
    %7774 = vmatmul.mubr.bf16.gmra.mxu0 %v7371
    %v7775 = vpop.f32.mrf.mxu0
    %v7776 = vadd.f32 0.0, %v7775
    %v7777 = vpop.f32.mrf.mxu0
    %v7778 = vadd.f32 0.0, %v7777
    %v7779 = vpop.f32.mrf.mxu0
    %v7780 = vadd.f32 0.0, %v7779
    %v7781 = vpop.f32.mrf.mxu0
    %v7782 = vadd.f32 0.0, %v7781
    %7783 = vmatprep.mubr.bf16.mxu0 %v7374
    %7784 = vmatmul.mubr.bf16.gmra.mxu0 %v7373
    %v7785 = vpop.f32.mrf.mxu0
    %v7786 = vadd.f32 0.0, %v7785
    %v7787 = vpop.f32.mrf.mxu0
    %v7788 = vadd.f32 0.0, %v7787
    %v7789 = vpop.f32.mrf.mxu0
    %v7790 = vadd.f32 0.0, %v7789
    %v7791 = vpop.f32.mrf.mxu0
    %v7792 = vadd.f32 0.0, %v7791
    %7793 = vdwg.mxu0
    %v7794 = vrot.slane %v7636, 3
    %v7795 = vrot.slane %v7638, 3
    %v7796 = vrot.slane %v7640, 3
    %v7797 = vrot.slane %v7642, 3
    %v7798 = vrot.slane %v7646, 3
    %v7799 = vrot.slane %v7648, 3
    %v7800 = vrot.slane %v7650, 3
    %v7801 = vrot.slane %v7652, 3
    %v7802 = vrot.slane %v7656, 3
    %v7803 = vrot.slane %v7658, 3
    %v7804 = vrot.slane %v7660, 3
    %v7805 = vrot.slane %v7662, 3
    %v7806 = vrot.slane %v7666, 3
    %v7807 = vrot.slane %v7668, 3
    %v7808 = vrot.slane %v7670, 3
    %v7809 = vrot.slane %v7672, 3
    %v7810 = vrot.slane %v7676, 3
    %v7811 = vrot.slane %v7678, 3
    %v7812 = vrot.slane %v7680, 3
    %v7813 = vrot.slane %v7682, 3
    %v7814 = vrot.slane %v7686, 3
    %v7815 = vrot.slane %v7688, 3
    %v7816 = vrot.slane %v7690, 3
    %v7817 = vrot.slane %v7692, 3
    %v7818 = vrot.slane %v7696, 3
    %v7819 = vrot.slane %v7698, 3
    %v7820 = vrot.slane %v7700, 3
    %v7821 = vrot.slane %v7702, 3
    %v7822 = vrot.slane %v7706, 3
    %v7823 = vrot.slane %v7708, 3
    %v7824 = vrot.slane %v7710, 3
    %v7825 = vrot.slane %v7712, 3
    %v7826 = vrot.slane %v7716, 3
    %v7827 = vrot.slane %v7718, 3
    %v7828 = vrot.slane %v7720, 3
    %v7829 = vrot.slane %v7722, 3
    %v7830 = vrot.slane %v7726, 3
    %v7831 = vrot.slane %v7728, 3
    %v7832 = vrot.slane %v7730, 3
    %v7833 = vrot.slane %v7732, 3
    %v7834 = vrot.slane %v7736, 3
    %v7835 = vrot.slane %v7738, 3
    %v7836 = vrot.slane %v7740, 3
    %v7837 = vrot.slane %v7742, 3
    %v7838 = vrot.slane %v7746, 3
    %v7839 = vrot.slane %v7748, 3
    %v7840 = vrot.slane %v7750, 3
    %v7841 = vrot.slane %v7752, 3
    %v7842 = vrot.slane %v7756, 3
    %v7843 = vrot.slane %v7758, 3
    %v7844 = vrot.slane %v7760, 3
    %v7845 = vrot.slane %v7762, 3
    %v7846 = vrot.slane %v7766, 3
    %v7847 = vrot.slane %v7768, 3
    %v7848 = vrot.slane %v7770, 3
    %v7849 = vrot.slane %v7772, 3
    %v7850 = vrot.slane %v7776, 3
    %v7851 = vrot.slane %v7778, 3
    %v7852 = vrot.slane %v7780, 3
    %v7853 = vrot.slane %v7782, 3
    %v7854 = vrot.slane %v7786, 3
    %v7855 = vrot.slane %v7788, 3
    %v7856 = vrot.slane %v7790, 3
    %v7857 = vrot.slane %v7792, 3
    %v7858 = vsel %vm1749, %v7854, %v7856
    %v7859 = vsel %vm1749, %v7855, %v7857
    %v7860 = vsel %vm1749, %v7852, %v7854
    %v7861 = vsel %vm1749, %v7853, %v7855
    %v7862 = vsel %vm1749, %v7850, %v7852
    %v7863 = vsel %vm1749, %v7851, %v7853
    %v7864 = vsel %vm1749, %v7848, %v7850
    %v7865 = vsel %vm1749, %v7849, %v7851
    %v7866 = vsel %vm1749, %v7846, %v7848
    %v7867 = vsel %vm1749, %v7847, %v7849
    %v7868 = vsel %vm1749, %v7844, %v7846
    %v7869 = vsel %vm1749, %v7845, %v7847
    %v7870 = vsel %vm1749, %v7842, %v7844
    %v7871 = vsel %vm1749, %v7843, %v7845
    %v7872 = vsel %vm1749, %v7840, %v7842
    %v7873 = vsel %vm1749, %v7841, %v7843
    %v7874 = vsel %vm1749, %v7838, %v7840
    %v7875 = vsel %vm1749, %v7839, %v7841
    %v7876 = vsel %vm1749, %v7836, %v7838
    %v7877 = vsel %vm1749, %v7837, %v7839
    %v7878 = vsel %vm1749, %v7834, %v7836
    %v7879 = vsel %vm1749, %v7835, %v7837
    %v7880 = vsel %vm1749, %v7832, %v7834
    %v7881 = vsel %vm1749, %v7833, %v7835
    %v7882 = vsel %vm1749, %v7830, %v7832
    %v7883 = vsel %vm1749, %v7831, %v7833
    %v7884 = vsel %vm1749, %v7828, %v7830
    %v7885 = vsel %vm1749, %v7829, %v7831
    %v7886 = vsel %vm1749, %v7826, %v7828
    %v7887 = vsel %vm1749, %v7827, %v7829
    %v7888 = vsel %vm1749, %v7824, %v7826
    %v7889 = vsel %vm1749, %v7825, %v7827
    %v7890 = vsel %vm1749, %v7822, %v7824
    %v7891 = vsel %vm1749, %v7823, %v7825
    %v7892 = vsel %vm1749, %v7820, %v7822
    %v7893 = vsel %vm1749, %v7821, %v7823
    %v7894 = vsel %vm1749, %v7818, %v7820
    %v7895 = vsel %vm1749, %v7819, %v7821
    %v7896 = vsel %vm1749, %v7816, %v7818
    %v7897 = vsel %vm1749, %v7817, %v7819
    %v7898 = vsel %vm1749, %v7814, %v7816
    %v7899 = vsel %vm1749, %v7815, %v7817
    %v7900 = vsel %vm1749, %v7812, %v7814
    %v7901 = vsel %vm1749, %v7813, %v7815
    %v7902 = vsel %vm1749, %v7810, %v7812
    %v7903 = vsel %vm1749, %v7811, %v7813
    %v7904 = vsel %vm1749, %v7808, %v7810
    %v7905 = vsel %vm1749, %v7809, %v7811
    %v7906 = vsel %vm1749, %v7806, %v7808
    %v7907 = vsel %vm1749, %v7807, %v7809
    %v7908 = vsel %vm1749, %v7804, %v7806
    %v7909 = vsel %vm1749, %v7805, %v7807
    %v7910 = vsel %vm1749, %v7802, %v7804
    %v7911 = vsel %vm1749, %v7803, %v7805
    %v7912 = vsel %vm1749, %v7800, %v7802
    %v7913 = vsel %vm1749, %v7801, %v7803
    %v7914 = vsel %vm1749, %v7798, %v7800
    %v7915 = vsel %vm1749, %v7799, %v7801
    %v7916 = vsel %vm1749, %v7796, %v7798
    %v7917 = vsel %vm1749, %v7797, %v7799
    %v7918 = vsel %vm1749, %v7794, %v7796
    %v7919 = vsel %vm1749, %v7795, %v7797
    %v7920 = vsel %vm1749, %v7856, %v7794
    %v7921 = vsel %vm1749, %v7857, %v7795
    %v7954 = vunpack.c.l.b16 %v7376
    %v7955 = vunpack.c.h.b16 %v7376
    %v7956 = vunpack.c.l.b16 %v7377
    %v7957 = vunpack.c.h.b16 %v7377
    %v7958 = vunpack.c.l.b16 %v7378
    %v7959 = vunpack.c.h.b16 %v7378
    %v7960 = vunpack.c.l.b16 %v7379
    %v7961 = vunpack.c.h.b16 %v7379
    %v7962 = vunpack.c.l.b16 %v7380
    %v7963 = vunpack.c.h.b16 %v7380
    %v7964 = vunpack.c.l.b16 %v7381
    %v7965 = vunpack.c.h.b16 %v7381
    %v7966 = vunpack.c.l.b16 %v7382
    %v7967 = vunpack.c.h.b16 %v7382
    %v7968 = vunpack.c.l.b16 %v7383
    %v7969 = vunpack.c.h.b16 %v7383
    %v7970 = vunpack.c.l.b16 %v7384
    %v7971 = vunpack.c.h.b16 %v7384
    %v7972 = vunpack.c.l.b16 %v7385
    %v7973 = vunpack.c.h.b16 %v7385
    %v7974 = vunpack.c.l.b16 %v7386
    %v7975 = vunpack.c.h.b16 %v7386
    %v7976 = vunpack.c.l.b16 %v7387
    %v7977 = vunpack.c.h.b16 %v7387
    %v7978 = vunpack.c.l.b16 %v7388
    %v7979 = vunpack.c.h.b16 %v7388
    %v7980 = vunpack.c.l.b16 %v7389
    %v7981 = vunpack.c.h.b16 %v7389
    %v7982 = vunpack.c.l.b16 %v7390
    %v7983 = vunpack.c.h.b16 %v7390
    %v7984 = vunpack.c.l.b16 %v7391
    %v7985 = vunpack.c.h.b16 %v7391
    %v7986 = vunpack.c.l.b16 %v7392
    %v7987 = vunpack.c.h.b16 %v7392
    %v7988 = vunpack.c.l.b16 %v7393
    %v7989 = vunpack.c.h.b16 %v7393
    %v7990 = vunpack.c.l.b16 %v7394
    %v7991 = vunpack.c.h.b16 %v7394
    %v7992 = vunpack.c.l.b16 %v7395
    %v7993 = vunpack.c.h.b16 %v7395
    %v7994 = vunpack.c.l.b16 %v7396
    %v7995 = vunpack.c.h.b16 %v7396
    %v7996 = vunpack.c.l.b16 %v7397
    %v7997 = vunpack.c.h.b16 %v7397
    %v7998 = vunpack.c.l.b16 %v7398
    %v7999 = vunpack.c.h.b16 %v7398
    %v8000 = vunpack.c.l.b16 %v7399
    %v8001 = vunpack.c.h.b16 %v7399
    %v8002 = vunpack.c.l.b16 %v7400
    %v8003 = vunpack.c.h.b16 %v7400
    %v8004 = vunpack.c.l.b16 %v7401
    %v8005 = vunpack.c.h.b16 %v7401
    %v8006 = vunpack.c.l.b16 %v7402
    %v8007 = vunpack.c.h.b16 %v7402
    %v8008 = vunpack.c.l.b16 %v7403
    %v8009 = vunpack.c.h.b16 %v7403
    %v8010 = vunpack.c.l.b16 %v7404
    %v8011 = vunpack.c.h.b16 %v7404
    %v8012 = vunpack.c.l.b16 %v7405
    %v8013 = vunpack.c.h.b16 %v7405
    %v8014 = vunpack.c.l.b16 %v7406
    %v8015 = vunpack.c.h.b16 %v7406
    %v8016 = vunpack.c.l.b16 %v7407
    %v8017 = vunpack.c.h.b16 %v7407
    %v8018 = vpack.c.b16 %v7956, %v7954
    %v8019 = vpack.c.b16 %v7957, %v7955
    %v8020 = vpack.c.b16 %v7960, %v7958
    %v8021 = vpack.c.b16 %v7961, %v7959
    %v8022 = vpack.c.b16 %v7964, %v7962
    %v8023 = vpack.c.b16 %v7965, %v7963
    %v8024 = vpack.c.b16 %v7968, %v7966
    %v8025 = vpack.c.b16 %v7969, %v7967
    %v8026 = vpack.c.b16 %v7972, %v7970
    %v8027 = vpack.c.b16 %v7973, %v7971
    %v8028 = vpack.c.b16 %v7976, %v7974
    %v8029 = vpack.c.b16 %v7977, %v7975
    %v8030 = vpack.c.b16 %v7980, %v7978
    %v8031 = vpack.c.b16 %v7981, %v7979
    %v8032 = vpack.c.b16 %v7984, %v7982
    %v8033 = vpack.c.b16 %v7985, %v7983
    %v8034 = vpack.c.b16 %v7988, %v7986
    %v8035 = vpack.c.b16 %v7989, %v7987
    %v8036 = vpack.c.b16 %v7992, %v7990
    %v8037 = vpack.c.b16 %v7993, %v7991
    %v8038 = vpack.c.b16 %v7996, %v7994
    %v8039 = vpack.c.b16 %v7997, %v7995
    %v8040 = vpack.c.b16 %v8000, %v7998
    %v8041 = vpack.c.b16 %v8001, %v7999
    %v8042 = vpack.c.b16 %v8004, %v8002
    %v8043 = vpack.c.b16 %v8005, %v8003
    %v8044 = vpack.c.b16 %v8008, %v8006
    %v8045 = vpack.c.b16 %v8009, %v8007
    %v8046 = vpack.c.b16 %v8012, %v8010
    %v8047 = vpack.c.b16 %v8013, %v8011
    %v8048 = vpack.c.b16 %v8016, %v8014
    %v8049 = vpack.c.b16 %v8017, %v8015
    %8082 = vmatprep.subr.bf16.mxu0 %v8033
    %8083 = vmatpush1.bf16.msra.mxu0 %v8032
    %8084 = vmatprep.subr.bf16.mxu0 %v8031
    %8085 = vmatpush1.bf16.msra.mxu0 %v8030
    %8086 = vmatprep.subr.bf16.mxu0 %v8029
    %8087 = vmatpush1.bf16.msra.mxu0 %v8028
    %8088 = vmatprep.subr.bf16.mxu0 %v8027
    %8089 = vmatpush1.bf16.msra.mxu0 %v8026
    %8090 = vmatprep.subr.bf16.mxu0 %v8025
    %8091 = vmatpush1.bf16.msra.mxu0 %v8024
    %8092 = vmatprep.subr.bf16.mxu0 %v8023
    %8093 = vmatpush1.bf16.msra.mxu0 %v8022
    %8094 = vmatprep.subr.bf16.mxu0 %v8021
    %8095 = vmatpush1.bf16.msra.mxu0 %v8020
    %8096 = vmatprep.subr.bf16.mxu0 %v8019
    %8097 = vmatpush1.bf16.msra.mxu0 %v8018
    %8098 = vmatprep.subr.bf16.mxu0 %v8049
    %8099 = vmatpush2.bf16.msra.mxu0 %v8048
    %8100 = vmatprep.subr.bf16.mxu0 %v8047
    %8101 = vmatpush2.bf16.msra.mxu0 %v8046
    %8102 = vmatprep.subr.bf16.mxu0 %v8045
    %8103 = vmatpush2.bf16.msra.mxu0 %v8044
    %8104 = vmatprep.subr.bf16.mxu0 %v8043
    %8105 = vmatpush2.bf16.msra.mxu0 %v8042
    %8106 = vmatprep.subr.bf16.mxu0 %v8041
    %8107 = vmatpush2.bf16.msra.mxu0 %v8040
    %8108 = vmatprep.subr.bf16.mxu0 %v8039
    %8109 = vmatpush2.bf16.msra.mxu0 %v8038
    %8110 = vmatprep.subr.bf16.mxu0 %v8037
    %8111 = vmatpush2.bf16.msra.mxu0 %v8036
    %8112 = vmatprep.subr.bf16.mxu0 %v8035
    %8113 = vmatpush2.bf16.msra.mxu0 %v8034
    %8114 = vmatprep.mubr.bf16.mxu0 %v7344
    %8115 = vmatmul.mubr.bf16.gmra.mxu0 %v7343
    %v8116 = vpop.f32.mrf.mxu0
    %v8117 = vadd.f32 %v7918, %v8116
    %v8118 = vpop.f32.mrf.mxu0
    %v8119 = vadd.f32 %v7919, %v8118
    %v8120 = vpop.f32.mrf.mxu0
    %v8121 = vadd.f32 %v7916, %v8120
    %v8122 = vpop.f32.mrf.mxu0
    %v8123 = vadd.f32 %v7917, %v8122
    %8124 = vmatprep.mubr.bf16.mxu0 %v7346
    %8125 = vmatmul.mubr.bf16.gmra.mxu0 %v7345
    %v8126 = vpop.f32.mrf.mxu0
    %v8127 = vadd.f32 %v7914, %v8126
    %v8128 = vpop.f32.mrf.mxu0
    %v8129 = vadd.f32 %v7915, %v8128
    %v8130 = vpop.f32.mrf.mxu0
    %v8131 = vadd.f32 %v7912, %v8130
    %v8132 = vpop.f32.mrf.mxu0
    %v8133 = vadd.f32 %v7913, %v8132
    %8134 = vmatprep.mubr.bf16.mxu0 %v7348
    %8135 = vmatmul.mubr.bf16.gmra.mxu0 %v7347
    %v8136 = vpop.f32.mrf.mxu0
    %v8137 = vadd.f32 %v7910, %v8136
    %v8138 = vpop.f32.mrf.mxu0
    %v8139 = vadd.f32 %v7911, %v8138
    %v8140 = vpop.f32.mrf.mxu0
    %v8141 = vadd.f32 %v7908, %v8140
    %v8142 = vpop.f32.mrf.mxu0
    %v8143 = vadd.f32 %v7909, %v8142
    %8144 = vmatprep.mubr.bf16.mxu0 %v7350
    %8145 = vmatmul.mubr.bf16.gmra.mxu0 %v7349
    %v8146 = vpop.f32.mrf.mxu0
    %v8147 = vadd.f32 %v7906, %v8146
    %v8148 = vpop.f32.mrf.mxu0
    %v8149 = vadd.f32 %v7907, %v8148
    %v8150 = vpop.f32.mrf.mxu0
    %v8151 = vadd.f32 %v7904, %v8150
    %v8152 = vpop.f32.mrf.mxu0
    %v8153 = vadd.f32 %v7905, %v8152
    %8154 = vmatprep.mubr.bf16.mxu0 %v7352
    %8155 = vmatmul.mubr.bf16.gmra.mxu0 %v7351
    %v8156 = vpop.f32.mrf.mxu0
    %v8157 = vadd.f32 %v7902, %v8156
    %v8158 = vpop.f32.mrf.mxu0
    %v8159 = vadd.f32 %v7903, %v8158
    %v8160 = vpop.f32.mrf.mxu0
    %v8161 = vadd.f32 %v7900, %v8160
    %v8162 = vpop.f32.mrf.mxu0
    %v8163 = vadd.f32 %v7901, %v8162
    %8164 = vmatprep.mubr.bf16.mxu0 %v7354
    %8165 = vmatmul.mubr.bf16.gmra.mxu0 %v7353
    %v8166 = vpop.f32.mrf.mxu0
    %v8167 = vadd.f32 %v7898, %v8166
    %v8168 = vpop.f32.mrf.mxu0
    %v8169 = vadd.f32 %v7899, %v8168
    %v8170 = vpop.f32.mrf.mxu0
    %v8171 = vadd.f32 %v7896, %v8170
    %v8172 = vpop.f32.mrf.mxu0
    %v8173 = vadd.f32 %v7897, %v8172
    %8174 = vmatprep.mubr.bf16.mxu0 %v7356
    %8175 = vmatmul.mubr.bf16.gmra.mxu0 %v7355
    %v8176 = vpop.f32.mrf.mxu0
    %v8177 = vadd.f32 %v7894, %v8176
    %v8178 = vpop.f32.mrf.mxu0
    %v8179 = vadd.f32 %v7895, %v8178
    %v8180 = vpop.f32.mrf.mxu0
    %v8181 = vadd.f32 %v7892, %v8180
    %v8182 = vpop.f32.mrf.mxu0
    %v8183 = vadd.f32 %v7893, %v8182
    %8184 = vmatprep.mubr.bf16.mxu0 %v7358
    %8185 = vmatmul.mubr.bf16.gmra.mxu0 %v7357
    %v8186 = vpop.f32.mrf.mxu0
    %v8187 = vadd.f32 %v7890, %v8186
    %v8188 = vpop.f32.mrf.mxu0
    %v8189 = vadd.f32 %v7891, %v8188
    %v8190 = vpop.f32.mrf.mxu0
    %v8191 = vadd.f32 %v7888, %v8190
    %v8192 = vpop.f32.mrf.mxu0
    %v8193 = vadd.f32 %v7889, %v8192
    %8194 = vmatprep.mubr.bf16.mxu0 %v7360
    %8195 = vmatmul.mubr.bf16.gmra.mxu0 %v7359
    %v8196 = vpop.f32.mrf.mxu0
    %v8197 = vadd.f32 %v7886, %v8196
    %v8198 = vpop.f32.mrf.mxu0
    %v8199 = vadd.f32 %v7887, %v8198
    %v8200 = vpop.f32.mrf.mxu0
    %v8201 = vadd.f32 %v7884, %v8200
    %v8202 = vpop.f32.mrf.mxu0
    %v8203 = vadd.f32 %v7885, %v8202
    %8204 = vmatprep.mubr.bf16.mxu0 %v7362
    %8205 = vmatmul.mubr.bf16.gmra.mxu0 %v7361
    %v8206 = vpop.f32.mrf.mxu0
    %v8207 = vadd.f32 %v7882, %v8206
    %v8208 = vpop.f32.mrf.mxu0
    %v8209 = vadd.f32 %v7883, %v8208
    %v8210 = vpop.f32.mrf.mxu0
    %v8211 = vadd.f32 %v7880, %v8210
    %v8212 = vpop.f32.mrf.mxu0
    %v8213 = vadd.f32 %v7881, %v8212
    %8214 = vmatprep.mubr.bf16.mxu0 %v7364
    %8215 = vmatmul.mubr.bf16.gmra.mxu0 %v7363
    %v8216 = vpop.f32.mrf.mxu0
    %v8217 = vadd.f32 %v7878, %v8216
    %v8218 = vpop.f32.mrf.mxu0
    %v8219 = vadd.f32 %v7879, %v8218
    %v8220 = vpop.f32.mrf.mxu0
    %v8221 = vadd.f32 %v7876, %v8220
    %v8222 = vpop.f32.mrf.mxu0
    %v8223 = vadd.f32 %v7877, %v8222
    %8224 = vmatprep.mubr.bf16.mxu0 %v7366
    %8225 = vmatmul.mubr.bf16.gmra.mxu0 %v7365
    %v8226 = vpop.f32.mrf.mxu0
    %v8227 = vadd.f32 %v7874, %v8226
    %v8228 = vpop.f32.mrf.mxu0
    %v8229 = vadd.f32 %v7875, %v8228
    %v8230 = vpop.f32.mrf.mxu0
    %v8231 = vadd.f32 %v7872, %v8230
    %v8232 = vpop.f32.mrf.mxu0
    %v8233 = vadd.f32 %v7873, %v8232
    %8234 = vmatprep.mubr.bf16.mxu0 %v7368
    %8235 = vmatmul.mubr.bf16.gmra.mxu0 %v7367
    %v8236 = vpop.f32.mrf.mxu0
    %v8237 = vadd.f32 %v7870, %v8236
    %v8238 = vpop.f32.mrf.mxu0
    %v8239 = vadd.f32 %v7871, %v8238
    %v8240 = vpop.f32.mrf.mxu0
    %v8241 = vadd.f32 %v7868, %v8240
    %v8242 = vpop.f32.mrf.mxu0
    %v8243 = vadd.f32 %v7869, %v8242
    %8244 = vmatprep.mubr.bf16.mxu0 %v7370
    %8245 = vmatmul.mubr.bf16.gmra.mxu0 %v7369
    %v8246 = vpop.f32.mrf.mxu0
    %v8247 = vadd.f32 %v7866, %v8246
    %v8248 = vpop.f32.mrf.mxu0
    %v8249 = vadd.f32 %v7867, %v8248
    %v8250 = vpop.f32.mrf.mxu0
    %v8251 = vadd.f32 %v7864, %v8250
    %v8252 = vpop.f32.mrf.mxu0
    %v8253 = vadd.f32 %v7865, %v8252
    %8254 = vmatprep.mubr.bf16.mxu0 %v7372
    %8255 = vmatmul.mubr.bf16.gmra.mxu0 %v7371
    %v8256 = vpop.f32.mrf.mxu0
    %v8257 = vadd.f32 %v7862, %v8256
    %v8258 = vpop.f32.mrf.mxu0
    %v8259 = vadd.f32 %v7863, %v8258
    %v8260 = vpop.f32.mrf.mxu0
    %v8261 = vadd.f32 %v7860, %v8260
    %v8262 = vpop.f32.mrf.mxu0
    %v8263 = vadd.f32 %v7861, %v8262
    %8264 = vmatprep.mubr.bf16.mxu0 %v7374
    %8265 = vmatmul.mubr.bf16.gmra.mxu0 %v7373
    %v8266 = vpop.f32.mrf.mxu0
    %v8267 = vadd.f32 %v7858, %v8266
    %v8268 = vpop.f32.mrf.mxu0
    %v8269 = vadd.f32 %v7859, %v8268
    %v8270 = vpop.f32.mrf.mxu0
    %v8271 = vadd.f32 %v7920, %v8270
    %v8272 = vpop.f32.mrf.mxu0
    %v8273 = vadd.f32 %v7921, %v8272
    %8274 = vdwg.mxu0
    %s8275 = scalar_lea.vmem [#allocation6], 2048
    %v8276 = vld [vmem:[%s8275] sm:$0xff]
    %v8277 = vld [vmem:[%s8275 + $0x8] sm:$0xff]
    %v8278 = vld [vmem:[%s8275 + $0x10] sm:$0xff]
    %v8279 = vld [vmem:[%s8275 + $0x18] sm:$0xff]
    %v8280 = vld [vmem:[%s8275 + $0x20] sm:$0xff]
    %v8281 = vld [vmem:[%s8275 + $0x28] sm:$0xff]
    %v8282 = vld [vmem:[%s8275 + $0x30] sm:$0xff]
    %v8283 = vld [vmem:[%s8275 + $0x38] sm:$0xff]
    %v8284 = vld [vmem:[%s8275 + $0x40] sm:$0xff]
    %v8285 = vld [vmem:[%s8275 + $0x48] sm:$0xff]
    %v8286 = vld [vmem:[%s8275 + $0x50] sm:$0xff]
    %v8287 = vld [vmem:[%s8275 + $0x58] sm:$0xff]
    %v8288 = vld [vmem:[%s8275 + $0x60] sm:$0xff]
    %v8289 = vld [vmem:[%s8275 + $0x68] sm:$0xff]
    %v8290 = vld [vmem:[%s8275 + $0x70] sm:$0xff]
    %v8291 = vld [vmem:[%s8275 + $0x78] sm:$0xff]
    %v8292 = vld [vmem:[%s8275 + $0x80] sm:$0xff]
    %v8293 = vld [vmem:[%s8275 + $0x88] sm:$0xff]
    %v8294 = vld [vmem:[%s8275 + $0x90] sm:$0xff]
    %v8295 = vld [vmem:[%s8275 + $0x98] sm:$0xff]
    %v8296 = vld [vmem:[%s8275 + $0xa0] sm:$0xff]
    %v8297 = vld [vmem:[%s8275 + $0xa8] sm:$0xff]
    %v8298 = vld [vmem:[%s8275 + $0xb0] sm:$0xff]
    %v8299 = vld [vmem:[%s8275 + $0xb8] sm:$0xff]
    %v8300 = vld [vmem:[%s8275 + $0xc0] sm:$0xff]
    %v8301 = vld [vmem:[%s8275 + $0xc8] sm:$0xff]
    %v8302 = vld [vmem:[%s8275 + $0xd0] sm:$0xff]
    %v8303 = vld [vmem:[%s8275 + $0xd8] sm:$0xff]
    %v8304 = vld [vmem:[%s8275 + $0xe0] sm:$0xff]
    %v8305 = vld [vmem:[%s8275 + $0xe8] sm:$0xff]
    %v8306 = vld [vmem:[%s8275 + $0xf0] sm:$0xff]
    %v8307 = vld [vmem:[%s8275 + $0xf8] sm:$0xff]
    %v8340 = vunpack.c.l.b16 %v8276
    %v8341 = vunpack.c.h.b16 %v8276
    %v8342 = vunpack.c.l.b16 %v8277
    %v8343 = vunpack.c.h.b16 %v8277
    %v8344 = vunpack.c.l.b16 %v8278
    %v8345 = vunpack.c.h.b16 %v8278
    %v8346 = vunpack.c.l.b16 %v8279
    %v8347 = vunpack.c.h.b16 %v8279
    %v8348 = vunpack.c.l.b16 %v8280
    %v8349 = vunpack.c.h.b16 %v8280
    %v8350 = vunpack.c.l.b16 %v8281
    %v8351 = vunpack.c.h.b16 %v8281
    %v8352 = vunpack.c.l.b16 %v8282
    %v8353 = vunpack.c.h.b16 %v8282
    %v8354 = vunpack.c.l.b16 %v8283
    %v8355 = vunpack.c.h.b16 %v8283
    %v8356 = vunpack.c.l.b16 %v8284
    %v8357 = vunpack.c.h.b16 %v8284
    %v8358 = vunpack.c.l.b16 %v8285
    %v8359 = vunpack.c.h.b16 %v8285
    %v8360 = vunpack.c.l.b16 %v8286
    %v8361 = vunpack.c.h.b16 %v8286
    %v8362 = vunpack.c.l.b16 %v8287
    %v8363 = vunpack.c.h.b16 %v8287
    %v8364 = vunpack.c.l.b16 %v8288
    %v8365 = vunpack.c.h.b16 %v8288
    %v8366 = vunpack.c.l.b16 %v8289
    %v8367 = vunpack.c.h.b16 %v8289
    %v8368 = vunpack.c.l.b16 %v8290
    %v8369 = vunpack.c.h.b16 %v8290
    %v8370 = vunpack.c.l.b16 %v8291
    %v8371 = vunpack.c.h.b16 %v8291
    %v8372 = vunpack.c.l.b16 %v8292
    %v8373 = vunpack.c.h.b16 %v8292
    %v8374 = vunpack.c.l.b16 %v8293
    %v8375 = vunpack.c.h.b16 %v8293
    %v8376 = vunpack.c.l.b16 %v8294
    %v8377 = vunpack.c.h.b16 %v8294
    %v8378 = vunpack.c.l.b16 %v8295
    %v8379 = vunpack.c.h.b16 %v8295
    %v8380 = vunpack.c.l.b16 %v8296
    %v8381 = vunpack.c.h.b16 %v8296
    %v8382 = vunpack.c.l.b16 %v8297
    %v8383 = vunpack.c.h.b16 %v8297
    %v8384 = vunpack.c.l.b16 %v8298
    %v8385 = vunpack.c.h.b16 %v8298
    %v8386 = vunpack.c.l.b16 %v8299
    %v8387 = vunpack.c.h.b16 %v8299
    %v8388 = vunpack.c.l.b16 %v8300
    %v8389 = vunpack.c.h.b16 %v8300
    %v8390 = vunpack.c.l.b16 %v8301
    %v8391 = vunpack.c.h.b16 %v8301
    %v8392 = vunpack.c.l.b16 %v8302
    %v8393 = vunpack.c.h.b16 %v8302
    %v8394 = vunpack.c.l.b16 %v8303
    %v8395 = vunpack.c.h.b16 %v8303
    %v8396 = vunpack.c.l.b16 %v8304
    %v8397 = vunpack.c.h.b16 %v8304
    %v8398 = vunpack.c.l.b16 %v8305
    %v8399 = vunpack.c.h.b16 %v8305
    %v8400 = vunpack.c.l.b16 %v8306
    %v8401 = vunpack.c.h.b16 %v8306
    %v8402 = vunpack.c.l.b16 %v8307
    %v8403 = vunpack.c.h.b16 %v8307
    %v8404 = vpack.c.b16 %v8342, %v8340
    %v8405 = vpack.c.b16 %v8343, %v8341
    %v8406 = vpack.c.b16 %v8346, %v8344
    %v8407 = vpack.c.b16 %v8347, %v8345
    %v8408 = vpack.c.b16 %v8350, %v8348
    %v8409 = vpack.c.b16 %v8351, %v8349
    %v8410 = vpack.c.b16 %v8354, %v8352
    %v8411 = vpack.c.b16 %v8355, %v8353
    %v8412 = vpack.c.b16 %v8358, %v8356
    %v8413 = vpack.c.b16 %v8359, %v8357
    %v8414 = vpack.c.b16 %v8362, %v8360
    %v8415 = vpack.c.b16 %v8363, %v8361
    %v8416 = vpack.c.b16 %v8366, %v8364
    %v8417 = vpack.c.b16 %v8367, %v8365
    %v8418 = vpack.c.b16 %v8370, %v8368
    %v8419 = vpack.c.b16 %v8371, %v8369
    %v8420 = vpack.c.b16 %v8374, %v8372
    %v8421 = vpack.c.b16 %v8375, %v8373
    %v8422 = vpack.c.b16 %v8378, %v8376
    %v8423 = vpack.c.b16 %v8379, %v8377
    %v8424 = vpack.c.b16 %v8382, %v8380
    %v8425 = vpack.c.b16 %v8383, %v8381
    %v8426 = vpack.c.b16 %v8386, %v8384
    %v8427 = vpack.c.b16 %v8387, %v8385
    %v8428 = vpack.c.b16 %v8390, %v8388
    %v8429 = vpack.c.b16 %v8391, %v8389
    %v8430 = vpack.c.b16 %v8394, %v8392
    %v8431 = vpack.c.b16 %v8395, %v8393
    %v8432 = vpack.c.b16 %v8398, %v8396
    %v8433 = vpack.c.b16 %v8399, %v8397
    %v8434 = vpack.c.b16 %v8402, %v8400
    %v8435 = vpack.c.b16 %v8403, %v8401
    %8468 = vmatprep.subr.bf16.mxu0 %v8419
    %8469 = vmatpush1.bf16.msra.mxu0 %v8418
    %8470 = vmatprep.subr.bf16.mxu0 %v8417
    %8471 = vmatpush1.bf16.msra.mxu0 %v8416
    %8472 = vmatprep.subr.bf16.mxu0 %v8415
    %8473 = vmatpush1.bf16.msra.mxu0 %v8414
    %8474 = vmatprep.subr.bf16.mxu0 %v8413
    %8475 = vmatpush1.bf16.msra.mxu0 %v8412
    %8476 = vmatprep.subr.bf16.mxu0 %v8411
    %8477 = vmatpush1.bf16.msra.mxu0 %v8410
    %8478 = vmatprep.subr.bf16.mxu0 %v8409
    %8479 = vmatpush1.bf16.msra.mxu0 %v8408
    %8480 = vmatprep.subr.bf16.mxu0 %v8407
    %8481 = vmatpush1.bf16.msra.mxu0 %v8406
    %8482 = vmatprep.subr.bf16.mxu0 %v8405
    %8483 = vmatpush1.bf16.msra.mxu0 %v8404
    %8484 = vmatprep.subr.bf16.mxu0 %v8435
    %8485 = vmatpush2.bf16.msra.mxu0 %v8434
    %8486 = vmatprep.subr.bf16.mxu0 %v8433
    %8487 = vmatpush2.bf16.msra.mxu0 %v8432
    %8488 = vmatprep.subr.bf16.mxu0 %v8431
    %8489 = vmatpush2.bf16.msra.mxu0 %v8430
    %8490 = vmatprep.subr.bf16.mxu0 %v8429
    %8491 = vmatpush2.bf16.msra.mxu0 %v8428
    %8492 = vmatprep.subr.bf16.mxu0 %v8427
    %8493 = vmatpush2.bf16.msra.mxu0 %v8426
    %8494 = vmatprep.subr.bf16.mxu0 %v8425
    %8495 = vmatpush2.bf16.msra.mxu0 %v8424
    %8496 = vmatprep.subr.bf16.mxu0 %v8423
    %8497 = vmatpush2.bf16.msra.mxu0 %v8422
    %8498 = vmatprep.subr.bf16.mxu0 %v8421
    %8499 = vmatpush2.bf16.msra.mxu0 %v8420
    %8500 = vmatprep.mubr.bf16.mxu0 %v7344
    %8501 = vmatmul.mubr.bf16.gmra.mxu0 %v7343
    %v8502 = vpop.f32.mrf.mxu0
    %v8503 = vadd.f32 0.0, %v8502
    %v8504 = vpop.f32.mrf.mxu0
    %v8505 = vadd.f32 0.0, %v8504
    %v8506 = vpop.f32.mrf.mxu0
    %v8507 = vadd.f32 0.0, %v8506
    %v8508 = vpop.f32.mrf.mxu0
    %v8509 = vadd.f32 0.0, %v8508
    %8510 = vmatprep.mubr.bf16.mxu0 %v7346
    %8511 = vmatmul.mubr.bf16.gmra.mxu0 %v7345
    %v8512 = vpop.f32.mrf.mxu0
    %v8513 = vadd.f32 0.0, %v8512
    %v8514 = vpop.f32.mrf.mxu0
    %v8515 = vadd.f32 0.0, %v8514
    %v8516 = vpop.f32.mrf.mxu0
    %v8517 = vadd.f32 0.0, %v8516
    %v8518 = vpop.f32.mrf.mxu0
    %v8519 = vadd.f32 0.0, %v8518
    %8520 = vmatprep.mubr.bf16.mxu0 %v7348
    %8521 = vmatmul.mubr.bf16.gmra.mxu0 %v7347
    %v8522 = vpop.f32.mrf.mxu0
    %v8523 = vadd.f32 0.0, %v8522
    %v8524 = vpop.f32.mrf.mxu0
    %v8525 = vadd.f32 0.0, %v8524
    %v8526 = vpop.f32.mrf.mxu0
    %v8527 = vadd.f32 0.0, %v8526
    %v8528 = vpop.f32.mrf.mxu0
    %v8529 = vadd.f32 0.0, %v8528
    %8530 = vmatprep.mubr.bf16.mxu0 %v7350
    %8531 = vmatmul.mubr.bf16.gmra.mxu0 %v7349
    %v8532 = vpop.f32.mrf.mxu0
    %v8533 = vadd.f32 0.0, %v8532
    %v8534 = vpop.f32.mrf.mxu0
    %v8535 = vadd.f32 0.0, %v8534
    %v8536 = vpop.f32.mrf.mxu0
    %v8537 = vadd.f32 0.0, %v8536
    %v8538 = vpop.f32.mrf.mxu0
    %v8539 = vadd.f32 0.0, %v8538
    %8540 = vmatprep.mubr.bf16.mxu0 %v7352
    %8541 = vmatmul.mubr.bf16.gmra.mxu0 %v7351
    %v8542 = vpop.f32.mrf.mxu0
    %v8543 = vadd.f32 0.0, %v8542
    %v8544 = vpop.f32.mrf.mxu0
    %v8545 = vadd.f32 0.0, %v8544
    %v8546 = vpop.f32.mrf.mxu0
    %v8547 = vadd.f32 0.0, %v8546
    %v8548 = vpop.f32.mrf.mxu0
    %v8549 = vadd.f32 0.0, %v8548
    %8550 = vmatprep.mubr.bf16.mxu0 %v7354
    %8551 = vmatmul.mubr.bf16.gmra.mxu0 %v7353
    %v8552 = vpop.f32.mrf.mxu0
    %v8553 = vadd.f32 0.0, %v8552
    %v8554 = vpop.f32.mrf.mxu0
    %v8555 = vadd.f32 0.0, %v8554
    %v8556 = vpop.f32.mrf.mxu0
    %v8557 = vadd.f32 0.0, %v8556
    %v8558 = vpop.f32.mrf.mxu0
    %v8559 = vadd.f32 0.0, %v8558
    %8560 = vmatprep.mubr.bf16.mxu0 %v7356
    %8561 = vmatmul.mubr.bf16.gmra.mxu0 %v7355
    %v8562 = vpop.f32.mrf.mxu0
    %v8563 = vadd.f32 0.0, %v8562
    %v8564 = vpop.f32.mrf.mxu0
    %v8565 = vadd.f32 0.0, %v8564
    %v8566 = vpop.f32.mrf.mxu0
    %v8567 = vadd.f32 0.0, %v8566
    %v8568 = vpop.f32.mrf.mxu0
    %v8569 = vadd.f32 0.0, %v8568
    %8570 = vmatprep.mubr.bf16.mxu0 %v7358
    %8571 = vmatmul.mubr.bf16.gmra.mxu0 %v7357
    %v8572 = vpop.f32.mrf.mxu0
    %v8573 = vadd.f32 0.0, %v8572
    %v8574 = vpop.f32.mrf.mxu0
    %v8575 = vadd.f32 0.0, %v8574
    %v8576 = vpop.f32.mrf.mxu0
    %v8577 = vadd.f32 0.0, %v8576
    %v8578 = vpop.f32.mrf.mxu0
    %v8579 = vadd.f32 0.0, %v8578
    %8580 = vmatprep.mubr.bf16.mxu0 %v7360
    %8581 = vmatmul.mubr.bf16.gmra.mxu0 %v7359
    %v8582 = vpop.f32.mrf.mxu0
    %v8583 = vadd.f32 0.0, %v8582
    %v8584 = vpop.f32.mrf.mxu0
    %v8585 = vadd.f32 0.0, %v8584
    %v8586 = vpop.f32.mrf.mxu0
    %v8587 = vadd.f32 0.0, %v8586
    %v8588 = vpop.f32.mrf.mxu0
    %v8589 = vadd.f32 0.0, %v8588
    %8590 = vmatprep.mubr.bf16.mxu0 %v7362
    %8591 = vmatmul.mubr.bf16.gmra.mxu0 %v7361
    %v8592 = vpop.f32.mrf.mxu0
    %v8593 = vadd.f32 0.0, %v8592
    %v8594 = vpop.f32.mrf.mxu0
    %v8595 = vadd.f32 0.0, %v8594
    %v8596 = vpop.f32.mrf.mxu0
    %v8597 = vadd.f32 0.0, %v8596
    %v8598 = vpop.f32.mrf.mxu0
    %v8599 = vadd.f32 0.0, %v8598
    %8600 = vmatprep.mubr.bf16.mxu0 %v7364
    %8601 = vmatmul.mubr.bf16.gmra.mxu0 %v7363
    %v8602 = vpop.f32.mrf.mxu0
    %v8603 = vadd.f32 0.0, %v8602
    %v8604 = vpop.f32.mrf.mxu0
    %v8605 = vadd.f32 0.0, %v8604
    %v8606 = vpop.f32.mrf.mxu0
    %v8607 = vadd.f32 0.0, %v8606
    %v8608 = vpop.f32.mrf.mxu0
    %v8609 = vadd.f32 0.0, %v8608
    %8610 = vmatprep.mubr.bf16.mxu0 %v7366
    %8611 = vmatmul.mubr.bf16.gmra.mxu0 %v7365
    %v8612 = vpop.f32.mrf.mxu0
    %v8613 = vadd.f32 0.0, %v8612
    %v8614 = vpop.f32.mrf.mxu0
    %v8615 = vadd.f32 0.0, %v8614
    %v8616 = vpop.f32.mrf.mxu0
    %v8617 = vadd.f32 0.0, %v8616
    %v8618 = vpop.f32.mrf.mxu0
    %v8619 = vadd.f32 0.0, %v8618
    %8620 = vmatprep.mubr.bf16.mxu0 %v7368
    %8621 = vmatmul.mubr.bf16.gmra.mxu0 %v7367
    %v8622 = vpop.f32.mrf.mxu0
    %v8623 = vadd.f32 0.0, %v8622
    %v8624 = vpop.f32.mrf.mxu0
    %v8625 = vadd.f32 0.0, %v8624
    %v8626 = vpop.f32.mrf.mxu0
    %v8627 = vadd.f32 0.0, %v8626
    %v8628 = vpop.f32.mrf.mxu0
    %v8629 = vadd.f32 0.0, %v8628
    %8630 = vmatprep.mubr.bf16.mxu0 %v7370
    %8631 = vmatmul.mubr.bf16.gmra.mxu0 %v7369
    %v8632 = vpop.f32.mrf.mxu0
    %v8633 = vadd.f32 0.0, %v8632
    %v8634 = vpop.f32.mrf.mxu0
    %v8635 = vadd.f32 0.0, %v8634
    %v8636 = vpop.f32.mrf.mxu0
    %v8637 = vadd.f32 0.0, %v8636
    %v8638 = vpop.f32.mrf.mxu0
    %v8639 = vadd.f32 0.0, %v8638
    %8640 = vmatprep.mubr.bf16.mxu0 %v7372
    %8641 = vmatmul.mubr.bf16.gmra.mxu0 %v7371
    %v8642 = vpop.f32.mrf.mxu0
    %v8643 = vadd.f32 0.0, %v8642
    %v8644 = vpop.f32.mrf.mxu0
    %v8645 = vadd.f32 0.0, %v8644
    %v8646 = vpop.f32.mrf.mxu0
    %v8647 = vadd.f32 0.0, %v8646
    %v8648 = vpop.f32.mrf.mxu0
    %v8649 = vadd.f32 0.0, %v8648
    %8650 = vmatprep.mubr.bf16.mxu0 %v7374
    %8651 = vmatmul.mubr.bf16.gmra.mxu0 %v7373
    %v8652 = vpop.f32.mrf.mxu0
    %v8653 = vadd.f32 0.0, %v8652
    %v8654 = vpop.f32.mrf.mxu0
    %v8655 = vadd.f32 0.0, %v8654
    %v8656 = vpop.f32.mrf.mxu0
    %v8657 = vadd.f32 0.0, %v8656
    %v8658 = vpop.f32.mrf.mxu0
    %v8659 = vadd.f32 0.0, %v8658
    %8660 = vdwg.mxu0
    %v8661 = vrot.slane %v8503, 6
    %v8662 = vrot.slane %v8505, 6
    %v8663 = vrot.slane %v8507, 6
    %v8664 = vrot.slane %v8509, 6
    %v8665 = vrot.slane %v8513, 6
    %v8666 = vrot.slane %v8515, 6
    %v8667 = vrot.slane %v8517, 6
    %v8668 = vrot.slane %v8519, 6
    %v8669 = vrot.slane %v8523, 6
    %v8670 = vrot.slane %v8525, 6
    %v8671 = vrot.slane %v8527, 6
    %v8672 = vrot.slane %v8529, 6
    %v8673 = vrot.slane %v8533, 6
    %v8674 = vrot.slane %v8535, 6
    %v8675 = vrot.slane %v8537, 6
    %v8676 = vrot.slane %v8539, 6
    %v8677 = vrot.slane %v8543, 6
    %v8678 = vrot.slane %v8545, 6
    %v8679 = vrot.slane %v8547, 6
    %v8680 = vrot.slane %v8549, 6
    %v8681 = vrot.slane %v8553, 6
    %v8682 = vrot.slane %v8555, 6
    %v8683 = vrot.slane %v8557, 6
    %v8684 = vrot.slane %v8559, 6
    %v8685 = vrot.slane %v8563, 6
    %v8686 = vrot.slane %v8565, 6
    %v8687 = vrot.slane %v8567, 6
    %v8688 = vrot.slane %v8569, 6
    %v8689 = vrot.slane %v8573, 6
    %v8690 = vrot.slane %v8575, 6
    %v8691 = vrot.slane %v8577, 6
    %v8692 = vrot.slane %v8579, 6
    %v8693 = vrot.slane %v8583, 6
    %v8694 = vrot.slane %v8585, 6
    %v8695 = vrot.slane %v8587, 6
    %v8696 = vrot.slane %v8589, 6
    %v8697 = vrot.slane %v8593, 6
    %v8698 = vrot.slane %v8595, 6
    %v8699 = vrot.slane %v8597, 6
    %v8700 = vrot.slane %v8599, 6
    %v8701 = vrot.slane %v8603, 6
    %v8702 = vrot.slane %v8605, 6
    %v8703 = vrot.slane %v8607, 6
    %v8704 = vrot.slane %v8609, 6
    %v8705 = vrot.slane %v8613, 6
    %v8706 = vrot.slane %v8615, 6
    %v8707 = vrot.slane %v8617, 6
    %v8708 = vrot.slane %v8619, 6
    %v8709 = vrot.slane %v8623, 6
    %v8710 = vrot.slane %v8625, 6
    %v8711 = vrot.slane %v8627, 6
    %v8712 = vrot.slane %v8629, 6
    %v8713 = vrot.slane %v8633, 6
    %v8714 = vrot.slane %v8635, 6
    %v8715 = vrot.slane %v8637, 6
    %v8716 = vrot.slane %v8639, 6
    %v8717 = vrot.slane %v8643, 6
    %v8718 = vrot.slane %v8645, 6
    %v8719 = vrot.slane %v8647, 6
    %v8720 = vrot.slane %v8649, 6
    %v8721 = vrot.slane %v8653, 6
    %v8722 = vrot.slane %v8655, 6
    %v8723 = vrot.slane %v8657, 6
    %v8724 = vrot.slane %v8659, 6
    %v8725 = vsel %vm3198, %v8721, %v8723
    %v8726 = vsel %vm3198, %v8722, %v8724
    %v8727 = vsel %vm3198, %v8719, %v8721
    %v8728 = vsel %vm3198, %v8720, %v8722
    %v8729 = vsel %vm3198, %v8717, %v8719
    %v8730 = vsel %vm3198, %v8718, %v8720
    %v8731 = vsel %vm3198, %v8715, %v8717
    %v8732 = vsel %vm3198, %v8716, %v8718
    %v8733 = vsel %vm3198, %v8713, %v8715
    %v8734 = vsel %vm3198, %v8714, %v8716
    %v8735 = vsel %vm3198, %v8711, %v8713
    %v8736 = vsel %vm3198, %v8712, %v8714
    %v8737 = vsel %vm3198, %v8709, %v8711
    %v8738 = vsel %vm3198, %v8710, %v8712
    %v8739 = vsel %vm3198, %v8707, %v8709
    %v8740 = vsel %vm3198, %v8708, %v8710
    %v8741 = vsel %vm3198, %v8705, %v8707
    %v8742 = vsel %vm3198, %v8706, %v8708
    %v8743 = vsel %vm3198, %v8703, %v8705
    %v8744 = vsel %vm3198, %v8704, %v8706
    %v8745 = vsel %vm3198, %v8701, %v8703
    %v8746 = vsel %vm3198, %v8702, %v8704
    %v8747 = vsel %vm3198, %v8699, %v8701
    %v8748 = vsel %vm3198, %v8700, %v8702
    %v8749 = vsel %vm3198, %v8697, %v8699
    %v8750 = vsel %vm3198, %v8698, %v8700
    %v8751 = vsel %vm3198, %v8695, %v8697
    %v8752 = vsel %vm3198, %v8696, %v8698
    %v8753 = vsel %vm3198, %v8693, %v8695
    %v8754 = vsel %vm3198, %v8694, %v8696
    %v8755 = vsel %vm3198, %v8691, %v8693
    %v8756 = vsel %vm3198, %v8692, %v8694
    %v8757 = vsel %vm3198, %v8689, %v8691
    %v8758 = vsel %vm3198, %v8690, %v8692
    %v8759 = vsel %vm3198, %v8687, %v8689
    %v8760 = vsel %vm3198, %v8688, %v8690
    %v8761 = vsel %vm3198, %v8685, %v8687
    %v8762 = vsel %vm3198, %v8686, %v8688
    %v8763 = vsel %vm3198, %v8683, %v8685
    %v8764 = vsel %vm3198, %v8684, %v8686
    %v8765 = vsel %vm3198, %v8681, %v8683
    %v8766 = vsel %vm3198, %v8682, %v8684
    %v8767 = vsel %vm3198, %v8679, %v8681
    %v8768 = vsel %vm3198, %v8680, %v8682
    %v8769 = vsel %vm3198, %v8677, %v8679
    %v8770 = vsel %vm3198, %v8678, %v8680
    %v8771 = vsel %vm3198, %v8675, %v8677
    %v8772 = vsel %vm3198, %v8676, %v8678
    %v8773 = vsel %vm3198, %v8673, %v8675
    %v8774 = vsel %vm3198, %v8674, %v8676
    %v8775 = vsel %vm3198, %v8671, %v8673
    %v8776 = vsel %vm3198, %v8672, %v8674
    %v8777 = vsel %vm3198, %v8669, %v8671
    %v8778 = vsel %vm3198, %v8670, %v8672
    %v8779 = vsel %vm3198, %v8667, %v8669
    %v8780 = vsel %vm3198, %v8668, %v8670
    %v8781 = vsel %vm3198, %v8665, %v8667
    %v8782 = vsel %vm3198, %v8666, %v8668
    %v8783 = vsel %vm3198, %v8663, %v8665
    %v8784 = vsel %vm3198, %v8664, %v8666
    %v8785 = vsel %vm3198, %v8661, %v8663
    %v8786 = vsel %vm3198, %v8662, %v8664
    %v8787 = vsel %vm3198, %v8723, %v8661
    %v8788 = vsel %vm3198, %v8724, %v8662
    %v8789 = vadd.f32 %v8117, %v8785
    %v8790 = vadd.f32 %v8119, %v8786
    %v8791 = vadd.f32 %v8121, %v8783
    %v8792 = vadd.f32 %v8123, %v8784
    %v8793 = vadd.f32 %v8127, %v8781
    %v8794 = vadd.f32 %v8129, %v8782
    %v8795 = vadd.f32 %v8131, %v8779
    %v8796 = vadd.f32 %v8133, %v8780
    %v8797 = vadd.f32 %v8137, %v8777
    %v8798 = vadd.f32 %v8139, %v8778
    %v8799 = vadd.f32 %v8141, %v8775
    %v8800 = vadd.f32 %v8143, %v8776
    %v8801 = vadd.f32 %v8147, %v8773
    %v8802 = vadd.f32 %v8149, %v8774
    %v8803 = vadd.f32 %v8151, %v8771
    %v8804 = vadd.f32 %v8153, %v8772
    %v8805 = vadd.f32 %v8157, %v8769
    %v8806 = vadd.f32 %v8159, %v8770
    %v8807 = vadd.f32 %v8161, %v8767
    %v8808 = vadd.f32 %v8163, %v8768
    %v8809 = vadd.f32 %v8167, %v8765
    %v8810 = vadd.f32 %v8169, %v8766
    %v8811 = vadd.f32 %v8171, %v8763
    %v8812 = vadd.f32 %v8173, %v8764
    %v8813 = vadd.f32 %v8177, %v8761
    %v8814 = vadd.f32 %v8179, %v8762
    %v8815 = vadd.f32 %v8181, %v8759
    %v8816 = vadd.f32 %v8183, %v8760
    %v8817 = vadd.f32 %v8187, %v8757
    %v8818 = vadd.f32 %v8189, %v8758
    %v8819 = vadd.f32 %v8191, %v8755
    %v8820 = vadd.f32 %v8193, %v8756
    %v8821 = vadd.f32 %v8197, %v8753
    %v8822 = vadd.f32 %v8199, %v8754
    %v8823 = vadd.f32 %v8201, %v8751
    %v8824 = vadd.f32 %v8203, %v8752
    %v8825 = vadd.f32 %v8207, %v8749
    %v8826 = vadd.f32 %v8209, %v8750
    %v8827 = vadd.f32 %v8211, %v8747
    %v8828 = vadd.f32 %v8213, %v8748
    %v8829 = vadd.f32 %v8217, %v8745
    %v8830 = vadd.f32 %v8219, %v8746
    %v8831 = vadd.f32 %v8221, %v8743
    %v8832 = vadd.f32 %v8223, %v8744
    %v8833 = vadd.f32 %v8227, %v8741
    %v8834 = vadd.f32 %v8229, %v8742
    %v8835 = vadd.f32 %v8231, %v8739
    %v8836 = vadd.f32 %v8233, %v8740
    %v8837 = vadd.f32 %v8237, %v8737
    %v8838 = vadd.f32 %v8239, %v8738
    %v8839 = vadd.f32 %v8241, %v8735
    %v8840 = vadd.f32 %v8243, %v8736
    %v8841 = vadd.f32 %v8247, %v8733
    %v8842 = vadd.f32 %v8249, %v8734
    %v8843 = vadd.f32 %v8251, %v8731
    %v8844 = vadd.f32 %v8253, %v8732
    %v8845 = vadd.f32 %v8257, %v8729
    %v8846 = vadd.f32 %v8259, %v8730
    %v8847 = vadd.f32 %v8261, %v8727
    %v8848 = vadd.f32 %v8263, %v8728
    %v8849 = vadd.f32 %v8267, %v8725
    %v8850 = vadd.f32 %v8269, %v8726
    %v8851 = vadd.f32 %v8271, %v8787
    %v8852 = vadd.f32 %v8273, %v8788
    %s8853 = scalar_lea.vmem [#allocation7], 4
    %v8854 = vld [vmem:[%s8853] sm:$0x3]
    %v8856 = vlaneseq
    %v8857 = vshrl.u32 %v8856, 7
    %v8858 = vsub.s32 0, %v8857
    %v8859 = vrot.slane %v8854, %v8858
    %v8860 = vlaneseq
    %v8861 = vshrl.u32 %v8860, 7
    %v8862 = vsub.s32 1, %v8861
    %v8863 = vrot.slane %v8854, %v8862
    %v8866 = vadd.f32 %v8789, %v8859
    %v8867 = vadd.f32 %v8790, %v8863
    %v8868 = vadd.f32 %v8791, %v8859
    %v8869 = vadd.f32 %v8792, %v8863
    %v8870 = vadd.f32 %v8793, %v8859
    %v8871 = vadd.f32 %v8794, %v8863
    %v8872 = vadd.f32 %v8795, %v8859
    %v8873 = vadd.f32 %v8796, %v8863
    %v8874 = vadd.f32 %v8797, %v8859
    %v8875 = vadd.f32 %v8798, %v8863
    %v8876 = vadd.f32 %v8799, %v8859
    %v8877 = vadd.f32 %v8800, %v8863
    %v8878 = vadd.f32 %v8801, %v8859
    %v8879 = vadd.f32 %v8802, %v8863
    %v8880 = vadd.f32 %v8803, %v8859
    %v8881 = vadd.f32 %v8804, %v8863
    %v8882 = vadd.f32 %v8805, %v8859
    %v8883 = vadd.f32 %v8806, %v8863
    %v8884 = vadd.f32 %v8807, %v8859
    %v8885 = vadd.f32 %v8808, %v8863
    %v8886 = vadd.f32 %v8809, %v8859
    %v8887 = vadd.f32 %v8810, %v8863
    %v8888 = vadd.f32 %v8811, %v8859
    %v8889 = vadd.f32 %v8812, %v8863
    %v8890 = vadd.f32 %v8813, %v8859
    %v8891 = vadd.f32 %v8814, %v8863
    %v8892 = vadd.f32 %v8815, %v8859
    %v8893 = vadd.f32 %v8816, %v8863
    %v8894 = vadd.f32 %v8817, %v8859
    %v8895 = vadd.f32 %v8818, %v8863
    %v8896 = vadd.f32 %v8819, %v8859
    %v8897 = vadd.f32 %v8820, %v8863
    %v8898 = vadd.f32 %v8821, %v8859
    %v8899 = vadd.f32 %v8822, %v8863
    %v8900 = vadd.f32 %v8823, %v8859
    %v8901 = vadd.f32 %v8824, %v8863
    %v8902 = vadd.f32 %v8825, %v8859
    %v8903 = vadd.f32 %v8826, %v8863
    %v8904 = vadd.f32 %v8827, %v8859
    %v8905 = vadd.f32 %v8828, %v8863
    %v8906 = vadd.f32 %v8829, %v8859
    %v8907 = vadd.f32 %v8830, %v8863
    %v8908 = vadd.f32 %v8831, %v8859
    %v8909 = vadd.f32 %v8832, %v8863
    %v8910 = vadd.f32 %v8833, %v8859
    %v8911 = vadd.f32 %v8834, %v8863
    %v8912 = vadd.f32 %v8835, %v8859
    %v8913 = vadd.f32 %v8836, %v8863
    %v8914 = vadd.f32 %v8837, %v8859
    %v8915 = vadd.f32 %v8838, %v8863
    %v8916 = vadd.f32 %v8839, %v8859
    %v8917 = vadd.f32 %v8840, %v8863
    %v8918 = vadd.f32 %v8841, %v8859
    %v8919 = vadd.f32 %v8842, %v8863
    %v8920 = vadd.f32 %v8843, %v8859
    %v8921 = vadd.f32 %v8844, %v8863
    %v8922 = vadd.f32 %v8845, %v8859
    %v8923 = vadd.f32 %v8846, %v8863
    %v8924 = vadd.f32 %v8847, %v8859
    %v8925 = vadd.f32 %v8848, %v8863
    %v8926 = vadd.f32 %v8849, %v8859
    %v8927 = vadd.f32 %v8850, %v8863
    %v8928 = vadd.f32 %v8851, %v8859
    %v8929 = vadd.f32 %v8852, %v8863
    %v8930 = vrot.slane %v7151, 3
    %v8931 = vrot.slane %v7152, 3
    %v8932 = vrot.slane %v7153, 3
    %v8933 = vrot.slane %v7154, 3
    %v8934 = vrot.slane %v7155, 3
    %v8935 = vrot.slane %v7156, 3
    %v8936 = vrot.slane %v7157, 3
    %v8937 = vrot.slane %v7158, 3
    %v8938 = vrot.slane %v7159, 3
    %v8939 = vrot.slane %v7160, 3
    %v8940 = vrot.slane %v7161, 3
    %v8941 = vrot.slane %v7162, 3
    %v8942 = vrot.slane %v7163, 3
    %v8943 = vrot.slane %v7164, 3
    %v8944 = vrot.slane %v7165, 3
    %v8945 = vrot.slane %v7166, 3
    %v8946 = vrot.slane %v7167, 3
    %v8947 = vrot.slane %v7168, 3
    %v8948 = vrot.slane %v7169, 3
    %v8949 = vrot.slane %v7170, 3
    %v8950 = vrot.slane %v7171, 3
    %v8951 = vrot.slane %v7172, 3
    %v8952 = vrot.slane %v7173, 3
    %v8953 = vrot.slane %v7174, 3
    %v8954 = vrot.slane %v7175, 3
    %v8955 = vrot.slane %v7176, 3
    %v8956 = vrot.slane %v7177, 3
    %v8957 = vrot.slane %v7178, 3
    %v8958 = vrot.slane %v7179, 3
    %v8959 = vrot.slane %v7180, 3
    %v8960 = vrot.slane %v7181, 3
    %v8961 = vrot.slane %v7182, 3
    %v8962 = vrot.slane %v7183, 3
    %v8963 = vrot.slane %v7184, 3
    %v8964 = vrot.slane %v7185, 3
    %v8965 = vrot.slane %v7186, 3
    %v8966 = vrot.slane %v7187, 3
    %v8967 = vrot.slane %v7188, 3
    %v8968 = vrot.slane %v7189, 3
    %v8969 = vrot.slane %v7190, 3
    %v8970 = vrot.slane %v7191, 3
    %v8971 = vrot.slane %v7192, 3
    %v8972 = vrot.slane %v7193, 3
    %v8973 = vrot.slane %v7194, 3
    %v8974 = vrot.slane %v7195, 3
    %v8975 = vrot.slane %v7196, 3
    %v8976 = vrot.slane %v7197, 3
    %v8977 = vrot.slane %v7198, 3
    %v8978 = vrot.slane %v7199, 3
    %v8979 = vrot.slane %v7200, 3
    %v8980 = vrot.slane %v7201, 3
    %v8981 = vrot.slane %v7202, 3
    %v8982 = vrot.slane %v7203, 3
    %v8983 = vrot.slane %v7204, 3
    %v8984 = vrot.slane %v7205, 3
    %v8985 = vrot.slane %v7206, 3
    %v8986 = vrot.slane %v7207, 3
    %v8987 = vrot.slane %v7208, 3
    %v8988 = vrot.slane %v7209, 3
    %v8989 = vrot.slane %v7210, 3
    %v8990 = vrot.slane %v7211, 3
    %v8991 = vrot.slane %v7212, 3
    %v8992 = vrot.slane %v7213, 3
    %v8993 = vrot.slane %v7214, 3
    %v8994 = vsel %vm1749, %v8990, %v8992
    %v8995 = vsel %vm1749, %v8991, %v8993
    %v8996 = vsel %vm1749, %v8988, %v8990
    %v8997 = vsel %vm1749, %v8989, %v8991
    %v8998 = vsel %vm1749, %v8986, %v8988
    %v8999 = vsel %vm1749, %v8987, %v8989
    %v9000 = vsel %vm1749, %v8984, %v8986
    %v9001 = vsel %vm1749, %v8985, %v8987
    %v9002 = vsel %vm1749, %v8982, %v8984
    %v9003 = vsel %vm1749, %v8983, %v8985
    %v9004 = vsel %vm1749, %v8980, %v8982
    %v9005 = vsel %vm1749, %v8981, %v8983
    %v9006 = vsel %vm1749, %v8978, %v8980
    %v9007 = vsel %vm1749, %v8979, %v8981
    %v9008 = vsel %vm1749, %v8976, %v8978
    %v9009 = vsel %vm1749, %v8977, %v8979
    %v9010 = vsel %vm1749, %v8974, %v8976
    %v9011 = vsel %vm1749, %v8975, %v8977
    %v9012 = vsel %vm1749, %v8972, %v8974
    %v9013 = vsel %vm1749, %v8973, %v8975
    %v9014 = vsel %vm1749, %v8970, %v8972
    %v9015 = vsel %vm1749, %v8971, %v8973
    %v9016 = vsel %vm1749, %v8968, %v8970
    %v9017 = vsel %vm1749, %v8969, %v8971
    %v9018 = vsel %vm1749, %v8966, %v8968
    %v9019 = vsel %vm1749, %v8967, %v8969
    %v9020 = vsel %vm1749, %v8964, %v8966
    %v9021 = vsel %vm1749, %v8965, %v8967
    %v9022 = vsel %vm1749, %v8962, %v8964
    %v9023 = vsel %vm1749, %v8963, %v8965
    %v9024 = vsel %vm1749, %v8960, %v8962
    %v9025 = vsel %vm1749, %v8961, %v8963
    %v9026 = vsel %vm1749, %v8958, %v8960
    %v9027 = vsel %vm1749, %v8959, %v8961
    %v9028 = vsel %vm1749, %v8956, %v8958
    %v9029 = vsel %vm1749, %v8957, %v8959
    %v9030 = vsel %vm1749, %v8954, %v8956
    %v9031 = vsel %vm1749, %v8955, %v8957
    %v9032 = vsel %vm1749, %v8952, %v8954
    %v9033 = vsel %vm1749, %v8953, %v8955
    %v9034 = vsel %vm1749, %v8950, %v8952
    %v9035 = vsel %vm1749, %v8951, %v8953
    %v9036 = vsel %vm1749, %v8948, %v8950
    %v9037 = vsel %vm1749, %v8949, %v8951
    %v9038 = vsel %vm1749, %v8946, %v8948
    %v9039 = vsel %vm1749, %v8947, %v8949
    %v9040 = vsel %vm1749, %v8944, %v8946
    %v9041 = vsel %vm1749, %v8945, %v8947
    %v9042 = vsel %vm1749, %v8942, %v8944
    %v9043 = vsel %vm1749, %v8943, %v8945
    %v9044 = vsel %vm1749, %v8940, %v8942
    %v9045 = vsel %vm1749, %v8941, %v8943
    %v9046 = vsel %vm1749, %v8938, %v8940
    %v9047 = vsel %vm1749, %v8939, %v8941
    %v9048 = vsel %vm1749, %v8936, %v8938
    %v9049 = vsel %vm1749, %v8937, %v8939
    %v9050 = vsel %vm1749, %v8934, %v8936
    %v9051 = vsel %vm1749, %v8935, %v8937
    %v9052 = vsel %vm1749, %v8932, %v8934
    %v9053 = vsel %vm1749, %v8933, %v8935
    %v9054 = vsel %vm1749, %v8930, %v8932
    %v9055 = vsel %vm1749, %v8931, %v8933
    %v9056 = vsel %vm1749, %v8992, %v8930
    %v9057 = vsel %vm1749, %v8993, %v8931
    %v9058 = vadd.f32 %v8866, %v9054
    %v9059 = vadd.f32 %v8867, %v9055
    %v9060 = vadd.f32 %v8868, %v9052
    %v9061 = vadd.f32 %v8869, %v9053
    %v9062 = vadd.f32 %v8870, %v9050
    %v9063 = vadd.f32 %v8871, %v9051
    %v9064 = vadd.f32 %v8872, %v9048
    %v9065 = vadd.f32 %v8873, %v9049
    %v9066 = vadd.f32 %v8874, %v9046
    %v9067 = vadd.f32 %v8875, %v9047
    %v9068 = vadd.f32 %v8876, %v9044
    %v9069 = vadd.f32 %v8877, %v9045
    %v9070 = vadd.f32 %v8878, %v9042
    %v9071 = vadd.f32 %v8879, %v9043
    %v9072 = vadd.f32 %v8880, %v9040
    %v9073 = vadd.f32 %v8881, %v9041
    %v9074 = vadd.f32 %v8882, %v9038
    %v9075 = vadd.f32 %v8883, %v9039
    %v9076 = vadd.f32 %v8884, %v9036
    %v9077 = vadd.f32 %v8885, %v9037
    %v9078 = vadd.f32 %v8886, %v9034
    %v9079 = vadd.f32 %v8887, %v9035
    %v9080 = vadd.f32 %v8888, %v9032
    %v9081 = vadd.f32 %v8889, %v9033
    %v9082 = vadd.f32 %v8890, %v9030
    %v9083 = vadd.f32 %v8891, %v9031
    %v9084 = vadd.f32 %v8892, %v9028
    %v9085 = vadd.f32 %v8893, %v9029
    %v9086 = vadd.f32 %v8894, %v9026
    %v9087 = vadd.f32 %v8895, %v9027
    %v9088 = vadd.f32 %v8896, %v9024
    %v9089 = vadd.f32 %v8897, %v9025
    %v9090 = vadd.f32 %v8898, %v9022
    %v9091 = vadd.f32 %v8899, %v9023
    %v9092 = vadd.f32 %v8900, %v9020
    %v9093 = vadd.f32 %v8901, %v9021
    %v9094 = vadd.f32 %v8902, %v9018
    %v9095 = vadd.f32 %v8903, %v9019
    %v9096 = vadd.f32 %v8904, %v9016
    %v9097 = vadd.f32 %v8905, %v9017
    %v9098 = vadd.f32 %v8906, %v9014
    %v9099 = vadd.f32 %v8907, %v9015
    %v9100 = vadd.f32 %v8908, %v9012
    %v9101 = vadd.f32 %v8909, %v9013
    %v9102 = vadd.f32 %v8910, %v9010
    %v9103 = vadd.f32 %v8911, %v9011
    %v9104 = vadd.f32 %v8912, %v9008
    %v9105 = vadd.f32 %v8913, %v9009
    %v9106 = vadd.f32 %v8914, %v9006
    %v9107 = vadd.f32 %v8915, %v9007
    %v9108 = vadd.f32 %v8916, %v9004
    %v9109 = vadd.f32 %v8917, %v9005
    %v9110 = vadd.f32 %v8918, %v9002
    %v9111 = vadd.f32 %v8919, %v9003
    %v9112 = vadd.f32 %v8920, %v9000
    %v9113 = vadd.f32 %v8921, %v9001
    %v9114 = vadd.f32 %v8922, %v8998
    %v9115 = vadd.f32 %v8923, %v8999
    %v9116 = vadd.f32 %v8924, %v8996
    %v9117 = vadd.f32 %v8925, %v8997
    %v9118 = vadd.f32 %v8926, %v8994
    %v9119 = vadd.f32 %v8927, %v8995
    %v9120 = vadd.f32 %v8928, %v9056
    %v9121 = vadd.f32 %v8929, %v9057
    %v9122 = vadd.s32 %v573, 8
    %v9123 = vadd.s32 %v573, 16
    %v9124 = vadd.s32 %v573, 24
    %vm9125 = vcmp.lt.s32.totalorder %v573, 8
    %vm9126 = vcmp.lt.s32.totalorder %v9122, 8
    %vm9127 = vcmp.lt.s32.totalorder %v9123, 8
    %vm9128 = vcmp.lt.s32.totalorder %v9124, 8
    %v9129 = vsel %vm9125, 1, 0
    %v9130 = vsel %vm9126, 1, 0
    %v9131 = vsel %vm9127, 1, 0
    %v9132 = vsel %vm9128, 1, 0
    %v9133 = vcvt.s32.f32 %v9129
    %v9134 = vcvt.s32.f32 %v9130
    %v9135 = vcvt.s32.f32 %v9131
    %v9136 = vcvt.s32.f32 %v9132
    %v9137 = vmul.f32 %v9058, %v9133
    %v9138 = vmul.f32 %v9059, %v9133
    %v9139 = vmul.f32 %v9060, %v9134
    %v9140 = vmul.f32 %v9061, %v9134
    %v9141 = vmul.f32 %v9062, %v9135
    %v9142 = vmul.f32 %v9063, %v9135
    %v9143 = vmul.f32 %v9064, %v9136
    %v9144 = vmul.f32 %v9065, %v9136
    %v9145 = vmul.f32 %v9066, %v9133
    %v9146 = vmul.f32 %v9067, %v9133
    %v9147 = vmul.f32 %v9068, %v9134
    %v9148 = vmul.f32 %v9069, %v9134
    %v9149 = vmul.f32 %v9070, %v9135
    %v9150 = vmul.f32 %v9071, %v9135
    %v9151 = vmul.f32 %v9072, %v9136
    %v9152 = vmul.f32 %v9073, %v9136
    %v9153 = vmul.f32 %v9074, %v9133
    %v9154 = vmul.f32 %v9075, %v9133
    %v9155 = vmul.f32 %v9076, %v9134
    %v9156 = vmul.f32 %v9077, %v9134
    %v9157 = vmul.f32 %v9078, %v9135
    %v9158 = vmul.f32 %v9079, %v9135
    %v9159 = vmul.f32 %v9080, %v9136
    %v9160 = vmul.f32 %v9081, %v9136
    %v9161 = vmul.f32 %v9082, %v9133
    %v9162 = vmul.f32 %v9083, %v9133
    %v9163 = vmul.f32 %v9084, %v9134
    %v9164 = vmul.f32 %v9085, %v9134
    %v9165 = vmul.f32 %v9086, %v9135
    %v9166 = vmul.f32 %v9087, %v9135
    %v9167 = vmul.f32 %v9088, %v9136
    %v9168 = vmul.f32 %v9089, %v9136
    %v9169 = vmul.f32 %v9090, %v9133
    %v9170 = vmul.f32 %v9091, %v9133
    %v9171 = vmul.f32 %v9092, %v9134
    %v9172 = vmul.f32 %v9093, %v9134
    %v9173 = vmul.f32 %v9094, %v9135
    %v9174 = vmul.f32 %v9095, %v9135
    %v9175 = vmul.f32 %v9096, %v9136
    %v9176 = vmul.f32 %v9097, %v9136
    %v9177 = vmul.f32 %v9098, %v9133
    %v9178 = vmul.f32 %v9099, %v9133
    %v9179 = vmul.f32 %v9100, %v9134
    %v9180 = vmul.f32 %v9101, %v9134
    %v9181 = vmul.f32 %v9102, %v9135
    %v9182 = vmul.f32 %v9103, %v9135
    %v9183 = vmul.f32 %v9104, %v9136
    %v9184 = vmul.f32 %v9105, %v9136
    %v9185 = vmul.f32 %v9106, %v9133
    %v9186 = vmul.f32 %v9107, %v9133
    %v9187 = vmul.f32 %v9108, %v9134
    %v9188 = vmul.f32 %v9109, %v9134
    %v9189 = vmul.f32 %v9110, %v9135
    %v9190 = vmul.f32 %v9111, %v9135
    %v9191 = vmul.f32 %v9112, %v9136
    %v9192 = vmul.f32 %v9113, %v9136
    %v9193 = vmul.f32 %v9114, %v9133
    %v9194 = vmul.f32 %v9115, %v9133
    %v9195 = vmul.f32 %v9116, %v9134
    %v9196 = vmul.f32 %v9117, %v9134
    %v9197 = vmul.f32 %v9118, %v9135
    %v9198 = vmul.f32 %v9119, %v9135
    %v9199 = vmul.f32 %v9120, %v9136
    %v9200 = vmul.f32 %v9121, %v9136
    %v9201 = vadd.f32 %v9137, %v9139
    %v9202 = vadd.f32 %v9201, %v9141
    %v9203 = vadd.f32 %v9202, %v9143
    %v9204 = vrot.slane %v9203, 4
    %v9205 = vadd.f32 %v9203, %v9204
    %v9206 = vrot.slane %v9205, 2
    %v9207 = vadd.f32 %v9205, %v9206
    %v9208 = vrot.slane %v9207, 1
    %v9209 = vadd.f32 %v9207, %v9208
    %v9210 = vadd.f32 %v9138, %v9140
    %v9211 = vadd.f32 %v9210, %v9142
    %v9212 = vadd.f32 %v9211, %v9144
    %v9213 = vrot.slane %v9212, 4
    %v9214 = vadd.f32 %v9212, %v9213
    %v9215 = vrot.slane %v9214, 2
    %v9216 = vadd.f32 %v9214, %v9215
    %v9217 = vrot.slane %v9216, 1
    %v9218 = vadd.f32 %v9216, %v9217
    %v9219 = vadd.f32 %v9145, %v9147
    %v9220 = vadd.f32 %v9219, %v9149
    %v9221 = vadd.f32 %v9220, %v9151
    %v9222 = vrot.slane %v9221, 4
    %v9223 = vadd.f32 %v9221, %v9222
    %v9224 = vrot.slane %v9223, 2
    %v9225 = vadd.f32 %v9223, %v9224
    %v9226 = vrot.slane %v9225, 1
    %v9227 = vadd.f32 %v9225, %v9226
    %v9228 = vadd.f32 %v9146, %v9148
    %v9229 = vadd.f32 %v9228, %v9150
    %v9230 = vadd.f32 %v9229, %v9152
    %v9231 = vrot.slane %v9230, 4
    %v9232 = vadd.f32 %v9230, %v9231
    %v9233 = vrot.slane %v9232, 2
    %v9234 = vadd.f32 %v9232, %v9233
    %v9235 = vrot.slane %v9234, 1
    %v9236 = vadd.f32 %v9234, %v9235
    %v9237 = vadd.f32 %v9153, %v9155
    %v9238 = vadd.f32 %v9237, %v9157
    %v9239 = vadd.f32 %v9238, %v9159
    %v9240 = vrot.slane %v9239, 4
    %v9241 = vadd.f32 %v9239, %v9240
    %v9242 = vrot.slane %v9241, 2
    %v9243 = vadd.f32 %v9241, %v9242
    %v9244 = vrot.slane %v9243, 1
    %v9245 = vadd.f32 %v9243, %v9244
    %v9246 = vadd.f32 %v9154, %v9156
    %v9247 = vadd.f32 %v9246, %v9158
    %v9248 = vadd.f32 %v9247, %v9160
    %v9249 = vrot.slane %v9248, 4
    %v9250 = vadd.f32 %v9248, %v9249
    %v9251 = vrot.slane %v9250, 2
    %v9252 = vadd.f32 %v9250, %v9251
    %v9253 = vrot.slane %v9252, 1
    %v9254 = vadd.f32 %v9252, %v9253
    %v9255 = vadd.f32 %v9161, %v9163
    %v9256 = vadd.f32 %v9255, %v9165
    %v9257 = vadd.f32 %v9256, %v9167
    %v9258 = vrot.slane %v9257, 4
    %v9259 = vadd.f32 %v9257, %v9258
    %v9260 = vrot.slane %v9259, 2
    %v9261 = vadd.f32 %v9259, %v9260
    %v9262 = vrot.slane %v9261, 1
    %v9263 = vadd.f32 %v9261, %v9262
    %v9264 = vadd.f32 %v9162, %v9164
    %v9265 = vadd.f32 %v9264, %v9166
    %v9266 = vadd.f32 %v9265, %v9168
    %v9267 = vrot.slane %v9266, 4
    %v9268 = vadd.f32 %v9266, %v9267
    %v9269 = vrot.slane %v9268, 2
    %v9270 = vadd.f32 %v9268, %v9269
    %v9271 = vrot.slane %v9270, 1
    %v9272 = vadd.f32 %v9270, %v9271
    %v9273 = vadd.f32 %v9169, %v9171
    %v9274 = vadd.f32 %v9273, %v9173
    %v9275 = vadd.f32 %v9274, %v9175
    %v9276 = vrot.slane %v9275, 4
    %v9277 = vadd.f32 %v9275, %v9276
    %v9278 = vrot.slane %v9277, 2
    %v9279 = vadd.f32 %v9277, %v9278
    %v9280 = vrot.slane %v9279, 1
    %v9281 = vadd.f32 %v9279, %v9280
    %v9282 = vadd.f32 %v9170, %v9172
    %v9283 = vadd.f32 %v9282, %v9174
    %v9284 = vadd.f32 %v9283, %v9176
    %v9285 = vrot.slane %v9284, 4
    %v9286 = vadd.f32 %v9284, %v9285
    %v9287 = vrot.slane %v9286, 2
    %v9288 = vadd.f32 %v9286, %v9287
    %v9289 = vrot.slane %v9288, 1
    %v9290 = vadd.f32 %v9288, %v9289
    %v9291 = vadd.f32 %v9177, %v9179
    %v9292 = vadd.f32 %v9291, %v9181
    %v9293 = vadd.f32 %v9292, %v9183
    %v9294 = vrot.slane %v9293, 4
    %v9295 = vadd.f32 %v9293, %v9294
    %v9296 = vrot.slane %v9295, 2
    %v9297 = vadd.f32 %v9295, %v9296
    %v9298 = vrot.slane %v9297, 1
    %v9299 = vadd.f32 %v9297, %v9298
    %v9300 = vadd.f32 %v9178, %v9180
    %v9301 = vadd.f32 %v9300, %v9182
    %v9302 = vadd.f32 %v9301, %v9184
    %v9303 = vrot.slane %v9302, 4
    %v9304 = vadd.f32 %v9302, %v9303
    %v9305 = vrot.slane %v9304, 2
    %v9306 = vadd.f32 %v9304, %v9305
    %v9307 = vrot.slane %v9306, 1
    %v9308 = vadd.f32 %v9306, %v9307
    %v9309 = vadd.f32 %v9185, %v9187
    %v9310 = vadd.f32 %v9309, %v9189
    %v9311 = vadd.f32 %v9310, %v9191
    %v9312 = vrot.slane %v9311, 4
    %v9313 = vadd.f32 %v9311, %v9312
    %v9314 = vrot.slane %v9313, 2
    %v9315 = vadd.f32 %v9313, %v9314
    %v9316 = vrot.slane %v9315, 1
    %v9317 = vadd.f32 %v9315, %v9316
    %v9318 = vadd.f32 %v9186, %v9188
    %v9319 = vadd.f32 %v9318, %v9190
    %v9320 = vadd.f32 %v9319, %v9192
    %v9321 = vrot.slane %v9320, 4
    %v9322 = vadd.f32 %v9320, %v9321
    %v9323 = vrot.slane %v9322, 2
    %v9324 = vadd.f32 %v9322, %v9323
    %v9325 = vrot.slane %v9324, 1
    %v9326 = vadd.f32 %v9324, %v9325
    %v9327 = vadd.f32 %v9193, %v9195
    %v9328 = vadd.f32 %v9327, %v9197
    %v9329 = vadd.f32 %v9328, %v9199
    %v9330 = vrot.slane %v9329, 4
    %v9331 = vadd.f32 %v9329, %v9330
    %v9332 = vrot.slane %v9331, 2
    %v9333 = vadd.f32 %v9331, %v9332
    %v9334 = vrot.slane %v9333, 1
    %v9335 = vadd.f32 %v9333, %v9334
    %v9336 = vadd.f32 %v9194, %v9196
    %v9337 = vadd.f32 %v9336, %v9198
    %v9338 = vadd.f32 %v9337, %v9200
    %v9339 = vrot.slane %v9338, 4
    %v9340 = vadd.f32 %v9338, %v9339
    %v9341 = vrot.slane %v9340, 2
    %v9342 = vadd.f32 %v9340, %v9341
    %v9343 = vrot.slane %v9342, 1
    %v9344 = vadd.f32 %v9342, %v9343
    %v9345 = vmul.f32 %v9209, 0.125
    %v9346 = vmul.f32 %v9218, 0.125
    %v9347 = vmul.f32 %v9227, 0.125
    %v9348 = vmul.f32 %v9236, 0.125
    %v9349 = vmul.f32 %v9245, 0.125
    %v9350 = vmul.f32 %v9254, 0.125
    %v9351 = vmul.f32 %v9263, 0.125
    %v9352 = vmul.f32 %v9272, 0.125
    %v9353 = vmul.f32 %v9281, 0.125
    %v9354 = vmul.f32 %v9290, 0.125
    %v9355 = vmul.f32 %v9299, 0.125
    %v9356 = vmul.f32 %v9308, 0.125
    %v9357 = vmul.f32 %v9317, 0.125
    %v9358 = vmul.f32 %v9326, 0.125
    %v9359 = vmul.f32 %v9335, 0.125
    %v9360 = vmul.f32 %v9344, 0.125
    %vm9377 = vcmask 1041409
    %v9378 = vsel %vm9377, %v9347, %v9345
    %vm9379 = vcmask 1042434
    %v9380 = vsel %vm9379, %v9349, %v9378
    %vm9381 = vcmask 1043459
    %v9382 = vsel %vm9381, %v9351, %v9380
    %vm9383 = vcmask 1044484
    %v9384 = vsel %vm9383, %v9353, %v9382
    %vm9385 = vcmask 1045509
    %v9386 = vsel %vm9385, %v9355, %v9384
    %vm9387 = vcmask 1046534
    %v9388 = vsel %vm9387, %v9357, %v9386
    %vm9389 = vcmask 1047559
    %v9390 = vsel %vm9389, %v9359, %v9388
    %v9391 = vsel %vm9377, %v9348, %v9346
    %v9392 = vsel %vm9379, %v9350, %v9391
    %v9393 = vsel %vm9381, %v9352, %v9392
    %v9394 = vsel %vm9383, %v9354, %v9393
    %v9395 = vsel %vm9385, %v9356, %v9394
    %v9396 = vsel %vm9387, %v9358, %v9395
    %v9397 = vsel %vm9389, %v9360, %v9396
    %9400 = vst [vmem:[%s5] sm:$0xff] %v9390
    %9401 = vst [vmem:[%s5 + $0x8] sm:$0xff] %v9397
    // Predicated region
    $region38: #{conv3dmm_forward.1} parent=1 // pred_check
      _
    $region39: #{conv3dmm_forward.1} parent=1 // pred_check_branch
      %9403 = sbr.rel (0) target = $region41
    $region40: #{conv3dmm_forward.1} parent=1 // pred_region
      _
    $region41: #{conv3dmm_forward.1} parent=1 // pred_fallthru
      _
    // Predicated region
    $region42: #{conv3dmm_forward.1} parent=1 // pred_check
      _
    $region43: #{conv3dmm_forward.1} parent=1 // pred_check_branch
      %9405 = sbr.rel (0) target = $region45
    $region44: #{conv3dmm_forward.1} parent=1 // pred_region
      _
    $region45: #{conv3dmm_forward.1} parent=1 // pred_fallthru
      _
    %9406 = vsyncpa [#allocation3], 1
    %9407 = vsyncpa [#allocation5], 1
    %9408 = vsyncpa [#allocation8], 1

</llo_original>
